<compile_context>
chip_gen: v5e
topology: v5e:2x2
jax: 0.10.0
libtpu: 0.0.40
codegen_flags: <defaults>
</compile_context>

<pallas_src>
import math

import numpy as np
import jax
import jax.numpy as jnp
from jax.experimental import pallas as pl
from jax.experimental.pallas import tpu as pltpu  # noqa: F401  (TPU backend assumed)

# ----------------------------- configuration --------------------------------
EMBED_SIZE = 32
NUM_HEADS = 4
HEAD_DIM = EMBED_SIZE // NUM_HEADS
NUM_ENC_LAYERS = 2
NUM_DEC_LAYERS = 2
FF_SIZE = 64
SRC_VOCAB = 50
TGT_VOCAB = 60
TGT_VOCAB_PAD = 128          # lane-dense logits; sliced back to TGT_VOCAB outside
SRC_PAD_IDX = 0
MAX_SEQ_LEN = 16
SRC_LEN = 10
TGT_LEN = 8
BATCH = 2
LN_EPS = 1e-5
NEG_BIG = -1e30              # finite "minus infinity" (no NaN on masked rows)
LANES = 128


# ----------------------------- blob layout -----------------------------------
def _build_layouts():
    E, F = EMBED_SIZE, FF_SIZE
    w_specs, b_names = [], []
    for i in range(NUM_ENC_LAYERS):
        p = f"e{i}."
        w_specs += [(p + "wqk", E), (p + "wvo", E), (p + "w1", E), (p + "w2", F)]
        b_names += [p + n for n in
                    ("bqk", "bo", "b1", "b2", "ln1g", "ln1b", "ln2g", "ln2b")]
    for i in range(NUM_DEC_LAYERS):
        p = f"d{i}."
        w_specs += [(p + "swqk", E), (p + "swvo", E), (p + "cwq", E),
                    (p + "cwk", E), (p + "cwvo", E), (p + "w1", E), (p + "w2", F)]
        b_names += [p + n for n in
                    ("sbqk", "sbo", "cbq", "cbk", "cbo", "b1", "b2",
                     "ln1g", "ln1b", "ln2g", "ln2b", "ln3g", "ln3b")]
    w_specs += [("fcw", E)]
    b_names += ["encng", "encnb", "decng", "decnb", "fcb"]

    w_off, off = {}, 0
    for name, rows in w_specs:
        w_off[name] = (off, rows)
        off += rows
    w_rows = -(-off // 16) * 16                    # bf16 sublane-tile multiple
    b_off = {name: i for i, name in enumerate(b_names)}
    b_rows = -(-len(b_names) // 8) * 8             # f32 sublane-tile multiple
    return w_off, w_rows, b_off, b_rows


_W_OFF, _W_ROWS, _B_OFF, _B_ROWS = _build_layouts()


# ----------------------------- fused kernel -----------------------------------
def _transformer_kernel(src_ref, tgt_ref, encb_ref, decb_ref, crsb_ref,
                        w_ref, b_ref, o_ref):
    E, D, F = EMBED_SIZE, HEAD_DIM, FF_SIZE

    def w(name):                                   # lazy bf16 weight tile (rows, 128)
        off, rows = _W_OFF[name]
        return w_ref[off:off + rows, :]

    def brow(name):                                # lazy f32 bias/LN row (1, 128)
        r = _B_OFF[name]
        return b_ref[r:r + 1, :]

    def dense(xb, wname, bname=None):
        r = jnp.dot(xb, w(wname), preferred_element_type=jnp.float32)   # (L, 128)
        return r if bname is None else r + brow(bname)

    def layernorm(x, gname, bname):
        m1 = jnp.mean(x, axis=-1, keepdims=True)
        m2 = jnp.mean(x * x, axis=-1, keepdims=True)   # independent reductions
        inv = jax.lax.rsqrt(m2 - m1 * m1 + LN_EPS)
        return (x - m1) * inv * brow(gname)[:, :E] + brow(bname)[:, :E]

    def attend(q, k, vo, bias, boname):
        # q: (Mq, E) pre-scaled by 1/sqrt(D); k: (Mk, E); vo: (Mk, H*E) with W_o
        # folded per head; bias: (Mq, Mk) additive (block-diag / causal / padding).
        acc = None
        for h in range(NUM_HEADS):
            qh = q[:, h * D:(h + 1) * D]
            kh = k[:, h * D:(h + 1) * D]
            s = jax.lax.dot_general(qh, kh, (((1,), (1,)), ((), ())),
                                    preferred_element_type=jnp.float32) + bias
            s = s - jnp.max(s, axis=-1, keepdims=True)
            p = jnp.exp(s)
            p = p / jnp.sum(p, axis=-1, keepdims=True)
            c = jnp.dot(p, vo[:, h * E:(h + 1) * E],
                        preferred_element_type=jnp.float32)
            acc = c if acc is None else acc + c
        return acc + brow(boname)[:, :E]

    # ----------------------------- encoder -----------------------------------
    x = src_ref[...]                               # (N*S, E), batch on sublanes
    enc_bias = encb_ref[...]
    for i in range(NUM_ENC_LAYERS):
        p = f"e{i}."
        xb = x.astype(jnp.bfloat16)
        qk = dense(xb, p + "wqk", p + "bqk")       # (M, 128): [q*scale | k | 0]
        vo = dense(xb, p + "wvo")                  # (M, 128): per-head x @ (Wv_h Wo_h)
        a = attend(qk[:, :E], qk[:, E:2 * E], vo, enc_bias, p + "bo")
        x = layernorm(x + a, p + "ln1g", p + "ln1b")
        hid = jnp.maximum(
            dense(x.astype(jnp.bfloat16), p + "w1", p + "b1")[:, :F], 0.0)
        f = dense(hid.astype(jnp.bfloat16), p + "w2", p + "b2")[:, :E]
        x = layernorm(x + f, p + "ln2g", p + "ln2b")
    memory = layernorm(x, "encng", "encnb")
    mem_b = memory.astype(jnp.bfloat16)            # cast hoisted out of decoder loop

    # ----------------------------- decoder -----------------------------------
    y = tgt_ref[...]                               # (N*T, E)
    dec_bias = decb_ref[...]
    crs_bias = crsb_ref[...]
    for i in range(NUM_DEC_LAYERS):
        p = f"d{i}."
        yb = y.astype(jnp.bfloat16)
        qk = dense(yb, p + "swqk", p + "sbqk")
        vo = dense(yb, p + "swvo")
        a = attend(qk[:, :E], qk[:, E:2 * E], vo, dec_bias, p + "sbo")
        y = layernorm(y + a, p + "ln1g", p + "ln1b")

        qc = dense(y.astype(jnp.bfloat16), p + "cwq", p + "cbq")[:, :E]
        kc = dense(mem_b, p + "cwk", p + "cbk")[:, :E]
        voc = dense(mem_b, p + "cwvo")
        c = attend(qc, kc, voc, crs_bias, p + "cbo")
        y = layernorm(y + c, p + "ln2g", p + "ln2b")

        hid = jnp.maximum(
            dense(y.astype(jnp.bfloat16), p + "w1", p + "b1")[:, :F], 0.0)
        f = dense(hid.astype(jnp.bfloat16), p + "w2", p + "b2")[:, :E]
        y = layernorm(y + f, p + "ln3g", p + "ln3b")

    y = layernorm(y, "decng", "decnb")
    o_ref[...] = dense(y.astype(jnp.bfloat16), "fcw", "fcb")   # (N*T, 128) lane-dense


# ----------------------------- wrapper -----------------------------------------
def transformer_forward(packed, source, target):
    S, N = source.shape
    T, _ = target.shape
    NS, NT = N * S, N * T
    E = EMBED_SIZE

    # Word + position embeddings, stacked batch-major on rows (gathers stay in XLA).
    emb_src = (packed["src_tok"][source.T] + packed["src_pos"][:S][None]).reshape(NS, E)
    emb_tgt = (packed["tgt_tok"][target.T] + packed["tgt_pos"][:T][None]).reshape(NT, E)

    # Additive attention biases: block-diagonal over the folded batch, with the
    # encoder key-padding mask and the decoder causal mask folded in (finite -1e30).
    qb_s = jnp.arange(NS) // S
    qb_t = jnp.arange(NT) // T
    pos_t = jnp.arange(NT) % T
    pad_k = (source.T.reshape(-1) == SRC_PAD_IDX)                      # (NS,)
    enc_bias = jnp.where((qb_s[:, None] == qb_s[None, :]) & ~pad_k[None, :],
                         0.0, NEG_BIG).astype(jnp.float32)             # (NS, NS)
    dec_bias = jnp.where((qb_t[:, None] == qb_t[None, :])
                         & (pos_t[None, :] <= pos_t[:, None]),
                         0.0, NEG_BIG).astype(jnp.float32)             # (NT, NT)
    crs_bias = jnp.where(qb_t[:, None] == qb_s[None, :],
                         0.0, NEG_BIG).astype(jnp.float32)             # (NT, NS)

    # Gridless call: every operand is a whole-array VMEM block (default BlockSpec);
    # total resident footprint (2 param blobs + tiny activations) is ~0.25 MiB.
    out = pl.pallas_call(
        _transformer_kernel,
        out_shape=jax.ShapeDtypeStruct((NT, TGT_VOCAB_PAD), jnp.float32),
    )(emb_src, emb_tgt, enc_bias, dec_bias, crs_bias,
      packed["wblob"], packed["bblob"])

    # (N*T, V_pad) -> (T, N, V)  (PyTorch seq-first convention)
    return out.reshape(N, T, TGT_VOCAB_PAD)[:, :, :TGT_VOCAB].transpose(1, 0, 2)


# ----------------------------- parameter init / packing ------------------------
def _normal(key, shape, scale=0.02):
    return scale * jax.random.normal(key, shape, dtype=jnp.float32)


def _init_enc_layer(key):
    E, F = EMBED_SIZE, FF_SIZE
    ks = jax.random.split(key, 10)
    return {
        "wq": _normal(ks[0], (E, E)), "wk": _normal(ks[1], (E, E)),
        "wv": _normal(ks[2], (E, E)), "wo": _normal(ks[3], (E, E)),
        "bq": _normal(ks[4], (E,), 0.01), "bk": _normal(ks[5], (E,), 0.01),
        "bv": _normal(ks[6], (E,), 0.01), "bo": _normal(ks[7], (E,), 0.01),
        "w1": _normal(ks[8], (E, F)), "b1": jnp.zeros((F,), jnp.float32),
        "w2": _normal(ks[9], (F, E)), "b2": jnp.zeros((E,), jnp.float32),
        "ln1_g": jnp.ones((E,), jnp.float32), "ln1_b": jnp.zeros((E,), jnp.float32),
        "ln2_g": jnp.ones((E,), jnp.float32), "ln2_b": jnp.zeros((E,), jnp.float32),
    }


def _init_dec_layer(key):
    E, F = EMBED_SIZE, FF_SIZE
    ks = jax.random.split(key, 18)
    return {
        "swq": _normal(ks[0], (E, E)), "swk": _normal(ks[1], (E, E)),
        "swv": _normal(ks[2], (E, E)), "swo": _normal(ks[3], (E, E)),
        "sbq": _normal(ks[4], (E,), 0.01), "sbk": _normal(ks[5], (E,), 0.01),
        "sbv": _normal(ks[6], (E,), 0.01), "sbo": _normal(ks[7], (E,), 0.01),
        "cwq": _normal(ks[8], (E, E)), "cwk": _normal(ks[9], (E, E)),
        "cwv": _normal(ks[10], (E, E)), "cwo": _normal(ks[11], (E, E)),
        "cbq": _normal(ks[12], (E,), 0.01), "cbk": _normal(ks[13], (E,), 0.01),
        "cbv": _normal(ks[14], (E,), 0.01), "cbo": _normal(ks[15], (E,), 0.01),
        "w1": _normal(ks[16], (E, F)), "b1": jnp.zeros((F,), jnp.float32),
        "w2": _normal(ks[17], (F, E)), "b2": jnp.zeros((E,), jnp.float32),
        "ln1_g": jnp.ones((E,), jnp.float32), "ln1_b": jnp.zeros((E,), jnp.float32),
        "ln2_g": jnp.ones((E,), jnp.float32), "ln2_b": jnp.zeros((E,), jnp.float32),
        "ln3_g": jnp.ones((E,), jnp.float32), "ln3_b": jnp.zeros((E,), jnp.float32),
    }


def init_params(key):
    E = EMBED_SIZE
    keys = jax.random.split(key, 6 + NUM_ENC_LAYERS + NUM_DEC_LAYERS)
    return {
        "src_tok": jax.random.normal(keys[0], (SRC_VOCAB, E), dtype=jnp.float32),
        "tgt_tok": jax.random.normal(keys[1], (TGT_VOCAB, E), dtype=jnp.float32),
        "src_pos": jax.random.normal(keys[2], (MAX_SEQ_LEN, E), dtype=jnp.float32),
        "tgt_pos": jax.random.normal(keys[3], (MAX_SEQ_LEN, E), dtype=jnp.float32),
        "enc_norm_g": jnp.ones((E,), jnp.float32),
        "enc_norm_b": jnp.zeros((E,), jnp.float32),
        "dec_norm_g": jnp.ones((E,), jnp.float32),
        "dec_norm_b": jnp.zeros((E,), jnp.float32),
        "fc_w": _normal(keys[4], (E, TGT_VOCAB)),
        "fc_b": jnp.zeros((TGT_VOCAB,), jnp.float32),
        "enc_layers": [_init_enc_layer(keys[6 + i]) for i in range(NUM_ENC_LAYERS)],
        "dec_layers": [_init_dec_layer(keys[6 + NUM_ENC_LAYERS + i])
                       for i in range(NUM_DEC_LAYERS)],
    }


def pack_params(params):
    """Pack natural (torch-style) params into the two kernel blobs.

    Folds 1/sqrt(d) into W_q/b_q and the out-projection W_o into the V projection
    (per head: Wv_h @ Wo_h; bias: bo + bv @ Wo).  Note: if real torch weights are
    loaded, in_proj_weight is (3E, E) applied as x @ W^T — transpose accordingly.
    """
    E, F, D, H = EMBED_SIZE, FF_SIZE, HEAD_DIM, NUM_HEADS
    scale = 1.0 / math.sqrt(D)
    wblob = np.zeros((_W_ROWS, LANES), np.float32)
    bblob = np.zeros((_B_ROWS, LANES), np.float32)

    def put_w(name, mat):
        off, rows = _W_OFF[name]
        mat = np.asarray(mat, np.float32)
        wblob[off:off + rows, :mat.shape[1]] = mat

    def put_b(name, vec):
        vec = np.asarray(vec, np.float32).reshape(-1)
        bblob[_B_OFF[name], :vec.shape[0]] = vec

    def fold_vo(wv_, wo_):
        wv_, wo_ = np.asarray(wv_, np.float32), np.asarray(wo_, np.float32)
        return np.concatenate(
            [wv_[:, h * D:(h + 1) * D] @ wo_[h * D:(h + 1) * D, :] for h in range(H)],
            axis=1)                                         # (E, H*E)

    for i, lp in enumerate(params["enc_layers"]):
        p = f"e{i}."
        put_w(p + "wqk", np.concatenate(
            [np.asarray(lp["wq"]) * scale, np.asarray(lp["wk"])], axis=1))
        put_b(p + "bqk", np.concatenate(
            [np.asarray(lp["bq"]) * scale, np.asarray(lp["bk"])]))
        put_w(p + "wvo", fold_vo(lp["wv"], lp["wo"]))
        put_b(p + "bo", np.asarray(lp["bo"])
              + np.asarray(lp["bv"]) @ np.asarray(lp["wo"]))
        put_w(p + "w1", lp["w1"]); put_b(p + "b1", lp["b1"])
        put_w(p + "w2", lp["w2"]); put_b(p + "b2", lp["b2"])
        put_b(p + "ln1g", lp["ln1_g"]); put_b(p + "ln1b", lp["ln1_b"])
        put_b(p + "ln2g", lp["ln2_g"]); put_b(p + "ln2b", lp["ln2_b"])

    for i, lp in enumerate(params["dec_layers"]):
        p = f"d{i}."
        put_w(p + "swqk", np.concatenate(
            [np.asarray(lp["swq"]) * scale, np.asarray(lp["swk"])], axis=1))
        put_b(p + "sbqk", np.concatenate(
            [np.asarray(lp["sbq"]) * scale, np.asarray(lp["sbk"])]))
        put_w(p + "swvo", fold_vo(lp["swv"], lp["swo"]))
        put_b(p + "sbo", np.asarray(lp["sbo"])
              + np.asarray(lp["sbv"]) @ np.asarray(lp["swo"]))
        put_w(p + "cwq", np.asarray(lp["cwq"]) * scale)
        put_b(p + "cbq", np.asarray(lp["cbq"]) * scale)
        put_w(p + "cwk", lp["cwk"]); put_b(p + "cbk", lp["cbk"])
        put_w(p + "cwvo", fold_vo(lp["cwv"], lp["cwo"]))
        put_b(p + "cbo", np.asarray(lp["cbo"])
              + np.asarray(lp["cbv"]) @ np.asarray(lp["cwo"]))
        put_w(p + "w1", lp["w1"]); put_b(p + "b1", lp["b1"])
        put_w(p + "w2", lp["w2"]); put_b(p + "b2", lp["b2"])
        put_b(p + "ln1g", lp["ln1_g"]); put_b(p + "ln1b", lp["ln1_b"])
        put_b(p + "ln2g", lp["ln2_g"]); put_b(p + "ln2b", lp["ln2_b"])
        put_b(p + "ln3g", lp["ln3_g"]); put_b(p + "ln3b", lp["ln3_b"])

    put_b("encng", params["enc_norm_g"]); put_b("encnb", params["enc_norm_b"])
    put_b("decng", params["dec_norm_g"]); put_b("decnb", params["dec_norm_b"])
    put_w("fcw", params["fc_w"]); put_b("fcb", params["fc_b"])

    return {
        "wblob": jnp.asarray(wblob).astype(jnp.bfloat16),   # one bf16 weight blob
        "bblob": jnp.asarray(bblob),                        # one f32 bias/LN blob
        "src_tok": params["src_tok"], "tgt_tok": params["tgt_tok"],
        "src_pos": params["src_pos"], "tgt_pos": params["tgt_pos"],
    }


# ----------------------------- main ---------------------------------------------
if __name__ == "__main__":
    key = jax.random.PRNGKey(0)
    k_src, k_tgt, k_par = jax.random.split(key, 3)

    source = jax.random.randint(k_src, (SRC_LEN, BATCH), 1, SRC_VOCAB, dtype=jnp.int32)
    source = source.at[-2:, 1].set(SRC_PAD_IDX)   # pad a couple of positions in batch 1
    target = jax.random.randint(k_tgt, (TGT_LEN, BATCH), 1, TGT_VOCAB, dtype=jnp.int32)

    packed = pack_params(init_params(k_par))

    fwd = jax.jit(transformer_forward)
    out = jax.block_until_ready(fwd(packed, source, target))

    assert out.shape == (TGT_LEN, BATCH, TGT_VOCAB), out.shape
    assert bool(jnp.all(jnp.isfinite(out)))
    print("KERNEL_OK")
</pallas_src>

<mosaic_0001>
module attributes {stable_mosaic.version = 11 : i64} {
  func.func @_transformer_kernel(%arg0: memref<20x32xf32, #tpu.memory_space<vmem>>, %arg1: memref<16x32xf32, #tpu.memory_space<vmem>>, %arg2: memref<20x20xf32, #tpu.memory_space<vmem>>, %arg3: memref<16x16xf32, #tpu.memory_space<vmem>>, %arg4: memref<16x20xf32, #tpu.memory_space<vmem>>, %arg5: memref<864x128xbf16, #tpu.memory_space<vmem>>, %arg6: memref<48x128xf32, #tpu.memory_space<vmem>>, %arg7: memref<16x128xf32, #tpu.memory_space<vmem>>) attributes {dimension_semantics = [], scalar_prefetch = 0 : i64, scratch_operands = 0 : i64, tpu.core_type = #tpu.core_type<tc>} {
    %c0 = arith.constant 0 : index
    %c0_0 = arith.constant 0 : index
    %0 = vector.load %arg0[%c0, %c0_0] : memref<20x32xf32, #tpu.memory_space<vmem>>, vector<20x32xf32>
    %c0_1 = arith.constant 0 : index
    %c0_2 = arith.constant 0 : index
    %1 = vector.load %arg2[%c0_1, %c0_2] : memref<20x20xf32, #tpu.memory_space<vmem>>, vector<20x20xf32>
    %2 = arith.truncf %0 : vector<20x32xf32> to vector<20x32xbf16>
    %c0_3 = arith.constant 0 : index
    %c0_4 = arith.constant 0 : index
    %3 = vector.load %arg5[%c0_3, %c0_4] : memref<864x128xbf16, #tpu.memory_space<vmem>>, vector<32x128xbf16>
    %cst = arith.constant dense<0.000000e+00> : vector<20x128xf32>
    %4 = tpu.matmul %2, %3, %cst {dimension_numbers = #tpu.dot_dimension_numbers<[1], [0], [0], [1], [0, 0, 1, 1], [], []>} : vector<20x32xbf16>, vector<32x128xbf16>, vector<20x128xf32> -> vector<20x128xf32>
    %c0_5 = arith.constant 0 : index
    %c0_6 = arith.constant 0 : index
    %5 = vector.load %arg6[%c0_5, %c0_6] : memref<48x128xf32, #tpu.memory_space<vmem>>, vector<1x128xf32>
    %6 = vector.broadcast %5 : vector<1x128xf32> to vector<20x128xf32>
    %7 = arith.addf %4, %6 : vector<20x128xf32>
    %c32 = arith.constant 32 : index
    %c0_7 = arith.constant 0 : index
    %8 = vector.load %arg5[%c32, %c0_7] : memref<864x128xbf16, #tpu.memory_space<vmem>>, vector<32x128xbf16>
    %cst_8 = arith.constant dense<0.000000e+00> : vector<20x128xf32>
    %9 = tpu.matmul %2, %8, %cst_8 {dimension_numbers = #tpu.dot_dimension_numbers<[1], [0], [0], [1], [0, 0, 1, 1], [], []>} : vector<20x32xbf16>, vector<32x128xbf16>, vector<20x128xf32> -> vector<20x128xf32>
    %10 = vector.extract_strided_slice %7 {offsets = [0, 0], sizes = [20, 32], strides = [1, 1]} : vector<20x128xf32> to vector<20x32xf32>
    %11 = vector.extract_strided_slice %7 {offsets = [0, 32], sizes = [20, 32], strides = [1, 1]} : vector<20x128xf32> to vector<20x32xf32>
    %12 = vector.extract_strided_slice %10 {offsets = [0, 0], sizes = [20, 8], strides = [1, 1]} : vector<20x32xf32> to vector<20x8xf32>
    %13 = vector.extract_strided_slice %11 {offsets = [0, 0], sizes = [20, 8], strides = [1, 1]} : vector<20x32xf32> to vector<20x8xf32>
    %cst_9 = arith.constant dense<0.000000e+00> : vector<20x20xf32>
    %14 = tpu.matmul %12, %13, %cst_9 {dimension_numbers = #tpu.dot_dimension_numbers<[1], [1], [0], [0], [0, 0, 1, 0], [], []>} : vector<20x8xf32>, vector<20x8xf32>, vector<20x20xf32> -> vector<20x20xf32>
    %15 = arith.addf %14, %1 : vector<20x20xf32>
    %cst_10 = arith.constant dense<0xFF800000> : vector<20xf32>
    %16 = vector.multi_reduction <maximumf>, %15, %cst_10 [1] : vector<20x20xf32> to vector<20xf32>
    %17 = vector.shape_cast %16 : vector<20xf32> to vector<20x1xf32>
    %18 = vector.broadcast %17 : vector<20x1xf32> to vector<20x20xf32>
    %19 = arith.subf %15, %18 : vector<20x20xf32>
    %20 = math.exp %19 : vector<20x20xf32>
    %cst_11 = arith.constant dense<0.000000e+00> : vector<20xf32>
    %21 = vector.multi_reduction <add>, %20, %cst_11 [1] : vector<20x20xf32> to vector<20xf32>
    %22 = vector.shape_cast %21 : vector<20xf32> to vector<20x1xf32>
    %23 = vector.broadcast %22 : vector<20x1xf32> to vector<20x20xf32>
    %24 = arith.divf %20, %23 : vector<20x20xf32>
    %25 = vector.extract_strided_slice %9 {offsets = [0, 0], sizes = [20, 32], strides = [1, 1]} : vector<20x128xf32> to vector<20x32xf32>
    %cst_12 = arith.constant dense<0.000000e+00> : vector<20x32xf32>
    %26 = tpu.matmul %24, %25, %cst_12 {dimension_numbers = #tpu.dot_dimension_numbers<[1], [0], [0], [1], [0, 0, 1, 1], [], []>} : vector<20x20xf32>, vector<20x32xf32>, vector<20x32xf32> -> vector<20x32xf32>
    %27 = vector.extract_strided_slice %10 {offsets = [0, 8], sizes = [20, 8], strides = [1, 1]} : vector<20x32xf32> to vector<20x8xf32>
    %28 = vector.extract_strided_slice %11 {offsets = [0, 8], sizes = [20, 8], strides = [1, 1]} : vector<20x32xf32> to vector<20x8xf32>
    %cst_13 = arith.constant dense<0.000000e+00> : vector<20x20xf32>
    %29 = tpu.matmul %27, %28, %cst_13 {dimension_numbers = #tpu.dot_dimension_numbers<[1], [1], [0], [0], [0, 0, 1, 0], [], []>} : vector<20x8xf32>, vector<20x8xf32>, vector<20x20xf32> -> vector<20x20xf32>
    %30 = arith.addf %29, %1 : vector<20x20xf32>
    %cst_14 = arith.constant dense<0xFF800000> : vector<20xf32>
    %31 = vector.multi_reduction <maximumf>, %30, %cst_14 [1] : vector<20x20xf32> to vector<20xf32>
    %32 = vector.shape_cast %31 : vector<20xf32> to vector<20x1xf32>
    %33 = vector.broadcast %32 : vector<20x1xf32> to vector<20x20xf32>
    %34 = arith.subf %30, %33 : vector<20x20xf32>
    %35 = math.exp %34 : vector<20x20xf32>
    %cst_15 = arith.constant dense<0.000000e+00> : vector<20xf32>
    %36 = vector.multi_reduction <add>, %35, %cst_15 [1] : vector<20x20xf32> to vector<20xf32>
    %37 = vector.shape_cast %36 : vector<20xf32> to vector<20x1xf32>
    %38 = vector.broadcast %37 : vector<20x1xf32> to vector<20x20xf32>
    %39 = arith.divf %35, %38 : vector<20x20xf32>
    %40 = vector.extract_strided_slice %9 {offsets = [0, 32], sizes = [20, 32], strides = [1, 1]} : vector<20x128xf32> to vector<20x32xf32>
    %cst_16 = arith.constant dense<0.000000e+00> : vector<20x32xf32>
    %41 = tpu.matmul %39, %40, %cst_16 {dimension_numbers = #tpu.dot_dimension_numbers<[1], [0], [0], [1], [0, 0, 1, 1], [], []>} : vector<20x20xf32>, vector<20x32xf32>, vector<20x32xf32> -> vector<20x32xf32>
    %42 = arith.addf %26, %41 : vector<20x32xf32>
    %43 = vector.extract_strided_slice %10 {offsets = [0, 16], sizes = [20, 8], strides = [1, 1]} : vector<20x32xf32> to vector<20x8xf32>
    %44 = vector.extract_strided_slice %11 {offsets = [0, 16], sizes = [20, 8], strides = [1, 1]} : vector<20x32xf32> to vector<20x8xf32>
    %cst_17 = arith.constant dense<0.000000e+00> : vector<20x20xf32>
    %45 = tpu.matmul %43, %44, %cst_17 {dimension_numbers = #tpu.dot_dimension_numbers<[1], [1], [0], [0], [0, 0, 1, 0], [], []>} : vector<20x8xf32>, vector<20x8xf32>, vector<20x20xf32> -> vector<20x20xf32>
    %46 = arith.addf %45, %1 : vector<20x20xf32>
    %cst_18 = arith.constant dense<0xFF800000> : vector<20xf32>
    %47 = vector.multi_reduction <maximumf>, %46, %cst_18 [1] : vector<20x20xf32> to vector<20xf32>
    %48 = vector.shape_cast %47 : vector<20xf32> to vector<20x1xf32>
    %49 = vector.broadcast %48 : vector<20x1xf32> to vector<20x20xf32>
    %50 = arith.subf %46, %49 : vector<20x20xf32>
    %51 = math.exp %50 : vector<20x20xf32>
    %cst_19 = arith.constant dense<0.000000e+00> : vector<20xf32>
    %52 = vector.multi_reduction <add>, %51, %cst_19 [1] : vector<20x20xf32> to vector<20xf32>
    %53 = vector.shape_cast %52 : vector<20xf32> to vector<20x1xf32>
    %54 = vector.broadcast %53 : vector<20x1xf32> to vector<20x20xf32>
    %55 = arith.divf %51, %54 : vector<20x20xf32>
    %56 = vector.extract_strided_slice %9 {offsets = [0, 64], sizes = [20, 32], strides = [1, 1]} : vector<20x128xf32> to vector<20x32xf32>
    %cst_20 = arith.constant dense<0.000000e+00> : vector<20x32xf32>
    %57 = tpu.matmul %55, %56, %cst_20 {dimension_numbers = #tpu.dot_dimension_numbers<[1], [0], [0], [1], [0, 0, 1, 1], [], []>} : vector<20x20xf32>, vector<20x32xf32>, vector<20x32xf32> -> vector<20x32xf32>
    %58 = arith.addf %42, %57 : vector<20x32xf32>
    %59 = vector.extract_strided_slice %10 {offsets = [0, 24], sizes = [20, 8], strides = [1, 1]} : vector<20x32xf32> to vector<20x8xf32>
    %60 = vector.extract_strided_slice %11 {offsets = [0, 24], sizes = [20, 8], strides = [1, 1]} : vector<20x32xf32> to vector<20x8xf32>
    %cst_21 = arith.constant dense<0.000000e+00> : vector<20x20xf32>
    %61 = tpu.matmul %59, %60, %cst_21 {dimension_numbers = #tpu.dot_dimension_numbers<[1], [1], [0], [0], [0, 0, 1, 0], [], []>} : vector<20x8xf32>, vector<20x8xf32>, vector<20x20xf32> -> vector<20x20xf32>
    %62 = arith.addf %61, %1 : vector<20x20xf32>
    %cst_22 = arith.constant dense<0xFF800000> : vector<20xf32>
    %63 = vector.multi_reduction <maximumf>, %62, %cst_22 [1] : vector<20x20xf32> to vector<20xf32>
    %64 = vector.shape_cast %63 : vector<20xf32> to vector<20x1xf32>
    %65 = vector.broadcast %64 : vector<20x1xf32> to vector<20x20xf32>
    %66 = arith.subf %62, %65 : vector<20x20xf32>
    %67 = math.exp %66 : vector<20x20xf32>
    %cst_23 = arith.constant dense<0.000000e+00> : vector<20xf32>
    %68 = vector.multi_reduction <add>, %67, %cst_23 [1] : vector<20x20xf32> to vector<20xf32>
    %69 = vector.shape_cast %68 : vector<20xf32> to vector<20x1xf32>
    %70 = vector.broadcast %69 : vector<20x1xf32> to vector<20x20xf32>
    %71 = arith.divf %67, %70 : vector<20x20xf32>
    %72 = vector.extract_strided_slice %9 {offsets = [0, 96], sizes = [20, 32], strides = [1, 1]} : vector<20x128xf32> to vector<20x32xf32>
    %cst_24 = arith.constant dense<0.000000e+00> : vector<20x32xf32>
    %73 = tpu.matmul %71, %72, %cst_24 {dimension_numbers = #tpu.dot_dimension_numbers<[1], [0], [0], [1], [0, 0, 1, 1], [], []>} : vector<20x20xf32>, vector<20x32xf32>, vector<20x32xf32> -> vector<20x32xf32>
    %74 = arith.addf %58, %73 : vector<20x32xf32>
    %c1 = arith.constant 1 : index
    %c0_25 = arith.constant 0 : index
    %75 = vector.load %arg6[%c1, %c0_25] : memref<48x128xf32, #tpu.memory_space<vmem>>, vector<1x128xf32>
    %76 = vector.extract_strided_slice %75 {offsets = [0, 0], sizes = [1, 32], strides = [1, 1]} : vector<1x128xf32> to vector<1x32xf32>
    %77 = vector.broadcast %76 : vector<1x32xf32> to vector<20x32xf32>
    %78 = arith.addf %74, %77 : vector<20x32xf32>
    %79 = arith.addf %0, %78 : vector<20x32xf32>
    %cst_26 = arith.constant dense<0.000000e+00> : vector<20xf32>
    %80 = vector.multi_reduction <add>, %79, %cst_26 [1] : vector<20x32xf32> to vector<20xf32>
    %81 = vector.shape_cast %80 : vector<20xf32> to vector<20x1xf32>
    %cst_27 = arith.constant 3.200000e+01 : f32
    %82 = vector.broadcast %cst_27 : f32 to vector<20x1xf32>
    %83 = arith.divf %81, %82 : vector<20x1xf32>
    %84 = arith.mulf %79, %79 : vector<20x32xf32>
    %cst_28 = arith.constant dense<0.000000e+00> : vector<20xf32>
    %85 = vector.multi_reduction <add>, %84, %cst_28 [1] : vector<20x32xf32> to vector<20xf32>
    %86 = vector.shape_cast %85 : vector<20xf32> to vector<20x1xf32>
    %cst_29 = arith.constant 3.200000e+01 : f32
    %87 = vector.broadcast %cst_29 : f32 to vector<20x1xf32>
    %88 = arith.divf %86, %87 : vector<20x1xf32>
    %89 = arith.mulf %83, %83 : vector<20x1xf32>
    %90 = arith.subf %88, %89 : vector<20x1xf32>
    %cst_30 = arith.constant 9.99999974E-6 : f32
    %91 = vector.broadcast %cst_30 : f32 to vector<20x1xf32>
    %92 = arith.addf %90, %91 : vector<20x1xf32>
    %93 = math.rsqrt %92 : vector<20x1xf32>
    %94 = vector.broadcast %83 : vector<20x1xf32> to vector<20x32xf32>
    %95 = arith.subf %79, %94 : vector<20x32xf32>
    %96 = vector.broadcast %93 : vector<20x1xf32> to vector<20x32xf32>
    %97 = arith.mulf %95, %96 : vector<20x32xf32>
    %c4 = arith.constant 4 : index
    %c0_31 = arith.constant 0 : index
    %98 = vector.load %arg6[%c4, %c0_31] : memref<48x128xf32, #tpu.memory_space<vmem>>, vector<1x128xf32>
    %99 = vector.extract_strided_slice %98 {offsets = [0, 0], sizes = [1, 32], strides = [1, 1]} : vector<1x128xf32> to vector<1x32xf32>
    %100 = vector.broadcast %99 : vector<1x32xf32> to vector<20x32xf32>
    %101 = arith.mulf %97, %100 : vector<20x32xf32>
    %c5 = arith.constant 5 : index
    %c0_32 = arith.constant 0 : index
    %102 = vector.load %arg6[%c5, %c0_32] : memref<48x128xf32, #tpu.memory_space<vmem>>, vector<1x128xf32>
    %103 = vector.extract_strided_slice %102 {offsets = [0, 0], sizes = [1, 32], strides = [1, 1]} : vector<1x128xf32> to vector<1x32xf32>
    %104 = vector.broadcast %103 : vector<1x32xf32> to vector<20x32xf32>
    %105 = arith.addf %101, %104 : vector<20x32xf32>
    %106 = arith.truncf %105 : vector<20x32xf32> to vector<20x32xbf16>
    %c64 = arith.constant 64 : index
    %c0_33 = arith.constant 0 : index
    %107 = vector.load %arg5[%c64, %c0_33] : memref<864x128xbf16, #tpu.memory_space<vmem>>, vector<32x128xbf16>
    %cst_34 = arith.constant dense<0.000000e+00> : vector<20x128xf32>
    %108 = tpu.matmul %106, %107, %cst_34 {dimension_numbers = #tpu.dot_dimension_numbers<[1], [0], [0], [1], [0, 0, 1, 1], [], []>} : vector<20x32xbf16>, vector<32x128xbf16>, vector<20x128xf32> -> vector<20x128xf32>
    %c2 = arith.constant 2 : index
    %c0_35 = arith.constant 0 : index
    %109 = vector.load %arg6[%c2, %c0_35] : memref<48x128xf32, #tpu.memory_space<vmem>>, vector<1x128xf32>
    %110 = vector.broadcast %109 : vector<1x128xf32> to vector<20x128xf32>
    %111 = arith.addf %108, %110 : vector<20x128xf32>
    %112 = vector.extract_strided_slice %111 {offsets = [0, 0], sizes = [20, 64], strides = [1, 1]} : vector<20x128xf32> to vector<20x64xf32>
    %cst_36 = arith.constant 0.000000e+00 : f32
    %113 = vector.broadcast %cst_36 : f32 to vector<20x64xf32>
    %114 = arith.maximumf %112, %113 : vector<20x64xf32>
    %115 = arith.truncf %114 : vector<20x64xf32> to vector<20x64xbf16>
    %c96 = arith.constant 96 : index
    %c0_37 = arith.constant 0 : index
    %116 = vector.load %arg5[%c96, %c0_37] : memref<864x128xbf16, #tpu.memory_space<vmem>>, vector<64x128xbf16>
    %cst_38 = arith.constant dense<0.000000e+00> : vector<20x128xf32>
    %117 = tpu.matmul %115, %116, %cst_38 {dimension_numbers = #tpu.dot_dimension_numbers<[1], [0], [0], [1], [0, 0, 1, 1], [], []>} : vector<20x64xbf16>, vector<64x128xbf16>, vector<20x128xf32> -> vector<20x128xf32>
    %c3 = arith.constant 3 : index
    %c0_39 = arith.constant 0 : index
    %118 = vector.load %arg6[%c3, %c0_39] : memref<48x128xf32, #tpu.memory_space<vmem>>, vector<1x128xf32>
    %119 = vector.broadcast %118 : vector<1x128xf32> to vector<20x128xf32>
    %120 = arith.addf %117, %119 : vector<20x128xf32>
    %121 = vector.extract_strided_slice %120 {offsets = [0, 0], sizes = [20, 32], strides = [1, 1]} : vector<20x128xf32> to vector<20x32xf32>
    %122 = arith.addf %105, %121 : vector<20x32xf32>
    %cst_40 = arith.constant dense<0.000000e+00> : vector<20xf32>
    %123 = vector.multi_reduction <add>, %122, %cst_40 [1] : vector<20x32xf32> to vector<20xf32>
    %124 = vector.shape_cast %123 : vector<20xf32> to vector<20x1xf32>
    %cst_41 = arith.constant 3.200000e+01 : f32
    %125 = vector.broadcast %cst_41 : f32 to vector<20x1xf32>
    %126 = arith.divf %124, %125 : vector<20x1xf32>
    %127 = arith.mulf %122, %122 : vector<20x32xf32>
    %cst_42 = arith.constant dense<0.000000e+00> : vector<20xf32>
    %128 = vector.multi_reduction <add>, %127, %cst_42 [1] : vector<20x32xf32> to vector<20xf32>
    %129 = vector.shape_cast %128 : vector<20xf32> to vector<20x1xf32>
    %cst_43 = arith.constant 3.200000e+01 : f32
    %130 = vector.broadcast %cst_43 : f32 to vector<20x1xf32>
    %131 = arith.divf %129, %130 : vector<20x1xf32>
    %132 = arith.mulf %126, %126 : vector<20x1xf32>
    %133 = arith.subf %131, %132 : vector<20x1xf32>
    %cst_44 = arith.constant 9.99999974E-6 : f32
    %134 = vector.broadcast %cst_44 : f32 to vector<20x1xf32>
    %135 = arith.addf %133, %134 : vector<20x1xf32>
    %136 = math.rsqrt %135 : vector<20x1xf32>
    %137 = vector.broadcast %126 : vector<20x1xf32> to vector<20x32xf32>
    %138 = arith.subf %122, %137 : vector<20x32xf32>
    %139 = vector.broadcast %136 : vector<20x1xf32> to vector<20x32xf32>
    %140 = arith.mulf %138, %139 : vector<20x32xf32>
    %c6 = arith.constant 6 : index
    %c0_45 = arith.constant 0 : index
    %141 = vector.load %arg6[%c6, %c0_45] : memref<48x128xf32, #tpu.memory_space<vmem>>, vector<1x128xf32>
    %142 = vector.extract_strided_slice %141 {offsets = [0, 0], sizes = [1, 32], strides = [1, 1]} : vector<1x128xf32> to vector<1x32xf32>
    %143 = vector.broadcast %142 : vector<1x32xf32> to vector<20x32xf32>
    %144 = arith.mulf %140, %143 : vector<20x32xf32>
    %c7 = arith.constant 7 : index
    %c0_46 = arith.constant 0 : index
    %145 = vector.load %arg6[%c7, %c0_46] : memref<48x128xf32, #tpu.memory_space<vmem>>, vector<1x128xf32>
    %146 = vector.extract_strided_slice %145 {offsets = [0, 0], sizes = [1, 32], strides = [1, 1]} : vector<1x128xf32> to vector<1x32xf32>
    %147 = vector.broadcast %146 : vector<1x32xf32> to vector<20x32xf32>
    %148 = arith.addf %144, %147 : vector<20x32xf32>
    %149 = arith.truncf %148 : vector<20x32xf32> to vector<20x32xbf16>
    %c160 = arith.constant 160 : index
    %c0_47 = arith.constant 0 : index
    %150 = vector.load %arg5[%c160, %c0_47] : memref<864x128xbf16, #tpu.memory_space<vmem>>, vector<32x128xbf16>
    %cst_48 = arith.constant dense<0.000000e+00> : vector<20x128xf32>
    %151 = tpu.matmul %149, %150, %cst_48 {dimension_numbers = #tpu.dot_dimension_numbers<[1], [0], [0], [1], [0, 0, 1, 1], [], []>} : vector<20x32xbf16>, vector<32x128xbf16>, vector<20x128xf32> -> vector<20x128xf32>
    %c8 = arith.constant 8 : index
    %c0_49 = arith.constant 0 : index
    %152 = vector.load %arg6[%c8, %c0_49] : memref<48x128xf32, #tpu.memory_space<vmem>>, vector<1x128xf32>
    %153 = vector.broadcast %152 : vector<1x128xf32> to vector<20x128xf32>
    %154 = arith.addf %151, %153 : vector<20x128xf32>
    %c192 = arith.constant 192 : index
    %c0_50 = arith.constant 0 : index
    %155 = vector.load %arg5[%c192, %c0_50] : memref<864x128xbf16, #tpu.memory_space<vmem>>, vector<32x128xbf16>
    %cst_51 = arith.constant dense<0.000000e+00> : vector<20x128xf32>
    %156 = tpu.matmul %149, %155, %cst_51 {dimension_numbers = #tpu.dot_dimension_numbers<[1], [0], [0], [1], [0, 0, 1, 1], [], []>} : vector<20x32xbf16>, vector<32x128xbf16>, vector<20x128xf32> -> vector<20x128xf32>
    %157 = vector.extract_strided_slice %154 {offsets = [0, 0], sizes = [20, 32], strides = [1, 1]} : vector<20x128xf32> to vector<20x32xf32>
    %158 = vector.extract_strided_slice %154 {offsets = [0, 32], sizes = [20, 32], strides = [1, 1]} : vector<20x128xf32> to vector<20x32xf32>
    %159 = vector.extract_strided_slice %157 {offsets = [0, 0], sizes = [20, 8], strides = [1, 1]} : vector<20x32xf32> to vector<20x8xf32>
    %160 = vector.extract_strided_slice %158 {offsets = [0, 0], sizes = [20, 8], strides = [1, 1]} : vector<20x32xf32> to vector<20x8xf32>
    %cst_52 = arith.constant dense<0.000000e+00> : vector<20x20xf32>
    %161 = tpu.matmul %159, %160, %cst_52 {dimension_numbers = #tpu.dot_dimension_numbers<[1], [1], [0], [0], [0, 0, 1, 0], [], []>} : vector<20x8xf32>, vector<20x8xf32>, vector<20x20xf32> -> vector<20x20xf32>
    %162 = arith.addf %161, %1 : vector<20x20xf32>
    %cst_53 = arith.constant dense<0xFF800000> : vector<20xf32>
    %163 = vector.multi_reduction <maximumf>, %162, %cst_53 [1] : vector<20x20xf32> to vector<20xf32>
    %164 = vector.shape_cast %163 : vector<20xf32> to vector<20x1xf32>
    %165 = vector.broadcast %164 : vector<20x1xf32> to vector<20x20xf32>
    %166 = arith.subf %162, %165 : vector<20x20xf32>
    %167 = math.exp %166 : vector<20x20xf32>
    %cst_54 = arith.constant dense<0.000000e+00> : vector<20xf32>
    %168 = vector.multi_reduction <add>, %167, %cst_54 [1] : vector<20x20xf32> to vector<20xf32>
    %169 = vector.shape_cast %168 : vector<20xf32> to vector<20x1xf32>
    %170 = vector.broadcast %169 : vector<20x1xf32> to vector<20x20xf32>
    %171 = arith.divf %167, %170 : vector<20x20xf32>
    %172 = vector.extract_strided_slice %156 {offsets = [0, 0], sizes = [20, 32], strides = [1, 1]} : vector<20x128xf32> to vector<20x32xf32>
    %cst_55 = arith.constant dense<0.000000e+00> : vector<20x32xf32>
    %173 = tpu.matmul %171, %172, %cst_55 {dimension_numbers = #tpu.dot_dimension_numbers<[1], [0], [0], [1], [0, 0, 1, 1], [], []>} : vector<20x20xf32>, vector<20x32xf32>, vector<20x32xf32> -> vector<20x32xf32>
    %174 = vector.extract_strided_slice %157 {offsets = [0, 8], sizes = [20, 8], strides = [1, 1]} : vector<20x32xf32> to vector<20x8xf32>
    %175 = vector.extract_strided_slice %158 {offsets = [0, 8], sizes = [20, 8], strides = [1, 1]} : vector<20x32xf32> to vector<20x8xf32>
    %cst_56 = arith.constant dense<0.000000e+00> : vector<20x20xf32>
    %176 = tpu.matmul %174, %175, %cst_56 {dimension_numbers = #tpu.dot_dimension_numbers<[1], [1], [0], [0], [0, 0, 1, 0], [], []>} : vector<20x8xf32>, vector<20x8xf32>, vector<20x20xf32> -> vector<20x20xf32>
    %177 = arith.addf %176, %1 : vector<20x20xf32>
    %cst_57 = arith.constant dense<0xFF800000> : vector<20xf32>
    %178 = vector.multi_reduction <maximumf>, %177, %cst_57 [1] : vector<20x20xf32> to vector<20xf32>
    %179 = vector.shape_cast %178 : vector<20xf32> to vector<20x1xf32>
    %180 = vector.broadcast %179 : vector<20x1xf32> to vector<20x20xf32>
    %181 = arith.subf %177, %180 : vector<20x20xf32>
    %182 = math.exp %181 : vector<20x20xf32>
    %cst_58 = arith.constant dense<0.000000e+00> : vector<20xf32>
    %183 = vector.multi_reduction <add>, %182, %cst_58 [1] : vector<20x20xf32> to vector<20xf32>
    %184 = vector.shape_cast %183 : vector<20xf32> to vector<20x1xf32>
    %185 = vector.broadcast %184 : vector<20x1xf32> to vector<20x20xf32>
    %186 = arith.divf %182, %185 : vector<20x20xf32>
    %187 = vector.extract_strided_slice %156 {offsets = [0, 32], sizes = [20, 32], strides = [1, 1]} : vector<20x128xf32> to vector<20x32xf32>
    %cst_59 = arith.constant dense<0.000000e+00> : vector<20x32xf32>
    %188 = tpu.matmul %186, %187, %cst_59 {dimension_numbers = #tpu.dot_dimension_numbers<[1], [0], [0], [1], [0, 0, 1, 1], [], []>} : vector<20x20xf32>, vector<20x32xf32>, vector<20x32xf32> -> vector<20x32xf32>
    %189 = arith.addf %173, %188 : vector<20x32xf32>
    %190 = vector.extract_strided_slice %157 {offsets = [0, 16], sizes = [20, 8], strides = [1, 1]} : vector<20x32xf32> to vector<20x8xf32>
    %191 = vector.extract_strided_slice %158 {offsets = [0, 16], sizes = [20, 8], strides = [1, 1]} : vector<20x32xf32> to vector<20x8xf32>
    %cst_60 = arith.constant dense<0.000000e+00> : vector<20x20xf32>
    %192 = tpu.matmul %190, %191, %cst_60 {dimension_numbers = #tpu.dot_dimension_numbers<[1], [1], [0], [0], [0, 0, 1, 0], [], []>} : vector<20x8xf32>, vector<20x8xf32>, vector<20x20xf32> -> vector<20x20xf32>
    %193 = arith.addf %192, %1 : vector<20x20xf32>
    %cst_61 = arith.constant dense<0xFF800000> : vector<20xf32>
    %194 = vector.multi_reduction <maximumf>, %193, %cst_61 [1] : vector<20x20xf32> to vector<20xf32>
    %195 = vector.shape_cast %194 : vector<20xf32> to vector<20x1xf32>
    %196 = vector.broadcast %195 : vector<20x1xf32> to vector<20x20xf32>
    %197 = arith.subf %193, %196 : vector<20x20xf32>
    %198 = math.exp %197 : vector<20x20xf32>
    %cst_62 = arith.constant dense<0.000000e+00> : vector<20xf32>
    %199 = vector.multi_reduction <add>, %198, %cst_62 [1] : vector<20x20xf32> to vector<20xf32>
    %200 = vector.shape_cast %199 : vector<20xf32> to vector<20x1xf32>
    %201 = vector.broadcast %200 : vector<20x1xf32> to vector<20x20xf32>
    %202 = arith.divf %198, %201 : vector<20x20xf32>
    %203 = vector.extract_strided_slice %156 {offsets = [0, 64], sizes = [20, 32], strides = [1, 1]} : vector<20x128xf32> to vector<20x32xf32>
    %cst_63 = arith.constant dense<0.000000e+00> : vector<20x32xf32>
    %204 = tpu.matmul %202, %203, %cst_63 {dimension_numbers = #tpu.dot_dimension_numbers<[1], [0], [0], [1], [0, 0, 1, 1], [], []>} : vector<20x20xf32>, vector<20x32xf32>, vector<20x32xf32> -> vector<20x32xf32>
    %205 = arith.addf %189, %204 : vector<20x32xf32>
    %206 = vector.extract_strided_slice %157 {offsets = [0, 24], sizes = [20, 8], strides = [1, 1]} : vector<20x32xf32> to vector<20x8xf32>
    %207 = vector.extract_strided_slice %158 {offsets = [0, 24], sizes = [20, 8], strides = [1, 1]} : vector<20x32xf32> to vector<20x8xf32>
    %cst_64 = arith.constant dense<0.000000e+00> : vector<20x20xf32>
    %208 = tpu.matmul %206, %207, %cst_64 {dimension_numbers = #tpu.dot_dimension_numbers<[1], [1], [0], [0], [0, 0, 1, 0], [], []>} : vector<20x8xf32>, vector<20x8xf32>, vector<20x20xf32> -> vector<20x20xf32>
    %209 = arith.addf %208, %1 : vector<20x20xf32>
    %cst_65 = arith.constant dense<0xFF800000> : vector<20xf32>
    %210 = vector.multi_reduction <maximumf>, %209, %cst_65 [1] : vector<20x20xf32> to vector<20xf32>
    %211 = vector.shape_cast %210 : vector<20xf32> to vector<20x1xf32>
    %212 = vector.broadcast %211 : vector<20x1xf32> to vector<20x20xf32>
    %213 = arith.subf %209, %212 : vector<20x20xf32>
    %214 = math.exp %213 : vector<20x20xf32>
    %cst_66 = arith.constant dense<0.000000e+00> : vector<20xf32>
    %215 = vector.multi_reduction <add>, %214, %cst_66 [1] : vector<20x20xf32> to vector<20xf32>
    %216 = vector.shape_cast %215 : vector<20xf32> to vector<20x1xf32>
    %217 = vector.broadcast %216 : vector<20x1xf32> to vector<20x20xf32>
    %218 = arith.divf %214, %217 : vector<20x20xf32>
    %219 = vector.extract_strided_slice %156 {offsets = [0, 96], sizes = [20, 32], strides = [1, 1]} : vector<20x128xf32> to vector<20x32xf32>
    %cst_67 = arith.constant dense<0.000000e+00> : vector<20x32xf32>
    %220 = tpu.matmul %218, %219, %cst_67 {dimension_numbers = #tpu.dot_dimension_numbers<[1], [0], [0], [1], [0, 0, 1, 1], [], []>} : vector<20x20xf32>, vector<20x32xf32>, vector<20x32xf32> -> vector<20x32xf32>
    %221 = arith.addf %205, %220 : vector<20x32xf32>
    %c9 = arith.constant 9 : index
    %c0_68 = arith.constant 0 : index
    %222 = vector.load %arg6[%c9, %c0_68] : memref<48x128xf32, #tpu.memory_space<vmem>>, vector<1x128xf32>
    %223 = vector.extract_strided_slice %222 {offsets = [0, 0], sizes = [1, 32], strides = [1, 1]} : vector<1x128xf32> to vector<1x32xf32>
    %224 = vector.broadcast %223 : vector<1x32xf32> to vector<20x32xf32>
    %225 = arith.addf %221, %224 : vector<20x32xf32>
    %226 = arith.addf %148, %225 : vector<20x32xf32>
    %cst_69 = arith.constant dense<0.000000e+00> : vector<20xf32>
    %227 = vector.multi_reduction <add>, %226, %cst_69 [1] : vector<20x32xf32> to vector<20xf32>
    %228 = vector.shape_cast %227 : vector<20xf32> to vector<20x1xf32>
    %cst_70 = arith.constant 3.200000e+01 : f32
    %229 = vector.broadcast %cst_70 : f32 to vector<20x1xf32>
    %230 = arith.divf %228, %229 : vector<20x1xf32>
    %231 = arith.mulf %226, %226 : vector<20x32xf32>
    %cst_71 = arith.constant dense<0.000000e+00> : vector<20xf32>
    %232 = vector.multi_reduction <add>, %231, %cst_71 [1] : vector<20x32xf32> to vector<20xf32>
    %233 = vector.shape_cast %232 : vector<20xf32> to vector<20x1xf32>
    %cst_72 = arith.constant 3.200000e+01 : f32
    %234 = vector.broadcast %cst_72 : f32 to vector<20x1xf32>
    %235 = arith.divf %233, %234 : vector<20x1xf32>
    %236 = arith.mulf %230, %230 : vector<20x1xf32>
    %237 = arith.subf %235, %236 : vector<20x1xf32>
    %cst_73 = arith.constant 9.99999974E-6 : f32
    %238 = vector.broadcast %cst_73 : f32 to vector<20x1xf32>
    %239 = arith.addf %237, %238 : vector<20x1xf32>
    %240 = math.rsqrt %239 : vector<20x1xf32>
    %241 = vector.broadcast %230 : vector<20x1xf32> to vector<20x32xf32>
    %242 = arith.subf %226, %241 : vector<20x32xf32>
    %243 = vector.broadcast %240 : vector<20x1xf32> to vector<20x32xf32>
    %244 = arith.mulf %242, %243 : vector<20x32xf32>
    %c12 = arith.constant 12 : index
    %c0_74 = arith.constant 0 : index
    %245 = vector.load %arg6[%c12, %c0_74] : memref<48x128xf32, #tpu.memory_space<vmem>>, vector<1x128xf32>
    %246 = vector.extract_strided_slice %245 {offsets = [0, 0], sizes = [1, 32], strides = [1, 1]} : vector<1x128xf32> to vector<1x32xf32>
    %247 = vector.broadcast %246 : vector<1x32xf32> to vector<20x32xf32>
    %248 = arith.mulf %244, %247 : vector<20x32xf32>
    %c13 = arith.constant 13 : index
    %c0_75 = arith.constant 0 : index
    %249 = vector.load %arg6[%c13, %c0_75] : memref<48x128xf32, #tpu.memory_space<vmem>>, vector<1x128xf32>
    %250 = vector.extract_strided_slice %249 {offsets = [0, 0], sizes = [1, 32], strides = [1, 1]} : vector<1x128xf32> to vector<1x32xf32>
    %251 = vector.broadcast %250 : vector<1x32xf32> to vector<20x32xf32>
    %252 = arith.addf %248, %251 : vector<20x32xf32>
    %253 = arith.truncf %252 : vector<20x32xf32> to vector<20x32xbf16>
    %c224 = arith.constant 224 : index
    %c0_76 = arith.constant 0 : index
    %254 = vector.load %arg5[%c224, %c0_76] : memref<864x128xbf16, #tpu.memory_space<vmem>>, vector<32x128xbf16>
    %cst_77 = arith.constant dense<0.000000e+00> : vector<20x128xf32>
    %255 = tpu.matmul %253, %254, %cst_77 {dimension_numbers = #tpu.dot_dimension_numbers<[1], [0], [0], [1], [0, 0, 1, 1], [], []>} : vector<20x32xbf16>, vector<32x128xbf16>, vector<20x128xf32> -> vector<20x128xf32>
    %c10 = arith.constant 10 : index
    %c0_78 = arith.constant 0 : index
    %256 = vector.load %arg6[%c10, %c0_78] : memref<48x128xf32, #tpu.memory_space<vmem>>, vector<1x128xf32>
    %257 = vector.broadcast %256 : vector<1x128xf32> to vector<20x128xf32>
    %258 = arith.addf %255, %257 : vector<20x128xf32>
    %259 = vector.extract_strided_slice %258 {offsets = [0, 0], sizes = [20, 64], strides = [1, 1]} : vector<20x128xf32> to vector<20x64xf32>
    %cst_79 = arith.constant 0.000000e+00 : f32
    %260 = vector.broadcast %cst_79 : f32 to vector<20x64xf32>
    %261 = arith.maximumf %259, %260 : vector<20x64xf32>
    %262 = arith.truncf %261 : vector<20x64xf32> to vector<20x64xbf16>
    %c256 = arith.constant 256 : index
    %c0_80 = arith.constant 0 : index
    %263 = vector.load %arg5[%c256, %c0_80] : memref<864x128xbf16, #tpu.memory_space<vmem>>, vector<64x128xbf16>
    %cst_81 = arith.constant dense<0.000000e+00> : vector<20x128xf32>
    %264 = tpu.matmul %262, %263, %cst_81 {dimension_numbers = #tpu.dot_dimension_numbers<[1], [0], [0], [1], [0, 0, 1, 1], [], []>} : vector<20x64xbf16>, vector<64x128xbf16>, vector<20x128xf32> -> vector<20x128xf32>
    %c11 = arith.constant 11 : index
    %c0_82 = arith.constant 0 : index
    %265 = vector.load %arg6[%c11, %c0_82] : memref<48x128xf32, #tpu.memory_space<vmem>>, vector<1x128xf32>
    %266 = vector.broadcast %265 : vector<1x128xf32> to vector<20x128xf32>
    %267 = arith.addf %264, %266 : vector<20x128xf32>
    %268 = vector.extract_strided_slice %267 {offsets = [0, 0], sizes = [20, 32], strides = [1, 1]} : vector<20x128xf32> to vector<20x32xf32>
    %269 = arith.addf %252, %268 : vector<20x32xf32>
    %cst_83 = arith.constant dense<0.000000e+00> : vector<20xf32>
    %270 = vector.multi_reduction <add>, %269, %cst_83 [1] : vector<20x32xf32> to vector<20xf32>
    %271 = vector.shape_cast %270 : vector<20xf32> to vector<20x1xf32>
    %cst_84 = arith.constant 3.200000e+01 : f32
    %272 = vector.broadcast %cst_84 : f32 to vector<20x1xf32>
    %273 = arith.divf %271, %272 : vector<20x1xf32>
    %274 = arith.mulf %269, %269 : vector<20x32xf32>
    %cst_85 = arith.constant dense<0.000000e+00> : vector<20xf32>
    %275 = vector.multi_reduction <add>, %274, %cst_85 [1] : vector<20x32xf32> to vector<20xf32>
    %276 = vector.shape_cast %275 : vector<20xf32> to vector<20x1xf32>
    %cst_86 = arith.constant 3.200000e+01 : f32
    %277 = vector.broadcast %cst_86 : f32 to vector<20x1xf32>
    %278 = arith.divf %276, %277 : vector<20x1xf32>
    %279 = arith.mulf %273, %273 : vector<20x1xf32>
    %280 = arith.subf %278, %279 : vector<20x1xf32>
    %cst_87 = arith.constant 9.99999974E-6 : f32
    %281 = vector.broadcast %cst_87 : f32 to vector<20x1xf32>
    %282 = arith.addf %280, %281 : vector<20x1xf32>
    %283 = math.rsqrt %282 : vector<20x1xf32>
    %284 = vector.broadcast %273 : vector<20x1xf32> to vector<20x32xf32>
    %285 = arith.subf %269, %284 : vector<20x32xf32>
    %286 = vector.broadcast %283 : vector<20x1xf32> to vector<20x32xf32>
    %287 = arith.mulf %285, %286 : vector<20x32xf32>
    %c14 = arith.constant 14 : index
    %c0_88 = arith.constant 0 : index
    %288 = vector.load %arg6[%c14, %c0_88] : memref<48x128xf32, #tpu.memory_space<vmem>>, vector<1x128xf32>
    %289 = vector.extract_strided_slice %288 {offsets = [0, 0], sizes = [1, 32], strides = [1, 1]} : vector<1x128xf32> to vector<1x32xf32>
    %290 = vector.broadcast %289 : vector<1x32xf32> to vector<20x32xf32>
    %291 = arith.mulf %287, %290 : vector<20x32xf32>
    %c15 = arith.constant 15 : index
    %c0_89 = arith.constant 0 : index
    %292 = vector.load %arg6[%c15, %c0_89] : memref<48x128xf32, #tpu.memory_space<vmem>>, vector<1x128xf32>
    %293 = vector.extract_strided_slice %292 {offsets = [0, 0], sizes = [1, 32], strides = [1, 1]} : vector<1x128xf32> to vector<1x32xf32>
    %294 = vector.broadcast %293 : vector<1x32xf32> to vector<20x32xf32>
    %295 = arith.addf %291, %294 : vector<20x32xf32>
    %cst_90 = arith.constant dense<0.000000e+00> : vector<20xf32>
    %296 = vector.multi_reduction <add>, %295, %cst_90 [1] : vector<20x32xf32> to vector<20xf32>
    %297 = vector.shape_cast %296 : vector<20xf32> to vector<20x1xf32>
    %cst_91 = arith.constant 3.200000e+01 : f32
    %298 = vector.broadcast %cst_91 : f32 to vector<20x1xf32>
    %299 = arith.divf %297, %298 : vector<20x1xf32>
    %300 = arith.mulf %295, %295 : vector<20x32xf32>
    %cst_92 = arith.constant dense<0.000000e+00> : vector<20xf32>
    %301 = vector.multi_reduction <add>, %300, %cst_92 [1] : vector<20x32xf32> to vector<20xf32>
    %302 = vector.shape_cast %301 : vector<20xf32> to vector<20x1xf32>
    %cst_93 = arith.constant 3.200000e+01 : f32
    %303 = vector.broadcast %cst_93 : f32 to vector<20x1xf32>
    %304 = arith.divf %302, %303 : vector<20x1xf32>
    %305 = arith.mulf %299, %299 : vector<20x1xf32>
    %306 = arith.subf %304, %305 : vector<20x1xf32>
    %cst_94 = arith.constant 9.99999974E-6 : f32
    %307 = vector.broadcast %cst_94 : f32 to vector<20x1xf32>
    %308 = arith.addf %306, %307 : vector<20x1xf32>
    %309 = math.rsqrt %308 : vector<20x1xf32>
    %310 = vector.broadcast %299 : vector<20x1xf32> to vector<20x32xf32>
    %311 = arith.subf %295, %310 : vector<20x32xf32>
    %312 = vector.broadcast %309 : vector<20x1xf32> to vector<20x32xf32>
    %313 = arith.mulf %311, %312 : vector<20x32xf32>
    %c42 = arith.constant 42 : index
    %c0_95 = arith.constant 0 : index
    %314 = vector.load %arg6[%c42, %c0_95] : memref<48x128xf32, #tpu.memory_space<vmem>>, vector<1x128xf32>
    %315 = vector.extract_strided_slice %314 {offsets = [0, 0], sizes = [1, 32], strides = [1, 1]} : vector<1x128xf32> to vector<1x32xf32>
    %316 = vector.broadcast %315 : vector<1x32xf32> to vector<20x32xf32>
    %317 = arith.mulf %313, %316 : vector<20x32xf32>
    %c43 = arith.constant 43 : index
    %c0_96 = arith.constant 0 : index
    %318 = vector.load %arg6[%c43, %c0_96] : memref<48x128xf32, #tpu.memory_space<vmem>>, vector<1x128xf32>
    %319 = vector.extract_strided_slice %318 {offsets = [0, 0], sizes = [1, 32], strides = [1, 1]} : vector<1x128xf32> to vector<1x32xf32>
    %320 = vector.broadcast %319 : vector<1x32xf32> to vector<20x32xf32>
    %321 = arith.addf %317, %320 : vector<20x32xf32>
    %322 = arith.truncf %321 : vector<20x32xf32> to vector<20x32xbf16>
    %c0_97 = arith.constant 0 : index
    %c0_98 = arith.constant 0 : index
    %323 = vector.load %arg1[%c0_97, %c0_98] : memref<16x32xf32, #tpu.memory_space<vmem>>, vector<16x32xf32>
    %c0_99 = arith.constant 0 : index
    %c0_100 = arith.constant 0 : index
    %324 = vector.load %arg3[%c0_99, %c0_100] : memref<16x16xf32, #tpu.memory_space<vmem>>, vector<16x16xf32>
    %c0_101 = arith.constant 0 : index
    %c0_102 = arith.constant 0 : index
    %325 = vector.load %arg4[%c0_101, %c0_102] : memref<16x20xf32, #tpu.memory_space<vmem>>, vector<16x20xf32>
    %326 = arith.truncf %323 : vector<16x32xf32> to vector<16x32xbf16>
    %c320 = arith.constant 320 : index
    %c0_103 = arith.constant 0 : index
    %327 = vector.load %arg5[%c320, %c0_103] : memref<864x128xbf16, #tpu.memory_space<vmem>>, vector<32x128xbf16>
    %cst_104 = arith.constant dense<0.000000e+00> : vector<16x128xf32>
    %328 = tpu.matmul %326, %327, %cst_104 {dimension_numbers = #tpu.dot_dimension_numbers<[1], [0], [0], [1], [0, 0, 1, 1], [], []>} : vector<16x32xbf16>, vector<32x128xbf16>, vector<16x128xf32> -> vector<16x128xf32>
    %c16 = arith.constant 16 : index
    %c0_105 = arith.constant 0 : index
    %329 = vector.load %arg6[%c16, %c0_105] : memref<48x128xf32, #tpu.memory_space<vmem>>, vector<1x128xf32>
    %330 = vector.broadcast %329 : vector<1x128xf32> to vector<16x128xf32>
    %331 = arith.addf %328, %330 : vector<16x128xf32>
    %c352 = arith.constant 352 : index
    %c0_106 = arith.constant 0 : index
    %332 = vector.load %arg5[%c352, %c0_106] : memref<864x128xbf16, #tpu.memory_space<vmem>>, vector<32x128xbf16>
    %cst_107 = arith.constant dense<0.000000e+00> : vector<16x128xf32>
    %333 = tpu.matmul %326, %332, %cst_107 {dimension_numbers = #tpu.dot_dimension_numbers<[1], [0], [0], [1], [0, 0, 1, 1], [], []>} : vector<16x32xbf16>, vector<32x128xbf16>, vector<16x128xf32> -> vector<16x128xf32>
    %334 = vector.extract_strided_slice %331 {offsets = [0, 0], sizes = [16, 32], strides = [1, 1]} : vector<16x128xf32> to vector<16x32xf32>
    %335 = vector.extract_strided_slice %331 {offsets = [0, 32], sizes = [16, 32], strides = [1, 1]} : vector<16x128xf32> to vector<16x32xf32>
    %336 = vector.extract_strided_slice %334 {offsets = [0, 0], sizes = [16, 8], strides = [1, 1]} : vector<16x32xf32> to vector<16x8xf32>
    %337 = vector.extract_strided_slice %335 {offsets = [0, 0], sizes = [16, 8], strides = [1, 1]} : vector<16x32xf32> to vector<16x8xf32>
    %cst_108 = arith.constant dense<0.000000e+00> : vector<16x16xf32>
    %338 = tpu.matmul %336, %337, %cst_108 {dimension_numbers = #tpu.dot_dimension_numbers<[1], [1], [0], [0], [0, 0, 1, 0], [], []>} : vector<16x8xf32>, vector<16x8xf32>, vector<16x16xf32> -> vector<16x16xf32>
    %339 = arith.addf %338, %324 : vector<16x16xf32>
    %cst_109 = arith.constant dense<0xFF800000> : vector<16xf32>
    %340 = vector.multi_reduction <maximumf>, %339, %cst_109 [1] : vector<16x16xf32> to vector<16xf32>
    %341 = vector.shape_cast %340 : vector<16xf32> to vector<16x1xf32>
    %342 = vector.broadcast %341 : vector<16x1xf32> to vector<16x16xf32>
    %343 = arith.subf %339, %342 : vector<16x16xf32>
    %344 = math.exp %343 : vector<16x16xf32>
    %cst_110 = arith.constant dense<0.000000e+00> : vector<16xf32>
    %345 = vector.multi_reduction <add>, %344, %cst_110 [1] : vector<16x16xf32> to vector<16xf32>
    %346 = vector.shape_cast %345 : vector<16xf32> to vector<16x1xf32>
    %347 = vector.broadcast %346 : vector<16x1xf32> to vector<16x16xf32>
    %348 = arith.divf %344, %347 : vector<16x16xf32>
    %349 = vector.extract_strided_slice %333 {offsets = [0, 0], sizes = [16, 32], strides = [1, 1]} : vector<16x128xf32> to vector<16x32xf32>
    %cst_111 = arith.constant dense<0.000000e+00> : vector<16x32xf32>
    %350 = tpu.matmul %348, %349, %cst_111 {dimension_numbers = #tpu.dot_dimension_numbers<[1], [0], [0], [1], [0, 0, 1, 1], [], []>} : vector<16x16xf32>, vector<16x32xf32>, vector<16x32xf32> -> vector<16x32xf32>
    %351 = vector.extract_strided_slice %334 {offsets = [0, 8], sizes = [16, 8], strides = [1, 1]} : vector<16x32xf32> to vector<16x8xf32>
    %352 = vector.extract_strided_slice %335 {offsets = [0, 8], sizes = [16, 8], strides = [1, 1]} : vector<16x32xf32> to vector<16x8xf32>
    %cst_112 = arith.constant dense<0.000000e+00> : vector<16x16xf32>
    %353 = tpu.matmul %351, %352, %cst_112 {dimension_numbers = #tpu.dot_dimension_numbers<[1], [1], [0], [0], [0, 0, 1, 0], [], []>} : vector<16x8xf32>, vector<16x8xf32>, vector<16x16xf32> -> vector<16x16xf32>
    %354 = arith.addf %353, %324 : vector<16x16xf32>
    %cst_113 = arith.constant dense<0xFF800000> : vector<16xf32>
    %355 = vector.multi_reduction <maximumf>, %354, %cst_113 [1] : vector<16x16xf32> to vector<16xf32>
    %356 = vector.shape_cast %355 : vector<16xf32> to vector<16x1xf32>
    %357 = vector.broadcast %356 : vector<16x1xf32> to vector<16x16xf32>
    %358 = arith.subf %354, %357 : vector<16x16xf32>
    %359 = math.exp %358 : vector<16x16xf32>
    %cst_114 = arith.constant dense<0.000000e+00> : vector<16xf32>
    %360 = vector.multi_reduction <add>, %359, %cst_114 [1] : vector<16x16xf32> to vector<16xf32>
    %361 = vector.shape_cast %360 : vector<16xf32> to vector<16x1xf32>
    %362 = vector.broadcast %361 : vector<16x1xf32> to vector<16x16xf32>
    %363 = arith.divf %359, %362 : vector<16x16xf32>
    %364 = vector.extract_strided_slice %333 {offsets = [0, 32], sizes = [16, 32], strides = [1, 1]} : vector<16x128xf32> to vector<16x32xf32>
    %cst_115 = arith.constant dense<0.000000e+00> : vector<16x32xf32>
    %365 = tpu.matmul %363, %364, %cst_115 {dimension_numbers = #tpu.dot_dimension_numbers<[1], [0], [0], [1], [0, 0, 1, 1], [], []>} : vector<16x16xf32>, vector<16x32xf32>, vector<16x32xf32> -> vector<16x32xf32>
    %366 = arith.addf %350, %365 : vector<16x32xf32>
    %367 = vector.extract_strided_slice %334 {offsets = [0, 16], sizes = [16, 8], strides = [1, 1]} : vector<16x32xf32> to vector<16x8xf32>
    %368 = vector.extract_strided_slice %335 {offsets = [0, 16], sizes = [16, 8], strides = [1, 1]} : vector<16x32xf32> to vector<16x8xf32>
    %cst_116 = arith.constant dense<0.000000e+00> : vector<16x16xf32>
    %369 = tpu.matmul %367, %368, %cst_116 {dimension_numbers = #tpu.dot_dimension_numbers<[1], [1], [0], [0], [0, 0, 1, 0], [], []>} : vector<16x8xf32>, vector<16x8xf32>, vector<16x16xf32> -> vector<16x16xf32>
    %370 = arith.addf %369, %324 : vector<16x16xf32>
    %cst_117 = arith.constant dense<0xFF800000> : vector<16xf32>
    %371 = vector.multi_reduction <maximumf>, %370, %cst_117 [1] : vector<16x16xf32> to vector<16xf32>
    %372 = vector.shape_cast %371 : vector<16xf32> to vector<16x1xf32>
    %373 = vector.broadcast %372 : vector<16x1xf32> to vector<16x16xf32>
    %374 = arith.subf %370, %373 : vector<16x16xf32>
    %375 = math.exp %374 : vector<16x16xf32>
    %cst_118 = arith.constant dense<0.000000e+00> : vector<16xf32>
    %376 = vector.multi_reduction <add>, %375, %cst_118 [1] : vector<16x16xf32> to vector<16xf32>
    %377 = vector.shape_cast %376 : vector<16xf32> to vector<16x1xf32>
    %378 = vector.broadcast %377 : vector<16x1xf32> to vector<16x16xf32>
    %379 = arith.divf %375, %378 : vector<16x16xf32>
    %380 = vector.extract_strided_slice %333 {offsets = [0, 64], sizes = [16, 32], strides = [1, 1]} : vector<16x128xf32> to vector<16x32xf32>
    %cst_119 = arith.constant dense<0.000000e+00> : vector<16x32xf32>
    %381 = tpu.matmul %379, %380, %cst_119 {dimension_numbers = #tpu.dot_dimension_numbers<[1], [0], [0], [1], [0, 0, 1, 1], [], []>} : vector<16x16xf32>, vector<16x32xf32>, vector<16x32xf32> -> vector<16x32xf32>
    %382 = arith.addf %366, %381 : vector<16x32xf32>
    %383 = vector.extract_strided_slice %334 {offsets = [0, 24], sizes = [16, 8], strides = [1, 1]} : vector<16x32xf32> to vector<16x8xf32>
    %384 = vector.extract_strided_slice %335 {offsets = [0, 24], sizes = [16, 8], strides = [1, 1]} : vector<16x32xf32> to vector<16x8xf32>
    %cst_120 = arith.constant dense<0.000000e+00> : vector<16x16xf32>
    %385 = tpu.matmul %383, %384, %cst_120 {dimension_numbers = #tpu.dot_dimension_numbers<[1], [1], [0], [0], [0, 0, 1, 0], [], []>} : vector<16x8xf32>, vector<16x8xf32>, vector<16x16xf32> -> vector<16x16xf32>
    %386 = arith.addf %385, %324 : vector<16x16xf32>
    %cst_121 = arith.constant dense<0xFF800000> : vector<16xf32>
    %387 = vector.multi_reduction <maximumf>, %386, %cst_121 [1] : vector<16x16xf32> to vector<16xf32>
    %388 = vector.shape_cast %387 : vector<16xf32> to vector<16x1xf32>
    %389 = vector.broadcast %388 : vector<16x1xf32> to vector<16x16xf32>
    %390 = arith.subf %386, %389 : vector<16x16xf32>
    %391 = math.exp %390 : vector<16x16xf32>
    %cst_122 = arith.constant dense<0.000000e+00> : vector<16xf32>
    %392 = vector.multi_reduction <add>, %391, %cst_122 [1] : vector<16x16xf32> to vector<16xf32>
    %393 = vector.shape_cast %392 : vector<16xf32> to vector<16x1xf32>
    %394 = vector.broadcast %393 : vector<16x1xf32> to vector<16x16xf32>
    %395 = arith.divf %391, %394 : vector<16x16xf32>
    %396 = vector.extract_strided_slice %333 {offsets = [0, 96], sizes = [16, 32], strides = [1, 1]} : vector<16x128xf32> to vector<16x32xf32>
    %cst_123 = arith.constant dense<0.000000e+00> : vector<16x32xf32>
    %397 = tpu.matmul %395, %396, %cst_123 {dimension_numbers = #tpu.dot_dimension_numbers<[1], [0], [0], [1], [0, 0, 1, 1], [], []>} : vector<16x16xf32>, vector<16x32xf32>, vector<16x32xf32> -> vector<16x32xf32>
    %398 = arith.addf %382, %397 : vector<16x32xf32>
    %c17 = arith.constant 17 : index
    %c0_124 = arith.constant 0 : index
    %399 = vector.load %arg6[%c17, %c0_124] : memref<48x128xf32, #tpu.memory_space<vmem>>, vector<1x128xf32>
    %400 = vector.extract_strided_slice %399 {offsets = [0, 0], sizes = [1, 32], strides = [1, 1]} : vector<1x128xf32> to vector<1x32xf32>
    %401 = vector.broadcast %400 : vector<1x32xf32> to vector<16x32xf32>
    %402 = arith.addf %398, %401 : vector<16x32xf32>
    %403 = arith.addf %323, %402 : vector<16x32xf32>
    %cst_125 = arith.constant dense<0.000000e+00> : vector<16xf32>
    %404 = vector.multi_reduction <add>, %403, %cst_125 [1] : vector<16x32xf32> to vector<16xf32>
    %405 = vector.shape_cast %404 : vector<16xf32> to vector<16x1xf32>
    %cst_126 = arith.constant 3.200000e+01 : f32
    %406 = vector.broadcast %cst_126 : f32 to vector<16x1xf32>
    %407 = arith.divf %405, %406 : vector<16x1xf32>
    %408 = arith.mulf %403, %403 : vector<16x32xf32>
    %cst_127 = arith.constant dense<0.000000e+00> : vector<16xf32>
    %409 = vector.multi_reduction <add>, %408, %cst_127 [1] : vector<16x32xf32> to vector<16xf32>
    %410 = vector.shape_cast %409 : vector<16xf32> to vector<16x1xf32>
    %cst_128 = arith.constant 3.200000e+01 : f32
    %411 = vector.broadcast %cst_128 : f32 to vector<16x1xf32>
    %412 = arith.divf %410, %411 : vector<16x1xf32>
    %413 = arith.mulf %407, %407 : vector<16x1xf32>
    %414 = arith.subf %412, %413 : vector<16x1xf32>
    %cst_129 = arith.constant 9.99999974E-6 : f32
    %415 = vector.broadcast %cst_129 : f32 to vector<16x1xf32>
    %416 = arith.addf %414, %415 : vector<16x1xf32>
    %417 = math.rsqrt %416 : vector<16x1xf32>
    %418 = vector.broadcast %407 : vector<16x1xf32> to vector<16x32xf32>
    %419 = arith.subf %403, %418 : vector<16x32xf32>
    %420 = vector.broadcast %417 : vector<16x1xf32> to vector<16x32xf32>
    %421 = arith.mulf %419, %420 : vector<16x32xf32>
    %c23 = arith.constant 23 : index
    %c0_130 = arith.constant 0 : index
    %422 = vector.load %arg6[%c23, %c0_130] : memref<48x128xf32, #tpu.memory_space<vmem>>, vector<1x128xf32>
    %423 = vector.extract_strided_slice %422 {offsets = [0, 0], sizes = [1, 32], strides = [1, 1]} : vector<1x128xf32> to vector<1x32xf32>
    %424 = vector.broadcast %423 : vector<1x32xf32> to vector<16x32xf32>
    %425 = arith.mulf %421, %424 : vector<16x32xf32>
    %c24 = arith.constant 24 : index
    %c0_131 = arith.constant 0 : index
    %426 = vector.load %arg6[%c24, %c0_131] : memref<48x128xf32, #tpu.memory_space<vmem>>, vector<1x128xf32>
    %427 = vector.extract_strided_slice %426 {offsets = [0, 0], sizes = [1, 32], strides = [1, 1]} : vector<1x128xf32> to vector<1x32xf32>
    %428 = vector.broadcast %427 : vector<1x32xf32> to vector<16x32xf32>
    %429 = arith.addf %425, %428 : vector<16x32xf32>
    %430 = arith.truncf %429 : vector<16x32xf32> to vector<16x32xbf16>
    %c384 = arith.constant 384 : index
    %c0_132 = arith.constant 0 : index
    %431 = vector.load %arg5[%c384, %c0_132] : memref<864x128xbf16, #tpu.memory_space<vmem>>, vector<32x128xbf16>
    %cst_133 = arith.constant dense<0.000000e+00> : vector<16x128xf32>
    %432 = tpu.matmul %430, %431, %cst_133 {dimension_numbers = #tpu.dot_dimension_numbers<[1], [0], [0], [1], [0, 0, 1, 1], [], []>} : vector<16x32xbf16>, vector<32x128xbf16>, vector<16x128xf32> -> vector<16x128xf32>
    %c18 = arith.constant 18 : index
    %c0_134 = arith.constant 0 : index
    %433 = vector.load %arg6[%c18, %c0_134] : memref<48x128xf32, #tpu.memory_space<vmem>>, vector<1x128xf32>
    %434 = vector.broadcast %433 : vector<1x128xf32> to vector<16x128xf32>
    %435 = arith.addf %432, %434 : vector<16x128xf32>
    %436 = vector.extract_strided_slice %435 {offsets = [0, 0], sizes = [16, 32], strides = [1, 1]} : vector<16x128xf32> to vector<16x32xf32>
    %c416 = arith.constant 416 : index
    %c0_135 = arith.constant 0 : index
    %437 = vector.load %arg5[%c416, %c0_135] : memref<864x128xbf16, #tpu.memory_space<vmem>>, vector<32x128xbf16>
    %cst_136 = arith.constant dense<0.000000e+00> : vector<20x128xf32>
    %438 = tpu.matmul %322, %437, %cst_136 {dimension_numbers = #tpu.dot_dimension_numbers<[1], [0], [0], [1], [0, 0, 1, 1], [], []>} : vector<20x32xbf16>, vector<32x128xbf16>, vector<20x128xf32> -> vector<20x128xf32>
    %c19 = arith.constant 19 : index
    %c0_137 = arith.constant 0 : index
    %439 = vector.load %arg6[%c19, %c0_137] : memref<48x128xf32, #tpu.memory_space<vmem>>, vector<1x128xf32>
    %440 = vector.broadcast %439 : vector<1x128xf32> to vector<20x128xf32>
    %441 = arith.addf %438, %440 : vector<20x128xf32>
    %442 = vector.extract_strided_slice %441 {offsets = [0, 0], sizes = [20, 32], strides = [1, 1]} : vector<20x128xf32> to vector<20x32xf32>
    %c448 = arith.constant 448 : index
    %c0_138 = arith.constant 0 : index
    %443 = vector.load %arg5[%c448, %c0_138] : memref<864x128xbf16, #tpu.memory_space<vmem>>, vector<32x128xbf16>
    %cst_139 = arith.constant dense<0.000000e+00> : vector<20x128xf32>
    %444 = tpu.matmul %322, %443, %cst_139 {dimension_numbers = #tpu.dot_dimension_numbers<[1], [0], [0], [1], [0, 0, 1, 1], [], []>} : vector<20x32xbf16>, vector<32x128xbf16>, vector<20x128xf32> -> vector<20x128xf32>
    %445 = vector.extract_strided_slice %436 {offsets = [0, 0], sizes = [16, 8], strides = [1, 1]} : vector<16x32xf32> to vector<16x8xf32>
    %446 = vector.extract_strided_slice %442 {offsets = [0, 0], sizes = [20, 8], strides = [1, 1]} : vector<20x32xf32> to vector<20x8xf32>
    %cst_140 = arith.constant dense<0.000000e+00> : vector<16x20xf32>
    %447 = tpu.matmul %445, %446, %cst_140 {dimension_numbers = #tpu.dot_dimension_numbers<[1], [1], [0], [0], [0, 0, 1, 0], [], []>} : vector<16x8xf32>, vector<20x8xf32>, vector<16x20xf32> -> vector<16x20xf32>
    %448 = arith.addf %447, %325 : vector<16x20xf32>
    %cst_141 = arith.constant dense<0xFF800000> : vector<16xf32>
    %449 = vector.multi_reduction <maximumf>, %448, %cst_141 [1] : vector<16x20xf32> to vector<16xf32>
    %450 = vector.shape_cast %449 : vector<16xf32> to vector<16x1xf32>
    %451 = vector.broadcast %450 : vector<16x1xf32> to vector<16x20xf32>
    %452 = arith.subf %448, %451 : vector<16x20xf32>
    %453 = math.exp %452 : vector<16x20xf32>
    %cst_142 = arith.constant dense<0.000000e+00> : vector<16xf32>
    %454 = vector.multi_reduction <add>, %453, %cst_142 [1] : vector<16x20xf32> to vector<16xf32>
    %455 = vector.shape_cast %454 : vector<16xf32> to vector<16x1xf32>
    %456 = vector.broadcast %455 : vector<16x1xf32> to vector<16x20xf32>
    %457 = arith.divf %453, %456 : vector<16x20xf32>
    %458 = vector.extract_strided_slice %444 {offsets = [0, 0], sizes = [20, 32], strides = [1, 1]} : vector<20x128xf32> to vector<20x32xf32>
    %cst_143 = arith.constant dense<0.000000e+00> : vector<16x32xf32>
    %459 = tpu.matmul %457, %458, %cst_143 {dimension_numbers = #tpu.dot_dimension_numbers<[1], [0], [0], [1], [0, 0, 1, 1], [], []>} : vector<16x20xf32>, vector<20x32xf32>, vector<16x32xf32> -> vector<16x32xf32>
    %460 = vector.extract_strided_slice %436 {offsets = [0, 8], sizes = [16, 8], strides = [1, 1]} : vector<16x32xf32> to vector<16x8xf32>
    %461 = vector.extract_strided_slice %442 {offsets = [0, 8], sizes = [20, 8], strides = [1, 1]} : vector<20x32xf32> to vector<20x8xf32>
    %cst_144 = arith.constant dense<0.000000e+00> : vector<16x20xf32>
    %462 = tpu.matmul %460, %461, %cst_144 {dimension_numbers = #tpu.dot_dimension_numbers<[1], [1], [0], [0], [0, 0, 1, 0], [], []>} : vector<16x8xf32>, vector<20x8xf32>, vector<16x20xf32> -> vector<16x20xf32>
    %463 = arith.addf %462, %325 : vector<16x20xf32>
    %cst_145 = arith.constant dense<0xFF800000> : vector<16xf32>
    %464 = vector.multi_reduction <maximumf>, %463, %cst_145 [1] : vector<16x20xf32> to vector<16xf32>
    %465 = vector.shape_cast %464 : vector<16xf32> to vector<16x1xf32>
    %466 = vector.broadcast %465 : vector<16x1xf32> to vector<16x20xf32>
    %467 = arith.subf %463, %466 : vector<16x20xf32>
    %468 = math.exp %467 : vector<16x20xf32>
    %cst_146 = arith.constant dense<0.000000e+00> : vector<16xf32>
    %469 = vector.multi_reduction <add>, %468, %cst_146 [1] : vector<16x20xf32> to vector<16xf32>
    %470 = vector.shape_cast %469 : vector<16xf32> to vector<16x1xf32>
    %471 = vector.broadcast %470 : vector<16x1xf32> to vector<16x20xf32>
    %472 = arith.divf %468, %471 : vector<16x20xf32>
    %473 = vector.extract_strided_slice %444 {offsets = [0, 32], sizes = [20, 32], strides = [1, 1]} : vector<20x128xf32> to vector<20x32xf32>
    %cst_147 = arith.constant dense<0.000000e+00> : vector<16x32xf32>
    %474 = tpu.matmul %472, %473, %cst_147 {dimension_numbers = #tpu.dot_dimension_numbers<[1], [0], [0], [1], [0, 0, 1, 1], [], []>} : vector<16x20xf32>, vector<20x32xf32>, vector<16x32xf32> -> vector<16x32xf32>
    %475 = arith.addf %459, %474 : vector<16x32xf32>
    %476 = vector.extract_strided_slice %436 {offsets = [0, 16], sizes = [16, 8], strides = [1, 1]} : vector<16x32xf32> to vector<16x8xf32>
    %477 = vector.extract_strided_slice %442 {offsets = [0, 16], sizes = [20, 8], strides = [1, 1]} : vector<20x32xf32> to vector<20x8xf32>
    %cst_148 = arith.constant dense<0.000000e+00> : vector<16x20xf32>
    %478 = tpu.matmul %476, %477, %cst_148 {dimension_numbers = #tpu.dot_dimension_numbers<[1], [1], [0], [0], [0, 0, 1, 0], [], []>} : vector<16x8xf32>, vector<20x8xf32>, vector<16x20xf32> -> vector<16x20xf32>
    %479 = arith.addf %478, %325 : vector<16x20xf32>
    %cst_149 = arith.constant dense<0xFF800000> : vector<16xf32>
    %480 = vector.multi_reduction <maximumf>, %479, %cst_149 [1] : vector<16x20xf32> to vector<16xf32>
    %481 = vector.shape_cast %480 : vector<16xf32> to vector<16x1xf32>
    %482 = vector.broadcast %481 : vector<16x1xf32> to vector<16x20xf32>
    %483 = arith.subf %479, %482 : vector<16x20xf32>
    %484 = math.exp %483 : vector<16x20xf32>
    %cst_150 = arith.constant dense<0.000000e+00> : vector<16xf32>
    %485 = vector.multi_reduction <add>, %484, %cst_150 [1] : vector<16x20xf32> to vector<16xf32>
    %486 = vector.shape_cast %485 : vector<16xf32> to vector<16x1xf32>
    %487 = vector.broadcast %486 : vector<16x1xf32> to vector<16x20xf32>
    %488 = arith.divf %484, %487 : vector<16x20xf32>
    %489 = vector.extract_strided_slice %444 {offsets = [0, 64], sizes = [20, 32], strides = [1, 1]} : vector<20x128xf32> to vector<20x32xf32>
    %cst_151 = arith.constant dense<0.000000e+00> : vector<16x32xf32>
    %490 = tpu.matmul %488, %489, %cst_151 {dimension_numbers = #tpu.dot_dimension_numbers<[1], [0], [0], [1], [0, 0, 1, 1], [], []>} : vector<16x20xf32>, vector<20x32xf32>, vector<16x32xf32> -> vector<16x32xf32>
    %491 = arith.addf %475, %490 : vector<16x32xf32>
    %492 = vector.extract_strided_slice %436 {offsets = [0, 24], sizes = [16, 8], strides = [1, 1]} : vector<16x32xf32> to vector<16x8xf32>
    %493 = vector.extract_strided_slice %442 {offsets = [0, 24], sizes = [20, 8], strides = [1, 1]} : vector<20x32xf32> to vector<20x8xf32>
    %cst_152 = arith.constant dense<0.000000e+00> : vector<16x20xf32>
    %494 = tpu.matmul %492, %493, %cst_152 {dimension_numbers = #tpu.dot_dimension_numbers<[1], [1], [0], [0], [0, 0, 1, 0], [], []>} : vector<16x8xf32>, vector<20x8xf32>, vector<16x20xf32> -> vector<16x20xf32>
    %495 = arith.addf %494, %325 : vector<16x20xf32>
    %cst_153 = arith.constant dense<0xFF800000> : vector<16xf32>
    %496 = vector.multi_reduction <maximumf>, %495, %cst_153 [1] : vector<16x20xf32> to vector<16xf32>
    %497 = vector.shape_cast %496 : vector<16xf32> to vector<16x1xf32>
    %498 = vector.broadcast %497 : vector<16x1xf32> to vector<16x20xf32>
    %499 = arith.subf %495, %498 : vector<16x20xf32>
    %500 = math.exp %499 : vector<16x20xf32>
    %cst_154 = arith.constant dense<0.000000e+00> : vector<16xf32>
    %501 = vector.multi_reduction <add>, %500, %cst_154 [1] : vector<16x20xf32> to vector<16xf32>
    %502 = vector.shape_cast %501 : vector<16xf32> to vector<16x1xf32>
    %503 = vector.broadcast %502 : vector<16x1xf32> to vector<16x20xf32>
    %504 = arith.divf %500, %503 : vector<16x20xf32>
    %505 = vector.extract_strided_slice %444 {offsets = [0, 96], sizes = [20, 32], strides = [1, 1]} : vector<20x128xf32> to vector<20x32xf32>
    %cst_155 = arith.constant dense<0.000000e+00> : vector<16x32xf32>
    %506 = tpu.matmul %504, %505, %cst_155 {dimension_numbers = #tpu.dot_dimension_numbers<[1], [0], [0], [1], [0, 0, 1, 1], [], []>} : vector<16x20xf32>, vector<20x32xf32>, vector<16x32xf32> -> vector<16x32xf32>
    %507 = arith.addf %491, %506 : vector<16x32xf32>
    %c20 = arith.constant 20 : index
    %c0_156 = arith.constant 0 : index
    %508 = vector.load %arg6[%c20, %c0_156] : memref<48x128xf32, #tpu.memory_space<vmem>>, vector<1x128xf32>
    %509 = vector.extract_strided_slice %508 {offsets = [0, 0], sizes = [1, 32], strides = [1, 1]} : vector<1x128xf32> to vector<1x32xf32>
    %510 = vector.broadcast %509 : vector<1x32xf32> to vector<16x32xf32>
    %511 = arith.addf %507, %510 : vector<16x32xf32>
    %512 = arith.addf %429, %511 : vector<16x32xf32>
    %cst_157 = arith.constant dense<0.000000e+00> : vector<16xf32>
    %513 = vector.multi_reduction <add>, %512, %cst_157 [1] : vector<16x32xf32> to vector<16xf32>
    %514 = vector.shape_cast %513 : vector<16xf32> to vector<16x1xf32>
    %cst_158 = arith.constant 3.200000e+01 : f32
    %515 = vector.broadcast %cst_158 : f32 to vector<16x1xf32>
    %516 = arith.divf %514, %515 : vector<16x1xf32>
    %517 = arith.mulf %512, %512 : vector<16x32xf32>
    %cst_159 = arith.constant dense<0.000000e+00> : vector<16xf32>
    %518 = vector.multi_reduction <add>, %517, %cst_159 [1] : vector<16x32xf32> to vector<16xf32>
    %519 = vector.shape_cast %518 : vector<16xf32> to vector<16x1xf32>
    %cst_160 = arith.constant 3.200000e+01 : f32
    %520 = vector.broadcast %cst_160 : f32 to vector<16x1xf32>
    %521 = arith.divf %519, %520 : vector<16x1xf32>
    %522 = arith.mulf %516, %516 : vector<16x1xf32>
    %523 = arith.subf %521, %522 : vector<16x1xf32>
    %cst_161 = arith.constant 9.99999974E-6 : f32
    %524 = vector.broadcast %cst_161 : f32 to vector<16x1xf32>
    %525 = arith.addf %523, %524 : vector<16x1xf32>
    %526 = math.rsqrt %525 : vector<16x1xf32>
    %527 = vector.broadcast %516 : vector<16x1xf32> to vector<16x32xf32>
    %528 = arith.subf %512, %527 : vector<16x32xf32>
    %529 = vector.broadcast %526 : vector<16x1xf32> to vector<16x32xf32>
    %530 = arith.mulf %528, %529 : vector<16x32xf32>
    %c25 = arith.constant 25 : index
    %c0_162 = arith.constant 0 : index
    %531 = vector.load %arg6[%c25, %c0_162] : memref<48x128xf32, #tpu.memory_space<vmem>>, vector<1x128xf32>
    %532 = vector.extract_strided_slice %531 {offsets = [0, 0], sizes = [1, 32], strides = [1, 1]} : vector<1x128xf32> to vector<1x32xf32>
    %533 = vector.broadcast %532 : vector<1x32xf32> to vector<16x32xf32>
    %534 = arith.mulf %530, %533 : vector<16x32xf32>
    %c26 = arith.constant 26 : index
    %c0_163 = arith.constant 0 : index
    %535 = vector.load %arg6[%c26, %c0_163] : memref<48x128xf32, #tpu.memory_space<vmem>>, vector<1x128xf32>
    %536 = vector.extract_strided_slice %535 {offsets = [0, 0], sizes = [1, 32], strides = [1, 1]} : vector<1x128xf32> to vector<1x32xf32>
    %537 = vector.broadcast %536 : vector<1x32xf32> to vector<16x32xf32>
    %538 = arith.addf %534, %537 : vector<16x32xf32>
    %539 = arith.truncf %538 : vector<16x32xf32> to vector<16x32xbf16>
    %c480 = arith.constant 480 : index
    %c0_164 = arith.constant 0 : index
    %540 = vector.load %arg5[%c480, %c0_164] : memref<864x128xbf16, #tpu.memory_space<vmem>>, vector<32x128xbf16>
    %cst_165 = arith.constant dense<0.000000e+00> : vector<16x128xf32>
    %541 = tpu.matmul %539, %540, %cst_165 {dimension_numbers = #tpu.dot_dimension_numbers<[1], [0], [0], [1], [0, 0, 1, 1], [], []>} : vector<16x32xbf16>, vector<32x128xbf16>, vector<16x128xf32> -> vector<16x128xf32>
    %c21 = arith.constant 21 : index
    %c0_166 = arith.constant 0 : index
    %542 = vector.load %arg6[%c21, %c0_166] : memref<48x128xf32, #tpu.memory_space<vmem>>, vector<1x128xf32>
    %543 = vector.broadcast %542 : vector<1x128xf32> to vector<16x128xf32>
    %544 = arith.addf %541, %543 : vector<16x128xf32>
    %545 = vector.extract_strided_slice %544 {offsets = [0, 0], sizes = [16, 64], strides = [1, 1]} : vector<16x128xf32> to vector<16x64xf32>
    %cst_167 = arith.constant 0.000000e+00 : f32
    %546 = vector.broadcast %cst_167 : f32 to vector<16x64xf32>
    %547 = arith.maximumf %545, %546 : vector<16x64xf32>
    %548 = arith.truncf %547 : vector<16x64xf32> to vector<16x64xbf16>
    %c512 = arith.constant 512 : index
    %c0_168 = arith.constant 0 : index
    %549 = vector.load %arg5[%c512, %c0_168] : memref<864x128xbf16, #tpu.memory_space<vmem>>, vector<64x128xbf16>
    %cst_169 = arith.constant dense<0.000000e+00> : vector<16x128xf32>
    %550 = tpu.matmul %548, %549, %cst_169 {dimension_numbers = #tpu.dot_dimension_numbers<[1], [0], [0], [1], [0, 0, 1, 1], [], []>} : vector<16x64xbf16>, vector<64x128xbf16>, vector<16x128xf32> -> vector<16x128xf32>
    %c22 = arith.constant 22 : index
    %c0_170 = arith.constant 0 : index
    %551 = vector.load %arg6[%c22, %c0_170] : memref<48x128xf32, #tpu.memory_space<vmem>>, vector<1x128xf32>
    %552 = vector.broadcast %551 : vector<1x128xf32> to vector<16x128xf32>
    %553 = arith.addf %550, %552 : vector<16x128xf32>
    %554 = vector.extract_strided_slice %553 {offsets = [0, 0], sizes = [16, 32], strides = [1, 1]} : vector<16x128xf32> to vector<16x32xf32>
    %555 = arith.addf %538, %554 : vector<16x32xf32>
    %cst_171 = arith.constant dense<0.000000e+00> : vector<16xf32>
    %556 = vector.multi_reduction <add>, %555, %cst_171 [1] : vector<16x32xf32> to vector<16xf32>
    %557 = vector.shape_cast %556 : vector<16xf32> to vector<16x1xf32>
    %cst_172 = arith.constant 3.200000e+01 : f32
    %558 = vector.broadcast %cst_172 : f32 to vector<16x1xf32>
    %559 = arith.divf %557, %558 : vector<16x1xf32>
    %560 = arith.mulf %555, %555 : vector<16x32xf32>
    %cst_173 = arith.constant dense<0.000000e+00> : vector<16xf32>
    %561 = vector.multi_reduction <add>, %560, %cst_173 [1] : vector<16x32xf32> to vector<16xf32>
    %562 = vector.shape_cast %561 : vector<16xf32> to vector<16x1xf32>
    %cst_174 = arith.constant 3.200000e+01 : f32
    %563 = vector.broadcast %cst_174 : f32 to vector<16x1xf32>
    %564 = arith.divf %562, %563 : vector<16x1xf32>
    %565 = arith.mulf %559, %559 : vector<16x1xf32>
    %566 = arith.subf %564, %565 : vector<16x1xf32>
    %cst_175 = arith.constant 9.99999974E-6 : f32
    %567 = vector.broadcast %cst_175 : f32 to vector<16x1xf32>
    %568 = arith.addf %566, %567 : vector<16x1xf32>
    %569 = math.rsqrt %568 : vector<16x1xf32>
    %570 = vector.broadcast %559 : vector<16x1xf32> to vector<16x32xf32>
    %571 = arith.subf %555, %570 : vector<16x32xf32>
    %572 = vector.broadcast %569 : vector<16x1xf32> to vector<16x32xf32>
    %573 = arith.mulf %571, %572 : vector<16x32xf32>
    %c27 = arith.constant 27 : index
    %c0_176 = arith.constant 0 : index
    %574 = vector.load %arg6[%c27, %c0_176] : memref<48x128xf32, #tpu.memory_space<vmem>>, vector<1x128xf32>
    %575 = vector.extract_strided_slice %574 {offsets = [0, 0], sizes = [1, 32], strides = [1, 1]} : vector<1x128xf32> to vector<1x32xf32>
    %576 = vector.broadcast %575 : vector<1x32xf32> to vector<16x32xf32>
    %577 = arith.mulf %573, %576 : vector<16x32xf32>
    %c28 = arith.constant 28 : index
    %c0_177 = arith.constant 0 : index
    %578 = vector.load %arg6[%c28, %c0_177] : memref<48x128xf32, #tpu.memory_space<vmem>>, vector<1x128xf32>
    %579 = vector.extract_strided_slice %578 {offsets = [0, 0], sizes = [1, 32], strides = [1, 1]} : vector<1x128xf32> to vector<1x32xf32>
    %580 = vector.broadcast %579 : vector<1x32xf32> to vector<16x32xf32>
    %581 = arith.addf %577, %580 : vector<16x32xf32>
    %582 = arith.truncf %581 : vector<16x32xf32> to vector<16x32xbf16>
    %c576 = arith.constant 576 : index
    %c0_178 = arith.constant 0 : index
    %583 = vector.load %arg5[%c576, %c0_178] : memref<864x128xbf16, #tpu.memory_space<vmem>>, vector<32x128xbf16>
    %cst_179 = arith.constant dense<0.000000e+00> : vector<16x128xf32>
    %584 = tpu.matmul %582, %583, %cst_179 {dimension_numbers = #tpu.dot_dimension_numbers<[1], [0], [0], [1], [0, 0, 1, 1], [], []>} : vector<16x32xbf16>, vector<32x128xbf16>, vector<16x128xf32> -> vector<16x128xf32>
    %c29 = arith.constant 29 : index
    %c0_180 = arith.constant 0 : index
    %585 = vector.load %arg6[%c29, %c0_180] : memref<48x128xf32, #tpu.memory_space<vmem>>, vector<1x128xf32>
    %586 = vector.broadcast %585 : vector<1x128xf32> to vector<16x128xf32>
    %587 = arith.addf %584, %586 : vector<16x128xf32>
    %c608 = arith.constant 608 : index
    %c0_181 = arith.constant 0 : index
    %588 = vector.load %arg5[%c608, %c0_181] : memref<864x128xbf16, #tpu.memory_space<vmem>>, vector<32x128xbf16>
    %cst_182 = arith.constant dense<0.000000e+00> : vector<16x128xf32>
    %589 = tpu.matmul %582, %588, %cst_182 {dimension_numbers = #tpu.dot_dimension_numbers<[1], [0], [0], [1], [0, 0, 1, 1], [], []>} : vector<16x32xbf16>, vector<32x128xbf16>, vector<16x128xf32> -> vector<16x128xf32>
    %590 = vector.extract_strided_slice %587 {offsets = [0, 0], sizes = [16, 32], strides = [1, 1]} : vector<16x128xf32> to vector<16x32xf32>
    %591 = vector.extract_strided_slice %587 {offsets = [0, 32], sizes = [16, 32], strides = [1, 1]} : vector<16x128xf32> to vector<16x32xf32>
    %592 = vector.extract_strided_slice %590 {offsets = [0, 0], sizes = [16, 8], strides = [1, 1]} : vector<16x32xf32> to vector<16x8xf32>
    %593 = vector.extract_strided_slice %591 {offsets = [0, 0], sizes = [16, 8], strides = [1, 1]} : vector<16x32xf32> to vector<16x8xf32>
    %cst_183 = arith.constant dense<0.000000e+00> : vector<16x16xf32>
    %594 = tpu.matmul %592, %593, %cst_183 {dimension_numbers = #tpu.dot_dimension_numbers<[1], [1], [0], [0], [0, 0, 1, 0], [], []>} : vector<16x8xf32>, vector<16x8xf32>, vector<16x16xf32> -> vector<16x16xf32>
    %595 = arith.addf %594, %324 : vector<16x16xf32>
    %cst_184 = arith.constant dense<0xFF800000> : vector<16xf32>
    %596 = vector.multi_reduction <maximumf>, %595, %cst_184 [1] : vector<16x16xf32> to vector<16xf32>
    %597 = vector.shape_cast %596 : vector<16xf32> to vector<16x1xf32>
    %598 = vector.broadcast %597 : vector<16x1xf32> to vector<16x16xf32>
    %599 = arith.subf %595, %598 : vector<16x16xf32>
    %600 = math.exp %599 : vector<16x16xf32>
    %cst_185 = arith.constant dense<0.000000e+00> : vector<16xf32>
    %601 = vector.multi_reduction <add>, %600, %cst_185 [1] : vector<16x16xf32> to vector<16xf32>
    %602 = vector.shape_cast %601 : vector<16xf32> to vector<16x1xf32>
    %603 = vector.broadcast %602 : vector<16x1xf32> to vector<16x16xf32>
    %604 = arith.divf %600, %603 : vector<16x16xf32>
    %605 = vector.extract_strided_slice %589 {offsets = [0, 0], sizes = [16, 32], strides = [1, 1]} : vector<16x128xf32> to vector<16x32xf32>
    %cst_186 = arith.constant dense<0.000000e+00> : vector<16x32xf32>
    %606 = tpu.matmul %604, %605, %cst_186 {dimension_numbers = #tpu.dot_dimension_numbers<[1], [0], [0], [1], [0, 0, 1, 1], [], []>} : vector<16x16xf32>, vector<16x32xf32>, vector<16x32xf32> -> vector<16x32xf32>
    %607 = vector.extract_strided_slice %590 {offsets = [0, 8], sizes = [16, 8], strides = [1, 1]} : vector<16x32xf32> to vector<16x8xf32>
    %608 = vector.extract_strided_slice %591 {offsets = [0, 8], sizes = [16, 8], strides = [1, 1]} : vector<16x32xf32> to vector<16x8xf32>
    %cst_187 = arith.constant dense<0.000000e+00> : vector<16x16xf32>
    %609 = tpu.matmul %607, %608, %cst_187 {dimension_numbers = #tpu.dot_dimension_numbers<[1], [1], [0], [0], [0, 0, 1, 0], [], []>} : vector<16x8xf32>, vector<16x8xf32>, vector<16x16xf32> -> vector<16x16xf32>
    %610 = arith.addf %609, %324 : vector<16x16xf32>
    %cst_188 = arith.constant dense<0xFF800000> : vector<16xf32>
    %611 = vector.multi_reduction <maximumf>, %610, %cst_188 [1] : vector<16x16xf32> to vector<16xf32>
    %612 = vector.shape_cast %611 : vector<16xf32> to vector<16x1xf32>
    %613 = vector.broadcast %612 : vector<16x1xf32> to vector<16x16xf32>
    %614 = arith.subf %610, %613 : vector<16x16xf32>
    %615 = math.exp %614 : vector<16x16xf32>
    %cst_189 = arith.constant dense<0.000000e+00> : vector<16xf32>
    %616 = vector.multi_reduction <add>, %615, %cst_189 [1] : vector<16x16xf32> to vector<16xf32>
    %617 = vector.shape_cast %616 : vector<16xf32> to vector<16x1xf32>
    %618 = vector.broadcast %617 : vector<16x1xf32> to vector<16x16xf32>
    %619 = arith.divf %615, %618 : vector<16x16xf32>
    %620 = vector.extract_strided_slice %589 {offsets = [0, 32], sizes = [16, 32], strides = [1, 1]} : vector<16x128xf32> to vector<16x32xf32>
    %cst_190 = arith.constant dense<0.000000e+00> : vector<16x32xf32>
    %621 = tpu.matmul %619, %620, %cst_190 {dimension_numbers = #tpu.dot_dimension_numbers<[1], [0], [0], [1], [0, 0, 1, 1], [], []>} : vector<16x16xf32>, vector<16x32xf32>, vector<16x32xf32> -> vector<16x32xf32>
    %622 = arith.addf %606, %621 : vector<16x32xf32>
    %623 = vector.extract_strided_slice %590 {offsets = [0, 16], sizes = [16, 8], strides = [1, 1]} : vector<16x32xf32> to vector<16x8xf32>
    %624 = vector.extract_strided_slice %591 {offsets = [0, 16], sizes = [16, 8], strides = [1, 1]} : vector<16x32xf32> to vector<16x8xf32>
    %cst_191 = arith.constant dense<0.000000e+00> : vector<16x16xf32>
    %625 = tpu.matmul %623, %624, %cst_191 {dimension_numbers = #tpu.dot_dimension_numbers<[1], [1], [0], [0], [0, 0, 1, 0], [], []>} : vector<16x8xf32>, vector<16x8xf32>, vector<16x16xf32> -> vector<16x16xf32>
    %626 = arith.addf %625, %324 : vector<16x16xf32>
    %cst_192 = arith.constant dense<0xFF800000> : vector<16xf32>
    %627 = vector.multi_reduction <maximumf>, %626, %cst_192 [1] : vector<16x16xf32> to vector<16xf32>
    %628 = vector.shape_cast %627 : vector<16xf32> to vector<16x1xf32>
    %629 = vector.broadcast %628 : vector<16x1xf32> to vector<16x16xf32>
    %630 = arith.subf %626, %629 : vector<16x16xf32>
    %631 = math.exp %630 : vector<16x16xf32>
    %cst_193 = arith.constant dense<0.000000e+00> : vector<16xf32>
    %632 = vector.multi_reduction <add>, %631, %cst_193 [1] : vector<16x16xf32> to vector<16xf32>
    %633 = vector.shape_cast %632 : vector<16xf32> to vector<16x1xf32>
    %634 = vector.broadcast %633 : vector<16x1xf32> to vector<16x16xf32>
    %635 = arith.divf %631, %634 : vector<16x16xf32>
    %636 = vector.extract_strided_slice %589 {offsets = [0, 64], sizes = [16, 32], strides = [1, 1]} : vector<16x128xf32> to vector<16x32xf32>
    %cst_194 = arith.constant dense<0.000000e+00> : vector<16x32xf32>
    %637 = tpu.matmul %635, %636, %cst_194 {dimension_numbers = #tpu.dot_dimension_numbers<[1], [0], [0], [1], [0, 0, 1, 1], [], []>} : vector<16x16xf32>, vector<16x32xf32>, vector<16x32xf32> -> vector<16x32xf32>
    %638 = arith.addf %622, %637 : vector<16x32xf32>
    %639 = vector.extract_strided_slice %590 {offsets = [0, 24], sizes = [16, 8], strides = [1, 1]} : vector<16x32xf32> to vector<16x8xf32>
    %640 = vector.extract_strided_slice %591 {offsets = [0, 24], sizes = [16, 8], strides = [1, 1]} : vector<16x32xf32> to vector<16x8xf32>
    %cst_195 = arith.constant dense<0.000000e+00> : vector<16x16xf32>
    %641 = tpu.matmul %639, %640, %cst_195 {dimension_numbers = #tpu.dot_dimension_numbers<[1], [1], [0], [0], [0, 0, 1, 0], [], []>} : vector<16x8xf32>, vector<16x8xf32>, vector<16x16xf32> -> vector<16x16xf32>
    %642 = arith.addf %641, %324 : vector<16x16xf32>
    %cst_196 = arith.constant dense<0xFF800000> : vector<16xf32>
    %643 = vector.multi_reduction <maximumf>, %642, %cst_196 [1] : vector<16x16xf32> to vector<16xf32>
    %644 = vector.shape_cast %643 : vector<16xf32> to vector<16x1xf32>
    %645 = vector.broadcast %644 : vector<16x1xf32> to vector<16x16xf32>
    %646 = arith.subf %642, %645 : vector<16x16xf32>
    %647 = math.exp %646 : vector<16x16xf32>
    %cst_197 = arith.constant dense<0.000000e+00> : vector<16xf32>
    %648 = vector.multi_reduction <add>, %647, %cst_197 [1] : vector<16x16xf32> to vector<16xf32>
    %649 = vector.shape_cast %648 : vector<16xf32> to vector<16x1xf32>
    %650 = vector.broadcast %649 : vector<16x1xf32> to vector<16x16xf32>
    %651 = arith.divf %647, %650 : vector<16x16xf32>
    %652 = vector.extract_strided_slice %589 {offsets = [0, 96], sizes = [16, 32], strides = [1, 1]} : vector<16x128xf32> to vector<16x32xf32>
    %cst_198 = arith.constant dense<0.000000e+00> : vector<16x32xf32>
    %653 = tpu.matmul %651, %652, %cst_198 {dimension_numbers = #tpu.dot_dimension_numbers<[1], [0], [0], [1], [0, 0, 1, 1], [], []>} : vector<16x16xf32>, vector<16x32xf32>, vector<16x32xf32> -> vector<16x32xf32>
    %654 = arith.addf %638, %653 : vector<16x32xf32>
    %c30 = arith.constant 30 : index
    %c0_199 = arith.constant 0 : index
    %655 = vector.load %arg6[%c30, %c0_199] : memref<48x128xf32, #tpu.memory_space<vmem>>, vector<1x128xf32>
    %656 = vector.extract_strided_slice %655 {offsets = [0, 0], sizes = [1, 32], strides = [1, 1]} : vector<1x128xf32> to vector<1x32xf32>
    %657 = vector.broadcast %656 : vector<1x32xf32> to vector<16x32xf32>
    %658 = arith.addf %654, %657 : vector<16x32xf32>
    %659 = arith.addf %581, %658 : vector<16x32xf32>
    %cst_200 = arith.constant dense<0.000000e+00> : vector<16xf32>
    %660 = vector.multi_reduction <add>, %659, %cst_200 [1] : vector<16x32xf32> to vector<16xf32>
    %661 = vector.shape_cast %660 : vector<16xf32> to vector<16x1xf32>
    %cst_201 = arith.constant 3.200000e+01 : f32
    %662 = vector.broadcast %cst_201 : f32 to vector<16x1xf32>
    %663 = arith.divf %661, %662 : vector<16x1xf32>
    %664 = arith.mulf %659, %659 : vector<16x32xf32>
    %cst_202 = arith.constant dense<0.000000e+00> : vector<16xf32>
    %665 = vector.multi_reduction <add>, %664, %cst_202 [1] : vector<16x32xf32> to vector<16xf32>
    %666 = vector.shape_cast %665 : vector<16xf32> to vector<16x1xf32>
    %cst_203 = arith.constant 3.200000e+01 : f32
    %667 = vector.broadcast %cst_203 : f32 to vector<16x1xf32>
    %668 = arith.divf %666, %667 : vector<16x1xf32>
    %669 = arith.mulf %663, %663 : vector<16x1xf32>
    %670 = arith.subf %668, %669 : vector<16x1xf32>
    %cst_204 = arith.constant 9.99999974E-6 : f32
    %671 = vector.broadcast %cst_204 : f32 to vector<16x1xf32>
    %672 = arith.addf %670, %671 : vector<16x1xf32>
    %673 = math.rsqrt %672 : vector<16x1xf32>
    %674 = vector.broadcast %663 : vector<16x1xf32> to vector<16x32xf32>
    %675 = arith.subf %659, %674 : vector<16x32xf32>
    %676 = vector.broadcast %673 : vector<16x1xf32> to vector<16x32xf32>
    %677 = arith.mulf %675, %676 : vector<16x32xf32>
    %c36 = arith.constant 36 : index
    %c0_205 = arith.constant 0 : index
    %678 = vector.load %arg6[%c36, %c0_205] : memref<48x128xf32, #tpu.memory_space<vmem>>, vector<1x128xf32>
    %679 = vector.extract_strided_slice %678 {offsets = [0, 0], sizes = [1, 32], strides = [1, 1]} : vector<1x128xf32> to vector<1x32xf32>
    %680 = vector.broadcast %679 : vector<1x32xf32> to vector<16x32xf32>
    %681 = arith.mulf %677, %680 : vector<16x32xf32>
    %c37 = arith.constant 37 : index
    %c0_206 = arith.constant 0 : index
    %682 = vector.load %arg6[%c37, %c0_206] : memref<48x128xf32, #tpu.memory_space<vmem>>, vector<1x128xf32>
    %683 = vector.extract_strided_slice %682 {offsets = [0, 0], sizes = [1, 32], strides = [1, 1]} : vector<1x128xf32> to vector<1x32xf32>
    %684 = vector.broadcast %683 : vector<1x32xf32> to vector<16x32xf32>
    %685 = arith.addf %681, %684 : vector<16x32xf32>
    %686 = arith.truncf %685 : vector<16x32xf32> to vector<16x32xbf16>
    %c640 = arith.constant 640 : index
    %c0_207 = arith.constant 0 : index
    %687 = vector.load %arg5[%c640, %c0_207] : memref<864x128xbf16, #tpu.memory_space<vmem>>, vector<32x128xbf16>
    %cst_208 = arith.constant dense<0.000000e+00> : vector<16x128xf32>
    %688 = tpu.matmul %686, %687, %cst_208 {dimension_numbers = #tpu.dot_dimension_numbers<[1], [0], [0], [1], [0, 0, 1, 1], [], []>} : vector<16x32xbf16>, vector<32x128xbf16>, vector<16x128xf32> -> vector<16x128xf32>
    %c31 = arith.constant 31 : index
    %c0_209 = arith.constant 0 : index
    %689 = vector.load %arg6[%c31, %c0_209] : memref<48x128xf32, #tpu.memory_space<vmem>>, vector<1x128xf32>
    %690 = vector.broadcast %689 : vector<1x128xf32> to vector<16x128xf32>
    %691 = arith.addf %688, %690 : vector<16x128xf32>
    %692 = vector.extract_strided_slice %691 {offsets = [0, 0], sizes = [16, 32], strides = [1, 1]} : vector<16x128xf32> to vector<16x32xf32>
    %c672 = arith.constant 672 : index
    %c0_210 = arith.constant 0 : index
    %693 = vector.load %arg5[%c672, %c0_210] : memref<864x128xbf16, #tpu.memory_space<vmem>>, vector<32x128xbf16>
    %cst_211 = arith.constant dense<0.000000e+00> : vector<20x128xf32>
    %694 = tpu.matmul %322, %693, %cst_211 {dimension_numbers = #tpu.dot_dimension_numbers<[1], [0], [0], [1], [0, 0, 1, 1], [], []>} : vector<20x32xbf16>, vector<32x128xbf16>, vector<20x128xf32> -> vector<20x128xf32>
    %c32_212 = arith.constant 32 : index
    %c0_213 = arith.constant 0 : index
    %695 = vector.load %arg6[%c32_212, %c0_213] : memref<48x128xf32, #tpu.memory_space<vmem>>, vector<1x128xf32>
    %696 = vector.broadcast %695 : vector<1x128xf32> to vector<20x128xf32>
    %697 = arith.addf %694, %696 : vector<20x128xf32>
    %698 = vector.extract_strided_slice %697 {offsets = [0, 0], sizes = [20, 32], strides = [1, 1]} : vector<20x128xf32> to vector<20x32xf32>
    %c704 = arith.constant 704 : index
    %c0_214 = arith.constant 0 : index
    %699 = vector.load %arg5[%c704, %c0_214] : memref<864x128xbf16, #tpu.memory_space<vmem>>, vector<32x128xbf16>
    %cst_215 = arith.constant dense<0.000000e+00> : vector<20x128xf32>
    %700 = tpu.matmul %322, %699, %cst_215 {dimension_numbers = #tpu.dot_dimension_numbers<[1], [0], [0], [1], [0, 0, 1, 1], [], []>} : vector<20x32xbf16>, vector<32x128xbf16>, vector<20x128xf32> -> vector<20x128xf32>
    %701 = vector.extract_strided_slice %692 {offsets = [0, 0], sizes = [16, 8], strides = [1, 1]} : vector<16x32xf32> to vector<16x8xf32>
    %702 = vector.extract_strided_slice %698 {offsets = [0, 0], sizes = [20, 8], strides = [1, 1]} : vector<20x32xf32> to vector<20x8xf32>
    %cst_216 = arith.constant dense<0.000000e+00> : vector<16x20xf32>
    %703 = tpu.matmul %701, %702, %cst_216 {dimension_numbers = #tpu.dot_dimension_numbers<[1], [1], [0], [0], [0, 0, 1, 0], [], []>} : vector<16x8xf32>, vector<20x8xf32>, vector<16x20xf32> -> vector<16x20xf32>
    %704 = arith.addf %703, %325 : vector<16x20xf32>
    %cst_217 = arith.constant dense<0xFF800000> : vector<16xf32>
    %705 = vector.multi_reduction <maximumf>, %704, %cst_217 [1] : vector<16x20xf32> to vector<16xf32>
    %706 = vector.shape_cast %705 : vector<16xf32> to vector<16x1xf32>
    %707 = vector.broadcast %706 : vector<16x1xf32> to vector<16x20xf32>
    %708 = arith.subf %704, %707 : vector<16x20xf32>
    %709 = math.exp %708 : vector<16x20xf32>
    %cst_218 = arith.constant dense<0.000000e+00> : vector<16xf32>
    %710 = vector.multi_reduction <add>, %709, %cst_218 [1] : vector<16x20xf32> to vector<16xf32>
    %711 = vector.shape_cast %710 : vector<16xf32> to vector<16x1xf32>
    %712 = vector.broadcast %711 : vector<16x1xf32> to vector<16x20xf32>
    %713 = arith.divf %709, %712 : vector<16x20xf32>
    %714 = vector.extract_strided_slice %700 {offsets = [0, 0], sizes = [20, 32], strides = [1, 1]} : vector<20x128xf32> to vector<20x32xf32>
    %cst_219 = arith.constant dense<0.000000e+00> : vector<16x32xf32>
    %715 = tpu.matmul %713, %714, %cst_219 {dimension_numbers = #tpu.dot_dimension_numbers<[1], [0], [0], [1], [0, 0, 1, 1], [], []>} : vector<16x20xf32>, vector<20x32xf32>, vector<16x32xf32> -> vector<16x32xf32>
    %716 = vector.extract_strided_slice %692 {offsets = [0, 8], sizes = [16, 8], strides = [1, 1]} : vector<16x32xf32> to vector<16x8xf32>
    %717 = vector.extract_strided_slice %698 {offsets = [0, 8], sizes = [20, 8], strides = [1, 1]} : vector<20x32xf32> to vector<20x8xf32>
    %cst_220 = arith.constant dense<0.000000e+00> : vector<16x20xf32>
    %718 = tpu.matmul %716, %717, %cst_220 {dimension_numbers = #tpu.dot_dimension_numbers<[1], [1], [0], [0], [0, 0, 1, 0], [], []>} : vector<16x8xf32>, vector<20x8xf32>, vector<16x20xf32> -> vector<16x20xf32>
    %719 = arith.addf %718, %325 : vector<16x20xf32>
    %cst_221 = arith.constant dense<0xFF800000> : vector<16xf32>
    %720 = vector.multi_reduction <maximumf>, %719, %cst_221 [1] : vector<16x20xf32> to vector<16xf32>
    %721 = vector.shape_cast %720 : vector<16xf32> to vector<16x1xf32>
    %722 = vector.broadcast %721 : vector<16x1xf32> to vector<16x20xf32>
    %723 = arith.subf %719, %722 : vector<16x20xf32>
    %724 = math.exp %723 : vector<16x20xf32>
    %cst_222 = arith.constant dense<0.000000e+00> : vector<16xf32>
    %725 = vector.multi_reduction <add>, %724, %cst_222 [1] : vector<16x20xf32> to vector<16xf32>
    %726 = vector.shape_cast %725 : vector<16xf32> to vector<16x1xf32>
    %727 = vector.broadcast %726 : vector<16x1xf32> to vector<16x20xf32>
    %728 = arith.divf %724, %727 : vector<16x20xf32>
    %729 = vector.extract_strided_slice %700 {offsets = [0, 32], sizes = [20, 32], strides = [1, 1]} : vector<20x128xf32> to vector<20x32xf32>
    %cst_223 = arith.constant dense<0.000000e+00> : vector<16x32xf32>
    %730 = tpu.matmul %728, %729, %cst_223 {dimension_numbers = #tpu.dot_dimension_numbers<[1], [0], [0], [1], [0, 0, 1, 1], [], []>} : vector<16x20xf32>, vector<20x32xf32>, vector<16x32xf32> -> vector<16x32xf32>
    %731 = arith.addf %715, %730 : vector<16x32xf32>
    %732 = vector.extract_strided_slice %692 {offsets = [0, 16], sizes = [16, 8], strides = [1, 1]} : vector<16x32xf32> to vector<16x8xf32>
    %733 = vector.extract_strided_slice %698 {offsets = [0, 16], sizes = [20, 8], strides = [1, 1]} : vector<20x32xf32> to vector<20x8xf32>
    %cst_224 = arith.constant dense<0.000000e+00> : vector<16x20xf32>
    %734 = tpu.matmul %732, %733, %cst_224 {dimension_numbers = #tpu.dot_dimension_numbers<[1], [1], [0], [0], [0, 0, 1, 0], [], []>} : vector<16x8xf32>, vector<20x8xf32>, vector<16x20xf32> -> vector<16x20xf32>
    %735 = arith.addf %734, %325 : vector<16x20xf32>
    %cst_225 = arith.constant dense<0xFF800000> : vector<16xf32>
    %736 = vector.multi_reduction <maximumf>, %735, %cst_225 [1] : vector<16x20xf32> to vector<16xf32>
    %737 = vector.shape_cast %736 : vector<16xf32> to vector<16x1xf32>
    %738 = vector.broadcast %737 : vector<16x1xf32> to vector<16x20xf32>
    %739 = arith.subf %735, %738 : vector<16x20xf32>
    %740 = math.exp %739 : vector<16x20xf32>
    %cst_226 = arith.constant dense<0.000000e+00> : vector<16xf32>
    %741 = vector.multi_reduction <add>, %740, %cst_226 [1] : vector<16x20xf32> to vector<16xf32>
    %742 = vector.shape_cast %741 : vector<16xf32> to vector<16x1xf32>
    %743 = vector.broadcast %742 : vector<16x1xf32> to vector<16x20xf32>
    %744 = arith.divf %740, %743 : vector<16x20xf32>
    %745 = vector.extract_strided_slice %700 {offsets = [0, 64], sizes = [20, 32], strides = [1, 1]} : vector<20x128xf32> to vector<20x32xf32>
    %cst_227 = arith.constant dense<0.000000e+00> : vector<16x32xf32>
    %746 = tpu.matmul %744, %745, %cst_227 {dimension_numbers = #tpu.dot_dimension_numbers<[1], [0], [0], [1], [0, 0, 1, 1], [], []>} : vector<16x20xf32>, vector<20x32xf32>, vector<16x32xf32> -> vector<16x32xf32>
    %747 = arith.addf %731, %746 : vector<16x32xf32>
    %748 = vector.extract_strided_slice %692 {offsets = [0, 24], sizes = [16, 8], strides = [1, 1]} : vector<16x32xf32> to vector<16x8xf32>
    %749 = vector.extract_strided_slice %698 {offsets = [0, 24], sizes = [20, 8], strides = [1, 1]} : vector<20x32xf32> to vector<20x8xf32>
    %cst_228 = arith.constant dense<0.000000e+00> : vector<16x20xf32>
    %750 = tpu.matmul %748, %749, %cst_228 {dimension_numbers = #tpu.dot_dimension_numbers<[1], [1], [0], [0], [0, 0, 1, 0], [], []>} : vector<16x8xf32>, vector<20x8xf32>, vector<16x20xf32> -> vector<16x20xf32>
    %751 = arith.addf %750, %325 : vector<16x20xf32>
    %cst_229 = arith.constant dense<0xFF800000> : vector<16xf32>
    %752 = vector.multi_reduction <maximumf>, %751, %cst_229 [1] : vector<16x20xf32> to vector<16xf32>
    %753 = vector.shape_cast %752 : vector<16xf32> to vector<16x1xf32>
    %754 = vector.broadcast %753 : vector<16x1xf32> to vector<16x20xf32>
    %755 = arith.subf %751, %754 : vector<16x20xf32>
    %756 = math.exp %755 : vector<16x20xf32>
    %cst_230 = arith.constant dense<0.000000e+00> : vector<16xf32>
    %757 = vector.multi_reduction <add>, %756, %cst_230 [1] : vector<16x20xf32> to vector<16xf32>
    %758 = vector.shape_cast %757 : vector<16xf32> to vector<16x1xf32>
    %759 = vector.broadcast %758 : vector<16x1xf32> to vector<16x20xf32>
    %760 = arith.divf %756, %759 : vector<16x20xf32>
    %761 = vector.extract_strided_slice %700 {offsets = [0, 96], sizes = [20, 32], strides = [1, 1]} : vector<20x128xf32> to vector<20x32xf32>
    %cst_231 = arith.constant dense<0.000000e+00> : vector<16x32xf32>
    %762 = tpu.matmul %760, %761, %cst_231 {dimension_numbers = #tpu.dot_dimension_numbers<[1], [0], [0], [1], [0, 0, 1, 1], [], []>} : vector<16x20xf32>, vector<20x32xf32>, vector<16x32xf32> -> vector<16x32xf32>
    %763 = arith.addf %747, %762 : vector<16x32xf32>
    %c33 = arith.constant 33 : index
    %c0_232 = arith.constant 0 : index
    %764 = vector.load %arg6[%c33, %c0_232] : memref<48x128xf32, #tpu.memory_space<vmem>>, vector<1x128xf32>
    %765 = vector.extract_strided_slice %764 {offsets = [0, 0], sizes = [1, 32], strides = [1, 1]} : vector<1x128xf32> to vector<1x32xf32>
    %766 = vector.broadcast %765 : vector<1x32xf32> to vector<16x32xf32>
    %767 = arith.addf %763, %766 : vector<16x32xf32>
    %768 = arith.addf %685, %767 : vector<16x32xf32>
    %cst_233 = arith.constant dense<0.000000e+00> : vector<16xf32>
    %769 = vector.multi_reduction <add>, %768, %cst_233 [1] : vector<16x32xf32> to vector<16xf32>
    %770 = vector.shape_cast %769 : vector<16xf32> to vector<16x1xf32>
    %cst_234 = arith.constant 3.200000e+01 : f32
    %771 = vector.broadcast %cst_234 : f32 to vector<16x1xf32>
    %772 = arith.divf %770, %771 : vector<16x1xf32>
    %773 = arith.mulf %768, %768 : vector<16x32xf32>
    %cst_235 = arith.constant dense<0.000000e+00> : vector<16xf32>
    %774 = vector.multi_reduction <add>, %773, %cst_235 [1] : vector<16x32xf32> to vector<16xf32>
    %775 = vector.shape_cast %774 : vector<16xf32> to vector<16x1xf32>
    %cst_236 = arith.constant 3.200000e+01 : f32
    %776 = vector.broadcast %cst_236 : f32 to vector<16x1xf32>
    %777 = arith.divf %775, %776 : vector<16x1xf32>
    %778 = arith.mulf %772, %772 : vector<16x1xf32>
    %779 = arith.subf %777, %778 : vector<16x1xf32>
    %cst_237 = arith.constant 9.99999974E-6 : f32
    %780 = vector.broadcast %cst_237 : f32 to vector<16x1xf32>
    %781 = arith.addf %779, %780 : vector<16x1xf32>
    %782 = math.rsqrt %781 : vector<16x1xf32>
    %783 = vector.broadcast %772 : vector<16x1xf32> to vector<16x32xf32>
    %784 = arith.subf %768, %783 : vector<16x32xf32>
    %785 = vector.broadcast %782 : vector<16x1xf32> to vector<16x32xf32>
    %786 = arith.mulf %784, %785 : vector<16x32xf32>
    %c38 = arith.constant 38 : index
    %c0_238 = arith.constant 0 : index
    %787 = vector.load %arg6[%c38, %c0_238] : memref<48x128xf32, #tpu.memory_space<vmem>>, vector<1x128xf32>
    %788 = vector.extract_strided_slice %787 {offsets = [0, 0], sizes = [1, 32], strides = [1, 1]} : vector<1x128xf32> to vector<1x32xf32>
    %789 = vector.broadcast %788 : vector<1x32xf32> to vector<16x32xf32>
    %790 = arith.mulf %786, %789 : vector<16x32xf32>
    %c39 = arith.constant 39 : index
    %c0_239 = arith.constant 0 : index
    %791 = vector.load %arg6[%c39, %c0_239] : memref<48x128xf32, #tpu.memory_space<vmem>>, vector<1x128xf32>
    %792 = vector.extract_strided_slice %791 {offsets = [0, 0], sizes = [1, 32], strides = [1, 1]} : vector<1x128xf32> to vector<1x32xf32>
    %793 = vector.broadcast %792 : vector<1x32xf32> to vector<16x32xf32>
    %794 = arith.addf %790, %793 : vector<16x32xf32>
    %795 = arith.truncf %794 : vector<16x32xf32> to vector<16x32xbf16>
    %c736 = arith.constant 736 : index
    %c0_240 = arith.constant 0 : index
    %796 = vector.load %arg5[%c736, %c0_240] : memref<864x128xbf16, #tpu.memory_space<vmem>>, vector<32x128xbf16>
    %cst_241 = arith.constant dense<0.000000e+00> : vector<16x128xf32>
    %797 = tpu.matmul %795, %796, %cst_241 {dimension_numbers = #tpu.dot_dimension_numbers<[1], [0], [0], [1], [0, 0, 1, 1], [], []>} : vector<16x32xbf16>, vector<32x128xbf16>, vector<16x128xf32> -> vector<16x128xf32>
    %c34 = arith.constant 34 : index
    %c0_242 = arith.constant 0 : index
    %798 = vector.load %arg6[%c34, %c0_242] : memref<48x128xf32, #tpu.memory_space<vmem>>, vector<1x128xf32>
    %799 = vector.broadcast %798 : vector<1x128xf32> to vector<16x128xf32>
    %800 = arith.addf %797, %799 : vector<16x128xf32>
    %801 = vector.extract_strided_slice %800 {offsets = [0, 0], sizes = [16, 64], strides = [1, 1]} : vector<16x128xf32> to vector<16x64xf32>
    %cst_243 = arith.constant 0.000000e+00 : f32
    %802 = vector.broadcast %cst_243 : f32 to vector<16x64xf32>
    %803 = arith.maximumf %801, %802 : vector<16x64xf32>
    %804 = arith.truncf %803 : vector<16x64xf32> to vector<16x64xbf16>
    %c768 = arith.constant 768 : index
    %c0_244 = arith.constant 0 : index
    %805 = vector.load %arg5[%c768, %c0_244] : memref<864x128xbf16, #tpu.memory_space<vmem>>, vector<64x128xbf16>
    %cst_245 = arith.constant dense<0.000000e+00> : vector<16x128xf32>
    %806 = tpu.matmul %804, %805, %cst_245 {dimension_numbers = #tpu.dot_dimension_numbers<[1], [0], [0], [1], [0, 0, 1, 1], [], []>} : vector<16x64xbf16>, vector<64x128xbf16>, vector<16x128xf32> -> vector<16x128xf32>
    %c35 = arith.constant 35 : index
    %c0_246 = arith.constant 0 : index
    %807 = vector.load %arg6[%c35, %c0_246] : memref<48x128xf32, #tpu.memory_space<vmem>>, vector<1x128xf32>
    %808 = vector.broadcast %807 : vector<1x128xf32> to vector<16x128xf32>
    %809 = arith.addf %806, %808 : vector<16x128xf32>
    %810 = vector.extract_strided_slice %809 {offsets = [0, 0], sizes = [16, 32], strides = [1, 1]} : vector<16x128xf32> to vector<16x32xf32>
    %811 = arith.addf %794, %810 : vector<16x32xf32>
    %cst_247 = arith.constant dense<0.000000e+00> : vector<16xf32>
    %812 = vector.multi_reduction <add>, %811, %cst_247 [1] : vector<16x32xf32> to vector<16xf32>
    %813 = vector.shape_cast %812 : vector<16xf32> to vector<16x1xf32>
    %cst_248 = arith.constant 3.200000e+01 : f32
    %814 = vector.broadcast %cst_248 : f32 to vector<16x1xf32>
    %815 = arith.divf %813, %814 : vector<16x1xf32>
    %816 = arith.mulf %811, %811 : vector<16x32xf32>
    %cst_249 = arith.constant dense<0.000000e+00> : vector<16xf32>
    %817 = vector.multi_reduction <add>, %816, %cst_249 [1] : vector<16x32xf32> to vector<16xf32>
    %818 = vector.shape_cast %817 : vector<16xf32> to vector<16x1xf32>
    %cst_250 = arith.constant 3.200000e+01 : f32
    %819 = vector.broadcast %cst_250 : f32 to vector<16x1xf32>
    %820 = arith.divf %818, %819 : vector<16x1xf32>
    %821 = arith.mulf %815, %815 : vector<16x1xf32>
    %822 = arith.subf %820, %821 : vector<16x1xf32>
    %cst_251 = arith.constant 9.99999974E-6 : f32
    %823 = vector.broadcast %cst_251 : f32 to vector<16x1xf32>
    %824 = arith.addf %822, %823 : vector<16x1xf32>
    %825 = math.rsqrt %824 : vector<16x1xf32>
    %826 = vector.broadcast %815 : vector<16x1xf32> to vector<16x32xf32>
    %827 = arith.subf %811, %826 : vector<16x32xf32>
    %828 = vector.broadcast %825 : vector<16x1xf32> to vector<16x32xf32>
    %829 = arith.mulf %827, %828 : vector<16x32xf32>
    %c40 = arith.constant 40 : index
    %c0_252 = arith.constant 0 : index
    %830 = vector.load %arg6[%c40, %c0_252] : memref<48x128xf32, #tpu.memory_space<vmem>>, vector<1x128xf32>
    %831 = vector.extract_strided_slice %830 {offsets = [0, 0], sizes = [1, 32], strides = [1, 1]} : vector<1x128xf32> to vector<1x32xf32>
    %832 = vector.broadcast %831 : vector<1x32xf32> to vector<16x32xf32>
    %833 = arith.mulf %829, %832 : vector<16x32xf32>
    %c41 = arith.constant 41 : index
    %c0_253 = arith.constant 0 : index
    %834 = vector.load %arg6[%c41, %c0_253] : memref<48x128xf32, #tpu.memory_space<vmem>>, vector<1x128xf32>
    %835 = vector.extract_strided_slice %834 {offsets = [0, 0], sizes = [1, 32], strides = [1, 1]} : vector<1x128xf32> to vector<1x32xf32>
    %836 = vector.broadcast %835 : vector<1x32xf32> to vector<16x32xf32>
    %837 = arith.addf %833, %836 : vector<16x32xf32>
    %cst_254 = arith.constant dense<0.000000e+00> : vector<16xf32>
    %838 = vector.multi_reduction <add>, %837, %cst_254 [1] : vector<16x32xf32> to vector<16xf32>
    %839 = vector.shape_cast %838 : vector<16xf32> to vector<16x1xf32>
    %cst_255 = arith.constant 3.200000e+01 : f32
    %840 = vector.broadcast %cst_255 : f32 to vector<16x1xf32>
    %841 = arith.divf %839, %840 : vector<16x1xf32>
    %842 = arith.mulf %837, %837 : vector<16x32xf32>
    %cst_256 = arith.constant dense<0.000000e+00> : vector<16xf32>
    %843 = vector.multi_reduction <add>, %842, %cst_256 [1] : vector<16x32xf32> to vector<16xf32>
    %844 = vector.shape_cast %843 : vector<16xf32> to vector<16x1xf32>
    %cst_257 = arith.constant 3.200000e+01 : f32
    %845 = vector.broadcast %cst_257 : f32 to vector<16x1xf32>
    %846 = arith.divf %844, %845 : vector<16x1xf32>
    %847 = arith.mulf %841, %841 : vector<16x1xf32>
    %848 = arith.subf %846, %847 : vector<16x1xf32>
    %cst_258 = arith.constant 9.99999974E-6 : f32
    %849 = vector.broadcast %cst_258 : f32 to vector<16x1xf32>
    %850 = arith.addf %848, %849 : vector<16x1xf32>
    %851 = math.rsqrt %850 : vector<16x1xf32>
    %852 = vector.broadcast %841 : vector<16x1xf32> to vector<16x32xf32>
    %853 = arith.subf %837, %852 : vector<16x32xf32>
    %854 = vector.broadcast %851 : vector<16x1xf32> to vector<16x32xf32>
    %855 = arith.mulf %853, %854 : vector<16x32xf32>
    %c44 = arith.constant 44 : index
    %c0_259 = arith.constant 0 : index
    %856 = vector.load %arg6[%c44, %c0_259] : memref<48x128xf32, #tpu.memory_space<vmem>>, vector<1x128xf32>
    %857 = vector.extract_strided_slice %856 {offsets = [0, 0], sizes = [1, 32], strides = [1, 1]} : vector<1x128xf32> to vector<1x32xf32>
    %858 = vector.broadcast %857 : vector<1x32xf32> to vector<16x32xf32>
    %859 = arith.mulf %855, %858 : vector<16x32xf32>
    %c45 = arith.constant 45 : index
    %c0_260 = arith.constant 0 : index
    %860 = vector.load %arg6[%c45, %c0_260] : memref<48x128xf32, #tpu.memory_space<vmem>>, vector<1x128xf32>
    %861 = vector.extract_strided_slice %860 {offsets = [0, 0], sizes = [1, 32], strides = [1, 1]} : vector<1x128xf32> to vector<1x32xf32>
    %862 = vector.broadcast %861 : vector<1x32xf32> to vector<16x32xf32>
    %863 = arith.addf %859, %862 : vector<16x32xf32>
    %864 = arith.truncf %863 : vector<16x32xf32> to vector<16x32xbf16>
    %c832 = arith.constant 832 : index
    %c0_261 = arith.constant 0 : index
    %865 = vector.load %arg5[%c832, %c0_261] : memref<864x128xbf16, #tpu.memory_space<vmem>>, vector<32x128xbf16>
    %cst_262 = arith.constant dense<0.000000e+00> : vector<16x128xf32>
    %866 = tpu.matmul %864, %865, %cst_262 {dimension_numbers = #tpu.dot_dimension_numbers<[1], [0], [0], [1], [0, 0, 1, 1], [], []>} : vector<16x32xbf16>, vector<32x128xbf16>, vector<16x128xf32> -> vector<16x128xf32>
    %c46 = arith.constant 46 : index
    %c0_263 = arith.constant 0 : index
    %867 = vector.load %arg6[%c46, %c0_263] : memref<48x128xf32, #tpu.memory_space<vmem>>, vector<1x128xf32>
    %868 = vector.broadcast %867 : vector<1x128xf32> to vector<16x128xf32>
    %869 = arith.addf %866, %868 : vector<16x128xf32>
    %c0_264 = arith.constant 0 : index
    %c0_265 = arith.constant 0 : index
    %870 = vector.load %arg7[%c0_264, %c0_265] : memref<16x128xf32, #tpu.memory_space<vmem>>, vector<16x128xf32>
    tpu.vector_store %arg7[%c0_264, %c0_265], %869 {strides = array<i32>} : memref<16x128xf32, #tpu.memory_space<vmem>>, vector<16x128xf32>,
    return
  }
}

</mosaic_0001>

<llo_original>
// kernel: transformer_forward.1
$region0: #{transformer_forward.1}
  #allocation0 [shape = 'u32[]', space=smem, size = 0x4, offset = 0x4, fixed_abs, tag = 'smem constant byte address 0x4 - core index']
  #allocation1 [shape = 'u32[72,128]{1,0:T(1,128)}', space=vmem, size = 0x9000, scoped, tag = 'internal scratch']
  %s0 = inlined_call_operand.vmem [shape: f32[20,32], index: 0, kind: input, shape index: {}]
  %s1 = inlined_call_operand.vmem [shape: f32[16,32], index: 1, kind: input, shape index: {}]
  %s2 = inlined_call_operand.vmem [shape: f32[20,20], index: 2, kind: input, shape index: {}]
  %s3 = inlined_call_operand.vmem [shape: f32[16,16], index: 3, kind: input, shape index: {}]
  %s4 = inlined_call_operand.vmem [shape: f32[16,20], index: 4, kind: input, shape index: {}]
  %s5 = inlined_call_operand.vmem [shape: bf16[864,128], index: 5, kind: input, shape index: {}]
  %s6 = inlined_call_operand.vmem [shape: f32[48,128], index: 6, kind: input, shape index: {}]
  %s7 = inlined_call_operand.vmem [shape: f32[16,128], index: 7, kind: output, shape index: {}]
  %s8 = sld [smem:[#allocation0]]
  $region38: #{transformer_forward.1} parent=0
    _
  %s10 = ssub.s32 1, %s8
  %s11 = scalar_select 0, %s10, %s8
  // Predicated region
  $region2: #{transformer_forward.1} parent=0 // pred_check
    _
  $region3: #{transformer_forward.1} parent=0 // pred_check_branch
    %13 = sbr.rel (0) target = $region5
  $region4: #{transformer_forward.1} parent=0 // pred_region
    _
  $region5: #{transformer_forward.1} parent=0 // pred_fallthru
    _
  // Predicated region
  $region6: #{transformer_forward.1} parent=0 // pred_check
    _
  $region7: #{transformer_forward.1} parent=0 // pred_check_branch
    %15 = sbr.rel (0) target = $region9
  $region8: #{transformer_forward.1} parent=0 // pred_region
    _
  $region9: #{transformer_forward.1} parent=0 // pred_fallthru
    _
  // Predicated region
  $region10: #{transformer_forward.1} parent=0 // pred_check
    _
  $region11: #{transformer_forward.1} parent=0 // pred_check_branch
    %17 = sbr.rel (0) target = $region13
  $region12: #{transformer_forward.1} parent=0 // pred_region
    _
  $region13: #{transformer_forward.1} parent=0 // pred_fallthru
    _
  // Predicated region
  $region14: #{transformer_forward.1} parent=0 // pred_check
    _
  $region15: #{transformer_forward.1} parent=0 // pred_check_branch
    %19 = sbr.rel (0) target = $region17
  $region16: #{transformer_forward.1} parent=0 // pred_region
    _
  $region17: #{transformer_forward.1} parent=0 // pred_fallthru
    _
  // Predicated region
  $region18: #{transformer_forward.1} parent=0 // pred_check
    _
  $region19: #{transformer_forward.1} parent=0 // pred_check_branch
    %21 = sbr.rel (0) target = $region21
  $region20: #{transformer_forward.1} parent=0 // pred_region
    _
  $region21: #{transformer_forward.1} parent=0 // pred_fallthru
    _
  // Predicated region
  $region22: #{transformer_forward.1} parent=0 // pred_check
    _
  $region23: #{transformer_forward.1} parent=0 // pred_check_branch
    %23 = sbr.rel (0) target = $region25
  $region24: #{transformer_forward.1} parent=0 // pred_region
    _
  $region25: #{transformer_forward.1} parent=0 // pred_fallthru
    _
  // Predicated region
  $region26: #{transformer_forward.1} parent=0 // pred_check
    _
  $region27: #{transformer_forward.1} parent=0 // pred_check_branch
    %25 = sbr.rel (0) target = $region29
  $region28: #{transformer_forward.1} parent=0 // pred_region
    _
  $region29: #{transformer_forward.1} parent=0 // pred_fallthru
    _
  %v27 = vld [vmem:[%s0] sm:$0xff]
  %v28 = vld [vmem:[%s0 + $0x8] sm:$0xff]
  %v29 = vld [vmem:[%s0 + $0x10] sm:$0xf]
  %v30 = vld [vmem:[%s2] sm:$0xff]
  %v31 = vld [vmem:[%s2 + $0x8] sm:$0xff]
  %v32 = vld [vmem:[%s2 + $0x10] sm:$0xf]
  %v33 = vpack.c.bf16 %v28, %v27
  %v34 = vpack.c.bf16 %v29, %v29
  %v35 = vld [vmem:[%s5] sm:$0xf]
  %v36 = vld [vmem:[%s5 + $0x4] sm:$0xf]
  %v37 = vld [vmem:[%s5 + $0x8] sm:$0xf]
  %v38 = vld [vmem:[%s5 + $0xc] sm:$0xf]
  %v39 = vld [vmem:[%s6] sm:$0x1]
  %v40 = vperm.slane %v39, 0
  %v45 = vunpack.c.l.b16 %v35
  %v46 = vunpack.c.l.b16 %v36
  %v47 = vunpack.c.l.b16 %v37
  %v48 = vunpack.c.l.b16 %v38
  %v49 = vpack.c.b16 %v46, %v45
  %v50 = vpack.c.b16 %v48, %v47
  %vm53 = vcmask 261120
  %v55 = vsel %vm53, %v33, 0
  %v58 = vsel %vm53, %v34, 0
  %60 = vmatpush.bf16.msra.mxu0 0
  %61 = vmatpush.bf16.msra.mxu0 0
  %62 = vmatpush.bf16.msra.mxu0 0
  %63 = vmatpush.bf16.msra.mxu0 0
  %64 = vmatpush.bf16.msra.mxu0 0
  %65 = vmatpush.bf16.msra.mxu0 0
  %66 = vmatpush.bf16.msra.mxu0 %v50
  %67 = vmatpush.bf16.msra.mxu0 %v49
  %68 = vmatmul.bf16.gmra.mxu0 %v55
  %v69 = vpop.f32.mrf.mxu0
  %v70 = vadd.f32 %v40, %v69
  %v71 = vpop.f32.mrf.mxu0
  %v72 = vadd.f32 %v40, %v71
  %73 = vmatmul.bf16.gmra.mxu0 %v58
  %v74 = vpop.f32.mrf.mxu0
  %v75 = vadd.f32 %v40, %v74
  %v76 = vpop.f32.mrf.mxu0
  %77 = vdwg.mxu0
  %v78 = vld [vmem:[%s5 + $0x10] sm:$0xf]
  %v79 = vld [vmem:[%s5 + $0x14] sm:$0xf]
  %v80 = vld [vmem:[%s5 + $0x18] sm:$0xf]
  %v81 = vld [vmem:[%s5 + $0x1c] sm:$0xf]
  %v86 = vunpack.c.l.b16 %v78
  %v87 = vunpack.c.l.b16 %v79
  %v88 = vunpack.c.l.b16 %v80
  %v89 = vunpack.c.l.b16 %v81
  %v90 = vpack.c.b16 %v87, %v86
  %v91 = vpack.c.b16 %v89, %v88
  %94 = vmatpush.bf16.msra.mxu0 0
  %95 = vmatpush.bf16.msra.mxu0 0
  %96 = vmatpush.bf16.msra.mxu0 0
  %97 = vmatpush.bf16.msra.mxu0 0
  %98 = vmatpush.bf16.msra.mxu0 0
  %99 = vmatpush.bf16.msra.mxu0 0
  %100 = vmatpush.bf16.msra.mxu0 %v91
  %101 = vmatpush.bf16.msra.mxu0 %v90
  %102 = vmatmul.bf16.gmra.mxu0 %v55
  %v103 = vpop.f32.mrf.mxu0
  %v104 = vadd.f32 0.0, %v103
  %v105 = vpop.f32.mrf.mxu0
  %v106 = vadd.f32 0.0, %v105
  %107 = vmatmul.bf16.gmra.mxu0 %v58
  %v108 = vpop.f32.mrf.mxu0
  %v109 = vadd.f32 0.0, %v108
  %v110 = vpop.f32.mrf.mxu0
  %111 = vdwg.mxu0
  %115 = vrot.lane.b32.xlu0 %v70, 96
  %v116 = vpop.permute.xlu0 %115
  %117 = vrot.lane.b32.xlu0 %v72, 96
  %v118 = vpop.permute.xlu0 %117
  %119 = vrot.lane.b32.xlu0 %v75, 96
  %v120 = vpop.permute.xlu0 %119
  %vm121 = vcmask 64512
  %v122 = vsel %vm121, %v70, 0
  %v124 = vsel %vm121, %v72, 0
  %v126 = vsel %vm121, %v75, 0
  %v128 = vsel %vm121, %v116, 0
  %v130 = vsel %vm121, %v118, 0
  %v132 = vsel %vm121, %v120, 0
  %134 = vmatpush.xpose.msra.mxu0 0.0
  %135 = vmatpush.xpose.msra.mxu0 0.0
  %136 = vmatpush.xpose.msra.mxu0 0.0
  %137 = vmatpush.xpose.msra.mxu0 0.0
  %138 = vmatpush.xpose.msra.mxu0 0.0
  %139 = vmatpush.xpose.msra.mxu0 0.0
  %140 = vmatpush.xpose.msra.mxu0 0.0
  %141 = vmatpush.xpose.msra.mxu0 0.0
  %142 = vmatpush.xpose.msra.mxu0 0.0
  %143 = vmatpush.xpose.msra.mxu0 0.0
  %144 = vmatpush.xpose.msra.mxu0 0.0
  %145 = vmatpush.xpose.msra.mxu0 0.0
  %146 = vmatpush.xpose.msra.mxu0 0.0
  %147 = vmatpush.xpose.msra.mxu0 %v132
  %148 = vmatpush.xpose.msra.mxu0 %v130
  %149 = vmatpush.xpose.msra.mxu0 %v128
  %150 = vmatmul.f32.gmra.mxu0 %v122
  %v151 = vpop.f32.mrf.mxu0
  %v152 = vadd.f32 %v30, %v151
  %153 = vmatmul.f32.gmra.mxu0 %v124
  %v154 = vpop.f32.mrf.mxu0
  %v155 = vadd.f32 %v31, %v154
  %156 = vmatmul.f32.gmra.mxu0 %v126
  %v157 = vpop.f32.mrf.mxu0
  %v158 = vadd.f32 %v32, %v157
  %159 = vdwg.mxu0
  %vm160 = vcmask 162816
  %v161 = vsel %vm160, %v152, -inf
  %162 = vmax.xlane.f32.xlu0 %v161
  %v163 = vpop.xlane.xlu0 %162
  %v164 = vsel %vm160, %v155, -inf
  %165 = vmax.xlane.f32.xlu0 %v164
  %v166 = vpop.xlane.xlu0 %165
  %vm167 = vcmask 158720
  %v168 = vsel %vm167, %v158, -inf
  %169 = vmax.xlane.f32.xlu0 %v168
  %v170 = vpop.xlane.xlu0 %169
  %v171 = vsub.f32 %v152, %v163
  %v172 = vsub.f32 %v155, %v166
  %v173 = vsub.f32 %v158, %v170
  %v174 = vmul.f32 %v171, 1.442695
  %v175 = vpow.pop %v174
  %v176 = vmul.f32 %v172, 1.442695
  %v177 = vpow.pop %v176
  %v178 = vmul.f32 %v173, 1.442695
  %v179 = vpow.pop %v178
  %v180 = vsel %vm160, %v175, 0.0
  %181 = vadd.xlane.f32.xlu0 %v180
  %v182 = vpop.xlane.xlu0 %181
  %v183 = vsel %vm160, %v177, 0.0
  %184 = vadd.xlane.f32.xlu0 %v183
  %v185 = vpop.xlane.xlu0 %184
  %v186 = vsel %vm167, %v179, 0.0
  %187 = vadd.xlane.f32.xlu0 %v186
  %v188 = vpop.xlane.xlu0 %187
  %v189 = vrcp.pop %v182
  %v190 = vmul.f32 %v182, %v189
  %v191 = vsub.f32 1.0, %v190
  %v192 = vmul.f32 %v189, %v191
  %v193 = vadd.f32 %v189, %v192
  %vm194 = vweird.f32 %v182
  %vm195 = vweird.f32 %v189
  %vm196 = vmor %vm194, %vm195
  %v197 = vsel %vm196, %v189, %v193
  %v198 = vand.u32 2147483647, %v182
  %vm199 = vcmp.eq.f32.partialorder %v198, 8.507059e+37
  %v200 = vand.u32 %v182, 2147483648
  %v201 = vor.u32 1.1754944e-38, %v200
  %v202 = vsel %vm199, %v201, %v197
  %v203 = vmul.f32 %v175, %v202
  %v204 = vrcp.pop %v185
  %v205 = vmul.f32 %v185, %v204
  %v206 = vsub.f32 1.0, %v205
  %v207 = vmul.f32 %v204, %v206
  %v208 = vadd.f32 %v204, %v207
  %vm209 = vweird.f32 %v185
  %vm210 = vweird.f32 %v204
  %vm211 = vmor %vm209, %vm210
  %v212 = vsel %vm211, %v204, %v208
  %v213 = vand.u32 2147483647, %v185
  %vm214 = vcmp.eq.f32.partialorder %v213, 8.507059e+37
  %v215 = vand.u32 %v185, 2147483648
  %v216 = vor.u32 1.1754944e-38, %v215
  %v217 = vsel %vm214, %v216, %v212
  %v218 = vmul.f32 %v177, %v217
  %v219 = vrcp.pop %v188
  %v220 = vmul.f32 %v188, %v219
  %v221 = vsub.f32 1.0, %v220
  %v222 = vmul.f32 %v219, %v221
  %v223 = vadd.f32 %v219, %v222
  %vm224 = vweird.f32 %v188
  %vm225 = vweird.f32 %v219
  %vm226 = vmor %vm224, %vm225
  %v227 = vsel %vm226, %v219, %v223
  %v228 = vand.u32 2147483647, %v188
  %vm229 = vcmp.eq.f32.partialorder %v228, 8.507059e+37
  %v230 = vand.u32 %v188, 2147483648
  %v231 = vor.u32 1.1754944e-38, %v230
  %v232 = vsel %vm229, %v231, %v227
  %v233 = vmul.f32 %v179, %v232
  %234 = vrot.lane.b32.xlu0 %v70, 120
  %v235 = vpop.permute.xlu0 %234
  %236 = vrot.lane.b32.xlu0 %v72, 120
  %v237 = vpop.permute.xlu0 %236
  %238 = vrot.lane.b32.xlu0 %v75, 120
  %v239 = vpop.permute.xlu0 %238
  %240 = vrot.lane.b32.xlu0 %v70, 88
  %v241 = vpop.permute.xlu0 %240
  %242 = vrot.lane.b32.xlu0 %v72, 88
  %v243 = vpop.permute.xlu0 %242
  %244 = vrot.lane.b32.xlu0 %v75, 88
  %v245 = vpop.permute.xlu0 %244
  %v246 = vsel %vm121, %v235, 0
  %v248 = vsel %vm121, %v237, 0
  %v250 = vsel %vm121, %v239, 0
  %v252 = vsel %vm121, %v241, 0
  %v254 = vsel %vm121, %v243, 0
  %v256 = vsel %vm121, %v245, 0
  %258 = vmatpush.xpose.msra.mxu0 0.0
  %259 = vmatpush.xpose.msra.mxu0 0.0
  %260 = vmatpush.xpose.msra.mxu0 0.0
  %261 = vmatpush.xpose.msra.mxu0 0.0
  %262 = vmatpush.xpose.msra.mxu0 0.0
  %263 = vmatpush.xpose.msra.mxu0 0.0
  %264 = vmatpush.xpose.msra.mxu0 0.0
  %265 = vmatpush.xpose.msra.mxu0 0.0
  %266 = vmatpush.xpose.msra.mxu0 0.0
  %267 = vmatpush.xpose.msra.mxu0 0.0
  %268 = vmatpush.xpose.msra.mxu0 0.0
  %269 = vmatpush.xpose.msra.mxu0 0.0
  %270 = vmatpush.xpose.msra.mxu0 0.0
  %271 = vmatpush.xpose.msra.mxu0 %v256
  %272 = vmatpush.xpose.msra.mxu0 %v254
  %273 = vmatpush.xpose.msra.mxu0 %v252
  %274 = vmatmul.f32.gmra.mxu0 %v246
  %v275 = vpop.f32.mrf.mxu0
  %v276 = vadd.f32 %v30, %v275
  %277 = vmatmul.f32.gmra.mxu0 %v248
  %v278 = vpop.f32.mrf.mxu0
  %v279 = vadd.f32 %v31, %v278
  %280 = vmatmul.f32.gmra.mxu0 %v250
  %v281 = vpop.f32.mrf.mxu0
  %v282 = vadd.f32 %v32, %v281
  %283 = vdwg.mxu0
  %v284 = vsel %vm160, %v276, -inf
  %285 = vmax.xlane.f32.xlu0 %v284
  %v286 = vpop.xlane.xlu0 %285
  %v287 = vsel %vm160, %v279, -inf
  %288 = vmax.xlane.f32.xlu0 %v287
  %v289 = vpop.xlane.xlu0 %288
  %v290 = vsel %vm167, %v282, -inf
  %291 = vmax.xlane.f32.xlu0 %v290
  %v292 = vpop.xlane.xlu0 %291
  %v293 = vsub.f32 %v276, %v286
  %v294 = vsub.f32 %v279, %v289
  %v295 = vsub.f32 %v282, %v292
  %v296 = vmul.f32 %v293, 1.442695
  %v297 = vpow.pop %v296
  %v298 = vmul.f32 %v294, 1.442695
  %v299 = vpow.pop %v298
  %v300 = vmul.f32 %v295, 1.442695
  %v301 = vpow.pop %v300
  %v302 = vsel %vm160, %v297, 0.0
  %303 = vadd.xlane.f32.xlu0 %v302
  %v304 = vpop.xlane.xlu0 %303
  %v305 = vsel %vm160, %v299, 0.0
  %306 = vadd.xlane.f32.xlu0 %v305
  %v307 = vpop.xlane.xlu0 %306
  %v308 = vsel %vm167, %v301, 0.0
  %309 = vadd.xlane.f32.xlu0 %v308
  %v310 = vpop.xlane.xlu0 %309
  %v311 = vrcp.pop %v304
  %v312 = vmul.f32 %v304, %v311
  %v313 = vsub.f32 1.0, %v312
  %v314 = vmul.f32 %v311, %v313
  %v315 = vadd.f32 %v311, %v314
  %vm316 = vweird.f32 %v304
  %vm317 = vweird.f32 %v311
  %vm318 = vmor %vm316, %vm317
  %v319 = vsel %vm318, %v311, %v315
  %v320 = vand.u32 2147483647, %v304
  %vm321 = vcmp.eq.f32.partialorder %v320, 8.507059e+37
  %v322 = vand.u32 %v304, 2147483648
  %v323 = vor.u32 1.1754944e-38, %v322
  %v324 = vsel %vm321, %v323, %v319
  %v325 = vmul.f32 %v297, %v324
  %v326 = vrcp.pop %v307
  %v327 = vmul.f32 %v307, %v326
  %v328 = vsub.f32 1.0, %v327
  %v329 = vmul.f32 %v326, %v328
  %v330 = vadd.f32 %v326, %v329
  %vm331 = vweird.f32 %v307
  %vm332 = vweird.f32 %v326
  %vm333 = vmor %vm331, %vm332
  %v334 = vsel %vm333, %v326, %v330
  %v335 = vand.u32 2147483647, %v307
  %vm336 = vcmp.eq.f32.partialorder %v335, 8.507059e+37
  %v337 = vand.u32 %v307, 2147483648
  %v338 = vor.u32 1.1754944e-38, %v337
  %v339 = vsel %vm336, %v338, %v334
  %v340 = vmul.f32 %v299, %v339
  %v341 = vrcp.pop %v310
  %v342 = vmul.f32 %v310, %v341
  %v343 = vsub.f32 1.0, %v342
  %v344 = vmul.f32 %v341, %v343
  %v345 = vadd.f32 %v341, %v344
  %vm346 = vweird.f32 %v310
  %vm347 = vweird.f32 %v341
  %vm348 = vmor %vm346, %vm347
  %v349 = vsel %vm348, %v341, %v345
  %v350 = vand.u32 2147483647, %v310
  %vm351 = vcmp.eq.f32.partialorder %v350, 8.507059e+37
  %v352 = vand.u32 %v310, 2147483648
  %v353 = vor.u32 1.1754944e-38, %v352
  %v354 = vsel %vm351, %v353, %v349
  %v355 = vmul.f32 %v301, %v354
  %359 = vrot.lane.b32.xlu0 %v104, 96
  %v360 = vpop.permute.xlu0 %359
  %361 = vrot.lane.b32.xlu0 %v106, 96
  %v362 = vpop.permute.xlu0 %361
  %363 = vrot.lane.b32.xlu0 %v109, 96
  %v364 = vpop.permute.xlu0 %363
  %v368 = vsel %vm160, %v325, 0
  %v371 = vsel %vm160, %v340, 0
  %v374 = vsel %vm160, %v355, 0
  %vm376 = vcmask 1043456
  %v377 = vsel %vm376, %v364, 0
  %379 = vmatpush.msra.mxu0 0.0
  %380 = vmatpush.msra.mxu0 0.0
  %381 = vmatpush.msra.mxu0 0.0
  %382 = vmatpush.msra.mxu0 0.0
  %383 = vmatpush.msra.mxu0 0.0
  %384 = vmatpush.msra.mxu0 0.0
  %385 = vmatpush.msra.mxu0 0.0
  %386 = vmatpush.msra.mxu0 0.0
  %387 = vmatpush.msra.mxu0 0.0
  %388 = vmatpush.msra.mxu0 0.0
  %389 = vmatpush.msra.mxu0 0.0
  %390 = vmatpush.msra.mxu0 0.0
  %391 = vmatpush.msra.mxu0 0.0
  %392 = vmatpush.msra.mxu0 %v377
  %393 = vmatpush.msra.mxu0 %v362
  %394 = vmatpush.msra.mxu0 %v360
  %395 = vmatmul.f32.gmra.mxu0 %v368
  %v396 = vpop.f32.mrf.mxu0
  %v397 = vadd.f32 0.0, %v396
  %398 = vmatmul.f32.gmra.mxu0 %v371
  %v399 = vpop.f32.mrf.mxu0
  %v400 = vadd.f32 0.0, %v399
  %401 = vmatmul.f32.gmra.mxu0 %v374
  %v402 = vpop.f32.mrf.mxu0
  %v403 = vadd.f32 0.0, %v402
  %404 = vdwg.mxu0
  %v406 = vsel %vm160, %v203, 0
  %v409 = vsel %vm160, %v218, 0
  %v412 = vsel %vm160, %v233, 0
  %v414 = vsel %vm376, %v109, 0
  %416 = vmatpush.msra.mxu0 0.0
  %417 = vmatpush.msra.mxu0 0.0
  %418 = vmatpush.msra.mxu0 0.0
  %419 = vmatpush.msra.mxu0 0.0
  %420 = vmatpush.msra.mxu0 0.0
  %421 = vmatpush.msra.mxu0 0.0
  %422 = vmatpush.msra.mxu0 0.0
  %423 = vmatpush.msra.mxu0 0.0
  %424 = vmatpush.msra.mxu0 0.0
  %425 = vmatpush.msra.mxu0 0.0
  %426 = vmatpush.msra.mxu0 0.0
  %427 = vmatpush.msra.mxu0 0.0
  %428 = vmatpush.msra.mxu0 0.0
  %429 = vmatpush.msra.mxu0 %v414
  %430 = vmatpush.msra.mxu0 %v106
  %431 = vmatpush.msra.mxu0 %v104
  %432 = vmatmul.f32.gmra.mxu0 %v406
  %v433 = vpop.f32.mrf.mxu0
  %v434 = vadd.f32 %v397, %v433
  %435 = vmatmul.f32.gmra.mxu0 %v409
  %v436 = vpop.f32.mrf.mxu0
  %v437 = vadd.f32 %v400, %v436
  %438 = vmatmul.f32.gmra.mxu0 %v412
  %v439 = vpop.f32.mrf.mxu0
  %v440 = vadd.f32 %v403, %v439
  %441 = vdwg.mxu0
  %442 = vrot.lane.b32.xlu0 %v70, 112
  %v443 = vpop.permute.xlu0 %442
  %444 = vrot.lane.b32.xlu0 %v72, 112
  %v445 = vpop.permute.xlu0 %444
  %446 = vrot.lane.b32.xlu0 %v75, 112
  %v447 = vpop.permute.xlu0 %446
  %448 = vrot.lane.b32.xlu0 %v70, 80
  %v449 = vpop.permute.xlu0 %448
  %450 = vrot.lane.b32.xlu0 %v72, 80
  %v451 = vpop.permute.xlu0 %450
  %452 = vrot.lane.b32.xlu0 %v75, 80
  %v453 = vpop.permute.xlu0 %452
  %v454 = vsel %vm121, %v443, 0
  %v456 = vsel %vm121, %v445, 0
  %v458 = vsel %vm121, %v447, 0
  %v460 = vsel %vm121, %v449, 0
  %v462 = vsel %vm121, %v451, 0
  %v464 = vsel %vm121, %v453, 0
  %466 = vmatpush.xpose.msra.mxu0 0.0
  %467 = vmatpush.xpose.msra.mxu0 0.0
  %468 = vmatpush.xpose.msra.mxu0 0.0
  %469 = vmatpush.xpose.msra.mxu0 0.0
  %470 = vmatpush.xpose.msra.mxu0 0.0
  %471 = vmatpush.xpose.msra.mxu0 0.0
  %472 = vmatpush.xpose.msra.mxu0 0.0
  %473 = vmatpush.xpose.msra.mxu0 0.0
  %474 = vmatpush.xpose.msra.mxu0 0.0
  %475 = vmatpush.xpose.msra.mxu0 0.0
  %476 = vmatpush.xpose.msra.mxu0 0.0
  %477 = vmatpush.xpose.msra.mxu0 0.0
  %478 = vmatpush.xpose.msra.mxu0 0.0
  %479 = vmatpush.xpose.msra.mxu0 %v464
  %480 = vmatpush.xpose.msra.mxu0 %v462
  %481 = vmatpush.xpose.msra.mxu0 %v460
  %482 = vmatmul.f32.gmra.mxu0 %v454
  %v483 = vpop.f32.mrf.mxu0
  %v484 = vadd.f32 %v30, %v483
  %485 = vmatmul.f32.gmra.mxu0 %v456
  %v486 = vpop.f32.mrf.mxu0
  %v487 = vadd.f32 %v31, %v486
  %488 = vmatmul.f32.gmra.mxu0 %v458
  %v489 = vpop.f32.mrf.mxu0
  %v490 = vadd.f32 %v32, %v489
  %491 = vdwg.mxu0
  %v492 = vsel %vm160, %v484, -inf
  %493 = vmax.xlane.f32.xlu0 %v492
  %v494 = vpop.xlane.xlu0 %493
  %v495 = vsel %vm160, %v487, -inf
  %496 = vmax.xlane.f32.xlu0 %v495
  %v497 = vpop.xlane.xlu0 %496
  %v498 = vsel %vm167, %v490, -inf
  %499 = vmax.xlane.f32.xlu0 %v498
  %v500 = vpop.xlane.xlu0 %499
  %v501 = vsub.f32 %v484, %v494
  %v502 = vsub.f32 %v487, %v497
  %v503 = vsub.f32 %v490, %v500
  %v504 = vmul.f32 %v501, 1.442695
  %v505 = vpow.pop %v504
  %v506 = vmul.f32 %v502, 1.442695
  %v507 = vpow.pop %v506
  %v508 = vmul.f32 %v503, 1.442695
  %v509 = vpow.pop %v508
  %v510 = vsel %vm160, %v505, 0.0
  %511 = vadd.xlane.f32.xlu0 %v510
  %v512 = vpop.xlane.xlu0 %511
  %v513 = vsel %vm160, %v507, 0.0
  %514 = vadd.xlane.f32.xlu0 %v513
  %v515 = vpop.xlane.xlu0 %514
  %v516 = vsel %vm167, %v509, 0.0
  %517 = vadd.xlane.f32.xlu0 %v516
  %v518 = vpop.xlane.xlu0 %517
  %v519 = vrcp.pop %v512
  %v520 = vmul.f32 %v512, %v519
  %v521 = vsub.f32 1.0, %v520
  %v522 = vmul.f32 %v519, %v521
  %v523 = vadd.f32 %v519, %v522
  %vm524 = vweird.f32 %v512
  %vm525 = vweird.f32 %v519
  %vm526 = vmor %vm524, %vm525
  %v527 = vsel %vm526, %v519, %v523
  %v528 = vand.u32 2147483647, %v512
  %vm529 = vcmp.eq.f32.partialorder %v528, 8.507059e+37
  %v530 = vand.u32 %v512, 2147483648
  %v531 = vor.u32 1.1754944e-38, %v530
  %v532 = vsel %vm529, %v531, %v527
  %v533 = vmul.f32 %v505, %v532
  %v534 = vrcp.pop %v515
  %v535 = vmul.f32 %v515, %v534
  %v536 = vsub.f32 1.0, %v535
  %v537 = vmul.f32 %v534, %v536
  %v538 = vadd.f32 %v534, %v537
  %vm539 = vweird.f32 %v515
  %vm540 = vweird.f32 %v534
  %vm541 = vmor %vm539, %vm540
  %v542 = vsel %vm541, %v534, %v538
  %v543 = vand.u32 2147483647, %v515
  %vm544 = vcmp.eq.f32.partialorder %v543, 8.507059e+37
  %v545 = vand.u32 %v515, 2147483648
  %v546 = vor.u32 1.1754944e-38, %v545
  %v547 = vsel %vm544, %v546, %v542
  %v548 = vmul.f32 %v507, %v547
  %v549 = vrcp.pop %v518
  %v550 = vmul.f32 %v518, %v549
  %v551 = vsub.f32 1.0, %v550
  %v552 = vmul.f32 %v549, %v551
  %v553 = vadd.f32 %v549, %v552
  %vm554 = vweird.f32 %v518
  %vm555 = vweird.f32 %v549
  %vm556 = vmor %vm554, %vm555
  %v557 = vsel %vm556, %v549, %v553
  %v558 = vand.u32 2147483647, %v518
  %vm559 = vcmp.eq.f32.partialorder %v558, 8.507059e+37
  %v560 = vand.u32 %v518, 2147483648
  %v561 = vor.u32 1.1754944e-38, %v560
  %v562 = vsel %vm559, %v561, %v557
  %v563 = vmul.f32 %v509, %v562
  %564 = vrot.lane.b32.xlu0 %v104, 64
  %v565 = vpop.permute.xlu0 %564
  %566 = vrot.lane.b32.xlu0 %v106, 64
  %v567 = vpop.permute.xlu0 %566
  %568 = vrot.lane.b32.xlu0 %v109, 64
  %v569 = vpop.permute.xlu0 %568
  %v573 = vsel %vm160, %v533, 0
  %v576 = vsel %vm160, %v548, 0
  %v579 = vsel %vm160, %v563, 0
  %v581 = vsel %vm376, %v569, 0
  %583 = vmatpush.msra.mxu0 0.0
  %584 = vmatpush.msra.mxu0 0.0
  %585 = vmatpush.msra.mxu0 0.0
  %586 = vmatpush.msra.mxu0 0.0
  %587 = vmatpush.msra.mxu0 0.0
  %588 = vmatpush.msra.mxu0 0.0
  %589 = vmatpush.msra.mxu0 0.0
  %590 = vmatpush.msra.mxu0 0.0
  %591 = vmatpush.msra.mxu0 0.0
  %592 = vmatpush.msra.mxu0 0.0
  %593 = vmatpush.msra.mxu0 0.0
  %594 = vmatpush.msra.mxu0 0.0
  %595 = vmatpush.msra.mxu0 0.0
  %596 = vmatpush.msra.mxu0 %v581
  %597 = vmatpush.msra.mxu0 %v567
  %598 = vmatpush.msra.mxu0 %v565
  %599 = vmatmul.f32.gmra.mxu0 %v573
  %v600 = vpop.f32.mrf.mxu0
  %v601 = vadd.f32 0.0, %v600
  %602 = vmatmul.f32.gmra.mxu0 %v576
  %v603 = vpop.f32.mrf.mxu0
  %v604 = vadd.f32 0.0, %v603
  %605 = vmatmul.f32.gmra.mxu0 %v579
  %v606 = vpop.f32.mrf.mxu0
  %v607 = vadd.f32 0.0, %v606
  %608 = vdwg.mxu0
  %v609 = vadd.f32 %v434, %v601
  %v610 = vadd.f32 %v437, %v604
  %v611 = vadd.f32 %v440, %v607
  %612 = vrot.lane.b32.xlu0 %v70, 104
  %v613 = vpop.permute.xlu0 %612
  %614 = vrot.lane.b32.xlu0 %v72, 104
  %v615 = vpop.permute.xlu0 %614
  %616 = vrot.lane.b32.xlu0 %v75, 104
  %v617 = vpop.permute.xlu0 %616
  %618 = vrot.lane.b32.xlu0 %v70, 72
  %v619 = vpop.permute.xlu0 %618
  %620 = vrot.lane.b32.xlu0 %v72, 72
  %v621 = vpop.permute.xlu0 %620
  %622 = vrot.lane.b32.xlu0 %v75, 72
  %v623 = vpop.permute.xlu0 %622
  %v624 = vsel %vm121, %v613, 0
  %v626 = vsel %vm121, %v615, 0
  %v628 = vsel %vm121, %v617, 0
  %v630 = vsel %vm121, %v619, 0
  %v632 = vsel %vm121, %v621, 0
  %v634 = vsel %vm121, %v623, 0
  %636 = vmatpush.xpose.msra.mxu0 0.0
  %637 = vmatpush.xpose.msra.mxu0 0.0
  %638 = vmatpush.xpose.msra.mxu0 0.0
  %639 = vmatpush.xpose.msra.mxu0 0.0
  %640 = vmatpush.xpose.msra.mxu0 0.0
  %641 = vmatpush.xpose.msra.mxu0 0.0
  %642 = vmatpush.xpose.msra.mxu0 0.0
  %643 = vmatpush.xpose.msra.mxu0 0.0
  %644 = vmatpush.xpose.msra.mxu0 0.0
  %645 = vmatpush.xpose.msra.mxu0 0.0
  %646 = vmatpush.xpose.msra.mxu0 0.0
  %647 = vmatpush.xpose.msra.mxu0 0.0
  %648 = vmatpush.xpose.msra.mxu0 0.0
  %649 = vmatpush.xpose.msra.mxu0 %v634
  %650 = vmatpush.xpose.msra.mxu0 %v632
  %651 = vmatpush.xpose.msra.mxu0 %v630
  %652 = vmatmul.f32.gmra.mxu0 %v624
  %v653 = vpop.f32.mrf.mxu0
  %v654 = vadd.f32 %v30, %v653
  %655 = vmatmul.f32.gmra.mxu0 %v626
  %v656 = vpop.f32.mrf.mxu0
  %v657 = vadd.f32 %v31, %v656
  %658 = vmatmul.f32.gmra.mxu0 %v628
  %v659 = vpop.f32.mrf.mxu0
  %v660 = vadd.f32 %v32, %v659
  %661 = vdwg.mxu0
  %v662 = vsel %vm160, %v654, -inf
  %663 = vmax.xlane.f32.xlu0 %v662
  %v664 = vpop.xlane.xlu0 %663
  %v665 = vsel %vm160, %v657, -inf
  %666 = vmax.xlane.f32.xlu0 %v665
  %v667 = vpop.xlane.xlu0 %666
  %v668 = vsel %vm167, %v660, -inf
  %669 = vmax.xlane.f32.xlu0 %v668
  %v670 = vpop.xlane.xlu0 %669
  %v671 = vsub.f32 %v654, %v664
  %v672 = vsub.f32 %v657, %v667
  %v673 = vsub.f32 %v660, %v670
  %v674 = vmul.f32 %v671, 1.442695
  %v675 = vpow.pop %v674
  %v676 = vmul.f32 %v672, 1.442695
  %v677 = vpow.pop %v676
  %v678 = vmul.f32 %v673, 1.442695
  %v679 = vpow.pop %v678
  %v680 = vsel %vm160, %v675, 0.0
  %681 = vadd.xlane.f32.xlu0 %v680
  %v682 = vpop.xlane.xlu0 %681
  %v683 = vsel %vm160, %v677, 0.0
  %684 = vadd.xlane.f32.xlu0 %v683
  %v685 = vpop.xlane.xlu0 %684
  %v686 = vsel %vm167, %v679, 0.0
  %687 = vadd.xlane.f32.xlu0 %v686
  %v688 = vpop.xlane.xlu0 %687
  %v689 = vrcp.pop %v682
  %v690 = vmul.f32 %v682, %v689
  %v691 = vsub.f32 1.0, %v690
  %v692 = vmul.f32 %v689, %v691
  %v693 = vadd.f32 %v689, %v692
  %vm694 = vweird.f32 %v682
  %vm695 = vweird.f32 %v689
  %vm696 = vmor %vm694, %vm695
  %v697 = vsel %vm696, %v689, %v693
  %v698 = vand.u32 2147483647, %v682
  %vm699 = vcmp.eq.f32.partialorder %v698, 8.507059e+37
  %v700 = vand.u32 %v682, 2147483648
  %v701 = vor.u32 1.1754944e-38, %v700
  %v702 = vsel %vm699, %v701, %v697
  %v703 = vmul.f32 %v675, %v702
  %v704 = vrcp.pop %v685
  %v705 = vmul.f32 %v685, %v704
  %v706 = vsub.f32 1.0, %v705
  %v707 = vmul.f32 %v704, %v706
  %v708 = vadd.f32 %v704, %v707
  %vm709 = vweird.f32 %v685
  %vm710 = vweird.f32 %v704
  %vm711 = vmor %vm709, %vm710
  %v712 = vsel %vm711, %v704, %v708
  %v713 = vand.u32 2147483647, %v685
  %vm714 = vcmp.eq.f32.partialorder %v713, 8.507059e+37
  %v715 = vand.u32 %v685, 2147483648
  %v716 = vor.u32 1.1754944e-38, %v715
  %v717 = vsel %vm714, %v716, %v712
  %v718 = vmul.f32 %v677, %v717
  %v719 = vrcp.pop %v688
  %v720 = vmul.f32 %v688, %v719
  %v721 = vsub.f32 1.0, %v720
  %v722 = vmul.f32 %v719, %v721
  %v723 = vadd.f32 %v719, %v722
  %vm724 = vweird.f32 %v688
  %vm725 = vweird.f32 %v719
  %vm726 = vmor %vm724, %vm725
  %v727 = vsel %vm726, %v719, %v723
  %v728 = vand.u32 2147483647, %v688
  %vm729 = vcmp.eq.f32.partialorder %v728, 8.507059e+37
  %v730 = vand.u32 %v688, 2147483648
  %v731 = vor.u32 1.1754944e-38, %v730
  %v732 = vsel %vm729, %v731, %v727
  %v733 = vmul.f32 %v679, %v732
  %734 = vrot.lane.b32.xlu0 %v104, 32
  %v735 = vpop.permute.xlu0 %734
  %736 = vrot.lane.b32.xlu0 %v106, 32
  %v737 = vpop.permute.xlu0 %736
  %738 = vrot.lane.b32.xlu0 %v109, 32
  %v739 = vpop.permute.xlu0 %738
  %v743 = vsel %vm160, %v703, 0
  %v746 = vsel %vm160, %v718, 0
  %v749 = vsel %vm160, %v733, 0
  %v751 = vsel %vm376, %v739, 0
  %753 = vmatpush.msra.mxu0 0.0
  %754 = vmatpush.msra.mxu0 0.0
  %755 = vmatpush.msra.mxu0 0.0
  %756 = vmatpush.msra.mxu0 0.0
  %757 = vmatpush.msra.mxu0 0.0
  %758 = vmatpush.msra.mxu0 0.0
  %759 = vmatpush.msra.mxu0 0.0
  %760 = vmatpush.msra.mxu0 0.0
  %761 = vmatpush.msra.mxu0 0.0
  %762 = vmatpush.msra.mxu0 0.0
  %763 = vmatpush.msra.mxu0 0.0
  %764 = vmatpush.msra.mxu0 0.0
  %765 = vmatpush.msra.mxu0 0.0
  %766 = vmatpush.msra.mxu0 %v751
  %767 = vmatpush.msra.mxu0 %v737
  %768 = vmatpush.msra.mxu0 %v735
  %769 = vmatmul.f32.gmra.mxu0 %v743
  %v770 = vpop.f32.mrf.mxu0
  %v771 = vadd.f32 0.0, %v770
  %772 = vmatmul.f32.gmra.mxu0 %v746
  %v773 = vpop.f32.mrf.mxu0
  %v774 = vadd.f32 0.0, %v773
  %775 = vmatmul.f32.gmra.mxu0 %v749
  %v776 = vpop.f32.mrf.mxu0
  %v777 = vadd.f32 0.0, %v776
  %778 = vdwg.mxu0
  %v779 = vadd.f32 %v609, %v771
  %v780 = vadd.f32 %v610, %v774
  %v781 = vadd.f32 %v611, %v777
  %v782 = vld [vmem:[%s6 + $0x1] sm:$0x1]
  %v783 = vperm.slane %v782, 0
  %v784 = vadd.f32 %v779, %v783
  %v785 = vadd.f32 %v780, %v783
  %v786 = vadd.f32 %v781, %v783
  %v787 = vadd.f32 %v27, %v784
  %v788 = vadd.f32 %v28, %v785
  %v789 = vadd.f32 %v29, %v786
  %v790 = vsel %vm53, %v787, 0.0
  %791 = vadd.xlane.f32.xlu0 %v790
  %v792 = vpop.xlane.xlu0 %791
  %v793 = vsel %vm53, %v788, 0.0
  %794 = vadd.xlane.f32.xlu0 %v793
  %v795 = vpop.xlane.xlu0 %794
  %vm796 = vcmask 257024
  %v797 = vsel %vm796, %v789, 0.0
  %798 = vadd.xlane.f32.xlu0 %v797
  %v799 = vpop.xlane.xlu0 %798
  %v800 = vrcp.pop 32.0
  %v801 = vmul.f32 32.0, %v800
  %v802 = vsub.f32 1.0, %v801
  %v803 = vmul.f32 %v800, %v802
  %v804 = vadd.f32 %v800, %v803
  %vm805 = vweird.f32 %v800
  %v806 = vsel %vm805, %v800, %v804
  %v807 = vmul.f32 %v792, %v806
  %v808 = vmul.f32 %v795, %v806
  %v809 = vmul.f32 %v799, %v806
  %v810 = vmul.f32 %v787, %v787
  %v811 = vmul.f32 %v788, %v788
  %v812 = vmul.f32 %v789, %v789
  %v813 = vsel %vm53, %v810, 0.0
  %814 = vadd.xlane.f32.xlu0 %v813
  %v815 = vpop.xlane.xlu0 %814
  %v816 = vsel %vm53, %v811, 0.0
  %817 = vadd.xlane.f32.xlu0 %v816
  %v818 = vpop.xlane.xlu0 %817
  %v819 = vsel %vm796, %v812, 0.0
  %820 = vadd.xlane.f32.xlu0 %v819
  %v821 = vpop.xlane.xlu0 %820
  %v822 = vmul.f32 %v815, %v806
  %v823 = vmul.f32 %v818, %v806
  %v824 = vmul.f32 %v821, %v806
  %v825 = vmul.f32 %v807, %v807
  %v826 = vmul.f32 %v808, %v808
  %v827 = vmul.f32 %v809, %v809
  %v828 = vsub.f32 %v822, %v825
  %v829 = vsub.f32 %v823, %v826
  %v830 = vsub.f32 %v824, %v827
  %v831 = vadd.f32 %v828, 1e-05
  %v832 = vadd.f32 %v829, 1e-05
  %v833 = vadd.f32 %v830, 1e-05
  %v834 = vrsqrt.pop %v831
  %v835 = vmul.f32 %v834, %v831
  %v836 = vmul.f32 %v835, %v834
  %v837 = vmul.f32 0.5, %v836
  %v838 = vsub.f32 1.5, %v837
  %v839 = vmul.f32 %v834, %v838
  %vm840 = vweird.f32 %v831
  %vm841 = vweird.f32 %v834
  %vm842 = vmor %vm840, %vm841
  %v843 = vsel %vm842, %v834, %v839
  %v844 = vrsqrt.pop %v832
  %v845 = vmul.f32 %v844, %v832
  %v846 = vmul.f32 %v845, %v844
  %v847 = vmul.f32 0.5, %v846
  %v848 = vsub.f32 1.5, %v847
  %v849 = vmul.f32 %v844, %v848
  %vm850 = vweird.f32 %v832
  %vm851 = vweird.f32 %v844
  %vm852 = vmor %vm850, %vm851
  %v853 = vsel %vm852, %v844, %v849
  %v854 = vrsqrt.pop %v833
  %v855 = vmul.f32 %v854, %v833
  %v856 = vmul.f32 %v855, %v854
  %v857 = vmul.f32 0.5, %v856
  %v858 = vsub.f32 1.5, %v857
  %v859 = vmul.f32 %v854, %v858
  %vm860 = vweird.f32 %v833
  %vm861 = vweird.f32 %v854
  %vm862 = vmor %vm860, %vm861
  %v863 = vsel %vm862, %v854, %v859
  %v864 = vsub.f32 %v787, %v807
  %v865 = vsub.f32 %v788, %v808
  %v866 = vsub.f32 %v789, %v809
  %v867 = vmul.f32 %v864, %v843
  %v868 = vmul.f32 %v865, %v853
  %v869 = vmul.f32 %v866, %v863
  %v870 = vld [vmem:[%s6 + $0x4] sm:$0x1]
  %v871 = vperm.slane %v870, 0
  %v872 = vmul.f32 %v867, %v871
  %v873 = vmul.f32 %v868, %v871
  %v874 = vmul.f32 %v869, %v871
  %v875 = vld [vmem:[%s6 + $0x5] sm:$0x1]
  %v876 = vperm.slane %v875, 0
  %v877 = vadd.f32 %v872, %v876
  %v878 = vadd.f32 %v873, %v876
  %v879 = vadd.f32 %v874, %v876
  %v880 = vpack.c.bf16 %v878, %v877
  %v881 = vpack.c.bf16 %v879, %v879
  %v882 = vld [vmem:[%s5 + $0x20] sm:$0xf]
  %v883 = vld [vmem:[%s5 + $0x24] sm:$0xf]
  %v884 = vld [vmem:[%s5 + $0x28] sm:$0xf]
  %v885 = vld [vmem:[%s5 + $0x2c] sm:$0xf]
  %v886 = vld [vmem:[%s6 + $0x2] sm:$0x1]
  %v887 = vperm.slane %v886, 0
  %v892 = vunpack.c.l.b16 %v882
  %v893 = vunpack.c.l.b16 %v883
  %v894 = vunpack.c.l.b16 %v884
  %v895 = vunpack.c.l.b16 %v885
  %v896 = vpack.c.b16 %v893, %v892
  %v897 = vpack.c.b16 %v895, %v894
  %v901 = vsel %vm53, %v880, 0
  %v904 = vsel %vm53, %v881, 0
  %906 = vmatpush.bf16.msra.mxu0 0
  %907 = vmatpush.bf16.msra.mxu0 0
  %908 = vmatpush.bf16.msra.mxu0 0
  %909 = vmatpush.bf16.msra.mxu0 0
  %910 = vmatpush.bf16.msra.mxu0 0
  %911 = vmatpush.bf16.msra.mxu0 0
  %912 = vmatpush.bf16.msra.mxu0 %v897
  %913 = vmatpush.bf16.msra.mxu0 %v896
  %914 = vmatmul.bf16.gmra.mxu0 %v901
  %v915 = vpop.f32.mrf.mxu0
  %v916 = vadd.f32 %v887, %v915
  %v917 = vpop.f32.mrf.mxu0
  %v918 = vadd.f32 %v887, %v917
  %919 = vmatmul.bf16.gmra.mxu0 %v904
  %v920 = vpop.f32.mrf.mxu0
  %v921 = vadd.f32 %v887, %v920
  %v922 = vpop.f32.mrf.mxu0
  %923 = vdwg.mxu0
  %v924 = vmax.f32 %v916, 0.0
  %v925 = vmax.f32 %v918, 0.0
  %v926 = vmax.f32 %v921, 0.0
  %v927 = vpack.c.bf16 %v925, %v924
  %v928 = vpack.c.bf16 %v926, %v926
  %v929 = vld [vmem:[%s5 + $0x30] sm:$0xf]
  %v930 = vld [vmem:[%s5 + $0x34] sm:$0xf]
  %v931 = vld [vmem:[%s5 + $0x38] sm:$0xf]
  %v932 = vld [vmem:[%s5 + $0x3c] sm:$0xf]
  %v933 = vld [vmem:[%s5 + $0x40] sm:$0xf]
  %v934 = vld [vmem:[%s5 + $0x44] sm:$0xf]
  %v935 = vld [vmem:[%s5 + $0x48] sm:$0xf]
  %v936 = vld [vmem:[%s5 + $0x4c] sm:$0xf]
  %v937 = vld [vmem:[%s6 + $0x3] sm:$0x1]
  %v938 = vperm.slane %v937, 0
  %v947 = vunpack.c.l.b16 %v929
  %v948 = vunpack.c.l.b16 %v930
  %v949 = vunpack.c.l.b16 %v931
  %v950 = vunpack.c.l.b16 %v932
  %v951 = vunpack.c.l.b16 %v933
  %v952 = vunpack.c.l.b16 %v934
  %v953 = vunpack.c.l.b16 %v935
  %v954 = vunpack.c.l.b16 %v936
  %v955 = vpack.c.b16 %v948, %v947
  %v956 = vpack.c.b16 %v950, %v949
  %v957 = vpack.c.b16 %v952, %v951
  %v958 = vpack.c.b16 %v954, %v953
  %vm963 = vcmask 523264
  %v965 = vsel %vm963, %v927, 0
  %v968 = vsel %vm963, %v928, 0
  %970 = vmatpush.bf16.msra.mxu0 0
  %971 = vmatpush.bf16.msra.mxu0 0
  %972 = vmatpush.bf16.msra.mxu0 0
  %973 = vmatpush.bf16.msra.mxu0 0
  %974 = vmatpush.bf16.msra.mxu0 %v958
  %975 = vmatpush.bf16.msra.mxu0 %v957
  %976 = vmatpush.bf16.msra.mxu0 %v956
  %977 = vmatpush.bf16.msra.mxu0 %v955
  %978 = vmatmul.bf16.gmra.mxu0 %v965
  %v979 = vpop.f32.mrf.mxu0
  %v980 = vadd.f32 %v938, %v979
  %v981 = vpop.f32.mrf.mxu0
  %v982 = vadd.f32 %v938, %v981
  %983 = vmatmul.bf16.gmra.mxu0 %v968
  %v984 = vpop.f32.mrf.mxu0
  %v985 = vadd.f32 %v938, %v984
  %v986 = vpop.f32.mrf.mxu0
  %987 = vdwg.mxu0
  %v988 = vadd.f32 %v877, %v980
  %v989 = vadd.f32 %v878, %v982
  %v990 = vadd.f32 %v879, %v985
  %v991 = vsel %vm53, %v988, 0.0
  %992 = vadd.xlane.f32.xlu0 %v991
  %v993 = vpop.xlane.xlu0 %992
  %v994 = vsel %vm53, %v989, 0.0
  %995 = vadd.xlane.f32.xlu0 %v994
  %v996 = vpop.xlane.xlu0 %995
  %v997 = vsel %vm796, %v990, 0.0
  %998 = vadd.xlane.f32.xlu0 %v997
  %v999 = vpop.xlane.xlu0 %998
  %v1000 = vmul.f32 %v993, %v806
  %v1001 = vmul.f32 %v996, %v806
  %v1002 = vmul.f32 %v999, %v806
  %v1003 = vmul.f32 %v988, %v988
  %v1004 = vmul.f32 %v989, %v989
  %v1005 = vmul.f32 %v990, %v990
  %v1006 = vsel %vm53, %v1003, 0.0
  %1007 = vadd.xlane.f32.xlu0 %v1006
  %v1008 = vpop.xlane.xlu0 %1007
  %v1009 = vsel %vm53, %v1004, 0.0
  %1010 = vadd.xlane.f32.xlu0 %v1009
  %v1011 = vpop.xlane.xlu0 %1010
  %v1012 = vsel %vm796, %v1005, 0.0
  %1013 = vadd.xlane.f32.xlu0 %v1012
  %v1014 = vpop.xlane.xlu0 %1013
  %v1015 = vmul.f32 %v1008, %v806
  %v1016 = vmul.f32 %v1011, %v806
  %v1017 = vmul.f32 %v1014, %v806
  %v1018 = vmul.f32 %v1000, %v1000
  %v1019 = vmul.f32 %v1001, %v1001
  %v1020 = vmul.f32 %v1002, %v1002
  %v1021 = vsub.f32 %v1015, %v1018
  %v1022 = vsub.f32 %v1016, %v1019
  %v1023 = vsub.f32 %v1017, %v1020
  %v1024 = vadd.f32 %v1021, 1e-05
  %v1025 = vadd.f32 %v1022, 1e-05
  %v1026 = vadd.f32 %v1023, 1e-05
  %v1027 = vrsqrt.pop %v1024
  %v1028 = vmul.f32 %v1027, %v1024
  %v1029 = vmul.f32 %v1028, %v1027
  %v1030 = vmul.f32 0.5, %v1029
  %v1031 = vsub.f32 1.5, %v1030
  %v1032 = vmul.f32 %v1027, %v1031
  %vm1033 = vweird.f32 %v1024
  %vm1034 = vweird.f32 %v1027
  %vm1035 = vmor %vm1033, %vm1034
  %v1036 = vsel %vm1035, %v1027, %v1032
  %v1037 = vrsqrt.pop %v1025
  %v1038 = vmul.f32 %v1037, %v1025
  %v1039 = vmul.f32 %v1038, %v1037
  %v1040 = vmul.f32 0.5, %v1039
  %v1041 = vsub.f32 1.5, %v1040
  %v1042 = vmul.f32 %v1037, %v1041
  %vm1043 = vweird.f32 %v1025
  %vm1044 = vweird.f32 %v1037
  %vm1045 = vmor %vm1043, %vm1044
  %v1046 = vsel %vm1045, %v1037, %v1042
  %v1047 = vrsqrt.pop %v1026
  %v1048 = vmul.f32 %v1047, %v1026
  %v1049 = vmul.f32 %v1048, %v1047
  %v1050 = vmul.f32 0.5, %v1049
  %v1051 = vsub.f32 1.5, %v1050
  %v1052 = vmul.f32 %v1047, %v1051
  %vm1053 = vweird.f32 %v1026
  %vm1054 = vweird.f32 %v1047
  %vm1055 = vmor %vm1053, %vm1054
  %v1056 = vsel %vm1055, %v1047, %v1052
  %v1057 = vsub.f32 %v988, %v1000
  %v1058 = vsub.f32 %v989, %v1001
  %v1059 = vsub.f32 %v990, %v1002
  %v1060 = vmul.f32 %v1057, %v1036
  %v1061 = vmul.f32 %v1058, %v1046
  %v1062 = vmul.f32 %v1059, %v1056
  %v1063 = vld [vmem:[%s6 + $0x6] sm:$0x1]
  %v1064 = vperm.slane %v1063, 0
  %v1065 = vmul.f32 %v1060, %v1064
  %v1066 = vmul.f32 %v1061, %v1064
  %v1067 = vmul.f32 %v1062, %v1064
  %v1068 = vld [vmem:[%s6 + $0x7] sm:$0x1]
  %v1069 = vperm.slane %v1068, 0
  %v1070 = vadd.f32 %v1065, %v1069
  %v1071 = vadd.f32 %v1066, %v1069
  %v1072 = vadd.f32 %v1067, %v1069
  %v1073 = vpack.c.bf16 %v1071, %v1070
  %v1074 = vpack.c.bf16 %v1072, %v1072
  %v1075 = vld [vmem:[%s5 + $0x50] sm:$0xf]
  %v1076 = vld [vmem:[%s5 + $0x54] sm:$0xf]
  %v1077 = vld [vmem:[%s5 + $0x58] sm:$0xf]
  %v1078 = vld [vmem:[%s5 + $0x5c] sm:$0xf]
  %v1079 = vld [vmem:[%s6 + $0x8] sm:$0x1]
  %v1080 = vperm.slane %v1079, 0
  %v1085 = vunpack.c.l.b16 %v1075
  %v1086 = vunpack.c.l.b16 %v1076
  %v1087 = vunpack.c.l.b16 %v1077
  %v1088 = vunpack.c.l.b16 %v1078
  %v1089 = vpack.c.b16 %v1086, %v1085
  %v1090 = vpack.c.b16 %v1088, %v1087
  %v1094 = vsel %vm53, %v1073, 0
  %v1097 = vsel %vm53, %v1074, 0
  %1099 = vmatpush.bf16.msra.mxu0 0
  %1100 = vmatpush.bf16.msra.mxu0 0
  %1101 = vmatpush.bf16.msra.mxu0 0
  %1102 = vmatpush.bf16.msra.mxu0 0
  %1103 = vmatpush.bf16.msra.mxu0 0
  %1104 = vmatpush.bf16.msra.mxu0 0
  %1105 = vmatpush.bf16.msra.mxu0 %v1090
  %1106 = vmatpush.bf16.msra.mxu0 %v1089
  %1107 = vmatmul.bf16.gmra.mxu0 %v1094
  %v1108 = vpop.f32.mrf.mxu0
  %v1109 = vadd.f32 %v1080, %v1108
  %v1110 = vpop.f32.mrf.mxu0
  %v1111 = vadd.f32 %v1080, %v1110
  %1112 = vmatmul.bf16.gmra.mxu0 %v1097
  %v1113 = vpop.f32.mrf.mxu0
  %v1114 = vadd.f32 %v1080, %v1113
  %v1115 = vpop.f32.mrf.mxu0
  %1116 = vdwg.mxu0
  %v1117 = vld [vmem:[%s5 + $0x60] sm:$0xf]
  %v1118 = vld [vmem:[%s5 + $0x64] sm:$0xf]
  %v1119 = vld [vmem:[%s5 + $0x68] sm:$0xf]
  %v1120 = vld [vmem:[%s5 + $0x6c] sm:$0xf]
  %v1125 = vunpack.c.l.b16 %v1117
  %v1126 = vunpack.c.l.b16 %v1118
  %v1127 = vunpack.c.l.b16 %v1119
  %v1128 = vunpack.c.l.b16 %v1120
  %v1129 = vpack.c.b16 %v1126, %v1125
  %v1130 = vpack.c.b16 %v1128, %v1127
  %1133 = vmatpush.bf16.msra.mxu0 0
  %1134 = vmatpush.bf16.msra.mxu0 0
  %1135 = vmatpush.bf16.msra.mxu0 0
  %1136 = vmatpush.bf16.msra.mxu0 0
  %1137 = vmatpush.bf16.msra.mxu0 0
  %1138 = vmatpush.bf16.msra.mxu0 0
  %1139 = vmatpush.bf16.msra.mxu0 %v1130
  %1140 = vmatpush.bf16.msra.mxu0 %v1129
  %1141 = vmatmul.bf16.gmra.mxu0 %v1094
  %v1142 = vpop.f32.mrf.mxu0
  %v1143 = vadd.f32 0.0, %v1142
  %v1144 = vpop.f32.mrf.mxu0
  %v1145 = vadd.f32 0.0, %v1144
  %1146 = vmatmul.bf16.gmra.mxu0 %v1097
  %v1147 = vpop.f32.mrf.mxu0
  %v1148 = vadd.f32 0.0, %v1147
  %v1149 = vpop.f32.mrf.mxu0
  %1150 = vdwg.mxu0
  %1154 = vrot.lane.b32.xlu0 %v1109, 96
  %v1155 = vpop.permute.xlu0 %1154
  %1156 = vrot.lane.b32.xlu0 %v1111, 96
  %v1157 = vpop.permute.xlu0 %1156
  %1158 = vrot.lane.b32.xlu0 %v1114, 96
  %v1159 = vpop.permute.xlu0 %1158
  %v1160 = vsel %vm121, %v1109, 0
  %v1162 = vsel %vm121, %v1111, 0
  %v1164 = vsel %vm121, %v1114, 0
  %v1166 = vsel %vm121, %v1155, 0
  %v1168 = vsel %vm121, %v1157, 0
  %v1170 = vsel %vm121, %v1159, 0
  %1172 = vmatpush.xpose.msra.mxu0 0.0
  %1173 = vmatpush.xpose.msra.mxu0 0.0
  %1174 = vmatpush.xpose.msra.mxu0 0.0
  %1175 = vmatpush.xpose.msra.mxu0 0.0
  %1176 = vmatpush.xpose.msra.mxu0 0.0
  %1177 = vmatpush.xpose.msra.mxu0 0.0
  %1178 = vmatpush.xpose.msra.mxu0 0.0
  %1179 = vmatpush.xpose.msra.mxu0 0.0
  %1180 = vmatpush.xpose.msra.mxu0 0.0
  %1181 = vmatpush.xpose.msra.mxu0 0.0
  %1182 = vmatpush.xpose.msra.mxu0 0.0
  %1183 = vmatpush.xpose.msra.mxu0 0.0
  %1184 = vmatpush.xpose.msra.mxu0 0.0
  %1185 = vmatpush.xpose.msra.mxu0 %v1170
  %1186 = vmatpush.xpose.msra.mxu0 %v1168
  %1187 = vmatpush.xpose.msra.mxu0 %v1166
  %1188 = vmatmul.f32.gmra.mxu0 %v1160
  %v1189 = vpop.f32.mrf.mxu0
  %v1190 = vadd.f32 %v30, %v1189
  %1191 = vmatmul.f32.gmra.mxu0 %v1162
  %v1192 = vpop.f32.mrf.mxu0
  %v1193 = vadd.f32 %v31, %v1192
  %1194 = vmatmul.f32.gmra.mxu0 %v1164
  %v1195 = vpop.f32.mrf.mxu0
  %v1196 = vadd.f32 %v32, %v1195
  %1197 = vdwg.mxu0
  %v1198 = vsel %vm160, %v1190, -inf
  %1199 = vmax.xlane.f32.xlu0 %v1198
  %v1200 = vpop.xlane.xlu0 %1199
  %v1201 = vsel %vm160, %v1193, -inf
  %1202 = vmax.xlane.f32.xlu0 %v1201
  %v1203 = vpop.xlane.xlu0 %1202
  %v1204 = vsel %vm167, %v1196, -inf
  %1205 = vmax.xlane.f32.xlu0 %v1204
  %v1206 = vpop.xlane.xlu0 %1205
  %v1207 = vsub.f32 %v1190, %v1200
  %v1208 = vsub.f32 %v1193, %v1203
  %v1209 = vsub.f32 %v1196, %v1206
  %v1210 = vmul.f32 %v1207, 1.442695
  %v1211 = vpow.pop %v1210
  %v1212 = vmul.f32 %v1208, 1.442695
  %v1213 = vpow.pop %v1212
  %v1214 = vmul.f32 %v1209, 1.442695
  %v1215 = vpow.pop %v1214
  %v1216 = vsel %vm160, %v1211, 0.0
  %1217 = vadd.xlane.f32.xlu0 %v1216
  %v1218 = vpop.xlane.xlu0 %1217
  %v1219 = vsel %vm160, %v1213, 0.0
  %1220 = vadd.xlane.f32.xlu0 %v1219
  %v1221 = vpop.xlane.xlu0 %1220
  %v1222 = vsel %vm167, %v1215, 0.0
  %1223 = vadd.xlane.f32.xlu0 %v1222
  %v1224 = vpop.xlane.xlu0 %1223
  %v1225 = vrcp.pop %v1218
  %v1226 = vmul.f32 %v1218, %v1225
  %v1227 = vsub.f32 1.0, %v1226
  %v1228 = vmul.f32 %v1225, %v1227
  %v1229 = vadd.f32 %v1225, %v1228
  %vm1230 = vweird.f32 %v1218
  %vm1231 = vweird.f32 %v1225
  %vm1232 = vmor %vm1230, %vm1231
  %v1233 = vsel %vm1232, %v1225, %v1229
  %v1234 = vand.u32 2147483647, %v1218
  %vm1235 = vcmp.eq.f32.partialorder %v1234, 8.507059e+37
  %v1236 = vand.u32 %v1218, 2147483648
  %v1237 = vor.u32 1.1754944e-38, %v1236
  %v1238 = vsel %vm1235, %v1237, %v1233
  %v1239 = vmul.f32 %v1211, %v1238
  %v1240 = vrcp.pop %v1221
  %v1241 = vmul.f32 %v1221, %v1240
  %v1242 = vsub.f32 1.0, %v1241
  %v1243 = vmul.f32 %v1240, %v1242
  %v1244 = vadd.f32 %v1240, %v1243
  %vm1245 = vweird.f32 %v1221
  %vm1246 = vweird.f32 %v1240
  %vm1247 = vmor %vm1245, %vm1246
  %v1248 = vsel %vm1247, %v1240, %v1244
  %v1249 = vand.u32 2147483647, %v1221
  %vm1250 = vcmp.eq.f32.partialorder %v1249, 8.507059e+37
  %v1251 = vand.u32 %v1221, 2147483648
  %v1252 = vor.u32 1.1754944e-38, %v1251
  %v1253 = vsel %vm1250, %v1252, %v1248
  %v1254 = vmul.f32 %v1213, %v1253
  %v1255 = vrcp.pop %v1224
  %v1256 = vmul.f32 %v1224, %v1255
  %v1257 = vsub.f32 1.0, %v1256
  %v1258 = vmul.f32 %v1255, %v1257
  %v1259 = vadd.f32 %v1255, %v1258
  %vm1260 = vweird.f32 %v1224
  %vm1261 = vweird.f32 %v1255
  %vm1262 = vmor %vm1260, %vm1261
  %v1263 = vsel %vm1262, %v1255, %v1259
  %v1264 = vand.u32 2147483647, %v1224
  %vm1265 = vcmp.eq.f32.partialorder %v1264, 8.507059e+37
  %v1266 = vand.u32 %v1224, 2147483648
  %v1267 = vor.u32 1.1754944e-38, %v1266
  %v1268 = vsel %vm1265, %v1267, %v1263
  %v1269 = vmul.f32 %v1215, %v1268
  %1270 = vrot.lane.b32.xlu0 %v1109, 120
  %v1271 = vpop.permute.xlu0 %1270
  %1272 = vrot.lane.b32.xlu0 %v1111, 120
  %v1273 = vpop.permute.xlu0 %1272
  %1274 = vrot.lane.b32.xlu0 %v1114, 120
  %v1275 = vpop.permute.xlu0 %1274
  %1276 = vrot.lane.b32.xlu0 %v1109, 88
  %v1277 = vpop.permute.xlu0 %1276
  %1278 = vrot.lane.b32.xlu0 %v1111, 88
  %v1279 = vpop.permute.xlu0 %1278
  %1280 = vrot.lane.b32.xlu0 %v1114, 88
  %v1281 = vpop.permute.xlu0 %1280
  %v1282 = vsel %vm121, %v1271, 0
  %v1284 = vsel %vm121, %v1273, 0
  %v1286 = vsel %vm121, %v1275, 0
  %v1288 = vsel %vm121, %v1277, 0
  %v1290 = vsel %vm121, %v1279, 0
  %v1292 = vsel %vm121, %v1281, 0
  %1294 = vmatpush.xpose.msra.mxu0 0.0
  %1295 = vmatpush.xpose.msra.mxu0 0.0
  %1296 = vmatpush.xpose.msra.mxu0 0.0
  %1297 = vmatpush.xpose.msra.mxu0 0.0
  %1298 = vmatpush.xpose.msra.mxu0 0.0
  %1299 = vmatpush.xpose.msra.mxu0 0.0
  %1300 = vmatpush.xpose.msra.mxu0 0.0
  %1301 = vmatpush.xpose.msra.mxu0 0.0
  %1302 = vmatpush.xpose.msra.mxu0 0.0
  %1303 = vmatpush.xpose.msra.mxu0 0.0
  %1304 = vmatpush.xpose.msra.mxu0 0.0
  %1305 = vmatpush.xpose.msra.mxu0 0.0
  %1306 = vmatpush.xpose.msra.mxu0 0.0
  %1307 = vmatpush.xpose.msra.mxu0 %v1292
  %1308 = vmatpush.xpose.msra.mxu0 %v1290
  %1309 = vmatpush.xpose.msra.mxu0 %v1288
  %1310 = vmatmul.f32.gmra.mxu0 %v1282
  %v1311 = vpop.f32.mrf.mxu0
  %v1312 = vadd.f32 %v30, %v1311
  %1313 = vmatmul.f32.gmra.mxu0 %v1284
  %v1314 = vpop.f32.mrf.mxu0
  %v1315 = vadd.f32 %v31, %v1314
  %1316 = vmatmul.f32.gmra.mxu0 %v1286
  %v1317 = vpop.f32.mrf.mxu0
  %v1318 = vadd.f32 %v32, %v1317
  %1319 = vdwg.mxu0
  %v1320 = vsel %vm160, %v1312, -inf
  %1321 = vmax.xlane.f32.xlu0 %v1320
  %v1322 = vpop.xlane.xlu0 %1321
  %v1323 = vsel %vm160, %v1315, -inf
  %1324 = vmax.xlane.f32.xlu0 %v1323
  %v1325 = vpop.xlane.xlu0 %1324
  %v1326 = vsel %vm167, %v1318, -inf
  %1327 = vmax.xlane.f32.xlu0 %v1326
  %v1328 = vpop.xlane.xlu0 %1327
  %v1329 = vsub.f32 %v1312, %v1322
  %v1330 = vsub.f32 %v1315, %v1325
  %v1331 = vsub.f32 %v1318, %v1328
  %v1332 = vmul.f32 %v1329, 1.442695
  %v1333 = vpow.pop %v1332
  %v1334 = vmul.f32 %v1330, 1.442695
  %v1335 = vpow.pop %v1334
  %v1336 = vmul.f32 %v1331, 1.442695
  %v1337 = vpow.pop %v1336
  %v1338 = vsel %vm160, %v1333, 0.0
  %1339 = vadd.xlane.f32.xlu0 %v1338
  %v1340 = vpop.xlane.xlu0 %1339
  %v1341 = vsel %vm160, %v1335, 0.0
  %1342 = vadd.xlane.f32.xlu0 %v1341
  %v1343 = vpop.xlane.xlu0 %1342
  %v1344 = vsel %vm167, %v1337, 0.0
  %1345 = vadd.xlane.f32.xlu0 %v1344
  %v1346 = vpop.xlane.xlu0 %1345
  %v1347 = vrcp.pop %v1340
  %v1348 = vmul.f32 %v1340, %v1347
  %v1349 = vsub.f32 1.0, %v1348
  %v1350 = vmul.f32 %v1347, %v1349
  %v1351 = vadd.f32 %v1347, %v1350
  %vm1352 = vweird.f32 %v1340
  %vm1353 = vweird.f32 %v1347
  %vm1354 = vmor %vm1352, %vm1353
  %v1355 = vsel %vm1354, %v1347, %v1351
  %v1356 = vand.u32 2147483647, %v1340
  %vm1357 = vcmp.eq.f32.partialorder %v1356, 8.507059e+37
  %v1358 = vand.u32 %v1340, 2147483648
  %v1359 = vor.u32 1.1754944e-38, %v1358
  %v1360 = vsel %vm1357, %v1359, %v1355
  %v1361 = vmul.f32 %v1333, %v1360
  %v1362 = vrcp.pop %v1343
  %v1363 = vmul.f32 %v1343, %v1362
  %v1364 = vsub.f32 1.0, %v1363
  %v1365 = vmul.f32 %v1362, %v1364
  %v1366 = vadd.f32 %v1362, %v1365
  %vm1367 = vweird.f32 %v1343
  %vm1368 = vweird.f32 %v1362
  %vm1369 = vmor %vm1367, %vm1368
  %v1370 = vsel %vm1369, %v1362, %v1366
  %v1371 = vand.u32 2147483647, %v1343
  %vm1372 = vcmp.eq.f32.partialorder %v1371, 8.507059e+37
  %v1373 = vand.u32 %v1343, 2147483648
  %v1374 = vor.u32 1.1754944e-38, %v1373
  %v1375 = vsel %vm1372, %v1374, %v1370
  %v1376 = vmul.f32 %v1335, %v1375
  %v1377 = vrcp.pop %v1346
  %v1378 = vmul.f32 %v1346, %v1377
  %v1379 = vsub.f32 1.0, %v1378
  %v1380 = vmul.f32 %v1377, %v1379
  %v1381 = vadd.f32 %v1377, %v1380
  %vm1382 = vweird.f32 %v1346
  %vm1383 = vweird.f32 %v1377
  %vm1384 = vmor %vm1382, %vm1383
  %v1385 = vsel %vm1384, %v1377, %v1381
  %v1386 = vand.u32 2147483647, %v1346
  %vm1387 = vcmp.eq.f32.partialorder %v1386, 8.507059e+37
  %v1388 = vand.u32 %v1346, 2147483648
  %v1389 = vor.u32 1.1754944e-38, %v1388
  %v1390 = vsel %vm1387, %v1389, %v1385
  %v1391 = vmul.f32 %v1337, %v1390
  %1395 = vrot.lane.b32.xlu0 %v1143, 96
  %v1396 = vpop.permute.xlu0 %1395
  %1397 = vrot.lane.b32.xlu0 %v1145, 96
  %v1398 = vpop.permute.xlu0 %1397
  %1399 = vrot.lane.b32.xlu0 %v1148, 96
  %v1400 = vpop.permute.xlu0 %1399
  %v1404 = vsel %vm160, %v1361, 0
  %v1407 = vsel %vm160, %v1376, 0
  %v1410 = vsel %vm160, %v1391, 0
  %v1412 = vsel %vm376, %v1400, 0
  %1414 = vmatpush.msra.mxu0 0.0
  %1415 = vmatpush.msra.mxu0 0.0
  %1416 = vmatpush.msra.mxu0 0.0
  %1417 = vmatpush.msra.mxu0 0.0
  %1418 = vmatpush.msra.mxu0 0.0
  %1419 = vmatpush.msra.mxu0 0.0
  %1420 = vmatpush.msra.mxu0 0.0
  %1421 = vmatpush.msra.mxu0 0.0
  %1422 = vmatpush.msra.mxu0 0.0
  %1423 = vmatpush.msra.mxu0 0.0
  %1424 = vmatpush.msra.mxu0 0.0
  %1425 = vmatpush.msra.mxu0 0.0
  %1426 = vmatpush.msra.mxu0 0.0
  %1427 = vmatpush.msra.mxu0 %v1412
  %1428 = vmatpush.msra.mxu0 %v1398
  %1429 = vmatpush.msra.mxu0 %v1396
  %1430 = vmatmul.f32.gmra.mxu0 %v1404
  %v1431 = vpop.f32.mrf.mxu0
  %v1432 = vadd.f32 0.0, %v1431
  %1433 = vmatmul.f32.gmra.mxu0 %v1407
  %v1434 = vpop.f32.mrf.mxu0
  %v1435 = vadd.f32 0.0, %v1434
  %1436 = vmatmul.f32.gmra.mxu0 %v1410
  %v1437 = vpop.f32.mrf.mxu0
  %v1438 = vadd.f32 0.0, %v1437
  %1439 = vdwg.mxu0
  %v1441 = vsel %vm160, %v1239, 0
  %v1444 = vsel %vm160, %v1254, 0
  %v1447 = vsel %vm160, %v1269, 0
  %v1449 = vsel %vm376, %v1148, 0
  %1451 = vmatpush.msra.mxu0 0.0
  %1452 = vmatpush.msra.mxu0 0.0
  %1453 = vmatpush.msra.mxu0 0.0
  %1454 = vmatpush.msra.mxu0 0.0
  %1455 = vmatpush.msra.mxu0 0.0
  %1456 = vmatpush.msra.mxu0 0.0
  %1457 = vmatpush.msra.mxu0 0.0
  %1458 = vmatpush.msra.mxu0 0.0
  %1459 = vmatpush.msra.mxu0 0.0
  %1460 = vmatpush.msra.mxu0 0.0
  %1461 = vmatpush.msra.mxu0 0.0
  %1462 = vmatpush.msra.mxu0 0.0
  %1463 = vmatpush.msra.mxu0 0.0
  %1464 = vmatpush.msra.mxu0 %v1449
  %1465 = vmatpush.msra.mxu0 %v1145
  %1466 = vmatpush.msra.mxu0 %v1143
  %1467 = vmatmul.f32.gmra.mxu0 %v1441
  %v1468 = vpop.f32.mrf.mxu0
  %v1469 = vadd.f32 %v1432, %v1468
  %1470 = vmatmul.f32.gmra.mxu0 %v1444
  %v1471 = vpop.f32.mrf.mxu0
  %v1472 = vadd.f32 %v1435, %v1471
  %1473 = vmatmul.f32.gmra.mxu0 %v1447
  %v1474 = vpop.f32.mrf.mxu0
  %v1475 = vadd.f32 %v1438, %v1474
  %1476 = vdwg.mxu0
  %1477 = vrot.lane.b32.xlu0 %v1109, 112
  %v1478 = vpop.permute.xlu0 %1477
  %1479 = vrot.lane.b32.xlu0 %v1111, 112
  %v1480 = vpop.permute.xlu0 %1479
  %1481 = vrot.lane.b32.xlu0 %v1114, 112
  %v1482 = vpop.permute.xlu0 %1481
  %1483 = vrot.lane.b32.xlu0 %v1109, 80
  %v1484 = vpop.permute.xlu0 %1483
  %1485 = vrot.lane.b32.xlu0 %v1111, 80
  %v1486 = vpop.permute.xlu0 %1485
  %1487 = vrot.lane.b32.xlu0 %v1114, 80
  %v1488 = vpop.permute.xlu0 %1487
  %v1489 = vsel %vm121, %v1478, 0
  %v1491 = vsel %vm121, %v1480, 0
  %v1493 = vsel %vm121, %v1482, 0
  %v1495 = vsel %vm121, %v1484, 0
  %v1497 = vsel %vm121, %v1486, 0
  %v1499 = vsel %vm121, %v1488, 0
  %1501 = vmatpush.xpose.msra.mxu0 0.0
  %1502 = vmatpush.xpose.msra.mxu0 0.0
  %1503 = vmatpush.xpose.msra.mxu0 0.0
  %1504 = vmatpush.xpose.msra.mxu0 0.0
  %1505 = vmatpush.xpose.msra.mxu0 0.0
  %1506 = vmatpush.xpose.msra.mxu0 0.0
  %1507 = vmatpush.xpose.msra.mxu0 0.0
  %1508 = vmatpush.xpose.msra.mxu0 0.0
  %1509 = vmatpush.xpose.msra.mxu0 0.0
  %1510 = vmatpush.xpose.msra.mxu0 0.0
  %1511 = vmatpush.xpose.msra.mxu0 0.0
  %1512 = vmatpush.xpose.msra.mxu0 0.0
  %1513 = vmatpush.xpose.msra.mxu0 0.0
  %1514 = vmatpush.xpose.msra.mxu0 %v1499
  %1515 = vmatpush.xpose.msra.mxu0 %v1497
  %1516 = vmatpush.xpose.msra.mxu0 %v1495
  %1517 = vmatmul.f32.gmra.mxu0 %v1489
  %v1518 = vpop.f32.mrf.mxu0
  %v1519 = vadd.f32 %v30, %v1518
  %1520 = vmatmul.f32.gmra.mxu0 %v1491
  %v1521 = vpop.f32.mrf.mxu0
  %v1522 = vadd.f32 %v31, %v1521
  %1523 = vmatmul.f32.gmra.mxu0 %v1493
  %v1524 = vpop.f32.mrf.mxu0
  %v1525 = vadd.f32 %v32, %v1524
  %1526 = vdwg.mxu0
  %v1527 = vsel %vm160, %v1519, -inf
  %1528 = vmax.xlane.f32.xlu0 %v1527
  %v1529 = vpop.xlane.xlu0 %1528
  %v1530 = vsel %vm160, %v1522, -inf
  %1531 = vmax.xlane.f32.xlu0 %v1530
  %v1532 = vpop.xlane.xlu0 %1531
  %v1533 = vsel %vm167, %v1525, -inf
  %1534 = vmax.xlane.f32.xlu0 %v1533
  %v1535 = vpop.xlane.xlu0 %1534
  %v1536 = vsub.f32 %v1519, %v1529
  %v1537 = vsub.f32 %v1522, %v1532
  %v1538 = vsub.f32 %v1525, %v1535
  %v1539 = vmul.f32 %v1536, 1.442695
  %v1540 = vpow.pop %v1539
  %v1541 = vmul.f32 %v1537, 1.442695
  %v1542 = vpow.pop %v1541
  %v1543 = vmul.f32 %v1538, 1.442695
  %v1544 = vpow.pop %v1543
  %v1545 = vsel %vm160, %v1540, 0.0
  %1546 = vadd.xlane.f32.xlu0 %v1545
  %v1547 = vpop.xlane.xlu0 %1546
  %v1548 = vsel %vm160, %v1542, 0.0
  %1549 = vadd.xlane.f32.xlu0 %v1548
  %v1550 = vpop.xlane.xlu0 %1549
  %v1551 = vsel %vm167, %v1544, 0.0
  %1552 = vadd.xlane.f32.xlu0 %v1551
  %v1553 = vpop.xlane.xlu0 %1552
  %v1554 = vrcp.pop %v1547
  %v1555 = vmul.f32 %v1547, %v1554
  %v1556 = vsub.f32 1.0, %v1555
  %v1557 = vmul.f32 %v1554, %v1556
  %v1558 = vadd.f32 %v1554, %v1557
  %vm1559 = vweird.f32 %v1547
  %vm1560 = vweird.f32 %v1554
  %vm1561 = vmor %vm1559, %vm1560
  %v1562 = vsel %vm1561, %v1554, %v1558
  %v1563 = vand.u32 2147483647, %v1547
  %vm1564 = vcmp.eq.f32.partialorder %v1563, 8.507059e+37
  %v1565 = vand.u32 %v1547, 2147483648
  %v1566 = vor.u32 1.1754944e-38, %v1565
  %v1567 = vsel %vm1564, %v1566, %v1562
  %v1568 = vmul.f32 %v1540, %v1567
  %v1569 = vrcp.pop %v1550
  %v1570 = vmul.f32 %v1550, %v1569
  %v1571 = vsub.f32 1.0, %v1570
  %v1572 = vmul.f32 %v1569, %v1571
  %v1573 = vadd.f32 %v1569, %v1572
  %vm1574 = vweird.f32 %v1550
  %vm1575 = vweird.f32 %v1569
  %vm1576 = vmor %vm1574, %vm1575
  %v1577 = vsel %vm1576, %v1569, %v1573
  %v1578 = vand.u32 2147483647, %v1550
  %vm1579 = vcmp.eq.f32.partialorder %v1578, 8.507059e+37
  %v1580 = vand.u32 %v1550, 2147483648
  %v1581 = vor.u32 1.1754944e-38, %v1580
  %v1582 = vsel %vm1579, %v1581, %v1577
  %v1583 = vmul.f32 %v1542, %v1582
  %v1584 = vrcp.pop %v1553
  %v1585 = vmul.f32 %v1553, %v1584
  %v1586 = vsub.f32 1.0, %v1585
  %v1587 = vmul.f32 %v1584, %v1586
  %v1588 = vadd.f32 %v1584, %v1587
  %vm1589 = vweird.f32 %v1553
  %vm1590 = vweird.f32 %v1584
  %vm1591 = vmor %vm1589, %vm1590
  %v1592 = vsel %vm1591, %v1584, %v1588
  %v1593 = vand.u32 2147483647, %v1553
  %vm1594 = vcmp.eq.f32.partialorder %v1593, 8.507059e+37
  %v1595 = vand.u32 %v1553, 2147483648
  %v1596 = vor.u32 1.1754944e-38, %v1595
  %v1597 = vsel %vm1594, %v1596, %v1592
  %v1598 = vmul.f32 %v1544, %v1597
  %1599 = vrot.lane.b32.xlu0 %v1143, 64
  %v1600 = vpop.permute.xlu0 %1599
  %1601 = vrot.lane.b32.xlu0 %v1145, 64
  %v1602 = vpop.permute.xlu0 %1601
  %1603 = vrot.lane.b32.xlu0 %v1148, 64
  %v1604 = vpop.permute.xlu0 %1603
  %v1608 = vsel %vm160, %v1568, 0
  %v1611 = vsel %vm160, %v1583, 0
  %v1614 = vsel %vm160, %v1598, 0
  %v1616 = vsel %vm376, %v1604, 0
  %1618 = vmatpush.msra.mxu0 0.0
  %1619 = vmatpush.msra.mxu0 0.0
  %1620 = vmatpush.msra.mxu0 0.0
  %1621 = vmatpush.msra.mxu0 0.0
  %1622 = vmatpush.msra.mxu0 0.0
  %1623 = vmatpush.msra.mxu0 0.0
  %1624 = vmatpush.msra.mxu0 0.0
  %1625 = vmatpush.msra.mxu0 0.0
  %1626 = vmatpush.msra.mxu0 0.0
  %1627 = vmatpush.msra.mxu0 0.0
  %1628 = vmatpush.msra.mxu0 0.0
  %1629 = vmatpush.msra.mxu0 0.0
  %1630 = vmatpush.msra.mxu0 0.0
  %1631 = vmatpush.msra.mxu0 %v1616
  %1632 = vmatpush.msra.mxu0 %v1602
  %1633 = vmatpush.msra.mxu0 %v1600
  %1634 = vmatmul.f32.gmra.mxu0 %v1608
  %v1635 = vpop.f32.mrf.mxu0
  %v1636 = vadd.f32 0.0, %v1635
  %1637 = vmatmul.f32.gmra.mxu0 %v1611
  %v1638 = vpop.f32.mrf.mxu0
  %v1639 = vadd.f32 0.0, %v1638
  %1640 = vmatmul.f32.gmra.mxu0 %v1614
  %v1641 = vpop.f32.mrf.mxu0
  %v1642 = vadd.f32 0.0, %v1641
  %1643 = vdwg.mxu0
  %v1644 = vadd.f32 %v1469, %v1636
  %v1645 = vadd.f32 %v1472, %v1639
  %v1646 = vadd.f32 %v1475, %v1642
  %1647 = vrot.lane.b32.xlu0 %v1109, 104
  %v1648 = vpop.permute.xlu0 %1647
  %1649 = vrot.lane.b32.xlu0 %v1111, 104
  %v1650 = vpop.permute.xlu0 %1649
  %1651 = vrot.lane.b32.xlu0 %v1114, 104
  %v1652 = vpop.permute.xlu0 %1651
  %1653 = vrot.lane.b32.xlu0 %v1109, 72
  %v1654 = vpop.permute.xlu0 %1653
  %1655 = vrot.lane.b32.xlu0 %v1111, 72
  %v1656 = vpop.permute.xlu0 %1655
  %1657 = vrot.lane.b32.xlu0 %v1114, 72
  %v1658 = vpop.permute.xlu0 %1657
  %v1659 = vsel %vm121, %v1648, 0
  %v1661 = vsel %vm121, %v1650, 0
  %v1663 = vsel %vm121, %v1652, 0
  %v1665 = vsel %vm121, %v1654, 0
  %v1667 = vsel %vm121, %v1656, 0
  %v1669 = vsel %vm121, %v1658, 0
  %1671 = vmatpush.xpose.msra.mxu0 0.0
  %1672 = vmatpush.xpose.msra.mxu0 0.0
  %1673 = vmatpush.xpose.msra.mxu0 0.0
  %1674 = vmatpush.xpose.msra.mxu0 0.0
  %1675 = vmatpush.xpose.msra.mxu0 0.0
  %1676 = vmatpush.xpose.msra.mxu0 0.0
  %1677 = vmatpush.xpose.msra.mxu0 0.0
  %1678 = vmatpush.xpose.msra.mxu0 0.0
  %1679 = vmatpush.xpose.msra.mxu0 0.0
  %1680 = vmatpush.xpose.msra.mxu0 0.0
  %1681 = vmatpush.xpose.msra.mxu0 0.0
  %1682 = vmatpush.xpose.msra.mxu0 0.0
  %1683 = vmatpush.xpose.msra.mxu0 0.0
  %1684 = vmatpush.xpose.msra.mxu0 %v1669
  %1685 = vmatpush.xpose.msra.mxu0 %v1667
  %1686 = vmatpush.xpose.msra.mxu0 %v1665
  %1687 = vmatmul.f32.gmra.mxu0 %v1659
  %v1688 = vpop.f32.mrf.mxu0
  %v1689 = vadd.f32 %v30, %v1688
  %1690 = vmatmul.f32.gmra.mxu0 %v1661
  %v1691 = vpop.f32.mrf.mxu0
  %v1692 = vadd.f32 %v31, %v1691
  %1693 = vmatmul.f32.gmra.mxu0 %v1663
  %v1694 = vpop.f32.mrf.mxu0
  %v1695 = vadd.f32 %v32, %v1694
  %1696 = vdwg.mxu0
  %v1697 = vsel %vm160, %v1689, -inf
  %1698 = vmax.xlane.f32.xlu0 %v1697
  %v1699 = vpop.xlane.xlu0 %1698
  %v1700 = vsel %vm160, %v1692, -inf
  %1701 = vmax.xlane.f32.xlu0 %v1700
  %v1702 = vpop.xlane.xlu0 %1701
  %v1703 = vsel %vm167, %v1695, -inf
  %1704 = vmax.xlane.f32.xlu0 %v1703
  %v1705 = vpop.xlane.xlu0 %1704
  %v1706 = vsub.f32 %v1689, %v1699
  %v1707 = vsub.f32 %v1692, %v1702
  %v1708 = vsub.f32 %v1695, %v1705
  %v1709 = vmul.f32 %v1706, 1.442695
  %v1710 = vpow.pop %v1709
  %v1711 = vmul.f32 %v1707, 1.442695
  %v1712 = vpow.pop %v1711
  %v1713 = vmul.f32 %v1708, 1.442695
  %v1714 = vpow.pop %v1713
  %v1715 = vsel %vm160, %v1710, 0.0
  %1716 = vadd.xlane.f32.xlu0 %v1715
  %v1717 = vpop.xlane.xlu0 %1716
  %v1718 = vsel %vm160, %v1712, 0.0
  %1719 = vadd.xlane.f32.xlu0 %v1718
  %v1720 = vpop.xlane.xlu0 %1719
  %v1721 = vsel %vm167, %v1714, 0.0
  %1722 = vadd.xlane.f32.xlu0 %v1721
  %v1723 = vpop.xlane.xlu0 %1722
  %v1724 = vrcp.pop %v1717
  %v1725 = vmul.f32 %v1717, %v1724
  %v1726 = vsub.f32 1.0, %v1725
  %v1727 = vmul.f32 %v1724, %v1726
  %v1728 = vadd.f32 %v1724, %v1727
  %vm1729 = vweird.f32 %v1717
  %vm1730 = vweird.f32 %v1724
  %vm1731 = vmor %vm1729, %vm1730
  %v1732 = vsel %vm1731, %v1724, %v1728
  %v1733 = vand.u32 2147483647, %v1717
  %vm1734 = vcmp.eq.f32.partialorder %v1733, 8.507059e+37
  %v1735 = vand.u32 %v1717, 2147483648
  %v1736 = vor.u32 1.1754944e-38, %v1735
  %v1737 = vsel %vm1734, %v1736, %v1732
  %v1738 = vmul.f32 %v1710, %v1737
  %v1739 = vrcp.pop %v1720
  %v1740 = vmul.f32 %v1720, %v1739
  %v1741 = vsub.f32 1.0, %v1740
  %v1742 = vmul.f32 %v1739, %v1741
  %v1743 = vadd.f32 %v1739, %v1742
  %vm1744 = vweird.f32 %v1720
  %vm1745 = vweird.f32 %v1739
  %vm1746 = vmor %vm1744, %vm1745
  %v1747 = vsel %vm1746, %v1739, %v1743
  %v1748 = vand.u32 2147483647, %v1720
  %vm1749 = vcmp.eq.f32.partialorder %v1748, 8.507059e+37
  %v1750 = vand.u32 %v1720, 2147483648
  %v1751 = vor.u32 1.1754944e-38, %v1750
  %v1752 = vsel %vm1749, %v1751, %v1747
  %v1753 = vmul.f32 %v1712, %v1752
  %v1754 = vrcp.pop %v1723
  %v1755 = vmul.f32 %v1723, %v1754
  %v1756 = vsub.f32 1.0, %v1755
  %v1757 = vmul.f32 %v1754, %v1756
  %v1758 = vadd.f32 %v1754, %v1757
  %vm1759 = vweird.f32 %v1723
  %vm1760 = vweird.f32 %v1754
  %vm1761 = vmor %vm1759, %vm1760
  %v1762 = vsel %vm1761, %v1754, %v1758
  %v1763 = vand.u32 2147483647, %v1723
  %vm1764 = vcmp.eq.f32.partialorder %v1763, 8.507059e+37
  %v1765 = vand.u32 %v1723, 2147483648
  %v1766 = vor.u32 1.1754944e-38, %v1765
  %v1767 = vsel %vm1764, %v1766, %v1762
  %v1768 = vmul.f32 %v1714, %v1767
  %1769 = vrot.lane.b32.xlu0 %v1143, 32
  %v1770 = vpop.permute.xlu0 %1769
  %1771 = vrot.lane.b32.xlu0 %v1145, 32
  %v1772 = vpop.permute.xlu0 %1771
  %1773 = vrot.lane.b32.xlu0 %v1148, 32
  %v1774 = vpop.permute.xlu0 %1773
  %v1778 = vsel %vm160, %v1738, 0
  %v1781 = vsel %vm160, %v1753, 0
  %v1784 = vsel %vm160, %v1768, 0
  %v1786 = vsel %vm376, %v1774, 0
  %1788 = vmatpush.msra.mxu0 0.0
  %1789 = vmatpush.msra.mxu0 0.0
  %1790 = vmatpush.msra.mxu0 0.0
  %1791 = vmatpush.msra.mxu0 0.0
  %1792 = vmatpush.msra.mxu0 0.0
  %1793 = vmatpush.msra.mxu0 0.0
  %1794 = vmatpush.msra.mxu0 0.0
  %1795 = vmatpush.msra.mxu0 0.0
  %1796 = vmatpush.msra.mxu0 0.0
  %1797 = vmatpush.msra.mxu0 0.0
  %1798 = vmatpush.msra.mxu0 0.0
  %1799 = vmatpush.msra.mxu0 0.0
  %1800 = vmatpush.msra.mxu0 0.0
  %1801 = vmatpush.msra.mxu0 %v1786
  %1802 = vmatpush.msra.mxu0 %v1772
  %1803 = vmatpush.msra.mxu0 %v1770
  %1804 = vmatmul.f32.gmra.mxu0 %v1778
  %v1805 = vpop.f32.mrf.mxu0
  %v1806 = vadd.f32 0.0, %v1805
  %1807 = vmatmul.f32.gmra.mxu0 %v1781
  %v1808 = vpop.f32.mrf.mxu0
  %v1809 = vadd.f32 0.0, %v1808
  %1810 = vmatmul.f32.gmra.mxu0 %v1784
  %v1811 = vpop.f32.mrf.mxu0
  %v1812 = vadd.f32 0.0, %v1811
  %1813 = vdwg.mxu0
  %v1814 = vadd.f32 %v1644, %v1806
  %v1815 = vadd.f32 %v1645, %v1809
  %v1816 = vadd.f32 %v1646, %v1812
  %v1817 = vld [vmem:[%s6 + $0x9] sm:$0x1]
  %v1818 = vperm.slane %v1817, 0
  %v1819 = vadd.f32 %v1814, %v1818
  %v1820 = vadd.f32 %v1815, %v1818
  %v1821 = vadd.f32 %v1816, %v1818
  %v1822 = vadd.f32 %v1070, %v1819
  %v1823 = vadd.f32 %v1071, %v1820
  %v1824 = vadd.f32 %v1072, %v1821
  %v1825 = vsel %vm53, %v1822, 0.0
  %1826 = vadd.xlane.f32.xlu0 %v1825
  %v1827 = vpop.xlane.xlu0 %1826
  %v1828 = vsel %vm53, %v1823, 0.0
  %1829 = vadd.xlane.f32.xlu0 %v1828
  %v1830 = vpop.xlane.xlu0 %1829
  %v1831 = vsel %vm796, %v1824, 0.0
  %1832 = vadd.xlane.f32.xlu0 %v1831
  %v1833 = vpop.xlane.xlu0 %1832
  %v1834 = vmul.f32 %v1827, %v806
  %v1835 = vmul.f32 %v1830, %v806
  %v1836 = vmul.f32 %v1833, %v806
  %v1837 = vmul.f32 %v1822, %v1822
  %v1838 = vmul.f32 %v1823, %v1823
  %v1839 = vmul.f32 %v1824, %v1824
  %v1840 = vsel %vm53, %v1837, 0.0
  %1841 = vadd.xlane.f32.xlu0 %v1840
  %v1842 = vpop.xlane.xlu0 %1841
  %v1843 = vsel %vm53, %v1838, 0.0
  %1844 = vadd.xlane.f32.xlu0 %v1843
  %v1845 = vpop.xlane.xlu0 %1844
  %v1846 = vsel %vm796, %v1839, 0.0
  %1847 = vadd.xlane.f32.xlu0 %v1846
  %v1848 = vpop.xlane.xlu0 %1847
  %v1849 = vmul.f32 %v1842, %v806
  %v1850 = vmul.f32 %v1845, %v806
  %v1851 = vmul.f32 %v1848, %v806
  %v1852 = vmul.f32 %v1834, %v1834
  %v1853 = vmul.f32 %v1835, %v1835
  %v1854 = vmul.f32 %v1836, %v1836
  %v1855 = vsub.f32 %v1849, %v1852
  %v1856 = vsub.f32 %v1850, %v1853
  %v1857 = vsub.f32 %v1851, %v1854
  %v1858 = vadd.f32 %v1855, 1e-05
  %v1859 = vadd.f32 %v1856, 1e-05
  %v1860 = vadd.f32 %v1857, 1e-05
  %v1861 = vrsqrt.pop %v1858
  %v1862 = vmul.f32 %v1861, %v1858
  %v1863 = vmul.f32 %v1862, %v1861
  %v1864 = vmul.f32 0.5, %v1863
  %v1865 = vsub.f32 1.5, %v1864
  %v1866 = vmul.f32 %v1861, %v1865
  %vm1867 = vweird.f32 %v1858
  %vm1868 = vweird.f32 %v1861
  %vm1869 = vmor %vm1867, %vm1868
  %v1870 = vsel %vm1869, %v1861, %v1866
  %v1871 = vrsqrt.pop %v1859
  %v1872 = vmul.f32 %v1871, %v1859
  %v1873 = vmul.f32 %v1872, %v1871
  %v1874 = vmul.f32 0.5, %v1873
  %v1875 = vsub.f32 1.5, %v1874
  %v1876 = vmul.f32 %v1871, %v1875
  %vm1877 = vweird.f32 %v1859
  %vm1878 = vweird.f32 %v1871
  %vm1879 = vmor %vm1877, %vm1878
  %v1880 = vsel %vm1879, %v1871, %v1876
  %v1881 = vrsqrt.pop %v1860
  %v1882 = vmul.f32 %v1881, %v1860
  %v1883 = vmul.f32 %v1882, %v1881
  %v1884 = vmul.f32 0.5, %v1883
  %v1885 = vsub.f32 1.5, %v1884
  %v1886 = vmul.f32 %v1881, %v1885
  %vm1887 = vweird.f32 %v1860
  %vm1888 = vweird.f32 %v1881
  %vm1889 = vmor %vm1887, %vm1888
  %v1890 = vsel %vm1889, %v1881, %v1886
  %v1891 = vsub.f32 %v1822, %v1834
  %v1892 = vsub.f32 %v1823, %v1835
  %v1893 = vsub.f32 %v1824, %v1836
  %v1894 = vmul.f32 %v1891, %v1870
  %v1895 = vmul.f32 %v1892, %v1880
  %v1896 = vmul.f32 %v1893, %v1890
  %v1897 = vld [vmem:[%s6 + $0xc] sm:$0x1]
  %v1898 = vperm.slane %v1897, 0
  %v1899 = vmul.f32 %v1894, %v1898
  %v1900 = vmul.f32 %v1895, %v1898
  %v1901 = vmul.f32 %v1896, %v1898
  %v1902 = vld [vmem:[%s6 + $0xd] sm:$0x1]
  %v1903 = vperm.slane %v1902, 0
  %v1904 = vadd.f32 %v1899, %v1903
  %v1905 = vadd.f32 %v1900, %v1903
  %v1906 = vadd.f32 %v1901, %v1903
  %v1907 = vpack.c.bf16 %v1905, %v1904
  %v1908 = vpack.c.bf16 %v1906, %v1906
  %v1909 = vld [vmem:[%s5 + $0x70] sm:$0xf]
  %v1910 = vld [vmem:[%s5 + $0x74] sm:$0xf]
  %v1911 = vld [vmem:[%s5 + $0x78] sm:$0xf]
  %v1912 = vld [vmem:[%s5 + $0x7c] sm:$0xf]
  %v1913 = vld [vmem:[%s6 + $0xa] sm:$0x1]
  %v1914 = vperm.slane %v1913, 0
  %v1919 = vunpack.c.l.b16 %v1909
  %v1920 = vunpack.c.l.b16 %v1910
  %v1921 = vunpack.c.l.b16 %v1911
  %v1922 = vunpack.c.l.b16 %v1912
  %v1923 = vpack.c.b16 %v1920, %v1919
  %v1924 = vpack.c.b16 %v1922, %v1921
  %v1928 = vsel %vm53, %v1907, 0
  %v1931 = vsel %vm53, %v1908, 0
  %1933 = vmatpush.bf16.msra.mxu0 0
  %1934 = vmatpush.bf16.msra.mxu0 0
  %1935 = vmatpush.bf16.msra.mxu0 0
  %1936 = vmatpush.bf16.msra.mxu0 0
  %1937 = vmatpush.bf16.msra.mxu0 0
  %1938 = vmatpush.bf16.msra.mxu0 0
  %1939 = vmatpush.bf16.msra.mxu0 %v1924
  %1940 = vmatpush.bf16.msra.mxu0 %v1923
  %1941 = vmatmul.bf16.gmra.mxu0 %v1928
  %v1942 = vpop.f32.mrf.mxu0
  %v1943 = vadd.f32 %v1914, %v1942
  %v1944 = vpop.f32.mrf.mxu0
  %v1945 = vadd.f32 %v1914, %v1944
  %1946 = vmatmul.bf16.gmra.mxu0 %v1931
  %v1947 = vpop.f32.mrf.mxu0
  %v1948 = vadd.f32 %v1914, %v1947
  %v1949 = vpop.f32.mrf.mxu0
  %1950 = vdwg.mxu0
  %v1951 = vmax.f32 %v1943, 0.0
  %v1952 = vmax.f32 %v1945, 0.0
  %v1953 = vmax.f32 %v1948, 0.0
  %v1954 = vpack.c.bf16 %v1952, %v1951
  %v1955 = vpack.c.bf16 %v1953, %v1953
  %v1956 = vld [vmem:[%s5 + $0x80] sm:$0xf]
  %v1957 = vld [vmem:[%s5 + $0x84] sm:$0xf]
  %v1958 = vld [vmem:[%s5 + $0x88] sm:$0xf]
  %v1959 = vld [vmem:[%s5 + $0x8c] sm:$0xf]
  %v1960 = vld [vmem:[%s5 + $0x90] sm:$0xf]
  %v1961 = vld [vmem:[%s5 + $0x94] sm:$0xf]
  %v1962 = vld [vmem:[%s5 + $0x98] sm:$0xf]
  %v1963 = vld [vmem:[%s5 + $0x9c] sm:$0xf]
  %v1964 = vld [vmem:[%s6 + $0xb] sm:$0x1]
  %v1965 = vperm.slane %v1964, 0
  %v1974 = vunpack.c.l.b16 %v1956
  %v1975 = vunpack.c.l.b16 %v1957
  %v1976 = vunpack.c.l.b16 %v1958
  %v1977 = vunpack.c.l.b16 %v1959
  %v1978 = vunpack.c.l.b16 %v1960
  %v1979 = vunpack.c.l.b16 %v1961
  %v1980 = vunpack.c.l.b16 %v1962
  %v1981 = vunpack.c.l.b16 %v1963
  %v1982 = vpack.c.b16 %v1975, %v1974
  %v1983 = vpack.c.b16 %v1977, %v1976
  %v1984 = vpack.c.b16 %v1979, %v1978
  %v1985 = vpack.c.b16 %v1981, %v1980
  %v1991 = vsel %vm963, %v1954, 0
  %v1994 = vsel %vm963, %v1955, 0
  %1996 = vmatpush.bf16.msra.mxu0 0
  %1997 = vmatpush.bf16.msra.mxu0 0
  %1998 = vmatpush.bf16.msra.mxu0 0
  %1999 = vmatpush.bf16.msra.mxu0 0
  %2000 = vmatpush.bf16.msra.mxu0 %v1985
  %2001 = vmatpush.bf16.msra.mxu0 %v1984
  %2002 = vmatpush.bf16.msra.mxu0 %v1983
  %2003 = vmatpush.bf16.msra.mxu0 %v1982
  %2004 = vmatmul.bf16.gmra.mxu0 %v1991
  %v2005 = vpop.f32.mrf.mxu0
  %v2006 = vadd.f32 %v1965, %v2005
  %v2007 = vpop.f32.mrf.mxu0
  %v2008 = vadd.f32 %v1965, %v2007
  %2009 = vmatmul.bf16.gmra.mxu0 %v1994
  %v2010 = vpop.f32.mrf.mxu0
  %v2011 = vadd.f32 %v1965, %v2010
  %v2012 = vpop.f32.mrf.mxu0
  %2013 = vdwg.mxu0
  %v2014 = vadd.f32 %v1904, %v2006
  %v2015 = vadd.f32 %v1905, %v2008
  %v2016 = vadd.f32 %v1906, %v2011
  %v2017 = vsel %vm53, %v2014, 0.0
  %2018 = vadd.xlane.f32.xlu0 %v2017
  %v2019 = vpop.xlane.xlu0 %2018
  %v2020 = vsel %vm53, %v2015, 0.0
  %2021 = vadd.xlane.f32.xlu0 %v2020
  %v2022 = vpop.xlane.xlu0 %2021
  %v2023 = vsel %vm796, %v2016, 0.0
  %2024 = vadd.xlane.f32.xlu0 %v2023
  %v2025 = vpop.xlane.xlu0 %2024
  %v2026 = vmul.f32 %v2019, %v806
  %v2027 = vmul.f32 %v2022, %v806
  %v2028 = vmul.f32 %v2025, %v806
  %v2029 = vmul.f32 %v2014, %v2014
  %v2030 = vmul.f32 %v2015, %v2015
  %v2031 = vmul.f32 %v2016, %v2016
  %v2032 = vsel %vm53, %v2029, 0.0
  %2033 = vadd.xlane.f32.xlu0 %v2032
  %v2034 = vpop.xlane.xlu0 %2033
  %v2035 = vsel %vm53, %v2030, 0.0
  %2036 = vadd.xlane.f32.xlu0 %v2035
  %v2037 = vpop.xlane.xlu0 %2036
  %v2038 = vsel %vm796, %v2031, 0.0
  %2039 = vadd.xlane.f32.xlu0 %v2038
  %v2040 = vpop.xlane.xlu0 %2039
  %v2041 = vmul.f32 %v2034, %v806
  %v2042 = vmul.f32 %v2037, %v806
  %v2043 = vmul.f32 %v2040, %v806
  %v2044 = vmul.f32 %v2026, %v2026
  %v2045 = vmul.f32 %v2027, %v2027
  %v2046 = vmul.f32 %v2028, %v2028
  %v2047 = vsub.f32 %v2041, %v2044
  %v2048 = vsub.f32 %v2042, %v2045
  %v2049 = vsub.f32 %v2043, %v2046
  %v2050 = vadd.f32 %v2047, 1e-05
  %v2051 = vadd.f32 %v2048, 1e-05
  %v2052 = vadd.f32 %v2049, 1e-05
  %v2053 = vrsqrt.pop %v2050
  %v2054 = vmul.f32 %v2053, %v2050
  %v2055 = vmul.f32 %v2054, %v2053
  %v2056 = vmul.f32 0.5, %v2055
  %v2057 = vsub.f32 1.5, %v2056
  %v2058 = vmul.f32 %v2053, %v2057
  %vm2059 = vweird.f32 %v2050
  %vm2060 = vweird.f32 %v2053
  %vm2061 = vmor %vm2059, %vm2060
  %v2062 = vsel %vm2061, %v2053, %v2058
  %v2063 = vrsqrt.pop %v2051
  %v2064 = vmul.f32 %v2063, %v2051
  %v2065 = vmul.f32 %v2064, %v2063
  %v2066 = vmul.f32 0.5, %v2065
  %v2067 = vsub.f32 1.5, %v2066
  %v2068 = vmul.f32 %v2063, %v2067
  %vm2069 = vweird.f32 %v2051
  %vm2070 = vweird.f32 %v2063
  %vm2071 = vmor %vm2069, %vm2070
  %v2072 = vsel %vm2071, %v2063, %v2068
  %v2073 = vrsqrt.pop %v2052
  %v2074 = vmul.f32 %v2073, %v2052
  %v2075 = vmul.f32 %v2074, %v2073
  %v2076 = vmul.f32 0.5, %v2075
  %v2077 = vsub.f32 1.5, %v2076
  %v2078 = vmul.f32 %v2073, %v2077
  %vm2079 = vweird.f32 %v2052
  %vm2080 = vweird.f32 %v2073
  %vm2081 = vmor %vm2079, %vm2080
  %v2082 = vsel %vm2081, %v2073, %v2078
  %v2083 = vsub.f32 %v2014, %v2026
  %v2084 = vsub.f32 %v2015, %v2027
  %v2085 = vsub.f32 %v2016, %v2028
  %v2086 = vmul.f32 %v2083, %v2062
  %v2087 = vmul.f32 %v2084, %v2072
  %v2088 = vmul.f32 %v2085, %v2082
  %v2089 = vld [vmem:[%s6 + $0xe] sm:$0x1]
  %v2090 = vperm.slane %v2089, 0
  %v2091 = vmul.f32 %v2086, %v2090
  %v2092 = vmul.f32 %v2087, %v2090
  %v2093 = vmul.f32 %v2088, %v2090
  %v2094 = vld [vmem:[%s6 + $0xf] sm:$0x1]
  %v2095 = vperm.slane %v2094, 0
  %v2096 = vadd.f32 %v2091, %v2095
  %v2097 = vadd.f32 %v2092, %v2095
  %v2098 = vadd.f32 %v2093, %v2095
  %v2099 = vsel %vm53, %v2096, 0.0
  %2100 = vadd.xlane.f32.xlu0 %v2099
  %v2101 = vpop.xlane.xlu0 %2100
  %v2102 = vsel %vm53, %v2097, 0.0
  %2103 = vadd.xlane.f32.xlu0 %v2102
  %v2104 = vpop.xlane.xlu0 %2103
  %v2105 = vsel %vm796, %v2098, 0.0
  %2106 = vadd.xlane.f32.xlu0 %v2105
  %v2107 = vpop.xlane.xlu0 %2106
  %v2108 = vmul.f32 %v2101, %v806
  %v2109 = vmul.f32 %v2104, %v806
  %v2110 = vmul.f32 %v2107, %v806
  %v2111 = vmul.f32 %v2096, %v2096
  %v2112 = vmul.f32 %v2097, %v2097
  %v2113 = vmul.f32 %v2098, %v2098
  %v2114 = vsel %vm53, %v2111, 0.0
  %2115 = vadd.xlane.f32.xlu0 %v2114
  %v2116 = vpop.xlane.xlu0 %2115
  %v2117 = vsel %vm53, %v2112, 0.0
  %2118 = vadd.xlane.f32.xlu0 %v2117
  %v2119 = vpop.xlane.xlu0 %2118
  %v2120 = vsel %vm796, %v2113, 0.0
  %2121 = vadd.xlane.f32.xlu0 %v2120
  %v2122 = vpop.xlane.xlu0 %2121
  %v2123 = vmul.f32 %v2116, %v806
  %v2124 = vmul.f32 %v2119, %v806
  %v2125 = vmul.f32 %v2122, %v806
  %v2126 = vmul.f32 %v2108, %v2108
  %v2127 = vmul.f32 %v2109, %v2109
  %v2128 = vmul.f32 %v2110, %v2110
  %v2129 = vsub.f32 %v2123, %v2126
  %v2130 = vsub.f32 %v2124, %v2127
  %v2131 = vsub.f32 %v2125, %v2128
  %v2132 = vadd.f32 %v2129, 1e-05
  %v2133 = vadd.f32 %v2130, 1e-05
  %v2134 = vadd.f32 %v2131, 1e-05
  %v2135 = vrsqrt.pop %v2132
  %v2136 = vmul.f32 %v2135, %v2132
  %v2137 = vmul.f32 %v2136, %v2135
  %v2138 = vmul.f32 0.5, %v2137
  %v2139 = vsub.f32 1.5, %v2138
  %v2140 = vmul.f32 %v2135, %v2139
  %vm2141 = vweird.f32 %v2132
  %vm2142 = vweird.f32 %v2135
  %vm2143 = vmor %vm2141, %vm2142
  %v2144 = vsel %vm2143, %v2135, %v2140
  %v2145 = vrsqrt.pop %v2133
  %v2146 = vmul.f32 %v2145, %v2133
  %v2147 = vmul.f32 %v2146, %v2145
  %v2148 = vmul.f32 0.5, %v2147
  %v2149 = vsub.f32 1.5, %v2148
  %v2150 = vmul.f32 %v2145, %v2149
  %vm2151 = vweird.f32 %v2133
  %vm2152 = vweird.f32 %v2145
  %vm2153 = vmor %vm2151, %vm2152
  %v2154 = vsel %vm2153, %v2145, %v2150
  %v2155 = vrsqrt.pop %v2134
  %v2156 = vmul.f32 %v2155, %v2134
  %v2157 = vmul.f32 %v2156, %v2155
  %v2158 = vmul.f32 0.5, %v2157
  %v2159 = vsub.f32 1.5, %v2158
  %v2160 = vmul.f32 %v2155, %v2159
  %vm2161 = vweird.f32 %v2134
  %vm2162 = vweird.f32 %v2155
  %vm2163 = vmor %vm2161, %vm2162
  %v2164 = vsel %vm2163, %v2155, %v2160
  %v2165 = vsub.f32 %v2096, %v2108
  %v2166 = vsub.f32 %v2097, %v2109
  %v2167 = vsub.f32 %v2098, %v2110
  %v2168 = vmul.f32 %v2165, %v2144
  %v2169 = vmul.f32 %v2166, %v2154
  %v2170 = vmul.f32 %v2167, %v2164
  %v2171 = vld [vmem:[%s6 + $0x2a] sm:$0x1]
  %v2172 = vperm.slane %v2171, 0
  %v2173 = vmul.f32 %v2168, %v2172
  %v2174 = vmul.f32 %v2169, %v2172
  %v2175 = vmul.f32 %v2170, %v2172
  %v2176 = vld [vmem:[%s6 + $0x2b] sm:$0x1]
  %v2177 = vperm.slane %v2176, 0
  %v2178 = vadd.f32 %v2173, %v2177
  %v2179 = vadd.f32 %v2174, %v2177
  %v2180 = vadd.f32 %v2175, %v2177
  %v2181 = vpack.c.bf16 %v2179, %v2178
  %v2182 = vpack.c.bf16 %v2180, %v2180
  %v2183 = vld [vmem:[%s1] sm:$0xff]
  %v2184 = vld [vmem:[%s1 + $0x8] sm:$0xff]
  %v2185 = vld [vmem:[%s3] sm:$0xff]
  %v2186 = vld [vmem:[%s3 + $0x8] sm:$0xff]
  %v2187 = vld [vmem:[%s4] sm:$0xff]
  %v2188 = vld [vmem:[%s4 + $0x8] sm:$0xff]
  %v2189 = vpack.c.bf16 %v2184, %v2183
  %v2190 = vld [vmem:[%s5 + $0xa0] sm:$0xf]
  %v2191 = vld [vmem:[%s5 + $0xa4] sm:$0xf]
  %v2192 = vld [vmem:[%s5 + $0xa8] sm:$0xf]
  %v2193 = vld [vmem:[%s5 + $0xac] sm:$0xf]
  %v2194 = vld [vmem:[%s6 + $0x10] sm:$0x1]
  %v2195 = vperm.slane %v2194, 0
  %v2200 = vunpack.c.l.b16 %v2190
  %v2201 = vunpack.c.l.b16 %v2191
  %v2202 = vunpack.c.l.b16 %v2192
  %v2203 = vunpack.c.l.b16 %v2193
  %v2204 = vpack.c.b16 %v2201, %v2200
  %v2205 = vpack.c.b16 %v2203, %v2202
  %v2209 = vsel %vm53, %v2189, 0
  %2211 = vmatpush.bf16.msra.mxu0 0
  %2212 = vmatpush.bf16.msra.mxu0 0
  %2213 = vmatpush.bf16.msra.mxu0 0
  %2214 = vmatpush.bf16.msra.mxu0 0
  %2215 = vmatpush.bf16.msra.mxu0 0
  %2216 = vmatpush.bf16.msra.mxu0 0
  %2217 = vmatpush.bf16.msra.mxu0 %v2205
  %2218 = vmatpush.bf16.msra.mxu0 %v2204
  %2219 = vmatmul.bf16.gmra.mxu0 %v2209
  %v2220 = vpop.f32.mrf.mxu0
  %v2221 = vadd.f32 %v2195, %v2220
  %v2222 = vpop.f32.mrf.mxu0
  %v2223 = vadd.f32 %v2195, %v2222
  %2224 = vdwg.mxu0
  %v2225 = vld [vmem:[%s5 + $0xb0] sm:$0xf]
  %v2226 = vld [vmem:[%s5 + $0xb4] sm:$0xf]
  %v2227 = vld [vmem:[%s5 + $0xb8] sm:$0xf]
  %v2228 = vld [vmem:[%s5 + $0xbc] sm:$0xf]
  %v2233 = vunpack.c.l.b16 %v2225
  %v2234 = vunpack.c.l.b16 %v2226
  %v2235 = vunpack.c.l.b16 %v2227
  %v2236 = vunpack.c.l.b16 %v2228
  %v2237 = vpack.c.b16 %v2234, %v2233
  %v2238 = vpack.c.b16 %v2236, %v2235
  %2241 = vmatpush.bf16.msra.mxu0 0
  %2242 = vmatpush.bf16.msra.mxu0 0
  %2243 = vmatpush.bf16.msra.mxu0 0
  %2244 = vmatpush.bf16.msra.mxu0 0
  %2245 = vmatpush.bf16.msra.mxu0 0
  %2246 = vmatpush.bf16.msra.mxu0 0
  %2247 = vmatpush.bf16.msra.mxu0 %v2238
  %2248 = vmatpush.bf16.msra.mxu0 %v2237
  %2249 = vmatmul.bf16.gmra.mxu0 %v2209
  %v2250 = vpop.f32.mrf.mxu0
  %v2251 = vadd.f32 0.0, %v2250
  %v2252 = vpop.f32.mrf.mxu0
  %v2253 = vadd.f32 0.0, %v2252
  %2254 = vdwg.mxu0
  %2257 = vrot.lane.b32.xlu0 %v2221, 96
  %v2258 = vpop.permute.xlu0 %2257
  %2259 = vrot.lane.b32.xlu0 %v2223, 96
  %v2260 = vpop.permute.xlu0 %2259
  %v2261 = vsel %vm121, %v2221, 0
  %v2263 = vsel %vm121, %v2223, 0
  %v2265 = vsel %vm121, %v2258, 0
  %v2267 = vsel %vm121, %v2260, 0
  %2269 = vmatpush.xpose.msra.mxu0 0.0
  %2270 = vmatpush.xpose.msra.mxu0 0.0
  %2271 = vmatpush.xpose.msra.mxu0 0.0
  %2272 = vmatpush.xpose.msra.mxu0 0.0
  %2273 = vmatpush.xpose.msra.mxu0 0.0
  %2274 = vmatpush.xpose.msra.mxu0 0.0
  %2275 = vmatpush.xpose.msra.mxu0 0.0
  %2276 = vmatpush.xpose.msra.mxu0 0.0
  %2277 = vmatpush.xpose.msra.mxu0 0.0
  %2278 = vmatpush.xpose.msra.mxu0 0.0
  %2279 = vmatpush.xpose.msra.mxu0 0.0
  %2280 = vmatpush.xpose.msra.mxu0 0.0
  %2281 = vmatpush.xpose.msra.mxu0 0.0
  %2282 = vmatpush.xpose.msra.mxu0 0.0
  %2283 = vmatpush.xpose.msra.mxu0 %v2267
  %2284 = vmatpush.xpose.msra.mxu0 %v2265
  %2285 = vmatmul.f32.gmra.mxu0 %v2261
  %v2286 = vpop.f32.mrf.mxu0
  %v2287 = vadd.f32 %v2185, %v2286
  %2288 = vmatmul.f32.gmra.mxu0 %v2263
  %v2289 = vpop.f32.mrf.mxu0
  %v2290 = vadd.f32 %v2186, %v2289
  %2291 = vdwg.mxu0
  %vm2292 = vcmask 130048
  %v2293 = vsel %vm2292, %v2287, -inf
  %2294 = vmax.xlane.f32.xlu0 %v2293
  %v2295 = vpop.xlane.xlu0 %2294
  %v2296 = vsel %vm2292, %v2290, -inf
  %2297 = vmax.xlane.f32.xlu0 %v2296
  %v2298 = vpop.xlane.xlu0 %2297
  %v2299 = vsub.f32 %v2287, %v2295
  %v2300 = vsub.f32 %v2290, %v2298
  %v2301 = vmul.f32 %v2299, 1.442695
  %v2302 = vpow.pop %v2301
  %v2303 = vmul.f32 %v2300, 1.442695
  %v2304 = vpow.pop %v2303
  %v2305 = vsel %vm2292, %v2302, 0.0
  %2306 = vadd.xlane.f32.xlu0 %v2305
  %v2307 = vpop.xlane.xlu0 %2306
  %v2308 = vsel %vm2292, %v2304, 0.0
  %2309 = vadd.xlane.f32.xlu0 %v2308
  %v2310 = vpop.xlane.xlu0 %2309
  %v2311 = vrcp.pop %v2307
  %v2312 = vmul.f32 %v2307, %v2311
  %v2313 = vsub.f32 1.0, %v2312
  %v2314 = vmul.f32 %v2311, %v2313
  %v2315 = vadd.f32 %v2311, %v2314
  %vm2316 = vweird.f32 %v2307
  %vm2317 = vweird.f32 %v2311
  %vm2318 = vmor %vm2316, %vm2317
  %v2319 = vsel %vm2318, %v2311, %v2315
  %v2320 = vand.u32 2147483647, %v2307
  %vm2321 = vcmp.eq.f32.partialorder %v2320, 8.507059e+37
  %v2322 = vand.u32 %v2307, 2147483648
  %v2323 = vor.u32 1.1754944e-38, %v2322
  %v2324 = vsel %vm2321, %v2323, %v2319
  %v2325 = vmul.f32 %v2302, %v2324
  %v2326 = vrcp.pop %v2310
  %v2327 = vmul.f32 %v2310, %v2326
  %v2328 = vsub.f32 1.0, %v2327
  %v2329 = vmul.f32 %v2326, %v2328
  %v2330 = vadd.f32 %v2326, %v2329
  %vm2331 = vweird.f32 %v2310
  %vm2332 = vweird.f32 %v2326
  %vm2333 = vmor %vm2331, %vm2332
  %v2334 = vsel %vm2333, %v2326, %v2330
  %v2335 = vand.u32 2147483647, %v2310
  %vm2336 = vcmp.eq.f32.partialorder %v2335, 8.507059e+37
  %v2337 = vand.u32 %v2310, 2147483648
  %v2338 = vor.u32 1.1754944e-38, %v2337
  %v2339 = vsel %vm2336, %v2338, %v2334
  %v2340 = vmul.f32 %v2304, %v2339
  %2341 = vrot.lane.b32.xlu0 %v2221, 120
  %v2342 = vpop.permute.xlu0 %2341
  %2343 = vrot.lane.b32.xlu0 %v2223, 120
  %v2344 = vpop.permute.xlu0 %2343
  %2345 = vrot.lane.b32.xlu0 %v2221, 88
  %v2346 = vpop.permute.xlu0 %2345
  %2347 = vrot.lane.b32.xlu0 %v2223, 88
  %v2348 = vpop.permute.xlu0 %2347
  %v2349 = vsel %vm121, %v2342, 0
  %v2351 = vsel %vm121, %v2344, 0
  %v2353 = vsel %vm121, %v2346, 0
  %v2355 = vsel %vm121, %v2348, 0
  %2357 = vmatpush.xpose.msra.mxu0 0.0
  %2358 = vmatpush.xpose.msra.mxu0 0.0
  %2359 = vmatpush.xpose.msra.mxu0 0.0
  %2360 = vmatpush.xpose.msra.mxu0 0.0
  %2361 = vmatpush.xpose.msra.mxu0 0.0
  %2362 = vmatpush.xpose.msra.mxu0 0.0
  %2363 = vmatpush.xpose.msra.mxu0 0.0
  %2364 = vmatpush.xpose.msra.mxu0 0.0
  %2365 = vmatpush.xpose.msra.mxu0 0.0
  %2366 = vmatpush.xpose.msra.mxu0 0.0
  %2367 = vmatpush.xpose.msra.mxu0 0.0
  %2368 = vmatpush.xpose.msra.mxu0 0.0
  %2369 = vmatpush.xpose.msra.mxu0 0.0
  %2370 = vmatpush.xpose.msra.mxu0 0.0
  %2371 = vmatpush.xpose.msra.mxu0 %v2355
  %2372 = vmatpush.xpose.msra.mxu0 %v2353
  %2373 = vmatmul.f32.gmra.mxu0 %v2349
  %v2374 = vpop.f32.mrf.mxu0
  %v2375 = vadd.f32 %v2185, %v2374
  %2376 = vmatmul.f32.gmra.mxu0 %v2351
  %v2377 = vpop.f32.mrf.mxu0
  %v2378 = vadd.f32 %v2186, %v2377
  %2379 = vdwg.mxu0
  %v2380 = vsel %vm2292, %v2375, -inf
  %2381 = vmax.xlane.f32.xlu0 %v2380
  %v2382 = vpop.xlane.xlu0 %2381
  %v2383 = vsel %vm2292, %v2378, -inf
  %2384 = vmax.xlane.f32.xlu0 %v2383
  %v2385 = vpop.xlane.xlu0 %2384
  %v2386 = vsub.f32 %v2375, %v2382
  %v2387 = vsub.f32 %v2378, %v2385
  %v2388 = vmul.f32 %v2386, 1.442695
  %v2389 = vpow.pop %v2388
  %v2390 = vmul.f32 %v2387, 1.442695
  %v2391 = vpow.pop %v2390
  %v2392 = vsel %vm2292, %v2389, 0.0
  %2393 = vadd.xlane.f32.xlu0 %v2392
  %v2394 = vpop.xlane.xlu0 %2393
  %v2395 = vsel %vm2292, %v2391, 0.0
  %2396 = vadd.xlane.f32.xlu0 %v2395
  %v2397 = vpop.xlane.xlu0 %2396
  %v2398 = vrcp.pop %v2394
  %v2399 = vmul.f32 %v2394, %v2398
  %v2400 = vsub.f32 1.0, %v2399
  %v2401 = vmul.f32 %v2398, %v2400
  %v2402 = vadd.f32 %v2398, %v2401
  %vm2403 = vweird.f32 %v2394
  %vm2404 = vweird.f32 %v2398
  %vm2405 = vmor %vm2403, %vm2404
  %v2406 = vsel %vm2405, %v2398, %v2402
  %v2407 = vand.u32 2147483647, %v2394
  %vm2408 = vcmp.eq.f32.partialorder %v2407, 8.507059e+37
  %v2409 = vand.u32 %v2394, 2147483648
  %v2410 = vor.u32 1.1754944e-38, %v2409
  %v2411 = vsel %vm2408, %v2410, %v2406
  %v2412 = vmul.f32 %v2389, %v2411
  %v2413 = vrcp.pop %v2397
  %v2414 = vmul.f32 %v2397, %v2413
  %v2415 = vsub.f32 1.0, %v2414
  %v2416 = vmul.f32 %v2413, %v2415
  %v2417 = vadd.f32 %v2413, %v2416
  %vm2418 = vweird.f32 %v2397
  %vm2419 = vweird.f32 %v2413
  %vm2420 = vmor %vm2418, %vm2419
  %v2421 = vsel %vm2420, %v2413, %v2417
  %v2422 = vand.u32 2147483647, %v2397
  %vm2423 = vcmp.eq.f32.partialorder %v2422, 8.507059e+37
  %v2424 = vand.u32 %v2397, 2147483648
  %v2425 = vor.u32 1.1754944e-38, %v2424
  %v2426 = vsel %vm2423, %v2425, %v2421
  %v2427 = vmul.f32 %v2391, %v2426
  %2430 = vrot.lane.b32.xlu0 %v2251, 96
  %v2431 = vpop.permute.xlu0 %2430
  %2432 = vrot.lane.b32.xlu0 %v2253, 96
  %v2433 = vpop.permute.xlu0 %2432
  %v2437 = vsel %vm2292, %v2412, 0
  %v2440 = vsel %vm2292, %v2427, 0
  %2442 = vmatpush.msra.mxu0 0.0
  %2443 = vmatpush.msra.mxu0 0.0
  %2444 = vmatpush.msra.mxu0 0.0
  %2445 = vmatpush.msra.mxu0 0.0
  %2446 = vmatpush.msra.mxu0 0.0
  %2447 = vmatpush.msra.mxu0 0.0
  %2448 = vmatpush.msra.mxu0 0.0
  %2449 = vmatpush.msra.mxu0 0.0
  %2450 = vmatpush.msra.mxu0 0.0
  %2451 = vmatpush.msra.mxu0 0.0
  %2452 = vmatpush.msra.mxu0 0.0
  %2453 = vmatpush.msra.mxu0 0.0
  %2454 = vmatpush.msra.mxu0 0.0
  %2455 = vmatpush.msra.mxu0 0.0
  %2456 = vmatpush.msra.mxu0 %v2433
  %2457 = vmatpush.msra.mxu0 %v2431
  %2458 = vmatmul.f32.gmra.mxu0 %v2437
  %v2459 = vpop.f32.mrf.mxu0
  %v2460 = vadd.f32 0.0, %v2459
  %2461 = vmatmul.f32.gmra.mxu0 %v2440
  %v2462 = vpop.f32.mrf.mxu0
  %v2463 = vadd.f32 0.0, %v2462
  %2464 = vdwg.mxu0
  %v2466 = vsel %vm2292, %v2325, 0
  %v2469 = vsel %vm2292, %v2340, 0
  %2471 = vmatpush.msra.mxu0 0.0
  %2472 = vmatpush.msra.mxu0 0.0
  %2473 = vmatpush.msra.mxu0 0.0
  %2474 = vmatpush.msra.mxu0 0.0
  %2475 = vmatpush.msra.mxu0 0.0
  %2476 = vmatpush.msra.mxu0 0.0
  %2477 = vmatpush.msra.mxu0 0.0
  %2478 = vmatpush.msra.mxu0 0.0
  %2479 = vmatpush.msra.mxu0 0.0
  %2480 = vmatpush.msra.mxu0 0.0
  %2481 = vmatpush.msra.mxu0 0.0
  %2482 = vmatpush.msra.mxu0 0.0
  %2483 = vmatpush.msra.mxu0 0.0
  %2484 = vmatpush.msra.mxu0 0.0
  %2485 = vmatpush.msra.mxu0 %v2253
  %2486 = vmatpush.msra.mxu0 %v2251
  %2487 = vmatmul.f32.gmra.mxu0 %v2466
  %v2488 = vpop.f32.mrf.mxu0
  %v2489 = vadd.f32 %v2460, %v2488
  %2490 = vmatmul.f32.gmra.mxu0 %v2469
  %v2491 = vpop.f32.mrf.mxu0
  %v2492 = vadd.f32 %v2463, %v2491
  %2493 = vdwg.mxu0
  %2494 = vrot.lane.b32.xlu0 %v2221, 112
  %v2495 = vpop.permute.xlu0 %2494
  %2496 = vrot.lane.b32.xlu0 %v2223, 112
  %v2497 = vpop.permute.xlu0 %2496
  %2498 = vrot.lane.b32.xlu0 %v2221, 80
  %v2499 = vpop.permute.xlu0 %2498
  %2500 = vrot.lane.b32.xlu0 %v2223, 80
  %v2501 = vpop.permute.xlu0 %2500
  %v2502 = vsel %vm121, %v2495, 0
  %v2504 = vsel %vm121, %v2497, 0
  %v2506 = vsel %vm121, %v2499, 0
  %v2508 = vsel %vm121, %v2501, 0
  %2510 = vmatpush.xpose.msra.mxu0 0.0
  %2511 = vmatpush.xpose.msra.mxu0 0.0
  %2512 = vmatpush.xpose.msra.mxu0 0.0
  %2513 = vmatpush.xpose.msra.mxu0 0.0
  %2514 = vmatpush.xpose.msra.mxu0 0.0
  %2515 = vmatpush.xpose.msra.mxu0 0.0
  %2516 = vmatpush.xpose.msra.mxu0 0.0
  %2517 = vmatpush.xpose.msra.mxu0 0.0
  %2518 = vmatpush.xpose.msra.mxu0 0.0
  %2519 = vmatpush.xpose.msra.mxu0 0.0
  %2520 = vmatpush.xpose.msra.mxu0 0.0
  %2521 = vmatpush.xpose.msra.mxu0 0.0
  %2522 = vmatpush.xpose.msra.mxu0 0.0
  %2523 = vmatpush.xpose.msra.mxu0 0.0
  %2524 = vmatpush.xpose.msra.mxu0 %v2508
  %2525 = vmatpush.xpose.msra.mxu0 %v2506
  %2526 = vmatmul.f32.gmra.mxu0 %v2502
  %v2527 = vpop.f32.mrf.mxu0
  %v2528 = vadd.f32 %v2185, %v2527
  %2529 = vmatmul.f32.gmra.mxu0 %v2504
  %v2530 = vpop.f32.mrf.mxu0
  %v2531 = vadd.f32 %v2186, %v2530
  %2532 = vdwg.mxu0
  %v2533 = vsel %vm2292, %v2528, -inf
  %2534 = vmax.xlane.f32.xlu0 %v2533
  %v2535 = vpop.xlane.xlu0 %2534
  %v2536 = vsel %vm2292, %v2531, -inf
  %2537 = vmax.xlane.f32.xlu0 %v2536
  %v2538 = vpop.xlane.xlu0 %2537
  %v2539 = vsub.f32 %v2528, %v2535
  %v2540 = vsub.f32 %v2531, %v2538
  %v2541 = vmul.f32 %v2539, 1.442695
  %v2542 = vpow.pop %v2541
  %v2543 = vmul.f32 %v2540, 1.442695
  %v2544 = vpow.pop %v2543
  %v2545 = vsel %vm2292, %v2542, 0.0
  %2546 = vadd.xlane.f32.xlu0 %v2545
  %v2547 = vpop.xlane.xlu0 %2546
  %v2548 = vsel %vm2292, %v2544, 0.0
  %2549 = vadd.xlane.f32.xlu0 %v2548
  %v2550 = vpop.xlane.xlu0 %2549
  %v2551 = vrcp.pop %v2547
  %v2552 = vmul.f32 %v2547, %v2551
  %v2553 = vsub.f32 1.0, %v2552
  %v2554 = vmul.f32 %v2551, %v2553
  %v2555 = vadd.f32 %v2551, %v2554
  %vm2556 = vweird.f32 %v2547
  %vm2557 = vweird.f32 %v2551
  %vm2558 = vmor %vm2556, %vm2557
  %v2559 = vsel %vm2558, %v2551, %v2555
  %v2560 = vand.u32 2147483647, %v2547
  %vm2561 = vcmp.eq.f32.partialorder %v2560, 8.507059e+37
  %v2562 = vand.u32 %v2547, 2147483648
  %v2563 = vor.u32 1.1754944e-38, %v2562
  %v2564 = vsel %vm2561, %v2563, %v2559
  %v2565 = vmul.f32 %v2542, %v2564
  %v2566 = vrcp.pop %v2550
  %v2567 = vmul.f32 %v2550, %v2566
  %v2568 = vsub.f32 1.0, %v2567
  %v2569 = vmul.f32 %v2566, %v2568
  %v2570 = vadd.f32 %v2566, %v2569
  %vm2571 = vweird.f32 %v2550
  %vm2572 = vweird.f32 %v2566
  %vm2573 = vmor %vm2571, %vm2572
  %v2574 = vsel %vm2573, %v2566, %v2570
  %v2575 = vand.u32 2147483647, %v2550
  %vm2576 = vcmp.eq.f32.partialorder %v2575, 8.507059e+37
  %v2577 = vand.u32 %v2550, 2147483648
  %v2578 = vor.u32 1.1754944e-38, %v2577
  %v2579 = vsel %vm2576, %v2578, %v2574
  %v2580 = vmul.f32 %v2544, %v2579
  %2581 = vrot.lane.b32.xlu0 %v2251, 64
  %v2582 = vpop.permute.xlu0 %2581
  %2583 = vrot.lane.b32.xlu0 %v2253, 64
  %v2584 = vpop.permute.xlu0 %2583
  %v2588 = vsel %vm2292, %v2565, 0
  %v2591 = vsel %vm2292, %v2580, 0
  %2593 = vmatpush.msra.mxu0 0.0
  %2594 = vmatpush.msra.mxu0 0.0
  %2595 = vmatpush.msra.mxu0 0.0
  %2596 = vmatpush.msra.mxu0 0.0
  %2597 = vmatpush.msra.mxu0 0.0
  %2598 = vmatpush.msra.mxu0 0.0
  %2599 = vmatpush.msra.mxu0 0.0
  %2600 = vmatpush.msra.mxu0 0.0
  %2601 = vmatpush.msra.mxu0 0.0
  %2602 = vmatpush.msra.mxu0 0.0
  %2603 = vmatpush.msra.mxu0 0.0
  %2604 = vmatpush.msra.mxu0 0.0
  %2605 = vmatpush.msra.mxu0 0.0
  %2606 = vmatpush.msra.mxu0 0.0
  %2607 = vmatpush.msra.mxu0 %v2584
  %2608 = vmatpush.msra.mxu0 %v2582
  %2609 = vmatmul.f32.gmra.mxu0 %v2588
  %v2610 = vpop.f32.mrf.mxu0
  %v2611 = vadd.f32 0.0, %v2610
  %2612 = vmatmul.f32.gmra.mxu0 %v2591
  %v2613 = vpop.f32.mrf.mxu0
  %v2614 = vadd.f32 0.0, %v2613
  %2615 = vdwg.mxu0
  %v2616 = vadd.f32 %v2489, %v2611
  %v2617 = vadd.f32 %v2492, %v2614
  %2618 = vrot.lane.b32.xlu0 %v2221, 104
  %v2619 = vpop.permute.xlu0 %2618
  %2620 = vrot.lane.b32.xlu0 %v2223, 104
  %v2621 = vpop.permute.xlu0 %2620
  %2622 = vrot.lane.b32.xlu0 %v2221, 72
  %v2623 = vpop.permute.xlu0 %2622
  %2624 = vrot.lane.b32.xlu0 %v2223, 72
  %v2625 = vpop.permute.xlu0 %2624
  %v2626 = vsel %vm121, %v2619, 0
  %v2628 = vsel %vm121, %v2621, 0
  %v2630 = vsel %vm121, %v2623, 0
  %v2632 = vsel %vm121, %v2625, 0
  %2634 = vmatpush.xpose.msra.mxu0 0.0
  %2635 = vmatpush.xpose.msra.mxu0 0.0
  %2636 = vmatpush.xpose.msra.mxu0 0.0
  %2637 = vmatpush.xpose.msra.mxu0 0.0
  %2638 = vmatpush.xpose.msra.mxu0 0.0
  %2639 = vmatpush.xpose.msra.mxu0 0.0
  %2640 = vmatpush.xpose.msra.mxu0 0.0
  %2641 = vmatpush.xpose.msra.mxu0 0.0
  %2642 = vmatpush.xpose.msra.mxu0 0.0
  %2643 = vmatpush.xpose.msra.mxu0 0.0
  %2644 = vmatpush.xpose.msra.mxu0 0.0
  %2645 = vmatpush.xpose.msra.mxu0 0.0
  %2646 = vmatpush.xpose.msra.mxu0 0.0
  %2647 = vmatpush.xpose.msra.mxu0 0.0
  %2648 = vmatpush.xpose.msra.mxu0 %v2632
  %2649 = vmatpush.xpose.msra.mxu0 %v2630
  %2650 = vmatmul.f32.gmra.mxu0 %v2626
  %v2651 = vpop.f32.mrf.mxu0
  %v2652 = vadd.f32 %v2185, %v2651
  %2653 = vmatmul.f32.gmra.mxu0 %v2628
  %v2654 = vpop.f32.mrf.mxu0
  %v2655 = vadd.f32 %v2186, %v2654
  %2656 = vdwg.mxu0
  %v2657 = vsel %vm2292, %v2652, -inf
  %2658 = vmax.xlane.f32.xlu0 %v2657
  %v2659 = vpop.xlane.xlu0 %2658
  %v2660 = vsel %vm2292, %v2655, -inf
  %2661 = vmax.xlane.f32.xlu0 %v2660
  %v2662 = vpop.xlane.xlu0 %2661
  %v2663 = vsub.f32 %v2652, %v2659
  %v2664 = vsub.f32 %v2655, %v2662
  %v2665 = vmul.f32 %v2663, 1.442695
  %v2666 = vpow.pop %v2665
  %v2667 = vmul.f32 %v2664, 1.442695
  %v2668 = vpow.pop %v2667
  %v2669 = vsel %vm2292, %v2666, 0.0
  %2670 = vadd.xlane.f32.xlu0 %v2669
  %v2671 = vpop.xlane.xlu0 %2670
  %v2672 = vsel %vm2292, %v2668, 0.0
  %2673 = vadd.xlane.f32.xlu0 %v2672
  %v2674 = vpop.xlane.xlu0 %2673
  %v2675 = vrcp.pop %v2671
  %v2676 = vmul.f32 %v2671, %v2675
  %v2677 = vsub.f32 1.0, %v2676
  %v2678 = vmul.f32 %v2675, %v2677
  %v2679 = vadd.f32 %v2675, %v2678
  %vm2680 = vweird.f32 %v2671
  %vm2681 = vweird.f32 %v2675
  %vm2682 = vmor %vm2680, %vm2681
  %v2683 = vsel %vm2682, %v2675, %v2679
  %v2684 = vand.u32 2147483647, %v2671
  %vm2685 = vcmp.eq.f32.partialorder %v2684, 8.507059e+37
  %v2686 = vand.u32 %v2671, 2147483648
  %v2687 = vor.u32 1.1754944e-38, %v2686
  %v2688 = vsel %vm2685, %v2687, %v2683
  %v2689 = vmul.f32 %v2666, %v2688
  %v2690 = vrcp.pop %v2674
  %v2691 = vmul.f32 %v2674, %v2690
  %v2692 = vsub.f32 1.0, %v2691
  %v2693 = vmul.f32 %v2690, %v2692
  %v2694 = vadd.f32 %v2690, %v2693
  %vm2695 = vweird.f32 %v2674
  %vm2696 = vweird.f32 %v2690
  %vm2697 = vmor %vm2695, %vm2696
  %v2698 = vsel %vm2697, %v2690, %v2694
  %v2699 = vand.u32 2147483647, %v2674
  %vm2700 = vcmp.eq.f32.partialorder %v2699, 8.507059e+37
  %v2701 = vand.u32 %v2674, 2147483648
  %v2702 = vor.u32 1.1754944e-38, %v2701
  %v2703 = vsel %vm2700, %v2702, %v2698
  %v2704 = vmul.f32 %v2668, %v2703
  %2705 = vrot.lane.b32.xlu0 %v2251, 32
  %v2706 = vpop.permute.xlu0 %2705
  %2707 = vrot.lane.b32.xlu0 %v2253, 32
  %v2708 = vpop.permute.xlu0 %2707
  %v2712 = vsel %vm2292, %v2689, 0
  %v2715 = vsel %vm2292, %v2704, 0
  %2717 = vmatpush.msra.mxu0 0.0
  %2718 = vmatpush.msra.mxu0 0.0
  %2719 = vmatpush.msra.mxu0 0.0
  %2720 = vmatpush.msra.mxu0 0.0
  %2721 = vmatpush.msra.mxu0 0.0
  %2722 = vmatpush.msra.mxu0 0.0
  %2723 = vmatpush.msra.mxu0 0.0
  %2724 = vmatpush.msra.mxu0 0.0
  %2725 = vmatpush.msra.mxu0 0.0
  %2726 = vmatpush.msra.mxu0 0.0
  %2727 = vmatpush.msra.mxu0 0.0
  %2728 = vmatpush.msra.mxu0 0.0
  %2729 = vmatpush.msra.mxu0 0.0
  %2730 = vmatpush.msra.mxu0 0.0
  %2731 = vmatpush.msra.mxu0 %v2708
  %2732 = vmatpush.msra.mxu0 %v2706
  %2733 = vmatmul.f32.gmra.mxu0 %v2712
  %v2734 = vpop.f32.mrf.mxu0
  %v2735 = vadd.f32 0.0, %v2734
  %2736 = vmatmul.f32.gmra.mxu0 %v2715
  %v2737 = vpop.f32.mrf.mxu0
  %v2738 = vadd.f32 0.0, %v2737
  %2739 = vdwg.mxu0
  %v2740 = vadd.f32 %v2616, %v2735
  %v2741 = vadd.f32 %v2617, %v2738
  %v2742 = vld [vmem:[%s6 + $0x11] sm:$0x1]
  %v2743 = vperm.slane %v2742, 0
  %v2744 = vadd.f32 %v2740, %v2743
  %v2745 = vadd.f32 %v2741, %v2743
  %v2746 = vadd.f32 %v2183, %v2744
  %v2747 = vadd.f32 %v2184, %v2745
  %v2748 = vsel %vm53, %v2746, 0.0
  %2749 = vadd.xlane.f32.xlu0 %v2748
  %v2750 = vpop.xlane.xlu0 %2749
  %v2751 = vsel %vm53, %v2747, 0.0
  %2752 = vadd.xlane.f32.xlu0 %v2751
  %v2753 = vpop.xlane.xlu0 %2752
  %v2754 = vmul.f32 %v2750, %v806
  %v2755 = vmul.f32 %v2753, %v806
  %v2756 = vmul.f32 %v2746, %v2746
  %v2757 = vmul.f32 %v2747, %v2747
  %v2758 = vsel %vm53, %v2756, 0.0
  %2759 = vadd.xlane.f32.xlu0 %v2758
  %v2760 = vpop.xlane.xlu0 %2759
  %v2761 = vsel %vm53, %v2757, 0.0
  %2762 = vadd.xlane.f32.xlu0 %v2761
  %v2763 = vpop.xlane.xlu0 %2762
  %v2764 = vmul.f32 %v2760, %v806
  %v2765 = vmul.f32 %v2763, %v806
  %v2766 = vmul.f32 %v2754, %v2754
  %v2767 = vmul.f32 %v2755, %v2755
  %v2768 = vsub.f32 %v2764, %v2766
  %v2769 = vsub.f32 %v2765, %v2767
  %v2770 = vadd.f32 %v2768, 1e-05
  %v2771 = vadd.f32 %v2769, 1e-05
  %v2772 = vrsqrt.pop %v2770
  %v2773 = vmul.f32 %v2772, %v2770
  %v2774 = vmul.f32 %v2773, %v2772
  %v2775 = vmul.f32 0.5, %v2774
  %v2776 = vsub.f32 1.5, %v2775
  %v2777 = vmul.f32 %v2772, %v2776
  %vm2778 = vweird.f32 %v2770
  %vm2779 = vweird.f32 %v2772
  %vm2780 = vmor %vm2778, %vm2779
  %v2781 = vsel %vm2780, %v2772, %v2777
  %v2782 = vrsqrt.pop %v2771
  %v2783 = vmul.f32 %v2782, %v2771
  %v2784 = vmul.f32 %v2783, %v2782
  %v2785 = vmul.f32 0.5, %v2784
  %v2786 = vsub.f32 1.5, %v2785
  %v2787 = vmul.f32 %v2782, %v2786
  %vm2788 = vweird.f32 %v2771
  %vm2789 = vweird.f32 %v2782
  %vm2790 = vmor %vm2788, %vm2789
  %v2791 = vsel %vm2790, %v2782, %v2787
  %v2792 = vsub.f32 %v2746, %v2754
  %v2793 = vsub.f32 %v2747, %v2755
  %v2794 = vmul.f32 %v2792, %v2781
  %v2795 = vmul.f32 %v2793, %v2791
  %v2796 = vld [vmem:[%s6 + $0x17] sm:$0x1]
  %v2797 = vperm.slane %v2796, 0
  %v2798 = vmul.f32 %v2794, %v2797
  %v2799 = vmul.f32 %v2795, %v2797
  %v2800 = vld [vmem:[%s6 + $0x18] sm:$0x1]
  %v2801 = vperm.slane %v2800, 0
  %v2802 = vadd.f32 %v2798, %v2801
  %v2803 = vadd.f32 %v2799, %v2801
  %v2804 = vpack.c.bf16 %v2803, %v2802
  %v2805 = vld [vmem:[%s5 + $0xc0] sm:$0xf]
  %v2806 = vld [vmem:[%s5 + $0xc4] sm:$0xf]
  %v2807 = vld [vmem:[%s5 + $0xc8] sm:$0xf]
  %v2808 = vld [vmem:[%s5 + $0xcc] sm:$0xf]
  %v2809 = vld [vmem:[%s6 + $0x12] sm:$0x1]
  %v2810 = vperm.slane %v2809, 0
  %v2815 = vunpack.c.l.b16 %v2805
  %v2816 = vunpack.c.l.b16 %v2806
  %v2817 = vunpack.c.l.b16 %v2807
  %v2818 = vunpack.c.l.b16 %v2808
  %v2819 = vpack.c.b16 %v2816, %v2815
  %v2820 = vpack.c.b16 %v2818, %v2817
  %v2824 = vsel %vm53, %v2804, 0
  %2826 = vmatpush.bf16.msra.mxu0 0
  %2827 = vmatpush.bf16.msra.mxu0 0
  %2828 = vmatpush.bf16.msra.mxu0 0
  %2829 = vmatpush.bf16.msra.mxu0 0
  %2830 = vmatpush.bf16.msra.mxu0 0
  %2831 = vmatpush.bf16.msra.mxu0 0
  %2832 = vmatpush.bf16.msra.mxu0 %v2820
  %2833 = vmatpush.bf16.msra.mxu0 %v2819
  %2834 = vmatmul.bf16.gmra.mxu0 %v2824
  %v2835 = vpop.f32.mrf.mxu0
  %v2836 = vadd.f32 %v2810, %v2835
  %v2837 = vpop.f32.mrf.mxu0
  %v2838 = vadd.f32 %v2810, %v2837
  %2839 = vdwg.mxu0
  %v2840 = vld [vmem:[%s5 + $0xd0] sm:$0xf]
  %v2841 = vld [vmem:[%s5 + $0xd4] sm:$0xf]
  %v2842 = vld [vmem:[%s5 + $0xd8] sm:$0xf]
  %v2843 = vld [vmem:[%s5 + $0xdc] sm:$0xf]
  %v2844 = vld [vmem:[%s6 + $0x13] sm:$0x1]
  %v2845 = vperm.slane %v2844, 0
  %v2850 = vunpack.c.l.b16 %v2840
  %v2851 = vunpack.c.l.b16 %v2841
  %v2852 = vunpack.c.l.b16 %v2842
  %v2853 = vunpack.c.l.b16 %v2843
  %v2854 = vpack.c.b16 %v2851, %v2850
  %v2855 = vpack.c.b16 %v2853, %v2852
  %v2859 = vsel %vm53, %v2181, 0
  %v2862 = vsel %vm53, %v2182, 0
  %2864 = vmatpush.bf16.msra.mxu0 0
  %2865 = vmatpush.bf16.msra.mxu0 0
  %2866 = vmatpush.bf16.msra.mxu0 0
  %2867 = vmatpush.bf16.msra.mxu0 0
  %2868 = vmatpush.bf16.msra.mxu0 0
  %2869 = vmatpush.bf16.msra.mxu0 0
  %2870 = vmatpush.bf16.msra.mxu0 %v2855
  %2871 = vmatpush.bf16.msra.mxu0 %v2854
  %2872 = vmatmul.bf16.gmra.mxu0 %v2859
  %v2873 = vpop.f32.mrf.mxu0
  %v2874 = vadd.f32 %v2845, %v2873
  %v2875 = vpop.f32.mrf.mxu0
  %v2876 = vadd.f32 %v2845, %v2875
  %2877 = vmatmul.bf16.gmra.mxu0 %v2862
  %v2878 = vpop.f32.mrf.mxu0
  %v2879 = vadd.f32 %v2845, %v2878
  %v2880 = vpop.f32.mrf.mxu0
  %2881 = vdwg.mxu0
  %v2882 = vld [vmem:[%s5 + $0xe0] sm:$0xf]
  %v2883 = vld [vmem:[%s5 + $0xe4] sm:$0xf]
  %v2884 = vld [vmem:[%s5 + $0xe8] sm:$0xf]
  %v2885 = vld [vmem:[%s5 + $0xec] sm:$0xf]
  %v2890 = vunpack.c.l.b16 %v2882
  %v2891 = vunpack.c.l.b16 %v2883
  %v2892 = vunpack.c.l.b16 %v2884
  %v2893 = vunpack.c.l.b16 %v2885
  %v2894 = vpack.c.b16 %v2891, %v2890
  %v2895 = vpack.c.b16 %v2893, %v2892
  %2898 = vmatpush.bf16.msra.mxu0 0
  %2899 = vmatpush.bf16.msra.mxu0 0
  %2900 = vmatpush.bf16.msra.mxu0 0
  %2901 = vmatpush.bf16.msra.mxu0 0
  %2902 = vmatpush.bf16.msra.mxu0 0
  %2903 = vmatpush.bf16.msra.mxu0 0
  %2904 = vmatpush.bf16.msra.mxu0 %v2895
  %2905 = vmatpush.bf16.msra.mxu0 %v2894
  %2906 = vmatmul.bf16.gmra.mxu0 %v2859
  %v2907 = vpop.f32.mrf.mxu0
  %v2908 = vadd.f32 0.0, %v2907
  %v2909 = vpop.f32.mrf.mxu0
  %v2910 = vadd.f32 0.0, %v2909
  %2911 = vmatmul.bf16.gmra.mxu0 %v2862
  %v2912 = vpop.f32.mrf.mxu0
  %v2913 = vadd.f32 0.0, %v2912
  %v2914 = vpop.f32.mrf.mxu0
  %2915 = vdwg.mxu0
  %v2917 = vsel %vm121, %v2836, 0
  %v2920 = vsel %vm121, %v2838, 0
  %v2923 = vsel %vm121, %v2874, 0
  %v2926 = vsel %vm121, %v2876, 0
  %v2929 = vsel %vm121, %v2879, 0
  %2931 = vmatpush.xpose.msra.mxu0 0.0
  %2932 = vmatpush.xpose.msra.mxu0 0.0
  %2933 = vmatpush.xpose.msra.mxu0 0.0
  %2934 = vmatpush.xpose.msra.mxu0 0.0
  %2935 = vmatpush.xpose.msra.mxu0 0.0
  %2936 = vmatpush.xpose.msra.mxu0 0.0
  %2937 = vmatpush.xpose.msra.mxu0 0.0
  %2938 = vmatpush.xpose.msra.mxu0 0.0
  %2939 = vmatpush.xpose.msra.mxu0 0.0
  %2940 = vmatpush.xpose.msra.mxu0 0.0
  %2941 = vmatpush.xpose.msra.mxu0 0.0
  %2942 = vmatpush.xpose.msra.mxu0 0.0
  %2943 = vmatpush.xpose.msra.mxu0 0.0
  %2944 = vmatpush.xpose.msra.mxu0 %v2929
  %2945 = vmatpush.xpose.msra.mxu0 %v2926
  %2946 = vmatpush.xpose.msra.mxu0 %v2923
  %2947 = vmatmul.f32.gmra.mxu0 %v2917
  %v2948 = vpop.f32.mrf.mxu0
  %v2949 = vadd.f32 %v2187, %v2948
  %2950 = vmatmul.f32.gmra.mxu0 %v2920
  %v2951 = vpop.f32.mrf.mxu0
  %v2952 = vadd.f32 %v2188, %v2951
  %2953 = vdwg.mxu0
  %v2954 = vsel %vm160, %v2949, -inf
  %2955 = vmax.xlane.f32.xlu0 %v2954
  %v2956 = vpop.xlane.xlu0 %2955
  %v2957 = vsel %vm160, %v2952, -inf
  %2958 = vmax.xlane.f32.xlu0 %v2957
  %v2959 = vpop.xlane.xlu0 %2958
  %v2960 = vsub.f32 %v2949, %v2956
  %v2961 = vsub.f32 %v2952, %v2959
  %v2962 = vmul.f32 %v2960, 1.442695
  %v2963 = vpow.pop %v2962
  %v2964 = vmul.f32 %v2961, 1.442695
  %v2965 = vpow.pop %v2964
  %v2966 = vsel %vm160, %v2963, 0.0
  %2967 = vadd.xlane.f32.xlu0 %v2966
  %v2968 = vpop.xlane.xlu0 %2967
  %v2969 = vsel %vm160, %v2965, 0.0
  %2970 = vadd.xlane.f32.xlu0 %v2969
  %v2971 = vpop.xlane.xlu0 %2970
  %v2972 = vrcp.pop %v2968
  %v2973 = vmul.f32 %v2968, %v2972
  %v2974 = vsub.f32 1.0, %v2973
  %v2975 = vmul.f32 %v2972, %v2974
  %v2976 = vadd.f32 %v2972, %v2975
  %vm2977 = vweird.f32 %v2968
  %vm2978 = vweird.f32 %v2972
  %vm2979 = vmor %vm2977, %vm2978
  %v2980 = vsel %vm2979, %v2972, %v2976
  %v2981 = vand.u32 2147483647, %v2968
  %vm2982 = vcmp.eq.f32.partialorder %v2981, 8.507059e+37
  %v2983 = vand.u32 %v2968, 2147483648
  %v2984 = vor.u32 1.1754944e-38, %v2983
  %v2985 = vsel %vm2982, %v2984, %v2980
  %v2986 = vmul.f32 %v2963, %v2985
  %v2987 = vrcp.pop %v2971
  %v2988 = vmul.f32 %v2971, %v2987
  %v2989 = vsub.f32 1.0, %v2988
  %v2990 = vmul.f32 %v2987, %v2989
  %v2991 = vadd.f32 %v2987, %v2990
  %vm2992 = vweird.f32 %v2971
  %vm2993 = vweird.f32 %v2987
  %vm2994 = vmor %vm2992, %vm2993
  %v2995 = vsel %vm2994, %v2987, %v2991
  %v2996 = vand.u32 2147483647, %v2971
  %vm2997 = vcmp.eq.f32.partialorder %v2996, 8.507059e+37
  %v2998 = vand.u32 %v2971, 2147483648
  %v2999 = vor.u32 1.1754944e-38, %v2998
  %v3000 = vsel %vm2997, %v2999, %v2995
  %v3001 = vmul.f32 %v2965, %v3000
  %3002 = vrot.lane.b32.xlu0 %v2836, 120
  %v3003 = vpop.permute.xlu0 %3002
  %3004 = vrot.lane.b32.xlu0 %v2838, 120
  %v3005 = vpop.permute.xlu0 %3004
  %3006 = vrot.lane.b32.xlu0 %v2874, 120
  %v3007 = vpop.permute.xlu0 %3006
  %3008 = vrot.lane.b32.xlu0 %v2876, 120
  %v3009 = vpop.permute.xlu0 %3008
  %3010 = vrot.lane.b32.xlu0 %v2879, 120
  %v3011 = vpop.permute.xlu0 %3010
  %v3012 = vsel %vm121, %v3003, 0
  %v3014 = vsel %vm121, %v3005, 0
  %v3016 = vsel %vm121, %v3007, 0
  %v3018 = vsel %vm121, %v3009, 0
  %v3020 = vsel %vm121, %v3011, 0
  %3022 = vmatpush.xpose.msra.mxu0 0.0
  %3023 = vmatpush.xpose.msra.mxu0 0.0
  %3024 = vmatpush.xpose.msra.mxu0 0.0
  %3025 = vmatpush.xpose.msra.mxu0 0.0
  %3026 = vmatpush.xpose.msra.mxu0 0.0
  %3027 = vmatpush.xpose.msra.mxu0 0.0
  %3028 = vmatpush.xpose.msra.mxu0 0.0
  %3029 = vmatpush.xpose.msra.mxu0 0.0
  %3030 = vmatpush.xpose.msra.mxu0 0.0
  %3031 = vmatpush.xpose.msra.mxu0 0.0
  %3032 = vmatpush.xpose.msra.mxu0 0.0
  %3033 = vmatpush.xpose.msra.mxu0 0.0
  %3034 = vmatpush.xpose.msra.mxu0 0.0
  %3035 = vmatpush.xpose.msra.mxu0 %v3020
  %3036 = vmatpush.xpose.msra.mxu0 %v3018
  %3037 = vmatpush.xpose.msra.mxu0 %v3016
  %3038 = vmatmul.f32.gmra.mxu0 %v3012
  %v3039 = vpop.f32.mrf.mxu0
  %v3040 = vadd.f32 %v2187, %v3039
  %3041 = vmatmul.f32.gmra.mxu0 %v3014
  %v3042 = vpop.f32.mrf.mxu0
  %v3043 = vadd.f32 %v2188, %v3042
  %3044 = vdwg.mxu0
  %v3045 = vsel %vm160, %v3040, -inf
  %3046 = vmax.xlane.f32.xlu0 %v3045
  %v3047 = vpop.xlane.xlu0 %3046
  %v3048 = vsel %vm160, %v3043, -inf
  %3049 = vmax.xlane.f32.xlu0 %v3048
  %v3050 = vpop.xlane.xlu0 %3049
  %v3051 = vsub.f32 %v3040, %v3047
  %v3052 = vsub.f32 %v3043, %v3050
  %v3053 = vmul.f32 %v3051, 1.442695
  %v3054 = vpow.pop %v3053
  %v3055 = vmul.f32 %v3052, 1.442695
  %v3056 = vpow.pop %v3055
  %v3057 = vsel %vm160, %v3054, 0.0
  %3058 = vadd.xlane.f32.xlu0 %v3057
  %v3059 = vpop.xlane.xlu0 %3058
  %v3060 = vsel %vm160, %v3056, 0.0
  %3061 = vadd.xlane.f32.xlu0 %v3060
  %v3062 = vpop.xlane.xlu0 %3061
  %v3063 = vrcp.pop %v3059
  %v3064 = vmul.f32 %v3059, %v3063
  %v3065 = vsub.f32 1.0, %v3064
  %v3066 = vmul.f32 %v3063, %v3065
  %v3067 = vadd.f32 %v3063, %v3066
  %vm3068 = vweird.f32 %v3059
  %vm3069 = vweird.f32 %v3063
  %vm3070 = vmor %vm3068, %vm3069
  %v3071 = vsel %vm3070, %v3063, %v3067
  %v3072 = vand.u32 2147483647, %v3059
  %vm3073 = vcmp.eq.f32.partialorder %v3072, 8.507059e+37
  %v3074 = vand.u32 %v3059, 2147483648
  %v3075 = vor.u32 1.1754944e-38, %v3074
  %v3076 = vsel %vm3073, %v3075, %v3071
  %v3077 = vmul.f32 %v3054, %v3076
  %v3078 = vrcp.pop %v3062
  %v3079 = vmul.f32 %v3062, %v3078
  %v3080 = vsub.f32 1.0, %v3079
  %v3081 = vmul.f32 %v3078, %v3080
  %v3082 = vadd.f32 %v3078, %v3081
  %vm3083 = vweird.f32 %v3062
  %vm3084 = vweird.f32 %v3078
  %vm3085 = vmor %vm3083, %vm3084
  %v3086 = vsel %vm3085, %v3078, %v3082
  %v3087 = vand.u32 2147483647, %v3062
  %vm3088 = vcmp.eq.f32.partialorder %v3087, 8.507059e+37
  %v3089 = vand.u32 %v3062, 2147483648
  %v3090 = vor.u32 1.1754944e-38, %v3089
  %v3091 = vsel %vm3088, %v3090, %v3086
  %v3092 = vmul.f32 %v3056, %v3091
  %3096 = vrot.lane.b32.xlu0 %v2908, 96
  %v3097 = vpop.permute.xlu0 %3096
  %3098 = vrot.lane.b32.xlu0 %v2910, 96
  %v3099 = vpop.permute.xlu0 %3098
  %3100 = vrot.lane.b32.xlu0 %v2913, 96
  %v3101 = vpop.permute.xlu0 %3100
  %v3105 = vsel %vm160, %v3077, 0
  %v3108 = vsel %vm160, %v3092, 0
  %v3110 = vsel %vm376, %v3101, 0
  %3112 = vmatpush.msra.mxu0 0.0
  %3113 = vmatpush.msra.mxu0 0.0
  %3114 = vmatpush.msra.mxu0 0.0
  %3115 = vmatpush.msra.mxu0 0.0
  %3116 = vmatpush.msra.mxu0 0.0
  %3117 = vmatpush.msra.mxu0 0.0
  %3118 = vmatpush.msra.mxu0 0.0
  %3119 = vmatpush.msra.mxu0 0.0
  %3120 = vmatpush.msra.mxu0 0.0
  %3121 = vmatpush.msra.mxu0 0.0
  %3122 = vmatpush.msra.mxu0 0.0
  %3123 = vmatpush.msra.mxu0 0.0
  %3124 = vmatpush.msra.mxu0 0.0
  %3125 = vmatpush.msra.mxu0 %v3110
  %3126 = vmatpush.msra.mxu0 %v3099
  %3127 = vmatpush.msra.mxu0 %v3097
  %3128 = vmatmul.f32.gmra.mxu0 %v3105
  %v3129 = vpop.f32.mrf.mxu0
  %v3130 = vadd.f32 0.0, %v3129
  %3131 = vmatmul.f32.gmra.mxu0 %v3108
  %v3132 = vpop.f32.mrf.mxu0
  %v3133 = vadd.f32 0.0, %v3132
  %3134 = vdwg.mxu0
  %v3136 = vsel %vm160, %v2986, 0
  %v3139 = vsel %vm160, %v3001, 0
  %v3141 = vsel %vm376, %v2913, 0
  %3143 = vmatpush.msra.mxu0 0.0
  %3144 = vmatpush.msra.mxu0 0.0
  %3145 = vmatpush.msra.mxu0 0.0
  %3146 = vmatpush.msra.mxu0 0.0
  %3147 = vmatpush.msra.mxu0 0.0
  %3148 = vmatpush.msra.mxu0 0.0
  %3149 = vmatpush.msra.mxu0 0.0
  %3150 = vmatpush.msra.mxu0 0.0
  %3151 = vmatpush.msra.mxu0 0.0
  %3152 = vmatpush.msra.mxu0 0.0
  %3153 = vmatpush.msra.mxu0 0.0
  %3154 = vmatpush.msra.mxu0 0.0
  %3155 = vmatpush.msra.mxu0 0.0
  %3156 = vmatpush.msra.mxu0 %v3141
  %3157 = vmatpush.msra.mxu0 %v2910
  %3158 = vmatpush.msra.mxu0 %v2908
  %3159 = vmatmul.f32.gmra.mxu0 %v3136
  %v3160 = vpop.f32.mrf.mxu0
  %v3161 = vadd.f32 %v3130, %v3160
  %3162 = vmatmul.f32.gmra.mxu0 %v3139
  %v3163 = vpop.f32.mrf.mxu0
  %v3164 = vadd.f32 %v3133, %v3163
  %3165 = vdwg.mxu0
  %3166 = vrot.lane.b32.xlu0 %v2836, 112
  %v3167 = vpop.permute.xlu0 %3166
  %3168 = vrot.lane.b32.xlu0 %v2838, 112
  %v3169 = vpop.permute.xlu0 %3168
  %3170 = vrot.lane.b32.xlu0 %v2874, 112
  %v3171 = vpop.permute.xlu0 %3170
  %3172 = vrot.lane.b32.xlu0 %v2876, 112
  %v3173 = vpop.permute.xlu0 %3172
  %3174 = vrot.lane.b32.xlu0 %v2879, 112
  %v3175 = vpop.permute.xlu0 %3174
  %v3176 = vsel %vm121, %v3167, 0
  %v3178 = vsel %vm121, %v3169, 0
  %v3180 = vsel %vm121, %v3171, 0
  %v3182 = vsel %vm121, %v3173, 0
  %v3184 = vsel %vm121, %v3175, 0
  %3186 = vmatpush.xpose.msra.mxu0 0.0
  %3187 = vmatpush.xpose.msra.mxu0 0.0
  %3188 = vmatpush.xpose.msra.mxu0 0.0
  %3189 = vmatpush.xpose.msra.mxu0 0.0
  %3190 = vmatpush.xpose.msra.mxu0 0.0
  %3191 = vmatpush.xpose.msra.mxu0 0.0
  %3192 = vmatpush.xpose.msra.mxu0 0.0
  %3193 = vmatpush.xpose.msra.mxu0 0.0
  %3194 = vmatpush.xpose.msra.mxu0 0.0
  %3195 = vmatpush.xpose.msra.mxu0 0.0
  %3196 = vmatpush.xpose.msra.mxu0 0.0
  %3197 = vmatpush.xpose.msra.mxu0 0.0
  %3198 = vmatpush.xpose.msra.mxu0 0.0
  %3199 = vmatpush.xpose.msra.mxu0 %v3184
  %3200 = vmatpush.xpose.msra.mxu0 %v3182
  %3201 = vmatpush.xpose.msra.mxu0 %v3180
  %3202 = vmatmul.f32.gmra.mxu0 %v3176
  %v3203 = vpop.f32.mrf.mxu0
  %v3204 = vadd.f32 %v2187, %v3203
  %3205 = vmatmul.f32.gmra.mxu0 %v3178
  %v3206 = vpop.f32.mrf.mxu0
  %v3207 = vadd.f32 %v2188, %v3206
  %3208 = vdwg.mxu0
  %v3209 = vsel %vm160, %v3204, -inf
  %3210 = vmax.xlane.f32.xlu0 %v3209
  %v3211 = vpop.xlane.xlu0 %3210
  %v3212 = vsel %vm160, %v3207, -inf
  %3213 = vmax.xlane.f32.xlu0 %v3212
  %v3214 = vpop.xlane.xlu0 %3213
  %v3215 = vsub.f32 %v3204, %v3211
  %v3216 = vsub.f32 %v3207, %v3214
  %v3217 = vmul.f32 %v3215, 1.442695
  %v3218 = vpow.pop %v3217
  %v3219 = vmul.f32 %v3216, 1.442695
  %v3220 = vpow.pop %v3219
  %v3221 = vsel %vm160, %v3218, 0.0
  %3222 = vadd.xlane.f32.xlu0 %v3221
  %v3223 = vpop.xlane.xlu0 %3222
  %v3224 = vsel %vm160, %v3220, 0.0
  %3225 = vadd.xlane.f32.xlu0 %v3224
  %v3226 = vpop.xlane.xlu0 %3225
  %v3227 = vrcp.pop %v3223
  %v3228 = vmul.f32 %v3223, %v3227
  %v3229 = vsub.f32 1.0, %v3228
  %v3230 = vmul.f32 %v3227, %v3229
  %v3231 = vadd.f32 %v3227, %v3230
  %vm3232 = vweird.f32 %v3223
  %vm3233 = vweird.f32 %v3227
  %vm3234 = vmor %vm3232, %vm3233
  %v3235 = vsel %vm3234, %v3227, %v3231
  %v3236 = vand.u32 2147483647, %v3223
  %vm3237 = vcmp.eq.f32.partialorder %v3236, 8.507059e+37
  %v3238 = vand.u32 %v3223, 2147483648
  %v3239 = vor.u32 1.1754944e-38, %v3238
  %v3240 = vsel %vm3237, %v3239, %v3235
  %v3241 = vmul.f32 %v3218, %v3240
  %v3242 = vrcp.pop %v3226
  %v3243 = vmul.f32 %v3226, %v3242
  %v3244 = vsub.f32 1.0, %v3243
  %v3245 = vmul.f32 %v3242, %v3244
  %v3246 = vadd.f32 %v3242, %v3245
  %vm3247 = vweird.f32 %v3226
  %vm3248 = vweird.f32 %v3242
  %vm3249 = vmor %vm3247, %vm3248
  %v3250 = vsel %vm3249, %v3242, %v3246
  %v3251 = vand.u32 2147483647, %v3226
  %vm3252 = vcmp.eq.f32.partialorder %v3251, 8.507059e+37
  %v3253 = vand.u32 %v3226, 2147483648
  %v3254 = vor.u32 1.1754944e-38, %v3253
  %v3255 = vsel %vm3252, %v3254, %v3250
  %v3256 = vmul.f32 %v3220, %v3255
  %3257 = vrot.lane.b32.xlu0 %v2908, 64
  %v3258 = vpop.permute.xlu0 %3257
  %3259 = vrot.lane.b32.xlu0 %v2910, 64
  %v3260 = vpop.permute.xlu0 %3259
  %3261 = vrot.lane.b32.xlu0 %v2913, 64
  %v3262 = vpop.permute.xlu0 %3261
  %v3266 = vsel %vm160, %v3241, 0
  %v3269 = vsel %vm160, %v3256, 0
  %v3271 = vsel %vm376, %v3262, 0
  %3273 = vmatpush.msra.mxu0 0.0
  %3274 = vmatpush.msra.mxu0 0.0
  %3275 = vmatpush.msra.mxu0 0.0
  %3276 = vmatpush.msra.mxu0 0.0
  %3277 = vmatpush.msra.mxu0 0.0
  %3278 = vmatpush.msra.mxu0 0.0
  %3279 = vmatpush.msra.mxu0 0.0
  %3280 = vmatpush.msra.mxu0 0.0
  %3281 = vmatpush.msra.mxu0 0.0
  %3282 = vmatpush.msra.mxu0 0.0
  %3283 = vmatpush.msra.mxu0 0.0
  %3284 = vmatpush.msra.mxu0 0.0
  %3285 = vmatpush.msra.mxu0 0.0
  %3286 = vmatpush.msra.mxu0 %v3271
  %3287 = vmatpush.msra.mxu0 %v3260
  %3288 = vmatpush.msra.mxu0 %v3258
  %3289 = vmatmul.f32.gmra.mxu0 %v3266
  %v3290 = vpop.f32.mrf.mxu0
  %v3291 = vadd.f32 0.0, %v3290
  %3292 = vmatmul.f32.gmra.mxu0 %v3269
  %v3293 = vpop.f32.mrf.mxu0
  %v3294 = vadd.f32 0.0, %v3293
  %3295 = vdwg.mxu0
  %v3296 = vadd.f32 %v3161, %v3291
  %v3297 = vadd.f32 %v3164, %v3294
  %3298 = vrot.lane.b32.xlu0 %v2836, 104
  %v3299 = vpop.permute.xlu0 %3298
  %3300 = vrot.lane.b32.xlu0 %v2838, 104
  %v3301 = vpop.permute.xlu0 %3300
  %3302 = vrot.lane.b32.xlu0 %v2874, 104
  %v3303 = vpop.permute.xlu0 %3302
  %3304 = vrot.lane.b32.xlu0 %v2876, 104
  %v3305 = vpop.permute.xlu0 %3304
  %3306 = vrot.lane.b32.xlu0 %v2879, 104
  %v3307 = vpop.permute.xlu0 %3306
  %v3308 = vsel %vm121, %v3299, 0
  %v3310 = vsel %vm121, %v3301, 0
  %v3312 = vsel %vm121, %v3303, 0
  %v3314 = vsel %vm121, %v3305, 0
  %v3316 = vsel %vm121, %v3307, 0
  %3318 = vmatpush.xpose.msra.mxu0 0.0
  %3319 = vmatpush.xpose.msra.mxu0 0.0
  %3320 = vmatpush.xpose.msra.mxu0 0.0
  %3321 = vmatpush.xpose.msra.mxu0 0.0
  %3322 = vmatpush.xpose.msra.mxu0 0.0
  %3323 = vmatpush.xpose.msra.mxu0 0.0
  %3324 = vmatpush.xpose.msra.mxu0 0.0
  %3325 = vmatpush.xpose.msra.mxu0 0.0
  %3326 = vmatpush.xpose.msra.mxu0 0.0
  %3327 = vmatpush.xpose.msra.mxu0 0.0
  %3328 = vmatpush.xpose.msra.mxu0 0.0
  %3329 = vmatpush.xpose.msra.mxu0 0.0
  %3330 = vmatpush.xpose.msra.mxu0 0.0
  %3331 = vmatpush.xpose.msra.mxu0 %v3316
  %3332 = vmatpush.xpose.msra.mxu0 %v3314
  %3333 = vmatpush.xpose.msra.mxu0 %v3312
  %3334 = vmatmul.f32.gmra.mxu0 %v3308
  %v3335 = vpop.f32.mrf.mxu0
  %v3336 = vadd.f32 %v2187, %v3335
  %3337 = vmatmul.f32.gmra.mxu0 %v3310
  %v3338 = vpop.f32.mrf.mxu0
  %v3339 = vadd.f32 %v2188, %v3338
  %3340 = vdwg.mxu0
  %v3341 = vsel %vm160, %v3336, -inf
  %3342 = vmax.xlane.f32.xlu0 %v3341
  %v3343 = vpop.xlane.xlu0 %3342
  %v3344 = vsel %vm160, %v3339, -inf
  %3345 = vmax.xlane.f32.xlu0 %v3344
  %v3346 = vpop.xlane.xlu0 %3345
  %v3347 = vsub.f32 %v3336, %v3343
  %v3348 = vsub.f32 %v3339, %v3346
  %v3349 = vmul.f32 %v3347, 1.442695
  %v3350 = vpow.pop %v3349
  %v3351 = vmul.f32 %v3348, 1.442695
  %v3352 = vpow.pop %v3351
  %v3353 = vsel %vm160, %v3350, 0.0
  %3354 = vadd.xlane.f32.xlu0 %v3353
  %v3355 = vpop.xlane.xlu0 %3354
  %v3356 = vsel %vm160, %v3352, 0.0
  %3357 = vadd.xlane.f32.xlu0 %v3356
  %v3358 = vpop.xlane.xlu0 %3357
  %v3359 = vrcp.pop %v3355
  %v3360 = vmul.f32 %v3355, %v3359
  %v3361 = vsub.f32 1.0, %v3360
  %v3362 = vmul.f32 %v3359, %v3361
  %v3363 = vadd.f32 %v3359, %v3362
  %vm3364 = vweird.f32 %v3355
  %vm3365 = vweird.f32 %v3359
  %vm3366 = vmor %vm3364, %vm3365
  %v3367 = vsel %vm3366, %v3359, %v3363
  %v3368 = vand.u32 2147483647, %v3355
  %vm3369 = vcmp.eq.f32.partialorder %v3368, 8.507059e+37
  %v3370 = vand.u32 %v3355, 2147483648
  %v3371 = vor.u32 1.1754944e-38, %v3370
  %v3372 = vsel %vm3369, %v3371, %v3367
  %v3373 = vmul.f32 %v3350, %v3372
  %v3374 = vrcp.pop %v3358
  %v3375 = vmul.f32 %v3358, %v3374
  %v3376 = vsub.f32 1.0, %v3375
  %v3377 = vmul.f32 %v3374, %v3376
  %v3378 = vadd.f32 %v3374, %v3377
  %vm3379 = vweird.f32 %v3358
  %vm3380 = vweird.f32 %v3374
  %vm3381 = vmor %vm3379, %vm3380
  %v3382 = vsel %vm3381, %v3374, %v3378
  %v3383 = vand.u32 2147483647, %v3358
  %vm3384 = vcmp.eq.f32.partialorder %v3383, 8.507059e+37
  %v3385 = vand.u32 %v3358, 2147483648
  %v3386 = vor.u32 1.1754944e-38, %v3385
  %v3387 = vsel %vm3384, %v3386, %v3382
  %v3388 = vmul.f32 %v3352, %v3387
  %3389 = vrot.lane.b32.xlu0 %v2908, 32
  %v3390 = vpop.permute.xlu0 %3389
  %3391 = vrot.lane.b32.xlu0 %v2910, 32
  %v3392 = vpop.permute.xlu0 %3391
  %3393 = vrot.lane.b32.xlu0 %v2913, 32
  %v3394 = vpop.permute.xlu0 %3393
  %v3398 = vsel %vm160, %v3373, 0
  %v3401 = vsel %vm160, %v3388, 0
  %v3403 = vsel %vm376, %v3394, 0
  %3405 = vmatpush.msra.mxu0 0.0
  %3406 = vmatpush.msra.mxu0 0.0
  %3407 = vmatpush.msra.mxu0 0.0
  %3408 = vmatpush.msra.mxu0 0.0
  %3409 = vmatpush.msra.mxu0 0.0
  %3410 = vmatpush.msra.mxu0 0.0
  %3411 = vmatpush.msra.mxu0 0.0
  %3412 = vmatpush.msra.mxu0 0.0
  %3413 = vmatpush.msra.mxu0 0.0
  %3414 = vmatpush.msra.mxu0 0.0
  %3415 = vmatpush.msra.mxu0 0.0
  %3416 = vmatpush.msra.mxu0 0.0
  %3417 = vmatpush.msra.mxu0 0.0
  %3418 = vmatpush.msra.mxu0 %v3403
  %3419 = vmatpush.msra.mxu0 %v3392
  %3420 = vmatpush.msra.mxu0 %v3390
  %3421 = vmatmul.f32.gmra.mxu0 %v3398
  %v3422 = vpop.f32.mrf.mxu0
  %v3423 = vadd.f32 0.0, %v3422
  %3424 = vmatmul.f32.gmra.mxu0 %v3401
  %v3425 = vpop.f32.mrf.mxu0
  %v3426 = vadd.f32 0.0, %v3425
  %3427 = vdwg.mxu0
  %v3428 = vadd.f32 %v3296, %v3423
  %v3429 = vadd.f32 %v3297, %v3426
  %v3430 = vld [vmem:[%s6 + $0x14] sm:$0x1]
  %v3431 = vperm.slane %v3430, 0
  %v3432 = vadd.f32 %v3428, %v3431
  %v3433 = vadd.f32 %v3429, %v3431
  %v3434 = vadd.f32 %v2802, %v3432
  %v3435 = vadd.f32 %v2803, %v3433
  %v3436 = vsel %vm53, %v3434, 0.0
  %3437 = vadd.xlane.f32.xlu0 %v3436
  %v3438 = vpop.xlane.xlu0 %3437
  %v3439 = vsel %vm53, %v3435, 0.0
  %3440 = vadd.xlane.f32.xlu0 %v3439
  %v3441 = vpop.xlane.xlu0 %3440
  %v3442 = vmul.f32 %v3438, %v806
  %v3443 = vmul.f32 %v3441, %v806
  %v3444 = vmul.f32 %v3434, %v3434
  %v3445 = vmul.f32 %v3435, %v3435
  %v3446 = vsel %vm53, %v3444, 0.0
  %3447 = vadd.xlane.f32.xlu0 %v3446
  %v3448 = vpop.xlane.xlu0 %3447
  %v3449 = vsel %vm53, %v3445, 0.0
  %3450 = vadd.xlane.f32.xlu0 %v3449
  %v3451 = vpop.xlane.xlu0 %3450
  %v3452 = vmul.f32 %v3448, %v806
  %v3453 = vmul.f32 %v3451, %v806
  %v3454 = vmul.f32 %v3442, %v3442
  %v3455 = vmul.f32 %v3443, %v3443
  %v3456 = vsub.f32 %v3452, %v3454
  %v3457 = vsub.f32 %v3453, %v3455
  %v3458 = vadd.f32 %v3456, 1e-05
  %v3459 = vadd.f32 %v3457, 1e-05
  %v3460 = vrsqrt.pop %v3458
  %v3461 = vmul.f32 %v3460, %v3458
  %v3462 = vmul.f32 %v3461, %v3460
  %v3463 = vmul.f32 0.5, %v3462
  %v3464 = vsub.f32 1.5, %v3463
  %v3465 = vmul.f32 %v3460, %v3464
  %vm3466 = vweird.f32 %v3458
  %vm3467 = vweird.f32 %v3460
  %vm3468 = vmor %vm3466, %vm3467
  %v3469 = vsel %vm3468, %v3460, %v3465
  %v3470 = vrsqrt.pop %v3459
  %v3471 = vmul.f32 %v3470, %v3459
  %v3472 = vmul.f32 %v3471, %v3470
  %v3473 = vmul.f32 0.5, %v3472
  %v3474 = vsub.f32 1.5, %v3473
  %v3475 = vmul.f32 %v3470, %v3474
  %vm3476 = vweird.f32 %v3459
  %vm3477 = vweird.f32 %v3470
  %vm3478 = vmor %vm3476, %vm3477
  %v3479 = vsel %vm3478, %v3470, %v3475
  %v3480 = vsub.f32 %v3434, %v3442
  %v3481 = vsub.f32 %v3435, %v3443
  %v3482 = vmul.f32 %v3480, %v3469
  %v3483 = vmul.f32 %v3481, %v3479
  %v3484 = vld [vmem:[%s6 + $0x19] sm:$0x1]
  %v3485 = vperm.slane %v3484, 0
  %v3486 = vmul.f32 %v3482, %v3485
  %v3487 = vmul.f32 %v3483, %v3485
  %v3488 = vld [vmem:[%s6 + $0x1a] sm:$0x1]
  %v3489 = vperm.slane %v3488, 0
  %v3490 = vadd.f32 %v3486, %v3489
  %v3491 = vadd.f32 %v3487, %v3489
  %v3492 = vpack.c.bf16 %v3491, %v3490
  %v3493 = vld [vmem:[%s5 + $0xf0] sm:$0xf]
  %v3494 = vld [vmem:[%s5 + $0xf4] sm:$0xf]
  %v3495 = vld [vmem:[%s5 + $0xf8] sm:$0xf]
  %v3496 = vld [vmem:[%s5 + $0xfc] sm:$0xf]
  %v3497 = vld [vmem:[%s6 + $0x15] sm:$0x1]
  %v3498 = vperm.slane %v3497, 0
  %v3503 = vunpack.c.l.b16 %v3493
  %v3504 = vunpack.c.l.b16 %v3494
  %v3505 = vunpack.c.l.b16 %v3495
  %v3506 = vunpack.c.l.b16 %v3496
  %v3507 = vpack.c.b16 %v3504, %v3503
  %v3508 = vpack.c.b16 %v3506, %v3505
  %v3512 = vsel %vm53, %v3492, 0
  %3514 = vmatpush.bf16.msra.mxu0 0
  %3515 = vmatpush.bf16.msra.mxu0 0
  %3516 = vmatpush.bf16.msra.mxu0 0
  %3517 = vmatpush.bf16.msra.mxu0 0
  %3518 = vmatpush.bf16.msra.mxu0 0
  %3519 = vmatpush.bf16.msra.mxu0 0
  %3520 = vmatpush.bf16.msra.mxu0 %v3508
  %3521 = vmatpush.bf16.msra.mxu0 %v3507
  %3522 = vmatmul.bf16.gmra.mxu0 %v3512
  %v3523 = vpop.f32.mrf.mxu0
  %v3524 = vadd.f32 %v3498, %v3523
  %v3525 = vpop.f32.mrf.mxu0
  %v3526 = vadd.f32 %v3498, %v3525
  %3527 = vdwg.mxu0
  %v3528 = vmax.f32 %v3524, 0.0
  %v3529 = vmax.f32 %v3526, 0.0
  %v3530 = vpack.c.bf16 %v3529, %v3528
  %v3531 = vld [vmem:[%s5 + $0x100] sm:$0xf]
  %v3532 = vld [vmem:[%s5 + $0x104] sm:$0xf]
  %v3533 = vld [vmem:[%s5 + $0x108] sm:$0xf]
  %v3534 = vld [vmem:[%s5 + $0x10c] sm:$0xf]
  %v3535 = vld [vmem:[%s5 + $0x110] sm:$0xf]
  %v3536 = vld [vmem:[%s5 + $0x114] sm:$0xf]
  %v3537 = vld [vmem:[%s5 + $0x118] sm:$0xf]
  %v3538 = vld [vmem:[%s5 + $0x11c] sm:$0xf]
  %v3539 = vld [vmem:[%s6 + $0x16] sm:$0x1]
  %v3540 = vperm.slane %v3539, 0
  %v3549 = vunpack.c.l.b16 %v3531
  %v3550 = vunpack.c.l.b16 %v3532
  %v3551 = vunpack.c.l.b16 %v3533
  %v3552 = vunpack.c.l.b16 %v3534
  %v3553 = vunpack.c.l.b16 %v3535
  %v3554 = vunpack.c.l.b16 %v3536
  %v3555 = vunpack.c.l.b16 %v3537
  %v3556 = vunpack.c.l.b16 %v3538
  %v3557 = vpack.c.b16 %v3550, %v3549
  %v3558 = vpack.c.b16 %v3552, %v3551
  %v3559 = vpack.c.b16 %v3554, %v3553
  %v3560 = vpack.c.b16 %v3556, %v3555
  %v3566 = vsel %vm963, %v3530, 0
  %3568 = vmatpush.bf16.msra.mxu0 0
  %3569 = vmatpush.bf16.msra.mxu0 0
  %3570 = vmatpush.bf16.msra.mxu0 0
  %3571 = vmatpush.bf16.msra.mxu0 0
  %3572 = vmatpush.bf16.msra.mxu0 %v3560
  %3573 = vmatpush.bf16.msra.mxu0 %v3559
  %3574 = vmatpush.bf16.msra.mxu0 %v3558
  %3575 = vmatpush.bf16.msra.mxu0 %v3557
  %3576 = vmatmul.bf16.gmra.mxu0 %v3566
  %v3577 = vpop.f32.mrf.mxu0
  %v3578 = vadd.f32 %v3540, %v3577
  %v3579 = vpop.f32.mrf.mxu0
  %v3580 = vadd.f32 %v3540, %v3579
  %3581 = vdwg.mxu0
  %v3582 = vadd.f32 %v3490, %v3578
  %v3583 = vadd.f32 %v3491, %v3580
  %v3584 = vsel %vm53, %v3582, 0.0
  %3585 = vadd.xlane.f32.xlu0 %v3584
  %v3586 = vpop.xlane.xlu0 %3585
  %v3587 = vsel %vm53, %v3583, 0.0
  %3588 = vadd.xlane.f32.xlu0 %v3587
  %v3589 = vpop.xlane.xlu0 %3588
  %v3590 = vmul.f32 %v3586, %v806
  %v3591 = vmul.f32 %v3589, %v806
  %v3592 = vmul.f32 %v3582, %v3582
  %v3593 = vmul.f32 %v3583, %v3583
  %v3594 = vsel %vm53, %v3592, 0.0
  %3595 = vadd.xlane.f32.xlu0 %v3594
  %v3596 = vpop.xlane.xlu0 %3595
  %v3597 = vsel %vm53, %v3593, 0.0
  %3598 = vadd.xlane.f32.xlu0 %v3597
  %v3599 = vpop.xlane.xlu0 %3598
  %v3600 = vmul.f32 %v3596, %v806
  %v3601 = vmul.f32 %v3599, %v806
  %v3602 = vmul.f32 %v3590, %v3590
  %v3603 = vmul.f32 %v3591, %v3591
  %v3604 = vsub.f32 %v3600, %v3602
  %v3605 = vsub.f32 %v3601, %v3603
  %v3606 = vadd.f32 %v3604, 1e-05
  %v3607 = vadd.f32 %v3605, 1e-05
  %v3608 = vrsqrt.pop %v3606
  %v3609 = vmul.f32 %v3608, %v3606
  %v3610 = vmul.f32 %v3609, %v3608
  %v3611 = vmul.f32 0.5, %v3610
  %v3612 = vsub.f32 1.5, %v3611
  %v3613 = vmul.f32 %v3608, %v3612
  %vm3614 = vweird.f32 %v3606
  %vm3615 = vweird.f32 %v3608
  %vm3616 = vmor %vm3614, %vm3615
  %v3617 = vsel %vm3616, %v3608, %v3613
  %v3618 = vrsqrt.pop %v3607
  %v3619 = vmul.f32 %v3618, %v3607
  %v3620 = vmul.f32 %v3619, %v3618
  %v3621 = vmul.f32 0.5, %v3620
  %v3622 = vsub.f32 1.5, %v3621
  %v3623 = vmul.f32 %v3618, %v3622
  %vm3624 = vweird.f32 %v3607
  %vm3625 = vweird.f32 %v3618
  %vm3626 = vmor %vm3624, %vm3625
  %v3627 = vsel %vm3626, %v3618, %v3623
  %v3628 = vsub.f32 %v3582, %v3590
  %v3629 = vsub.f32 %v3583, %v3591
  %v3630 = vmul.f32 %v3628, %v3617
  %v3631 = vmul.f32 %v3629, %v3627
  %v3632 = vld [vmem:[%s6 + $0x1b] sm:$0x1]
  %v3633 = vperm.slane %v3632, 0
  %v3634 = vmul.f32 %v3630, %v3633
  %v3635 = vmul.f32 %v3631, %v3633
  %v3636 = vld [vmem:[%s6 + $0x1c] sm:$0x1]
  %v3637 = vperm.slane %v3636, 0
  %v3638 = vadd.f32 %v3634, %v3637
  %v3639 = vadd.f32 %v3635, %v3637
  %v3640 = vpack.c.bf16 %v3639, %v3638
  %v3641 = vld [vmem:[%s5 + $0x120] sm:$0xf]
  %v3642 = vld [vmem:[%s5 + $0x124] sm:$0xf]
  %v3643 = vld [vmem:[%s5 + $0x128] sm:$0xf]
  %v3644 = vld [vmem:[%s5 + $0x12c] sm:$0xf]
  %v3645 = vld [vmem:[%s6 + $0x1d] sm:$0x1]
  %v3646 = vperm.slane %v3645, 0
  %v3651 = vunpack.c.l.b16 %v3641
  %v3652 = vunpack.c.l.b16 %v3642
  %v3653 = vunpack.c.l.b16 %v3643
  %v3654 = vunpack.c.l.b16 %v3644
  %v3655 = vpack.c.b16 %v3652, %v3651
  %v3656 = vpack.c.b16 %v3654, %v3653
  %v3660 = vsel %vm53, %v3640, 0
  %3662 = vmatpush.bf16.msra.mxu0 0
  %3663 = vmatpush.bf16.msra.mxu0 0
  %3664 = vmatpush.bf16.msra.mxu0 0
  %3665 = vmatpush.bf16.msra.mxu0 0
  %3666 = vmatpush.bf16.msra.mxu0 0
  %3667 = vmatpush.bf16.msra.mxu0 0
  %3668 = vmatpush.bf16.msra.mxu0 %v3656
  %3669 = vmatpush.bf16.msra.mxu0 %v3655
  %3670 = vmatmul.bf16.gmra.mxu0 %v3660
  %v3671 = vpop.f32.mrf.mxu0
  %v3672 = vadd.f32 %v3646, %v3671
  %v3673 = vpop.f32.mrf.mxu0
  %v3674 = vadd.f32 %v3646, %v3673
  %3675 = vdwg.mxu0
  %v3676 = vld [vmem:[%s5 + $0x130] sm:$0xf]
  %v3677 = vld [vmem:[%s5 + $0x134] sm:$0xf]
  %v3678 = vld [vmem:[%s5 + $0x138] sm:$0xf]
  %v3679 = vld [vmem:[%s5 + $0x13c] sm:$0xf]
  %v3684 = vunpack.c.l.b16 %v3676
  %v3685 = vunpack.c.l.b16 %v3677
  %v3686 = vunpack.c.l.b16 %v3678
  %v3687 = vunpack.c.l.b16 %v3679
  %v3688 = vpack.c.b16 %v3685, %v3684
  %v3689 = vpack.c.b16 %v3687, %v3686
  %3692 = vmatpush.bf16.msra.mxu0 0
  %3693 = vmatpush.bf16.msra.mxu0 0
  %3694 = vmatpush.bf16.msra.mxu0 0
  %3695 = vmatpush.bf16.msra.mxu0 0
  %3696 = vmatpush.bf16.msra.mxu0 0
  %3697 = vmatpush.bf16.msra.mxu0 0
  %3698 = vmatpush.bf16.msra.mxu0 %v3689
  %3699 = vmatpush.bf16.msra.mxu0 %v3688
  %3700 = vmatmul.bf16.gmra.mxu0 %v3660
  %v3701 = vpop.f32.mrf.mxu0
  %v3702 = vadd.f32 0.0, %v3701
  %v3703 = vpop.f32.mrf.mxu0
  %v3704 = vadd.f32 0.0, %v3703
  %3705 = vdwg.mxu0
  %3708 = vrot.lane.b32.xlu0 %v3672, 96
  %v3709 = vpop.permute.xlu0 %3708
  %3710 = vrot.lane.b32.xlu0 %v3674, 96
  %v3711 = vpop.permute.xlu0 %3710
  %v3712 = vsel %vm121, %v3672, 0
  %v3714 = vsel %vm121, %v3674, 0
  %v3716 = vsel %vm121, %v3709, 0
  %v3718 = vsel %vm121, %v3711, 0
  %3720 = vmatpush.xpose.msra.mxu0 0.0
  %3721 = vmatpush.xpose.msra.mxu0 0.0
  %3722 = vmatpush.xpose.msra.mxu0 0.0
  %3723 = vmatpush.xpose.msra.mxu0 0.0
  %3724 = vmatpush.xpose.msra.mxu0 0.0
  %3725 = vmatpush.xpose.msra.mxu0 0.0
  %3726 = vmatpush.xpose.msra.mxu0 0.0
  %3727 = vmatpush.xpose.msra.mxu0 0.0
  %3728 = vmatpush.xpose.msra.mxu0 0.0
  %3729 = vmatpush.xpose.msra.mxu0 0.0
  %3730 = vmatpush.xpose.msra.mxu0 0.0
  %3731 = vmatpush.xpose.msra.mxu0 0.0
  %3732 = vmatpush.xpose.msra.mxu0 0.0
  %3733 = vmatpush.xpose.msra.mxu0 0.0
  %3734 = vmatpush.xpose.msra.mxu0 %v3718
  %3735 = vmatpush.xpose.msra.mxu0 %v3716
  %3736 = vmatmul.f32.gmra.mxu0 %v3712
  %v3737 = vpop.f32.mrf.mxu0
  %v3738 = vadd.f32 %v2185, %v3737
  %3739 = vmatmul.f32.gmra.mxu0 %v3714
  %v3740 = vpop.f32.mrf.mxu0
  %v3741 = vadd.f32 %v2186, %v3740
  %3742 = vdwg.mxu0
  %v3743 = vsel %vm2292, %v3738, -inf
  %3744 = vmax.xlane.f32.xlu0 %v3743
  %v3745 = vpop.xlane.xlu0 %3744
  %v3746 = vsel %vm2292, %v3741, -inf
  %3747 = vmax.xlane.f32.xlu0 %v3746
  %v3748 = vpop.xlane.xlu0 %3747
  %v3749 = vsub.f32 %v3738, %v3745
  %v3750 = vsub.f32 %v3741, %v3748
  %v3751 = vmul.f32 %v3749, 1.442695
  %v3752 = vpow.pop %v3751
  %v3753 = vmul.f32 %v3750, 1.442695
  %v3754 = vpow.pop %v3753
  %v3755 = vsel %vm2292, %v3752, 0.0
  %3756 = vadd.xlane.f32.xlu0 %v3755
  %v3757 = vpop.xlane.xlu0 %3756
  %v3758 = vsel %vm2292, %v3754, 0.0
  %3759 = vadd.xlane.f32.xlu0 %v3758
  %v3760 = vpop.xlane.xlu0 %3759
  %v3761 = vrcp.pop %v3757
  %v3762 = vmul.f32 %v3757, %v3761
  %v3763 = vsub.f32 1.0, %v3762
  %v3764 = vmul.f32 %v3761, %v3763
  %v3765 = vadd.f32 %v3761, %v3764
  %vm3766 = vweird.f32 %v3757
  %vm3767 = vweird.f32 %v3761
  %vm3768 = vmor %vm3766, %vm3767
  %v3769 = vsel %vm3768, %v3761, %v3765
  %v3770 = vand.u32 2147483647, %v3757
  %vm3771 = vcmp.eq.f32.partialorder %v3770, 8.507059e+37
  %v3772 = vand.u32 %v3757, 2147483648
  %v3773 = vor.u32 1.1754944e-38, %v3772
  %v3774 = vsel %vm3771, %v3773, %v3769
  %v3775 = vmul.f32 %v3752, %v3774
  %v3776 = vrcp.pop %v3760
  %v3777 = vmul.f32 %v3760, %v3776
  %v3778 = vsub.f32 1.0, %v3777
  %v3779 = vmul.f32 %v3776, %v3778
  %v3780 = vadd.f32 %v3776, %v3779
  %vm3781 = vweird.f32 %v3760
  %vm3782 = vweird.f32 %v3776
  %vm3783 = vmor %vm3781, %vm3782
  %v3784 = vsel %vm3783, %v3776, %v3780
  %v3785 = vand.u32 2147483647, %v3760
  %vm3786 = vcmp.eq.f32.partialorder %v3785, 8.507059e+37
  %v3787 = vand.u32 %v3760, 2147483648
  %v3788 = vor.u32 1.1754944e-38, %v3787
  %v3789 = vsel %vm3786, %v3788, %v3784
  %v3790 = vmul.f32 %v3754, %v3789
  %3791 = vrot.lane.b32.xlu0 %v3672, 120
  %v3792 = vpop.permute.xlu0 %3791
  %3793 = vrot.lane.b32.xlu0 %v3674, 120
  %v3794 = vpop.permute.xlu0 %3793
  %3795 = vrot.lane.b32.xlu0 %v3672, 88
  %v3796 = vpop.permute.xlu0 %3795
  %3797 = vrot.lane.b32.xlu0 %v3674, 88
  %v3798 = vpop.permute.xlu0 %3797
  %v3799 = vsel %vm121, %v3792, 0
  %v3801 = vsel %vm121, %v3794, 0
  %v3803 = vsel %vm121, %v3796, 0
  %v3805 = vsel %vm121, %v3798, 0
  %3807 = vmatpush.xpose.msra.mxu0 0.0
  %3808 = vmatpush.xpose.msra.mxu0 0.0
  %3809 = vmatpush.xpose.msra.mxu0 0.0
  %3810 = vmatpush.xpose.msra.mxu0 0.0
  %3811 = vmatpush.xpose.msra.mxu0 0.0
  %3812 = vmatpush.xpose.msra.mxu0 0.0
  %3813 = vmatpush.xpose.msra.mxu0 0.0
  %3814 = vmatpush.xpose.msra.mxu0 0.0
  %3815 = vmatpush.xpose.msra.mxu0 0.0
  %3816 = vmatpush.xpose.msra.mxu0 0.0
  %3817 = vmatpush.xpose.msra.mxu0 0.0
  %3818 = vmatpush.xpose.msra.mxu0 0.0
  %3819 = vmatpush.xpose.msra.mxu0 0.0
  %3820 = vmatpush.xpose.msra.mxu0 0.0
  %3821 = vmatpush.xpose.msra.mxu0 %v3805
  %3822 = vmatpush.xpose.msra.mxu0 %v3803
  %3823 = vmatmul.f32.gmra.mxu0 %v3799
  %v3824 = vpop.f32.mrf.mxu0
  %v3825 = vadd.f32 %v2185, %v3824
  %3826 = vmatmul.f32.gmra.mxu0 %v3801
  %v3827 = vpop.f32.mrf.mxu0
  %v3828 = vadd.f32 %v2186, %v3827
  %3829 = vdwg.mxu0
  %v3830 = vsel %vm2292, %v3825, -inf
  %3831 = vmax.xlane.f32.xlu0 %v3830
  %v3832 = vpop.xlane.xlu0 %3831
  %v3833 = vsel %vm2292, %v3828, -inf
  %3834 = vmax.xlane.f32.xlu0 %v3833
  %v3835 = vpop.xlane.xlu0 %3834
  %v3836 = vsub.f32 %v3825, %v3832
  %v3837 = vsub.f32 %v3828, %v3835
  %v3838 = vmul.f32 %v3836, 1.442695
  %v3839 = vpow.pop %v3838
  %v3840 = vmul.f32 %v3837, 1.442695
  %v3841 = vpow.pop %v3840
  %v3842 = vsel %vm2292, %v3839, 0.0
  %3843 = vadd.xlane.f32.xlu0 %v3842
  %v3844 = vpop.xlane.xlu0 %3843
  %v3845 = vsel %vm2292, %v3841, 0.0
  %3846 = vadd.xlane.f32.xlu0 %v3845
  %v3847 = vpop.xlane.xlu0 %3846
  %v3848 = vrcp.pop %v3844
  %v3849 = vmul.f32 %v3844, %v3848
  %v3850 = vsub.f32 1.0, %v3849
  %v3851 = vmul.f32 %v3848, %v3850
  %v3852 = vadd.f32 %v3848, %v3851
  %vm3853 = vweird.f32 %v3844
  %vm3854 = vweird.f32 %v3848
  %vm3855 = vmor %vm3853, %vm3854
  %v3856 = vsel %vm3855, %v3848, %v3852
  %v3857 = vand.u32 2147483647, %v3844
  %vm3858 = vcmp.eq.f32.partialorder %v3857, 8.507059e+37
  %v3859 = vand.u32 %v3844, 2147483648
  %v3860 = vor.u32 1.1754944e-38, %v3859
  %v3861 = vsel %vm3858, %v3860, %v3856
  %v3862 = vmul.f32 %v3839, %v3861
  %v3863 = vrcp.pop %v3847
  %v3864 = vmul.f32 %v3847, %v3863
  %v3865 = vsub.f32 1.0, %v3864
  %v3866 = vmul.f32 %v3863, %v3865
  %v3867 = vadd.f32 %v3863, %v3866
  %vm3868 = vweird.f32 %v3847
  %vm3869 = vweird.f32 %v3863
  %vm3870 = vmor %vm3868, %vm3869
  %v3871 = vsel %vm3870, %v3863, %v3867
  %v3872 = vand.u32 2147483647, %v3847
  %vm3873 = vcmp.eq.f32.partialorder %v3872, 8.507059e+37
  %v3874 = vand.u32 %v3847, 2147483648
  %v3875 = vor.u32 1.1754944e-38, %v3874
  %v3876 = vsel %vm3873, %v3875, %v3871
  %v3877 = vmul.f32 %v3841, %v3876
  %3880 = vrot.lane.b32.xlu0 %v3702, 96
  %v3881 = vpop.permute.xlu0 %3880
  %3882 = vrot.lane.b32.xlu0 %v3704, 96
  %v3883 = vpop.permute.xlu0 %3882
  %v3887 = vsel %vm2292, %v3862, 0
  %v3890 = vsel %vm2292, %v3877, 0
  %3892 = vmatpush.msra.mxu0 0.0
  %3893 = vmatpush.msra.mxu0 0.0
  %3894 = vmatpush.msra.mxu0 0.0
  %3895 = vmatpush.msra.mxu0 0.0
  %3896 = vmatpush.msra.mxu0 0.0
  %3897 = vmatpush.msra.mxu0 0.0
  %3898 = vmatpush.msra.mxu0 0.0
  %3899 = vmatpush.msra.mxu0 0.0
  %3900 = vmatpush.msra.mxu0 0.0
  %3901 = vmatpush.msra.mxu0 0.0
  %3902 = vmatpush.msra.mxu0 0.0
  %3903 = vmatpush.msra.mxu0 0.0
  %3904 = vmatpush.msra.mxu0 0.0
  %3905 = vmatpush.msra.mxu0 0.0
  %3906 = vmatpush.msra.mxu0 %v3883
  %3907 = vmatpush.msra.mxu0 %v3881
  %3908 = vmatmul.f32.gmra.mxu0 %v3887
  %v3909 = vpop.f32.mrf.mxu0
  %v3910 = vadd.f32 0.0, %v3909
  %3911 = vmatmul.f32.gmra.mxu0 %v3890
  %v3912 = vpop.f32.mrf.mxu0
  %v3913 = vadd.f32 0.0, %v3912
  %3914 = vdwg.mxu0
  %v3916 = vsel %vm2292, %v3775, 0
  %v3919 = vsel %vm2292, %v3790, 0
  %3921 = vmatpush.msra.mxu0 0.0
  %3922 = vmatpush.msra.mxu0 0.0
  %3923 = vmatpush.msra.mxu0 0.0
  %3924 = vmatpush.msra.mxu0 0.0
  %3925 = vmatpush.msra.mxu0 0.0
  %3926 = vmatpush.msra.mxu0 0.0
  %3927 = vmatpush.msra.mxu0 0.0
  %3928 = vmatpush.msra.mxu0 0.0
  %3929 = vmatpush.msra.mxu0 0.0
  %3930 = vmatpush.msra.mxu0 0.0
  %3931 = vmatpush.msra.mxu0 0.0
  %3932 = vmatpush.msra.mxu0 0.0
  %3933 = vmatpush.msra.mxu0 0.0
  %3934 = vmatpush.msra.mxu0 0.0
  %3935 = vmatpush.msra.mxu0 %v3704
  %3936 = vmatpush.msra.mxu0 %v3702
  %3937 = vmatmul.f32.gmra.mxu0 %v3916
  %v3938 = vpop.f32.mrf.mxu0
  %v3939 = vadd.f32 %v3910, %v3938
  %3940 = vmatmul.f32.gmra.mxu0 %v3919
  %v3941 = vpop.f32.mrf.mxu0
  %v3942 = vadd.f32 %v3913, %v3941
  %3943 = vdwg.mxu0
  %3944 = vrot.lane.b32.xlu0 %v3672, 112
  %v3945 = vpop.permute.xlu0 %3944
  %3946 = vrot.lane.b32.xlu0 %v3674, 112
  %v3947 = vpop.permute.xlu0 %3946
  %3948 = vrot.lane.b32.xlu0 %v3672, 80
  %v3949 = vpop.permute.xlu0 %3948
  %3950 = vrot.lane.b32.xlu0 %v3674, 80
  %v3951 = vpop.permute.xlu0 %3950
  %v3952 = vsel %vm121, %v3945, 0
  %v3954 = vsel %vm121, %v3947, 0
  %v3956 = vsel %vm121, %v3949, 0
  %v3958 = vsel %vm121, %v3951, 0
  %3960 = vmatpush.xpose.msra.mxu0 0.0
  %3961 = vmatpush.xpose.msra.mxu0 0.0
  %3962 = vmatpush.xpose.msra.mxu0 0.0
  %3963 = vmatpush.xpose.msra.mxu0 0.0
  %3964 = vmatpush.xpose.msra.mxu0 0.0
  %3965 = vmatpush.xpose.msra.mxu0 0.0
  %3966 = vmatpush.xpose.msra.mxu0 0.0
  %3967 = vmatpush.xpose.msra.mxu0 0.0
  %3968 = vmatpush.xpose.msra.mxu0 0.0
  %3969 = vmatpush.xpose.msra.mxu0 0.0
  %3970 = vmatpush.xpose.msra.mxu0 0.0
  %3971 = vmatpush.xpose.msra.mxu0 0.0
  %3972 = vmatpush.xpose.msra.mxu0 0.0
  %3973 = vmatpush.xpose.msra.mxu0 0.0
  %3974 = vmatpush.xpose.msra.mxu0 %v3958
  %3975 = vmatpush.xpose.msra.mxu0 %v3956
  %3976 = vmatmul.f32.gmra.mxu0 %v3952
  %v3977 = vpop.f32.mrf.mxu0
  %v3978 = vadd.f32 %v2185, %v3977
  %3979 = vmatmul.f32.gmra.mxu0 %v3954
  %v3980 = vpop.f32.mrf.mxu0
  %v3981 = vadd.f32 %v2186, %v3980
  %3982 = vdwg.mxu0
  %v3983 = vsel %vm2292, %v3978, -inf
  %3984 = vmax.xlane.f32.xlu0 %v3983
  %v3985 = vpop.xlane.xlu0 %3984
  %v3986 = vsel %vm2292, %v3981, -inf
  %3987 = vmax.xlane.f32.xlu0 %v3986
  %v3988 = vpop.xlane.xlu0 %3987
  %v3989 = vsub.f32 %v3978, %v3985
  %v3990 = vsub.f32 %v3981, %v3988
  %v3991 = vmul.f32 %v3989, 1.442695
  %v3992 = vpow.pop %v3991
  %v3993 = vmul.f32 %v3990, 1.442695
  %v3994 = vpow.pop %v3993
  %v3995 = vsel %vm2292, %v3992, 0.0
  %3996 = vadd.xlane.f32.xlu0 %v3995
  %v3997 = vpop.xlane.xlu0 %3996
  %v3998 = vsel %vm2292, %v3994, 0.0
  %3999 = vadd.xlane.f32.xlu0 %v3998
  %v4000 = vpop.xlane.xlu0 %3999
  %v4001 = vrcp.pop %v3997
  %v4002 = vmul.f32 %v3997, %v4001
  %v4003 = vsub.f32 1.0, %v4002
  %v4004 = vmul.f32 %v4001, %v4003
  %v4005 = vadd.f32 %v4001, %v4004
  %vm4006 = vweird.f32 %v3997
  %vm4007 = vweird.f32 %v4001
  %vm4008 = vmor %vm4006, %vm4007
  %v4009 = vsel %vm4008, %v4001, %v4005
  %v4010 = vand.u32 2147483647, %v3997
  %vm4011 = vcmp.eq.f32.partialorder %v4010, 8.507059e+37
  %v4012 = vand.u32 %v3997, 2147483648
  %v4013 = vor.u32 1.1754944e-38, %v4012
  %v4014 = vsel %vm4011, %v4013, %v4009
  %v4015 = vmul.f32 %v3992, %v4014
  %v4016 = vrcp.pop %v4000
  %v4017 = vmul.f32 %v4000, %v4016
  %v4018 = vsub.f32 1.0, %v4017
  %v4019 = vmul.f32 %v4016, %v4018
  %v4020 = vadd.f32 %v4016, %v4019
  %vm4021 = vweird.f32 %v4000
  %vm4022 = vweird.f32 %v4016
  %vm4023 = vmor %vm4021, %vm4022
  %v4024 = vsel %vm4023, %v4016, %v4020
  %v4025 = vand.u32 2147483647, %v4000
  %vm4026 = vcmp.eq.f32.partialorder %v4025, 8.507059e+37
  %v4027 = vand.u32 %v4000, 2147483648
  %v4028 = vor.u32 1.1754944e-38, %v4027
  %v4029 = vsel %vm4026, %v4028, %v4024
  %v4030 = vmul.f32 %v3994, %v4029
  %4031 = vrot.lane.b32.xlu0 %v3702, 64
  %v4032 = vpop.permute.xlu0 %4031
  %4033 = vrot.lane.b32.xlu0 %v3704, 64
  %v4034 = vpop.permute.xlu0 %4033
  %v4038 = vsel %vm2292, %v4015, 0
  %v4041 = vsel %vm2292, %v4030, 0
  %4043 = vmatpush.msra.mxu0 0.0
  %4044 = vmatpush.msra.mxu0 0.0
  %4045 = vmatpush.msra.mxu0 0.0
  %4046 = vmatpush.msra.mxu0 0.0
  %4047 = vmatpush.msra.mxu0 0.0
  %4048 = vmatpush.msra.mxu0 0.0
  %4049 = vmatpush.msra.mxu0 0.0
  %4050 = vmatpush.msra.mxu0 0.0
  %4051 = vmatpush.msra.mxu0 0.0
  %4052 = vmatpush.msra.mxu0 0.0
  %4053 = vmatpush.msra.mxu0 0.0
  %4054 = vmatpush.msra.mxu0 0.0
  %4055 = vmatpush.msra.mxu0 0.0
  %4056 = vmatpush.msra.mxu0 0.0
  %4057 = vmatpush.msra.mxu0 %v4034
  %4058 = vmatpush.msra.mxu0 %v4032
  %4059 = vmatmul.f32.gmra.mxu0 %v4038
  %v4060 = vpop.f32.mrf.mxu0
  %v4061 = vadd.f32 0.0, %v4060
  %4062 = vmatmul.f32.gmra.mxu0 %v4041
  %v4063 = vpop.f32.mrf.mxu0
  %v4064 = vadd.f32 0.0, %v4063
  %4065 = vdwg.mxu0
  %v4066 = vadd.f32 %v3939, %v4061
  %v4067 = vadd.f32 %v3942, %v4064
  %4068 = vrot.lane.b32.xlu0 %v3672, 104
  %v4069 = vpop.permute.xlu0 %4068
  %4070 = vrot.lane.b32.xlu0 %v3674, 104
  %v4071 = vpop.permute.xlu0 %4070
  %4072 = vrot.lane.b32.xlu0 %v3672, 72
  %v4073 = vpop.permute.xlu0 %4072
  %4074 = vrot.lane.b32.xlu0 %v3674, 72
  %v4075 = vpop.permute.xlu0 %4074
  %v4076 = vsel %vm121, %v4069, 0
  %v4078 = vsel %vm121, %v4071, 0
  %v4080 = vsel %vm121, %v4073, 0
  %v4082 = vsel %vm121, %v4075, 0
  %4084 = vmatpush.xpose.msra.mxu0 0.0
  %4085 = vmatpush.xpose.msra.mxu0 0.0
  %4086 = vmatpush.xpose.msra.mxu0 0.0
  %4087 = vmatpush.xpose.msra.mxu0 0.0
  %4088 = vmatpush.xpose.msra.mxu0 0.0
  %4089 = vmatpush.xpose.msra.mxu0 0.0
  %4090 = vmatpush.xpose.msra.mxu0 0.0
  %4091 = vmatpush.xpose.msra.mxu0 0.0
  %4092 = vmatpush.xpose.msra.mxu0 0.0
  %4093 = vmatpush.xpose.msra.mxu0 0.0
  %4094 = vmatpush.xpose.msra.mxu0 0.0
  %4095 = vmatpush.xpose.msra.mxu0 0.0
  %4096 = vmatpush.xpose.msra.mxu0 0.0
  %4097 = vmatpush.xpose.msra.mxu0 0.0
  %4098 = vmatpush.xpose.msra.mxu0 %v4082
  %4099 = vmatpush.xpose.msra.mxu0 %v4080
  %4100 = vmatmul.f32.gmra.mxu0 %v4076
  %v4101 = vpop.f32.mrf.mxu0
  %v4102 = vadd.f32 %v2185, %v4101
  %4103 = vmatmul.f32.gmra.mxu0 %v4078
  %v4104 = vpop.f32.mrf.mxu0
  %v4105 = vadd.f32 %v2186, %v4104
  %4106 = vdwg.mxu0
  %v4107 = vsel %vm2292, %v4102, -inf
  %4108 = vmax.xlane.f32.xlu0 %v4107
  %v4109 = vpop.xlane.xlu0 %4108
  %v4110 = vsel %vm2292, %v4105, -inf
  %4111 = vmax.xlane.f32.xlu0 %v4110
  %v4112 = vpop.xlane.xlu0 %4111
  %v4113 = vsub.f32 %v4102, %v4109
  %v4114 = vsub.f32 %v4105, %v4112
  %v4115 = vmul.f32 %v4113, 1.442695
  %v4116 = vpow.pop %v4115
  %v4117 = vmul.f32 %v4114, 1.442695
  %v4118 = vpow.pop %v4117
  %v4119 = vsel %vm2292, %v4116, 0.0
  %4120 = vadd.xlane.f32.xlu0 %v4119
  %v4121 = vpop.xlane.xlu0 %4120
  %v4122 = vsel %vm2292, %v4118, 0.0
  %4123 = vadd.xlane.f32.xlu0 %v4122
  %v4124 = vpop.xlane.xlu0 %4123
  %v4125 = vrcp.pop %v4121
  %v4126 = vmul.f32 %v4121, %v4125
  %v4127 = vsub.f32 1.0, %v4126
  %v4128 = vmul.f32 %v4125, %v4127
  %v4129 = vadd.f32 %v4125, %v4128
  %vm4130 = vweird.f32 %v4121
  %vm4131 = vweird.f32 %v4125
  %vm4132 = vmor %vm4130, %vm4131
  %v4133 = vsel %vm4132, %v4125, %v4129
  %v4134 = vand.u32 2147483647, %v4121
  %vm4135 = vcmp.eq.f32.partialorder %v4134, 8.507059e+37
  %v4136 = vand.u32 %v4121, 2147483648
  %v4137 = vor.u32 1.1754944e-38, %v4136
  %v4138 = vsel %vm4135, %v4137, %v4133
  %v4139 = vmul.f32 %v4116, %v4138
  %v4140 = vrcp.pop %v4124
  %v4141 = vmul.f32 %v4124, %v4140
  %v4142 = vsub.f32 1.0, %v4141
  %v4143 = vmul.f32 %v4140, %v4142
  %v4144 = vadd.f32 %v4140, %v4143
  %vm4145 = vweird.f32 %v4124
  %vm4146 = vweird.f32 %v4140
  %vm4147 = vmor %vm4145, %vm4146
  %v4148 = vsel %vm4147, %v4140, %v4144
  %v4149 = vand.u32 2147483647, %v4124
  %vm4150 = vcmp.eq.f32.partialorder %v4149, 8.507059e+37
  %v4151 = vand.u32 %v4124, 2147483648
  %v4152 = vor.u32 1.1754944e-38, %v4151
  %v4153 = vsel %vm4150, %v4152, %v4148
  %v4154 = vmul.f32 %v4118, %v4153
  %4155 = vrot.lane.b32.xlu0 %v3702, 32
  %v4156 = vpop.permute.xlu0 %4155
  %4157 = vrot.lane.b32.xlu0 %v3704, 32
  %v4158 = vpop.permute.xlu0 %4157
  %v4162 = vsel %vm2292, %v4139, 0
  %v4165 = vsel %vm2292, %v4154, 0
  %4167 = vmatpush.msra.mxu0 0.0
  %4168 = vmatpush.msra.mxu0 0.0
  %4169 = vmatpush.msra.mxu0 0.0
  %4170 = vmatpush.msra.mxu0 0.0
  %4171 = vmatpush.msra.mxu0 0.0
  %4172 = vmatpush.msra.mxu0 0.0
  %4173 = vmatpush.msra.mxu0 0.0
  %4174 = vmatpush.msra.mxu0 0.0
  %4175 = vmatpush.msra.mxu0 0.0
  %4176 = vmatpush.msra.mxu0 0.0
  %4177 = vmatpush.msra.mxu0 0.0
  %4178 = vmatpush.msra.mxu0 0.0
  %4179 = vmatpush.msra.mxu0 0.0
  %4180 = vmatpush.msra.mxu0 0.0
  %4181 = vmatpush.msra.mxu0 %v4158
  %4182 = vmatpush.msra.mxu0 %v4156
  %4183 = vmatmul.f32.gmra.mxu0 %v4162
  %v4184 = vpop.f32.mrf.mxu0
  %v4185 = vadd.f32 0.0, %v4184
  %4186 = vmatmul.f32.gmra.mxu0 %v4165
  %v4187 = vpop.f32.mrf.mxu0
  %v4188 = vadd.f32 0.0, %v4187
  %4189 = vdwg.mxu0
  %v4190 = vadd.f32 %v4066, %v4185
  %v4191 = vadd.f32 %v4067, %v4188
  %v4192 = vld [vmem:[%s6 + $0x1e] sm:$0x1]
  %v4193 = vperm.slane %v4192, 0
  %v4194 = vadd.f32 %v4190, %v4193
  %v4195 = vadd.f32 %v4191, %v4193
  %v4196 = vadd.f32 %v3638, %v4194
  %v4197 = vadd.f32 %v3639, %v4195
  %v4198 = vsel %vm53, %v4196, 0.0
  %4199 = vadd.xlane.f32.xlu0 %v4198
  %v4200 = vpop.xlane.xlu0 %4199
  %v4201 = vsel %vm53, %v4197, 0.0
  %4202 = vadd.xlane.f32.xlu0 %v4201
  %v4203 = vpop.xlane.xlu0 %4202
  %v4204 = vmul.f32 %v4200, %v806
  %v4205 = vmul.f32 %v4203, %v806
  %v4206 = vmul.f32 %v4196, %v4196
  %v4207 = vmul.f32 %v4197, %v4197
  %v4208 = vsel %vm53, %v4206, 0.0
  %4209 = vadd.xlane.f32.xlu0 %v4208
  %v4210 = vpop.xlane.xlu0 %4209
  %v4211 = vsel %vm53, %v4207, 0.0
  %4212 = vadd.xlane.f32.xlu0 %v4211
  %v4213 = vpop.xlane.xlu0 %4212
  %v4214 = vmul.f32 %v4210, %v806
  %v4215 = vmul.f32 %v4213, %v806
  %v4216 = vmul.f32 %v4204, %v4204
  %v4217 = vmul.f32 %v4205, %v4205
  %v4218 = vsub.f32 %v4214, %v4216
  %v4219 = vsub.f32 %v4215, %v4217
  %v4220 = vadd.f32 %v4218, 1e-05
  %v4221 = vadd.f32 %v4219, 1e-05
  %v4222 = vrsqrt.pop %v4220
  %v4223 = vmul.f32 %v4222, %v4220
  %v4224 = vmul.f32 %v4223, %v4222
  %v4225 = vmul.f32 0.5, %v4224
  %v4226 = vsub.f32 1.5, %v4225
  %v4227 = vmul.f32 %v4222, %v4226
  %vm4228 = vweird.f32 %v4220
  %vm4229 = vweird.f32 %v4222
  %vm4230 = vmor %vm4228, %vm4229
  %v4231 = vsel %vm4230, %v4222, %v4227
  %v4232 = vrsqrt.pop %v4221
  %v4233 = vmul.f32 %v4232, %v4221
  %v4234 = vmul.f32 %v4233, %v4232
  %v4235 = vmul.f32 0.5, %v4234
  %v4236 = vsub.f32 1.5, %v4235
  %v4237 = vmul.f32 %v4232, %v4236
  %vm4238 = vweird.f32 %v4221
  %vm4239 = vweird.f32 %v4232
  %vm4240 = vmor %vm4238, %vm4239
  %v4241 = vsel %vm4240, %v4232, %v4237
  %v4242 = vsub.f32 %v4196, %v4204
  %v4243 = vsub.f32 %v4197, %v4205
  %v4244 = vmul.f32 %v4242, %v4231
  %v4245 = vmul.f32 %v4243, %v4241
  %v4246 = vld [vmem:[%s6 + $0x24] sm:$0x1]
  %v4247 = vperm.slane %v4246, 0
  %v4248 = vmul.f32 %v4244, %v4247
  %v4249 = vmul.f32 %v4245, %v4247
  %v4250 = vld [vmem:[%s6 + $0x25] sm:$0x1]
  %v4251 = vperm.slane %v4250, 0
  %v4252 = vadd.f32 %v4248, %v4251
  %v4253 = vadd.f32 %v4249, %v4251
  %v4254 = vpack.c.bf16 %v4253, %v4252
  %v4255 = vld [vmem:[%s5 + $0x140] sm:$0xf]
  %v4256 = vld [vmem:[%s5 + $0x144] sm:$0xf]
  %v4257 = vld [vmem:[%s5 + $0x148] sm:$0xf]
  %v4258 = vld [vmem:[%s5 + $0x14c] sm:$0xf]
  %v4259 = vld [vmem:[%s6 + $0x1f] sm:$0x1]
  %v4260 = vperm.slane %v4259, 0
  %v4265 = vunpack.c.l.b16 %v4255
  %v4266 = vunpack.c.l.b16 %v4256
  %v4267 = vunpack.c.l.b16 %v4257
  %v4268 = vunpack.c.l.b16 %v4258
  %v4269 = vpack.c.b16 %v4266, %v4265
  %v4270 = vpack.c.b16 %v4268, %v4267
  %v4274 = vsel %vm53, %v4254, 0
  %4276 = vmatpush.bf16.msra.mxu0 0
  %4277 = vmatpush.bf16.msra.mxu0 0
  %4278 = vmatpush.bf16.msra.mxu0 0
  %4279 = vmatpush.bf16.msra.mxu0 0
  %4280 = vmatpush.bf16.msra.mxu0 0
  %4281 = vmatpush.bf16.msra.mxu0 0
  %4282 = vmatpush.bf16.msra.mxu0 %v4270
  %4283 = vmatpush.bf16.msra.mxu0 %v4269
  %4284 = vmatmul.bf16.gmra.mxu0 %v4274
  %v4285 = vpop.f32.mrf.mxu0
  %v4286 = vadd.f32 %v4260, %v4285
  %v4287 = vpop.f32.mrf.mxu0
  %v4288 = vadd.f32 %v4260, %v4287
  %4289 = vdwg.mxu0
  %v4290 = vld [vmem:[%s5 + $0x150] sm:$0xf]
  %v4291 = vld [vmem:[%s5 + $0x154] sm:$0xf]
  %v4292 = vld [vmem:[%s5 + $0x158] sm:$0xf]
  %v4293 = vld [vmem:[%s5 + $0x15c] sm:$0xf]
  %v4294 = vld [vmem:[%s6 + $0x20] sm:$0x1]
  %v4295 = vperm.slane %v4294, 0
  %v4300 = vunpack.c.l.b16 %v4290
  %v4301 = vunpack.c.l.b16 %v4291
  %v4302 = vunpack.c.l.b16 %v4292
  %v4303 = vunpack.c.l.b16 %v4293
  %v4304 = vpack.c.b16 %v4301, %v4300
  %v4305 = vpack.c.b16 %v4303, %v4302
  %4308 = vmatpush.bf16.msra.mxu0 0
  %4309 = vmatpush.bf16.msra.mxu0 0
  %4310 = vmatpush.bf16.msra.mxu0 0
  %4311 = vmatpush.bf16.msra.mxu0 0
  %4312 = vmatpush.bf16.msra.mxu0 0
  %4313 = vmatpush.bf16.msra.mxu0 0
  %4314 = vmatpush.bf16.msra.mxu0 %v4305
  %4315 = vmatpush.bf16.msra.mxu0 %v4304
  %4316 = vmatmul.bf16.gmra.mxu0 %v2859
  %v4317 = vpop.f32.mrf.mxu0
  %v4318 = vadd.f32 %v4295, %v4317
  %v4319 = vpop.f32.mrf.mxu0
  %v4320 = vadd.f32 %v4295, %v4319
  %4321 = vmatmul.bf16.gmra.mxu0 %v2862
  %v4322 = vpop.f32.mrf.mxu0
  %v4323 = vadd.f32 %v4295, %v4322
  %v4324 = vpop.f32.mrf.mxu0
  %4325 = vdwg.mxu0
  %v4326 = vld [vmem:[%s5 + $0x160] sm:$0xf]
  %v4327 = vld [vmem:[%s5 + $0x164] sm:$0xf]
  %v4328 = vld [vmem:[%s5 + $0x168] sm:$0xf]
  %v4329 = vld [vmem:[%s5 + $0x16c] sm:$0xf]
  %v4334 = vunpack.c.l.b16 %v4326
  %v4335 = vunpack.c.l.b16 %v4327
  %v4336 = vunpack.c.l.b16 %v4328
  %v4337 = vunpack.c.l.b16 %v4329
  %v4338 = vpack.c.b16 %v4335, %v4334
  %v4339 = vpack.c.b16 %v4337, %v4336
  %4342 = vmatpush.bf16.msra.mxu0 0
  %4343 = vmatpush.bf16.msra.mxu0 0
  %4344 = vmatpush.bf16.msra.mxu0 0
  %4345 = vmatpush.bf16.msra.mxu0 0
  %4346 = vmatpush.bf16.msra.mxu0 0
  %4347 = vmatpush.bf16.msra.mxu0 0
  %4348 = vmatpush.bf16.msra.mxu0 %v4339
  %4349 = vmatpush.bf16.msra.mxu0 %v4338
  %4350 = vmatmul.bf16.gmra.mxu0 %v2859
  %v4351 = vpop.f32.mrf.mxu0
  %v4352 = vadd.f32 0.0, %v4351
  %v4353 = vpop.f32.mrf.mxu0
  %v4354 = vadd.f32 0.0, %v4353
  %4355 = vmatmul.bf16.gmra.mxu0 %v2862
  %v4356 = vpop.f32.mrf.mxu0
  %v4357 = vadd.f32 0.0, %v4356
  %v4358 = vpop.f32.mrf.mxu0
  %4359 = vdwg.mxu0
  %v4361 = vsel %vm121, %v4286, 0
  %v4364 = vsel %vm121, %v4288, 0
  %v4367 = vsel %vm121, %v4318, 0
  %v4370 = vsel %vm121, %v4320, 0
  %v4373 = vsel %vm121, %v4323, 0
  %4375 = vmatpush.xpose.msra.mxu0 0.0
  %4376 = vmatpush.xpose.msra.mxu0 0.0
  %4377 = vmatpush.xpose.msra.mxu0 0.0
  %4378 = vmatpush.xpose.msra.mxu0 0.0
  %4379 = vmatpush.xpose.msra.mxu0 0.0
  %4380 = vmatpush.xpose.msra.mxu0 0.0
  %4381 = vmatpush.xpose.msra.mxu0 0.0
  %4382 = vmatpush.xpose.msra.mxu0 0.0
  %4383 = vmatpush.xpose.msra.mxu0 0.0
  %4384 = vmatpush.xpose.msra.mxu0 0.0
  %4385 = vmatpush.xpose.msra.mxu0 0.0
  %4386 = vmatpush.xpose.msra.mxu0 0.0
  %4387 = vmatpush.xpose.msra.mxu0 0.0
  %4388 = vmatpush.xpose.msra.mxu0 %v4373
  %4389 = vmatpush.xpose.msra.mxu0 %v4370
  %4390 = vmatpush.xpose.msra.mxu0 %v4367
  %4391 = vmatmul.f32.gmra.mxu0 %v4361
  %v4392 = vpop.f32.mrf.mxu0
  %v4393 = vadd.f32 %v2187, %v4392
  %4394 = vmatmul.f32.gmra.mxu0 %v4364
  %v4395 = vpop.f32.mrf.mxu0
  %v4396 = vadd.f32 %v2188, %v4395
  %4397 = vdwg.mxu0
  %v4398 = vsel %vm160, %v4393, -inf
  %4399 = vmax.xlane.f32.xlu0 %v4398
  %v4400 = vpop.xlane.xlu0 %4399
  %v4401 = vsel %vm160, %v4396, -inf
  %4402 = vmax.xlane.f32.xlu0 %v4401
  %v4403 = vpop.xlane.xlu0 %4402
  %v4404 = vsub.f32 %v4393, %v4400
  %v4405 = vsub.f32 %v4396, %v4403
  %v4406 = vmul.f32 %v4404, 1.442695
  %v4407 = vpow.pop %v4406
  %v4408 = vmul.f32 %v4405, 1.442695
  %v4409 = vpow.pop %v4408
  %v4410 = vsel %vm160, %v4407, 0.0
  %4411 = vadd.xlane.f32.xlu0 %v4410
  %v4412 = vpop.xlane.xlu0 %4411
  %v4413 = vsel %vm160, %v4409, 0.0
  %4414 = vadd.xlane.f32.xlu0 %v4413
  %v4415 = vpop.xlane.xlu0 %4414
  %v4416 = vrcp.pop %v4412
  %v4417 = vmul.f32 %v4412, %v4416
  %v4418 = vsub.f32 1.0, %v4417
  %v4419 = vmul.f32 %v4416, %v4418
  %v4420 = vadd.f32 %v4416, %v4419
  %vm4421 = vweird.f32 %v4412
  %vm4422 = vweird.f32 %v4416
  %vm4423 = vmor %vm4421, %vm4422
  %v4424 = vsel %vm4423, %v4416, %v4420
  %v4425 = vand.u32 2147483647, %v4412
  %vm4426 = vcmp.eq.f32.partialorder %v4425, 8.507059e+37
  %v4427 = vand.u32 %v4412, 2147483648
  %v4428 = vor.u32 1.1754944e-38, %v4427
  %v4429 = vsel %vm4426, %v4428, %v4424
  %v4430 = vmul.f32 %v4407, %v4429
  %v4431 = vrcp.pop %v4415
  %v4432 = vmul.f32 %v4415, %v4431
  %v4433 = vsub.f32 1.0, %v4432
  %v4434 = vmul.f32 %v4431, %v4433
  %v4435 = vadd.f32 %v4431, %v4434
  %vm4436 = vweird.f32 %v4415
  %vm4437 = vweird.f32 %v4431
  %vm4438 = vmor %vm4436, %vm4437
  %v4439 = vsel %vm4438, %v4431, %v4435
  %v4440 = vand.u32 2147483647, %v4415
  %vm4441 = vcmp.eq.f32.partialorder %v4440, 8.507059e+37
  %v4442 = vand.u32 %v4415, 2147483648
  %v4443 = vor.u32 1.1754944e-38, %v4442
  %v4444 = vsel %vm4441, %v4443, %v4439
  %v4445 = vmul.f32 %v4409, %v4444
  %4446 = vrot.lane.b32.xlu0 %v4286, 120
  %v4447 = vpop.permute.xlu0 %4446
  %4448 = vrot.lane.b32.xlu0 %v4288, 120
  %v4449 = vpop.permute.xlu0 %4448
  %4450 = vrot.lane.b32.xlu0 %v4318, 120
  %v4451 = vpop.permute.xlu0 %4450
  %4452 = vrot.lane.b32.xlu0 %v4320, 120
  %v4453 = vpop.permute.xlu0 %4452
  %4454 = vrot.lane.b32.xlu0 %v4323, 120
  %v4455 = vpop.permute.xlu0 %4454
  %v4456 = vsel %vm121, %v4447, 0
  %v4458 = vsel %vm121, %v4449, 0
  %v4460 = vsel %vm121, %v4451, 0
  %v4462 = vsel %vm121, %v4453, 0
  %v4464 = vsel %vm121, %v4455, 0
  %4466 = vmatpush.xpose.msra.mxu0 0.0
  %4467 = vmatpush.xpose.msra.mxu0 0.0
  %4468 = vmatpush.xpose.msra.mxu0 0.0
  %4469 = vmatpush.xpose.msra.mxu0 0.0
  %4470 = vmatpush.xpose.msra.mxu0 0.0
  %4471 = vmatpush.xpose.msra.mxu0 0.0
  %4472 = vmatpush.xpose.msra.mxu0 0.0
  %4473 = vmatpush.xpose.msra.mxu0 0.0
  %4474 = vmatpush.xpose.msra.mxu0 0.0
  %4475 = vmatpush.xpose.msra.mxu0 0.0
  %4476 = vmatpush.xpose.msra.mxu0 0.0
  %4477 = vmatpush.xpose.msra.mxu0 0.0
  %4478 = vmatpush.xpose.msra.mxu0 0.0
  %4479 = vmatpush.xpose.msra.mxu0 %v4464
  %4480 = vmatpush.xpose.msra.mxu0 %v4462
  %4481 = vmatpush.xpose.msra.mxu0 %v4460
  %4482 = vmatmul.f32.gmra.mxu0 %v4456
  %v4483 = vpop.f32.mrf.mxu0
  %v4484 = vadd.f32 %v2187, %v4483
  %4485 = vmatmul.f32.gmra.mxu0 %v4458
  %v4486 = vpop.f32.mrf.mxu0
  %v4487 = vadd.f32 %v2188, %v4486
  %4488 = vdwg.mxu0
  %v4489 = vsel %vm160, %v4484, -inf
  %4490 = vmax.xlane.f32.xlu0 %v4489
  %v4491 = vpop.xlane.xlu0 %4490
  %v4492 = vsel %vm160, %v4487, -inf
  %4493 = vmax.xlane.f32.xlu0 %v4492
  %v4494 = vpop.xlane.xlu0 %4493
  %v4495 = vsub.f32 %v4484, %v4491
  %v4496 = vsub.f32 %v4487, %v4494
  %v4497 = vmul.f32 %v4495, 1.442695
  %v4498 = vpow.pop %v4497
  %v4499 = vmul.f32 %v4496, 1.442695
  %v4500 = vpow.pop %v4499
  %v4501 = vsel %vm160, %v4498, 0.0
  %4502 = vadd.xlane.f32.xlu0 %v4501
  %v4503 = vpop.xlane.xlu0 %4502
  %v4504 = vsel %vm160, %v4500, 0.0
  %4505 = vadd.xlane.f32.xlu0 %v4504
  %v4506 = vpop.xlane.xlu0 %4505
  %v4507 = vrcp.pop %v4503
  %v4508 = vmul.f32 %v4503, %v4507
  %v4509 = vsub.f32 1.0, %v4508
  %v4510 = vmul.f32 %v4507, %v4509
  %v4511 = vadd.f32 %v4507, %v4510
  %vm4512 = vweird.f32 %v4503
  %vm4513 = vweird.f32 %v4507
  %vm4514 = vmor %vm4512, %vm4513
  %v4515 = vsel %vm4514, %v4507, %v4511
  %v4516 = vand.u32 2147483647, %v4503
  %vm4517 = vcmp.eq.f32.partialorder %v4516, 8.507059e+37
  %v4518 = vand.u32 %v4503, 2147483648
  %v4519 = vor.u32 1.1754944e-38, %v4518
  %v4520 = vsel %vm4517, %v4519, %v4515
  %v4521 = vmul.f32 %v4498, %v4520
  %v4522 = vrcp.pop %v4506
  %v4523 = vmul.f32 %v4506, %v4522
  %v4524 = vsub.f32 1.0, %v4523
  %v4525 = vmul.f32 %v4522, %v4524
  %v4526 = vadd.f32 %v4522, %v4525
  %vm4527 = vweird.f32 %v4506
  %vm4528 = vweird.f32 %v4522
  %vm4529 = vmor %vm4527, %vm4528
  %v4530 = vsel %vm4529, %v4522, %v4526
  %v4531 = vand.u32 2147483647, %v4506
  %vm4532 = vcmp.eq.f32.partialorder %v4531, 8.507059e+37
  %v4533 = vand.u32 %v4506, 2147483648
  %v4534 = vor.u32 1.1754944e-38, %v4533
  %v4535 = vsel %vm4532, %v4534, %v4530
  %v4536 = vmul.f32 %v4500, %v4535
  %4540 = vrot.lane.b32.xlu0 %v4352, 96
  %v4541 = vpop.permute.xlu0 %4540
  %4542 = vrot.lane.b32.xlu0 %v4354, 96
  %v4543 = vpop.permute.xlu0 %4542
  %4544 = vrot.lane.b32.xlu0 %v4357, 96
  %v4545 = vpop.permute.xlu0 %4544
  %v4549 = vsel %vm160, %v4521, 0
  %v4552 = vsel %vm160, %v4536, 0
  %v4554 = vsel %vm376, %v4545, 0
  %4556 = vmatpush.msra.mxu0 0.0
  %4557 = vmatpush.msra.mxu0 0.0
  %4558 = vmatpush.msra.mxu0 0.0
  %4559 = vmatpush.msra.mxu0 0.0
  %4560 = vmatpush.msra.mxu0 0.0
  %4561 = vmatpush.msra.mxu0 0.0
  %4562 = vmatpush.msra.mxu0 0.0
  %4563 = vmatpush.msra.mxu0 0.0
  %4564 = vmatpush.msra.mxu0 0.0
  %4565 = vmatpush.msra.mxu0 0.0
  %4566 = vmatpush.msra.mxu0 0.0
  %4567 = vmatpush.msra.mxu0 0.0
  %4568 = vmatpush.msra.mxu0 0.0
  %4569 = vmatpush.msra.mxu0 %v4554
  %4570 = vmatpush.msra.mxu0 %v4543
  %4571 = vmatpush.msra.mxu0 %v4541
  %4572 = vmatmul.f32.gmra.mxu0 %v4549
  %v4573 = vpop.f32.mrf.mxu0
  %v4574 = vadd.f32 0.0, %v4573
  %4575 = vmatmul.f32.gmra.mxu0 %v4552
  %v4576 = vpop.f32.mrf.mxu0
  %v4577 = vadd.f32 0.0, %v4576
  %4578 = vdwg.mxu0
  %v4580 = vsel %vm160, %v4430, 0
  %v4583 = vsel %vm160, %v4445, 0
  %v4585 = vsel %vm376, %v4357, 0
  %4587 = vmatpush.msra.mxu0 0.0
  %4588 = vmatpush.msra.mxu0 0.0
  %4589 = vmatpush.msra.mxu0 0.0
  %4590 = vmatpush.msra.mxu0 0.0
  %4591 = vmatpush.msra.mxu0 0.0
  %4592 = vmatpush.msra.mxu0 0.0
  %4593 = vmatpush.msra.mxu0 0.0
  %4594 = vmatpush.msra.mxu0 0.0
  %4595 = vmatpush.msra.mxu0 0.0
  %4596 = vmatpush.msra.mxu0 0.0
  %4597 = vmatpush.msra.mxu0 0.0
  %4598 = vmatpush.msra.mxu0 0.0
  %4599 = vmatpush.msra.mxu0 0.0
  %4600 = vmatpush.msra.mxu0 %v4585
  %4601 = vmatpush.msra.mxu0 %v4354
  %4602 = vmatpush.msra.mxu0 %v4352
  %4603 = vmatmul.f32.gmra.mxu0 %v4580
  %v4604 = vpop.f32.mrf.mxu0
  %v4605 = vadd.f32 %v4574, %v4604
  %4606 = vmatmul.f32.gmra.mxu0 %v4583
  %v4607 = vpop.f32.mrf.mxu0
  %v4608 = vadd.f32 %v4577, %v4607
  %4609 = vdwg.mxu0
  %4610 = vrot.lane.b32.xlu0 %v4286, 112
  %v4611 = vpop.permute.xlu0 %4610
  %4612 = vrot.lane.b32.xlu0 %v4288, 112
  %v4613 = vpop.permute.xlu0 %4612
  %4614 = vrot.lane.b32.xlu0 %v4318, 112
  %v4615 = vpop.permute.xlu0 %4614
  %4616 = vrot.lane.b32.xlu0 %v4320, 112
  %v4617 = vpop.permute.xlu0 %4616
  %4618 = vrot.lane.b32.xlu0 %v4323, 112
  %v4619 = vpop.permute.xlu0 %4618
  %v4620 = vsel %vm121, %v4611, 0
  %v4622 = vsel %vm121, %v4613, 0
  %v4624 = vsel %vm121, %v4615, 0
  %v4626 = vsel %vm121, %v4617, 0
  %v4628 = vsel %vm121, %v4619, 0
  %4630 = vmatpush.xpose.msra.mxu0 0.0
  %4631 = vmatpush.xpose.msra.mxu0 0.0
  %4632 = vmatpush.xpose.msra.mxu0 0.0
  %4633 = vmatpush.xpose.msra.mxu0 0.0
  %4634 = vmatpush.xpose.msra.mxu0 0.0
  %4635 = vmatpush.xpose.msra.mxu0 0.0
  %4636 = vmatpush.xpose.msra.mxu0 0.0
  %4637 = vmatpush.xpose.msra.mxu0 0.0
  %4638 = vmatpush.xpose.msra.mxu0 0.0
  %4639 = vmatpush.xpose.msra.mxu0 0.0
  %4640 = vmatpush.xpose.msra.mxu0 0.0
  %4641 = vmatpush.xpose.msra.mxu0 0.0
  %4642 = vmatpush.xpose.msra.mxu0 0.0
  %4643 = vmatpush.xpose.msra.mxu0 %v4628
  %4644 = vmatpush.xpose.msra.mxu0 %v4626
  %4645 = vmatpush.xpose.msra.mxu0 %v4624
  %4646 = vmatmul.f32.gmra.mxu0 %v4620
  %v4647 = vpop.f32.mrf.mxu0
  %v4648 = vadd.f32 %v2187, %v4647
  %4649 = vmatmul.f32.gmra.mxu0 %v4622
  %v4650 = vpop.f32.mrf.mxu0
  %v4651 = vadd.f32 %v2188, %v4650
  %4652 = vdwg.mxu0
  %v4653 = vsel %vm160, %v4648, -inf
  %4654 = vmax.xlane.f32.xlu0 %v4653
  %v4655 = vpop.xlane.xlu0 %4654
  %v4656 = vsel %vm160, %v4651, -inf
  %4657 = vmax.xlane.f32.xlu0 %v4656
  %v4658 = vpop.xlane.xlu0 %4657
  %v4659 = vsub.f32 %v4648, %v4655
  %v4660 = vsub.f32 %v4651, %v4658
  %v4661 = vmul.f32 %v4659, 1.442695
  %v4662 = vpow.pop %v4661
  %v4663 = vmul.f32 %v4660, 1.442695
  %v4664 = vpow.pop %v4663
  %v4665 = vsel %vm160, %v4662, 0.0
  %4666 = vadd.xlane.f32.xlu0 %v4665
  %v4667 = vpop.xlane.xlu0 %4666
  %v4668 = vsel %vm160, %v4664, 0.0
  %4669 = vadd.xlane.f32.xlu0 %v4668
  %v4670 = vpop.xlane.xlu0 %4669
  %v4671 = vrcp.pop %v4667
  %v4672 = vmul.f32 %v4667, %v4671
  %v4673 = vsub.f32 1.0, %v4672
  %v4674 = vmul.f32 %v4671, %v4673
  %v4675 = vadd.f32 %v4671, %v4674
  %vm4676 = vweird.f32 %v4667
  %vm4677 = vweird.f32 %v4671
  %vm4678 = vmor %vm4676, %vm4677
  %v4679 = vsel %vm4678, %v4671, %v4675
  %v4680 = vand.u32 2147483647, %v4667
  %vm4681 = vcmp.eq.f32.partialorder %v4680, 8.507059e+37
  %v4682 = vand.u32 %v4667, 2147483648
  %v4683 = vor.u32 1.1754944e-38, %v4682
  %v4684 = vsel %vm4681, %v4683, %v4679
  %v4685 = vmul.f32 %v4662, %v4684
  %v4686 = vrcp.pop %v4670
  %v4687 = vmul.f32 %v4670, %v4686
  %v4688 = vsub.f32 1.0, %v4687
  %v4689 = vmul.f32 %v4686, %v4688
  %v4690 = vadd.f32 %v4686, %v4689
  %vm4691 = vweird.f32 %v4670
  %vm4692 = vweird.f32 %v4686
  %vm4693 = vmor %vm4691, %vm4692
  %v4694 = vsel %vm4693, %v4686, %v4690
  %v4695 = vand.u32 2147483647, %v4670
  %vm4696 = vcmp.eq.f32.partialorder %v4695, 8.507059e+37
  %v4697 = vand.u32 %v4670, 2147483648
  %v4698 = vor.u32 1.1754944e-38, %v4697
  %v4699 = vsel %vm4696, %v4698, %v4694
  %v4700 = vmul.f32 %v4664, %v4699
  %4701 = vrot.lane.b32.xlu0 %v4352, 64
  %v4702 = vpop.permute.xlu0 %4701
  %4703 = vrot.lane.b32.xlu0 %v4354, 64
  %v4704 = vpop.permute.xlu0 %4703
  %4705 = vrot.lane.b32.xlu0 %v4357, 64
  %v4706 = vpop.permute.xlu0 %4705
  %v4710 = vsel %vm160, %v4685, 0
  %v4713 = vsel %vm160, %v4700, 0
  %v4715 = vsel %vm376, %v4706, 0
  %4717 = vmatpush.msra.mxu0 0.0
  %4718 = vmatpush.msra.mxu0 0.0
  %4719 = vmatpush.msra.mxu0 0.0
  %4720 = vmatpush.msra.mxu0 0.0
  %4721 = vmatpush.msra.mxu0 0.0
  %4722 = vmatpush.msra.mxu0 0.0
  %4723 = vmatpush.msra.mxu0 0.0
  %4724 = vmatpush.msra.mxu0 0.0
  %4725 = vmatpush.msra.mxu0 0.0
  %4726 = vmatpush.msra.mxu0 0.0
  %4727 = vmatpush.msra.mxu0 0.0
  %4728 = vmatpush.msra.mxu0 0.0
  %4729 = vmatpush.msra.mxu0 0.0
  %4730 = vmatpush.msra.mxu0 %v4715
  %4731 = vmatpush.msra.mxu0 %v4704
  %4732 = vmatpush.msra.mxu0 %v4702
  %4733 = vmatmul.f32.gmra.mxu0 %v4710
  %v4734 = vpop.f32.mrf.mxu0
  %v4735 = vadd.f32 0.0, %v4734
  %4736 = vmatmul.f32.gmra.mxu0 %v4713
  %v4737 = vpop.f32.mrf.mxu0
  %v4738 = vadd.f32 0.0, %v4737
  %4739 = vdwg.mxu0
  %v4740 = vadd.f32 %v4605, %v4735
  %v4741 = vadd.f32 %v4608, %v4738
  %4742 = vrot.lane.b32.xlu0 %v4286, 104
  %v4743 = vpop.permute.xlu0 %4742
  %4744 = vrot.lane.b32.xlu0 %v4288, 104
  %v4745 = vpop.permute.xlu0 %4744
  %4746 = vrot.lane.b32.xlu0 %v4318, 104
  %v4747 = vpop.permute.xlu0 %4746
  %4748 = vrot.lane.b32.xlu0 %v4320, 104
  %v4749 = vpop.permute.xlu0 %4748
  %4750 = vrot.lane.b32.xlu0 %v4323, 104
  %v4751 = vpop.permute.xlu0 %4750
  %v4752 = vsel %vm121, %v4743, 0
  %v4754 = vsel %vm121, %v4745, 0
  %v4756 = vsel %vm121, %v4747, 0
  %v4758 = vsel %vm121, %v4749, 0
  %v4760 = vsel %vm121, %v4751, 0
  %4762 = vmatpush.xpose.msra.mxu0 0.0
  %4763 = vmatpush.xpose.msra.mxu0 0.0
  %4764 = vmatpush.xpose.msra.mxu0 0.0
  %4765 = vmatpush.xpose.msra.mxu0 0.0
  %4766 = vmatpush.xpose.msra.mxu0 0.0
  %4767 = vmatpush.xpose.msra.mxu0 0.0
  %4768 = vmatpush.xpose.msra.mxu0 0.0
  %4769 = vmatpush.xpose.msra.mxu0 0.0
  %4770 = vmatpush.xpose.msra.mxu0 0.0
  %4771 = vmatpush.xpose.msra.mxu0 0.0
  %4772 = vmatpush.xpose.msra.mxu0 0.0
  %4773 = vmatpush.xpose.msra.mxu0 0.0
  %4774 = vmatpush.xpose.msra.mxu0 0.0
  %4775 = vmatpush.xpose.msra.mxu0 %v4760
  %4776 = vmatpush.xpose.msra.mxu0 %v4758
  %4777 = vmatpush.xpose.msra.mxu0 %v4756
  %4778 = vmatmul.f32.gmra.mxu0 %v4752
  %v4779 = vpop.f32.mrf.mxu0
  %v4780 = vadd.f32 %v2187, %v4779
  %4781 = vmatmul.f32.gmra.mxu0 %v4754
  %v4782 = vpop.f32.mrf.mxu0
  %v4783 = vadd.f32 %v2188, %v4782
  %4784 = vdwg.mxu0
  %v4785 = vsel %vm160, %v4780, -inf
  %4786 = vmax.xlane.f32.xlu0 %v4785
  %v4787 = vpop.xlane.xlu0 %4786
  %v4788 = vsel %vm160, %v4783, -inf
  %4789 = vmax.xlane.f32.xlu0 %v4788
  %v4790 = vpop.xlane.xlu0 %4789
  %v4791 = vsub.f32 %v4780, %v4787
  %v4792 = vsub.f32 %v4783, %v4790
  %v4793 = vmul.f32 %v4791, 1.442695
  %v4794 = vpow.pop %v4793
  %v4795 = vmul.f32 %v4792, 1.442695
  %v4796 = vpow.pop %v4795
  %v4797 = vsel %vm160, %v4794, 0.0
  %4798 = vadd.xlane.f32.xlu0 %v4797
  %v4799 = vpop.xlane.xlu0 %4798
  %v4800 = vsel %vm160, %v4796, 0.0
  %4801 = vadd.xlane.f32.xlu0 %v4800
  %v4802 = vpop.xlane.xlu0 %4801
  %v4803 = vrcp.pop %v4799
  %v4804 = vmul.f32 %v4799, %v4803
  %v4805 = vsub.f32 1.0, %v4804
  %v4806 = vmul.f32 %v4803, %v4805
  %v4807 = vadd.f32 %v4803, %v4806
  %vm4808 = vweird.f32 %v4799
  %vm4809 = vweird.f32 %v4803
  %vm4810 = vmor %vm4808, %vm4809
  %v4811 = vsel %vm4810, %v4803, %v4807
  %v4812 = vand.u32 2147483647, %v4799
  %vm4813 = vcmp.eq.f32.partialorder %v4812, 8.507059e+37
  %v4814 = vand.u32 %v4799, 2147483648
  %v4815 = vor.u32 1.1754944e-38, %v4814
  %v4816 = vsel %vm4813, %v4815, %v4811
  %v4817 = vmul.f32 %v4794, %v4816
  %v4818 = vrcp.pop %v4802
  %v4819 = vmul.f32 %v4802, %v4818
  %v4820 = vsub.f32 1.0, %v4819
  %v4821 = vmul.f32 %v4818, %v4820
  %v4822 = vadd.f32 %v4818, %v4821
  %vm4823 = vweird.f32 %v4802
  %vm4824 = vweird.f32 %v4818
  %vm4825 = vmor %vm4823, %vm4824
  %v4826 = vsel %vm4825, %v4818, %v4822
  %v4827 = vand.u32 2147483647, %v4802
  %vm4828 = vcmp.eq.f32.partialorder %v4827, 8.507059e+37
  %v4829 = vand.u32 %v4802, 2147483648
  %v4830 = vor.u32 1.1754944e-38, %v4829
  %v4831 = vsel %vm4828, %v4830, %v4826
  %v4832 = vmul.f32 %v4796, %v4831
  %4833 = vrot.lane.b32.xlu0 %v4352, 32
  %v4834 = vpop.permute.xlu0 %4833
  %4835 = vrot.lane.b32.xlu0 %v4354, 32
  %v4836 = vpop.permute.xlu0 %4835
  %4837 = vrot.lane.b32.xlu0 %v4357, 32
  %v4838 = vpop.permute.xlu0 %4837
  %v4842 = vsel %vm160, %v4817, 0
  %v4845 = vsel %vm160, %v4832, 0
  %v4847 = vsel %vm376, %v4838, 0
  %4849 = vmatpush.msra.mxu0 0.0
  %4850 = vmatpush.msra.mxu0 0.0
  %4851 = vmatpush.msra.mxu0 0.0
  %4852 = vmatpush.msra.mxu0 0.0
  %4853 = vmatpush.msra.mxu0 0.0
  %4854 = vmatpush.msra.mxu0 0.0
  %4855 = vmatpush.msra.mxu0 0.0
  %4856 = vmatpush.msra.mxu0 0.0
  %4857 = vmatpush.msra.mxu0 0.0
  %4858 = vmatpush.msra.mxu0 0.0
  %4859 = vmatpush.msra.mxu0 0.0
  %4860 = vmatpush.msra.mxu0 0.0
  %4861 = vmatpush.msra.mxu0 0.0
  %4862 = vmatpush.msra.mxu0 %v4847
  %4863 = vmatpush.msra.mxu0 %v4836
  %4864 = vmatpush.msra.mxu0 %v4834
  %4865 = vmatmul.f32.gmra.mxu0 %v4842
  %v4866 = vpop.f32.mrf.mxu0
  %v4867 = vadd.f32 0.0, %v4866
  %4868 = vmatmul.f32.gmra.mxu0 %v4845
  %v4869 = vpop.f32.mrf.mxu0
  %v4870 = vadd.f32 0.0, %v4869
  %4871 = vdwg.mxu0
  %v4872 = vadd.f32 %v4740, %v4867
  %v4873 = vadd.f32 %v4741, %v4870
  %v4874 = vld [vmem:[%s6 + $0x21] sm:$0x1]
  %v4875 = vperm.slane %v4874, 0
  %v4876 = vadd.f32 %v4872, %v4875
  %v4877 = vadd.f32 %v4873, %v4875
  %v4878 = vadd.f32 %v4252, %v4876
  %v4879 = vadd.f32 %v4253, %v4877
  %v4880 = vsel %vm53, %v4878, 0.0
  %4881 = vadd.xlane.f32.xlu0 %v4880
  %v4882 = vpop.xlane.xlu0 %4881
  %v4883 = vsel %vm53, %v4879, 0.0
  %4884 = vadd.xlane.f32.xlu0 %v4883
  %v4885 = vpop.xlane.xlu0 %4884
  %v4886 = vmul.f32 %v4882, %v806
  %v4887 = vmul.f32 %v4885, %v806
  %v4888 = vmul.f32 %v4878, %v4878
  %v4889 = vmul.f32 %v4879, %v4879
  %v4890 = vsel %vm53, %v4888, 0.0
  %4891 = vadd.xlane.f32.xlu0 %v4890
  %v4892 = vpop.xlane.xlu0 %4891
  %v4893 = vsel %vm53, %v4889, 0.0
  %4894 = vadd.xlane.f32.xlu0 %v4893
  %v4895 = vpop.xlane.xlu0 %4894
  %v4896 = vmul.f32 %v4892, %v806
  %v4897 = vmul.f32 %v4895, %v806
  %v4898 = vmul.f32 %v4886, %v4886
  %v4899 = vmul.f32 %v4887, %v4887
  %v4900 = vsub.f32 %v4896, %v4898
  %v4901 = vsub.f32 %v4897, %v4899
  %v4902 = vadd.f32 %v4900, 1e-05
  %v4903 = vadd.f32 %v4901, 1e-05
  %v4904 = vrsqrt.pop %v4902
  %v4905 = vmul.f32 %v4904, %v4902
  %v4906 = vmul.f32 %v4905, %v4904
  %v4907 = vmul.f32 0.5, %v4906
  %v4908 = vsub.f32 1.5, %v4907
  %v4909 = vmul.f32 %v4904, %v4908
  %vm4910 = vweird.f32 %v4902
  %vm4911 = vweird.f32 %v4904
  %vm4912 = vmor %vm4910, %vm4911
  %v4913 = vsel %vm4912, %v4904, %v4909
  %v4914 = vrsqrt.pop %v4903
  %v4915 = vmul.f32 %v4914, %v4903
  %v4916 = vmul.f32 %v4915, %v4914
  %v4917 = vmul.f32 0.5, %v4916
  %v4918 = vsub.f32 1.5, %v4917
  %v4919 = vmul.f32 %v4914, %v4918
  %vm4920 = vweird.f32 %v4903
  %vm4921 = vweird.f32 %v4914
  %vm4922 = vmor %vm4920, %vm4921
  %v4923 = vsel %vm4922, %v4914, %v4919
  %v4924 = vsub.f32 %v4878, %v4886
  %v4925 = vsub.f32 %v4879, %v4887
  %v4926 = vmul.f32 %v4924, %v4913
  %v4927 = vmul.f32 %v4925, %v4923
  %v4928 = vld [vmem:[%s6 + $0x26] sm:$0x1]
  %v4929 = vperm.slane %v4928, 0
  %v4930 = vmul.f32 %v4926, %v4929
  %v4931 = vmul.f32 %v4927, %v4929
  %v4932 = vld [vmem:[%s6 + $0x27] sm:$0x1]
  %v4933 = vperm.slane %v4932, 0
  %v4934 = vadd.f32 %v4930, %v4933
  %v4935 = vadd.f32 %v4931, %v4933
  %v4936 = vpack.c.bf16 %v4935, %v4934
  %v4937 = vld [vmem:[%s5 + $0x170] sm:$0xf]
  %v4938 = vld [vmem:[%s5 + $0x174] sm:$0xf]
  %v4939 = vld [vmem:[%s5 + $0x178] sm:$0xf]
  %v4940 = vld [vmem:[%s5 + $0x17c] sm:$0xf]
  %v4941 = vld [vmem:[%s6 + $0x22] sm:$0x1]
  %v4942 = vperm.slane %v4941, 0
  %v4947 = vunpack.c.l.b16 %v4937
  %v4948 = vunpack.c.l.b16 %v4938
  %v4949 = vunpack.c.l.b16 %v4939
  %v4950 = vunpack.c.l.b16 %v4940
  %v4951 = vpack.c.b16 %v4948, %v4947
  %v4952 = vpack.c.b16 %v4950, %v4949
  %v4956 = vsel %vm53, %v4936, 0
  %4958 = vmatpush.bf16.msra.mxu0 0
  %4959 = vmatpush.bf16.msra.mxu0 0
  %4960 = vmatpush.bf16.msra.mxu0 0
  %4961 = vmatpush.bf16.msra.mxu0 0
  %4962 = vmatpush.bf16.msra.mxu0 0
  %4963 = vmatpush.bf16.msra.mxu0 0
  %4964 = vmatpush.bf16.msra.mxu0 %v4952
  %4965 = vmatpush.bf16.msra.mxu0 %v4951
  %4966 = vmatmul.bf16.gmra.mxu0 %v4956
  %v4967 = vpop.f32.mrf.mxu0
  %v4968 = vadd.f32 %v4942, %v4967
  %v4969 = vpop.f32.mrf.mxu0
  %v4970 = vadd.f32 %v4942, %v4969
  %4971 = vdwg.mxu0
  %v4972 = vmax.f32 %v4968, 0.0
  %v4973 = vmax.f32 %v4970, 0.0
  %v4974 = vpack.c.bf16 %v4973, %v4972
  %v4975 = vld [vmem:[%s5 + $0x180] sm:$0xf]
  %v4976 = vld [vmem:[%s5 + $0x184] sm:$0xf]
  %v4977 = vld [vmem:[%s5 + $0x188] sm:$0xf]
  %v4978 = vld [vmem:[%s5 + $0x18c] sm:$0xf]
  %v4979 = vld [vmem:[%s5 + $0x190] sm:$0xf]
  %v4980 = vld [vmem:[%s5 + $0x194] sm:$0xf]
  %v4981 = vld [vmem:[%s5 + $0x198] sm:$0xf]
  %v4982 = vld [vmem:[%s5 + $0x19c] sm:$0xf]
  %v4983 = vld [vmem:[%s6 + $0x23] sm:$0x1]
  %v4984 = vperm.slane %v4983, 0
  %v4993 = vunpack.c.l.b16 %v4975
  %v4994 = vunpack.c.l.b16 %v4976
  %v4995 = vunpack.c.l.b16 %v4977
  %v4996 = vunpack.c.l.b16 %v4978
  %v4997 = vunpack.c.l.b16 %v4979
  %v4998 = vunpack.c.l.b16 %v4980
  %v4999 = vunpack.c.l.b16 %v4981
  %v5000 = vunpack.c.l.b16 %v4982
  %v5001 = vpack.c.b16 %v4994, %v4993
  %v5002 = vpack.c.b16 %v4996, %v4995
  %v5003 = vpack.c.b16 %v4998, %v4997
  %v5004 = vpack.c.b16 %v5000, %v4999
  %v5010 = vsel %vm963, %v4974, 0
  %5012 = vmatpush.bf16.msra.mxu0 0
  %5013 = vmatpush.bf16.msra.mxu0 0
  %5014 = vmatpush.bf16.msra.mxu0 0
  %5015 = vmatpush.bf16.msra.mxu0 0
  %5016 = vmatpush.bf16.msra.mxu0 %v5004
  %5017 = vmatpush.bf16.msra.mxu0 %v5003
  %5018 = vmatpush.bf16.msra.mxu0 %v5002
  %5019 = vmatpush.bf16.msra.mxu0 %v5001
  %5020 = vmatmul.bf16.gmra.mxu0 %v5010
  %v5021 = vpop.f32.mrf.mxu0
  %v5022 = vadd.f32 %v4984, %v5021
  %v5023 = vpop.f32.mrf.mxu0
  %v5024 = vadd.f32 %v4984, %v5023
  %5025 = vdwg.mxu0
  %v5026 = vadd.f32 %v4934, %v5022
  %v5027 = vadd.f32 %v4935, %v5024
  %v5028 = vsel %vm53, %v5026, 0.0
  %5029 = vadd.xlane.f32.xlu0 %v5028
  %v5030 = vpop.xlane.xlu0 %5029
  %v5031 = vsel %vm53, %v5027, 0.0
  %5032 = vadd.xlane.f32.xlu0 %v5031
  %v5033 = vpop.xlane.xlu0 %5032
  %v5034 = vmul.f32 %v5030, %v806
  %v5035 = vmul.f32 %v5033, %v806
  %v5036 = vmul.f32 %v5026, %v5026
  %v5037 = vmul.f32 %v5027, %v5027
  %v5038 = vsel %vm53, %v5036, 0.0
  %5039 = vadd.xlane.f32.xlu0 %v5038
  %v5040 = vpop.xlane.xlu0 %5039
  %v5041 = vsel %vm53, %v5037, 0.0
  %5042 = vadd.xlane.f32.xlu0 %v5041
  %v5043 = vpop.xlane.xlu0 %5042
  %v5044 = vmul.f32 %v5040, %v806
  %v5045 = vmul.f32 %v5043, %v806
  %v5046 = vmul.f32 %v5034, %v5034
  %v5047 = vmul.f32 %v5035, %v5035
  %v5048 = vsub.f32 %v5044, %v5046
  %v5049 = vsub.f32 %v5045, %v5047
  %v5050 = vadd.f32 %v5048, 1e-05
  %v5051 = vadd.f32 %v5049, 1e-05
  %v5052 = vrsqrt.pop %v5050
  %v5053 = vmul.f32 %v5052, %v5050
  %v5054 = vmul.f32 %v5053, %v5052
  %v5055 = vmul.f32 0.5, %v5054
  %v5056 = vsub.f32 1.5, %v5055
  %v5057 = vmul.f32 %v5052, %v5056
  %vm5058 = vweird.f32 %v5050
  %vm5059 = vweird.f32 %v5052
  %vm5060 = vmor %vm5058, %vm5059
  %v5061 = vsel %vm5060, %v5052, %v5057
  %v5062 = vrsqrt.pop %v5051
  %v5063 = vmul.f32 %v5062, %v5051
  %v5064 = vmul.f32 %v5063, %v5062
  %v5065 = vmul.f32 0.5, %v5064
  %v5066 = vsub.f32 1.5, %v5065
  %v5067 = vmul.f32 %v5062, %v5066
  %vm5068 = vweird.f32 %v5051
  %vm5069 = vweird.f32 %v5062
  %vm5070 = vmor %vm5068, %vm5069
  %v5071 = vsel %vm5070, %v5062, %v5067
  %v5072 = vsub.f32 %v5026, %v5034
  %v5073 = vsub.f32 %v5027, %v5035
  %v5074 = vmul.f32 %v5072, %v5061
  %v5075 = vmul.f32 %v5073, %v5071
  %v5076 = vld [vmem:[%s6 + $0x28] sm:$0x1]
  %v5077 = vperm.slane %v5076, 0
  %v5078 = vmul.f32 %v5074, %v5077
  %v5079 = vmul.f32 %v5075, %v5077
  %v5080 = vld [vmem:[%s6 + $0x29] sm:$0x1]
  %v5081 = vperm.slane %v5080, 0
  %v5082 = vadd.f32 %v5078, %v5081
  %v5083 = vadd.f32 %v5079, %v5081
  %v5084 = vsel %vm53, %v5082, 0.0
  %5085 = vadd.xlane.f32.xlu0 %v5084
  %v5086 = vpop.xlane.xlu0 %5085
  %v5087 = vsel %vm53, %v5083, 0.0
  %5088 = vadd.xlane.f32.xlu0 %v5087
  %v5089 = vpop.xlane.xlu0 %5088
  %v5090 = vmul.f32 %v5086, %v806
  %v5091 = vmul.f32 %v5089, %v806
  %v5092 = vmul.f32 %v5082, %v5082
  %v5093 = vmul.f32 %v5083, %v5083
  %v5094 = vsel %vm53, %v5092, 0.0
  %5095 = vadd.xlane.f32.xlu0 %v5094
  %v5096 = vpop.xlane.xlu0 %5095
  %v5097 = vsel %vm53, %v5093, 0.0
  %5098 = vadd.xlane.f32.xlu0 %v5097
  %v5099 = vpop.xlane.xlu0 %5098
  %v5100 = vmul.f32 %v5096, %v806
  %v5101 = vmul.f32 %v5099, %v806
  %v5102 = vmul.f32 %v5090, %v5090
  %v5103 = vmul.f32 %v5091, %v5091
  %v5104 = vsub.f32 %v5100, %v5102
  %v5105 = vsub.f32 %v5101, %v5103
  %v5106 = vadd.f32 %v5104, 1e-05
  %v5107 = vadd.f32 %v5105, 1e-05
  %v5108 = vrsqrt.pop %v5106
  %v5109 = vmul.f32 %v5108, %v5106
  %v5110 = vmul.f32 %v5109, %v5108
  %v5111 = vmul.f32 0.5, %v5110
  %v5112 = vsub.f32 1.5, %v5111
  %v5113 = vmul.f32 %v5108, %v5112
  %vm5114 = vweird.f32 %v5106
  %vm5115 = vweird.f32 %v5108
  %vm5116 = vmor %vm5114, %vm5115
  %v5117 = vsel %vm5116, %v5108, %v5113
  %v5118 = vrsqrt.pop %v5107
  %v5119 = vmul.f32 %v5118, %v5107
  %v5120 = vmul.f32 %v5119, %v5118
  %v5121 = vmul.f32 0.5, %v5120
  %v5122 = vsub.f32 1.5, %v5121
  %v5123 = vmul.f32 %v5118, %v5122
  %vm5124 = vweird.f32 %v5107
  %vm5125 = vweird.f32 %v5118
  %vm5126 = vmor %vm5124, %vm5125
  %v5127 = vsel %vm5126, %v5118, %v5123
  %v5128 = vsub.f32 %v5082, %v5090
  %v5129 = vsub.f32 %v5083, %v5091
  %v5130 = vmul.f32 %v5128, %v5117
  %v5131 = vmul.f32 %v5129, %v5127
  %v5132 = vld [vmem:[%s6 + $0x2c] sm:$0x1]
  %v5133 = vperm.slane %v5132, 0
  %v5134 = vmul.f32 %v5130, %v5133
  %v5135 = vmul.f32 %v5131, %v5133
  %v5136 = vld [vmem:[%s6 + $0x2d] sm:$0x1]
  %v5137 = vperm.slane %v5136, 0
  %v5138 = vadd.f32 %v5134, %v5137
  %v5139 = vadd.f32 %v5135, %v5137
  %v5140 = vpack.c.bf16 %v5139, %v5138
  %v5141 = vld [vmem:[%s5 + $0x1a0] sm:$0xf]
  %v5142 = vld [vmem:[%s5 + $0x1a4] sm:$0xf]
  %v5143 = vld [vmem:[%s5 + $0x1a8] sm:$0xf]
  %v5144 = vld [vmem:[%s5 + $0x1ac] sm:$0xf]
  %v5145 = vld [vmem:[%s6 + $0x2e] sm:$0x1]
  %v5146 = vperm.slane %v5145, 0
  %v5151 = vunpack.c.l.b16 %v5141
  %v5152 = vunpack.c.l.b16 %v5142
  %v5153 = vunpack.c.l.b16 %v5143
  %v5154 = vunpack.c.l.b16 %v5144
  %v5155 = vpack.c.b16 %v5152, %v5151
  %v5156 = vpack.c.b16 %v5154, %v5153
  %v5160 = vsel %vm53, %v5140, 0
  %5162 = vmatpush.bf16.msra.mxu0 0
  %5163 = vmatpush.bf16.msra.mxu0 0
  %5164 = vmatpush.bf16.msra.mxu0 0
  %5165 = vmatpush.bf16.msra.mxu0 0
  %5166 = vmatpush.bf16.msra.mxu0 0
  %5167 = vmatpush.bf16.msra.mxu0 0
  %5168 = vmatpush.bf16.msra.mxu0 %v5156
  %5169 = vmatpush.bf16.msra.mxu0 %v5155
  %5170 = vmatmul.bf16.gmra.mxu0 %v5160
  %v5171 = vpop.f32.mrf.mxu0
  %v5172 = vadd.f32 %v5146, %v5171
  %v5173 = vpop.f32.mrf.mxu0
  %v5174 = vadd.f32 %v5146, %v5173
  %5175 = vdwg.mxu0
  %5176 = vst [vmem:[%s7] sm:$0xff] %v5172
  %5177 = vst [vmem:[%s7 + $0x8] sm:$0xff] %v5174
  // Predicated region
  $region30: #{transformer_forward.1} parent=0 // pred_check
    _
  $region31: #{transformer_forward.1} parent=0 // pred_check_branch
    %5179 = sbr.rel (0) target = $region33
  $region32: #{transformer_forward.1} parent=0 // pred_region
    _
  $region33: #{transformer_forward.1} parent=0 // pred_fallthru
    _
  // Predicated region
  $region34: #{transformer_forward.1} parent=0 // pred_check
    _
  $region35: #{transformer_forward.1} parent=0 // pred_check_branch
    %5181 = sbr.rel (0) target = $region37
  $region36: #{transformer_forward.1} parent=0 // pred_region
    _
  $region37: #{transformer_forward.1} parent=0 // pred_fallthru
    _

</llo_original>
